<compile_context>
chip_gen: v5e
topology: v5e:2x2
jax: 0.10.0
libtpu: 0.0.40
codegen_flags: <defaults>
</compile_context>

<pallas_src>
import numpy as np
import jax
import jax.numpy as jnp
from jax.experimental import pallas as pl
from jax.experimental.pallas import tpu as pltpu


LANES = 128      # channel padding (lane-dense output / MXU columns)
PAD_ROWS = 16    # zero guard band above/below the flattened pixel rows
N_CONV = 5


# ----------------------------------------------------------------------------
# The single fused kernel
# ----------------------------------------------------------------------------
def _build_kernel(B, C, H, W, shifts):
    M = B * H * W
    assert max(abs(s) for s in shifts) < PAD_ROWS

    def kernel(x_ref, fcw_ref, fcb_ref, bsel_ref, hwmask_ref, chansel_ref,
               convw_ref, convb_ref, tapmask_ref, out_ref, ext_ref):
        f32 = jnp.float32
        bf16 = jnp.bfloat16

        # Zero once: the guard bands stay zero forever, so shifted reads past
        # the image are zeros (and never uninitialised VMEM).
        ext_ref[...] = jnp.zeros_like(ext_ref)

        # ---------------- fcd1 + ReLU (in-kernel) ---------------------------
        # xpix[m, :] = x[batch(m), :]  (replicate the latent per output pixel)
        xpix = jnp.dot(bsel_ref[...], x_ref[...], preferred_element_type=f32)
        pix = jnp.dot(xpix.astype(bf16), fcw_ref[...],
                      preferred_element_type=f32)                 # (M, C*H*W)
        pix = jnp.maximum(pix + fcb_ref[...], 0.0)
        # keep only this pixel's columns, then fold channel-major fc layout
        # into channels-last lanes with a 0/1 selection matmul
        pix = pix * hwmask_ref[...]
        act = jnp.dot(pix.astype(bf16), chansel_ref[...],
                      preferred_element_type=f32)                 # (M, LANES)

        # ------------- 5 x (ConvTranspose2d 3x3 s1 p1 + ReLU) ---------------
        for l in range(N_CONV):
            ext_ref[PAD_ROWS:PAD_ROWS + M, :] = act               # VMEM resident
            acc = jnp.zeros((M, LANES), f32)
            for t in range(9):
                s = shifts[t]
                shifted = ext_ref[PAD_ROWS + s:PAD_ROWS + s + M, :]
                contrib = jnp.dot(shifted.astype(bf16), convw_ref[l * 9 + t],
                                  preferred_element_type=f32)
                acc = acc + tapmask_ref[t] * contrib              # row-mask, f32
            act = jnp.maximum(acc + convb_ref[l], 0.0)

        out_ref[...] = act                                         # (M, 128) f32

    return kernel


# ----------------------------------------------------------------------------
# One-time precomputation of every constant kernel operand
# ----------------------------------------------------------------------------
def build_decoder_inputs(params, batch, input_dim, output_shape):
    C, H, W = output_shape
    HW, CHW = H * W, C * H * W
    M = batch * HW

    fcw = np.asarray(params["fc_w"], np.float32)                  # (K, CHW)
    fcb = np.asarray(params["fc_b"], np.float32).reshape(1, CHW)

    # ConvTranspose(k3,s1,p1) -> flipped SAME correlation, zero-padded to 128
    convw = np.zeros((N_CONV * 9, LANES, LANES), np.float32)
    convb = np.zeros((N_CONV, 1, LANES), np.float32)
    for l in range(N_CONV):
        wt = np.asarray(params[f"tc{l + 1}_w"], np.float32)       # (Cin,Cout,3,3)
        cin, cout = wt.shape[0], wt.shape[1]
        assert cin <= LANES and cout <= LANES
        w_eff = np.transpose(wt[:, :, ::-1, ::-1], (2, 3, 0, 1))  # (3,3,Cin,Cout)
        for kh in range(3):
            for kw in range(3):
                convw[l * 9 + kh * 3 + kw, :cin, :cout] = w_eff[kh, kw]
        convb[l, 0, :cout] = np.asarray(params[f"tc{l + 1}_b"], np.float32)

    m_idx = np.arange(M)
    hw_idx = m_idx % HW
    hh, ww = hw_idx // W, hw_idx % W

    # fc-layout-conversion constants
    bsel = (m_idx[:, None] // HW == np.arange(batch)[None, :]).astype(np.float32)
    hwmask = (np.arange(CHW)[None, :] % HW == hw_idx[:, None]).astype(np.float32)
    chansel = np.zeros((CHW, LANES), np.float32)
    chansel[np.arange(CHW), np.arange(CHW) // HW] = 1.0

    # per-tap row shifts + validity masks for the flattened (b,h,w) layout
    shifts = []
    tapmask = np.zeros((9, M, LANES), np.float32)
    for kh in range(3):
        for kw in range(3):
            dy, dx = kh - 1, kw - 1
            shifts.append(dy * W + dx)
            valid = (hh + dy >= 0) & (hh + dy < H) & (ww + dx >= 0) & (ww + dx < W)
            tapmask[kh * 3 + kw] = valid[:, None].astype(np.float32)

    return {
        "fcw": jnp.asarray(fcw, jnp.bfloat16),
        "fcb": jnp.asarray(fcb, jnp.float32),
        "bsel": jnp.asarray(bsel, jnp.bfloat16),
        "hwmask": jnp.asarray(hwmask, jnp.float32),
        "chansel": jnp.asarray(chansel, jnp.bfloat16),
        "convw": jnp.asarray(convw, jnp.bfloat16),
        "convb": jnp.asarray(convb, jnp.float32),
        "tapmask": jnp.asarray(tapmask, jnp.float32),
        "shifts": tuple(shifts),
    }


# ----------------------------------------------------------------------------
# pallas_call wrapper
# ----------------------------------------------------------------------------
def make_decoder_forward(kin, batch, input_dim, output_shape):
    C, H, W = output_shape
    M = batch * H * W
    CHW = C * H * W

    kernel = _build_kernel(batch, C, H, W, kin["shifts"])

    def full_spec(shape):
        nd = len(shape)
        return pl.BlockSpec(shape, lambda i, _nd=nd: (0,) * _nd)

    operands = ("fcw", "fcb", "bsel", "hwmask", "chansel",
                "convw", "convb", "tapmask")
    in_shapes = [(batch, input_dim)] + [tuple(kin[k].shape) for k in operands]

    flops = (2 * M * (batch * input_dim + input_dim * CHW + CHW * LANES)
             + 2 * N_CONV * 9 * M * LANES * LANES)
    bytes_accessed = (batch * input_dim * 2
                      + sum(int(np.prod(kin[k].shape)) * kin[k].dtype.itemsize
                            for k in operands)
                      + M * LANES * 4)

    call = pl.pallas_call(
        kernel,
        out_shape=jax.ShapeDtypeStruct((M, LANES), jnp.float32),
        grid=(1,),
        in_specs=[full_spec(s) for s in in_shapes],
        out_specs=full_spec((M, LANES)),
        scratch_shapes=[pltpu.VMEM((M + 2 * PAD_ROWS, LANES), jnp.float32)],
        compiler_params=pltpu.CompilerParams(
            dimension_semantics=("arbitrary",),
            vmem_limit_bytes=32 * 1024 * 1024),
        cost_estimate=pl.CostEstimate(flops=flops, transcendentals=0,
                                      bytes_accessed=bytes_accessed),
    )

    def forward(x):
        res = call(x.astype(jnp.bfloat16), kin["fcw"], kin["fcb"], kin["bsel"],
                   kin["hwmask"], kin["chansel"], kin["convw"], kin["convb"],
                   kin["tapmask"])
        # only tiny layout glue outside the kernel: drop channel padding, NCHW
        return jnp.transpose(res[:, :C].reshape(batch, H, W, C), (0, 3, 1, 2))

    return forward


# ----------------------------------------------------------------------------
# Deterministic parameter init (mirrors the PyTorch module's shapes)
# ----------------------------------------------------------------------------
def init_params(key, input_dim, output_shape):
    C, H, W = output_shape
    K = C * H * W
    keys = jax.random.split(key, 12)

    def u(k, shape, fan_in):
        bound = 1.0 / np.sqrt(fan_in)
        return jax.random.uniform(k, shape, jnp.float32, -bound, bound)

    params = {
        "fc_w": u(keys[0], (input_dim, K), input_dim),   # stored transposed vs torch
        "fc_b": u(keys[1], (K,), input_dim),
    }
    chans = [C, 128, 64, 32, 16, C]
    for i in range(5):
        cin, cout = chans[i], chans[i + 1]
        params[f"tc{i + 1}_w"] = u(keys[2 + 2 * i], (cin, cout, 3, 3), cin * 9)
        params[f"tc{i + 1}_b"] = u(keys[3 + 2 * i], (cout,), cin * 9)
    return params


# ----------------------------------------------------------------------------
# Independent numpy reference (scatter formulation of transposed conv)
# ----------------------------------------------------------------------------
def ref_forward(x, params, output_shape):
    x = np.asarray(x, np.float32)
    p = {k: np.asarray(v, np.float32) for k, v in params.items()}
    C, H, W = output_shape
    B = x.shape[0]
    h = np.maximum(x @ p["fc_w"] + p["fc_b"], 0.0).reshape(B, C, H, W)
    for i in range(1, 6):
        w, b = p[f"tc{i}_w"], p[f"tc{i}_b"]
        Cout = w.shape[1]
        outp = np.zeros((B, Cout, H + 2, W + 2), np.float32)
        for kh in range(3):
            for kw in range(3):
                outp[:, :, kh:kh + H, kw:kw + W] += np.einsum(
                    "nchw,co->nohw", h, w[:, :, kh, kw])
        h = np.maximum(outp[:, :, 1:1 + H, 1:1 + W] + b[None, :, None, None], 0.0)
    return h


if __name__ == "__main__":
    input_dim = 32
    output_shape = (4, 8, 8)   # (C, H, W)
    batch = 2

    key = jax.random.PRNGKey(0)
    kx, kp = jax.random.split(key)
    x = jax.random.normal(kx, (batch, input_dim), jnp.float32)
    params = init_params(kp, input_dim, output_shape)

    kin = build_decoder_inputs(params, batch, input_dim, output_shape)
    fwd = jax.jit(make_decoder_forward(kin, batch, input_dim, output_shape))

    out = jax.block_until_ready(fwd(x))
    ref = ref_forward(x, params, output_shape)

    assert out.shape == (batch,) + output_shape
    err = np.max(np.abs(np.asarray(out, np.float32) - ref))
    assert np.allclose(np.asarray(out, np.float32), ref, rtol=5e-2, atol=5e-2), \
        f"max abs err {err}"

    print("KERNEL_OK")
</pallas_src>

<mosaic_0001>
module attributes {stable_mosaic.version = 11 : i64} {
  func.func @kernel(%arg0: i32, %arg1: memref<2x32xbf16, #tpu.memory_space<vmem>>, %arg2: memref<32x256xbf16, #tpu.memory_space<vmem>>, %arg3: memref<1x256xf32, #tpu.memory_space<vmem>>, %arg4: memref<128x2xbf16, #tpu.memory_space<vmem>>, %arg5: memref<128x256xf32, #tpu.memory_space<vmem>>, %arg6: memref<256x128xbf16, #tpu.memory_space<vmem>>, %arg7: memref<45x128x128xbf16, #tpu.memory_space<vmem>>, %arg8: memref<5x1x128xf32, #tpu.memory_space<vmem>>, %arg9: memref<9x128x128xf32, #tpu.memory_space<vmem>>, %arg10: memref<128x128xf32, #tpu.memory_space<vmem>>, %arg11: memref<160x128xf32, #tpu.memory_space<vmem>>) attributes {dimension_semantics = [#tpu.dimension_semantics<arbitrary>], iteration_bounds = array<i64: 1>, scalar_prefetch = 0 : i64, scratch_operands = 1 : i64, tpu.core_type = #tpu.core_type<tc>, window_params = [{pipeline_mode = #tpu.pipeline_mode<synchronous>, transform_indices = @transform_0, window_bounds = array<i64: 2, 32>}, {pipeline_mode = #tpu.pipeline_mode<synchronous>, transform_indices = @transform_1, window_bounds = array<i64: 32, 256>}, {pipeline_mode = #tpu.pipeline_mode<synchronous>, transform_indices = @transform_2, window_bounds = array<i64: 1, 256>}, {pipeline_mode = #tpu.pipeline_mode<synchronous>, transform_indices = @transform_3, window_bounds = array<i64: 128, 2>}, {pipeline_mode = #tpu.pipeline_mode<synchronous>, transform_indices = @transform_4, window_bounds = array<i64: 128, 256>}, {pipeline_mode = #tpu.pipeline_mode<synchronous>, transform_indices = @transform_5, window_bounds = array<i64: 256, 128>}, {pipeline_mode = #tpu.pipeline_mode<synchronous>, transform_indices = @transform_6, window_bounds = array<i64: 45, 128, 128>}, {pipeline_mode = #tpu.pipeline_mode<synchronous>, transform_indices = @transform_7, window_bounds = array<i64: 5, 1, 128>}, {pipeline_mode = #tpu.pipeline_mode<synchronous>, transform_indices = @transform_8, window_bounds = array<i64: 9, 128, 128>}, {pipeline_mode = #tpu.pipeline_mode<synchronous>, transform_indices = @transform_9, window_bounds = array<i64: 128, 128>}]} {
    %cst = arith.constant 0.000000e+00 : f32
    %0 = vector.broadcast %cst : f32 to vector<160x128xf32>
    %c0 = arith.constant 0 : index
    %c0_0 = arith.constant 0 : index
    %1 = vector.load %arg11[%c0, %c0_0] : memref<160x128xf32, #tpu.memory_space<vmem>>, vector<160x128xf32>
    tpu.vector_store %arg11[%c0, %c0_0], %0 {strides = array<i32>} : memref<160x128xf32, #tpu.memory_space<vmem>>, vector<160x128xf32>,
    %c0_1 = arith.constant 0 : index
    %c0_2 = arith.constant 0 : index
    %2 = vector.load %arg4[%c0_1, %c0_2] : memref<128x2xbf16, #tpu.memory_space<vmem>>, vector<128x2xbf16>
    %c0_3 = arith.constant 0 : index
    %c0_4 = arith.constant 0 : index
    %3 = vector.load %arg1[%c0_3, %c0_4] : memref<2x32xbf16, #tpu.memory_space<vmem>>, vector<2x32xbf16>
    %cst_5 = arith.constant dense<0.000000e+00> : vector<128x32xf32>
    %4 = tpu.matmul %2, %3, %cst_5 {dimension_numbers = #tpu.dot_dimension_numbers<[1], [0], [0], [1], [0, 0, 1, 1], [], []>} : vector<128x2xbf16>, vector<2x32xbf16>, vector<128x32xf32> -> vector<128x32xf32>
    %5 = arith.truncf %4 : vector<128x32xf32> to vector<128x32xbf16>
    %c0_6 = arith.constant 0 : index
    %c0_7 = arith.constant 0 : index
    %6 = vector.load %arg2[%c0_6, %c0_7] : memref<32x256xbf16, #tpu.memory_space<vmem>>, vector<32x256xbf16>
    %cst_8 = arith.constant dense<0.000000e+00> : vector<128x256xf32>
    %7 = tpu.matmul %5, %6, %cst_8 {dimension_numbers = #tpu.dot_dimension_numbers<[1], [0], [0], [1], [0, 0, 1, 1], [], []>} : vector<128x32xbf16>, vector<32x256xbf16>, vector<128x256xf32> -> vector<128x256xf32>
    %c0_9 = arith.constant 0 : index
    %c0_10 = arith.constant 0 : index
    %8 = vector.load %arg3[%c0_9, %c0_10] : memref<1x256xf32, #tpu.memory_space<vmem>>, vector<1x256xf32>
    %9 = vector.broadcast %8 : vector<1x256xf32> to vector<128x256xf32>
    %10 = arith.addf %7, %9 : vector<128x256xf32>
    %cst_11 = arith.constant 0.000000e+00 : f32
    %11 = vector.broadcast %cst_11 : f32 to vector<128x256xf32>
    %12 = arith.maximumf %10, %11 : vector<128x256xf32>
    %c0_12 = arith.constant 0 : index
    %c0_13 = arith.constant 0 : index
    %13 = vector.load %arg5[%c0_12, %c0_13] : memref<128x256xf32, #tpu.memory_space<vmem>>, vector<128x256xf32>
    %14 = arith.mulf %12, %13 : vector<128x256xf32>
    %15 = arith.truncf %14 : vector<128x256xf32> to vector<128x256xbf16>
    %c0_14 = arith.constant 0 : index
    %c0_15 = arith.constant 0 : index
    %16 = vector.load %arg6[%c0_14, %c0_15] : memref<256x128xbf16, #tpu.memory_space<vmem>>, vector<256x128xbf16>
    %cst_16 = arith.constant dense<0.000000e+00> : vector<128x128xf32>
    %17 = tpu.matmul %15, %16, %cst_16 {dimension_numbers = #tpu.dot_dimension_numbers<[1], [0], [0], [1], [0, 0, 1, 1], [], []>} : vector<128x256xbf16>, vector<256x128xbf16>, vector<128x128xf32> -> vector<128x128xf32>
    %c16 = arith.constant 16 : index
    %c0_17 = arith.constant 0 : index
    %18 = vector.load %arg11[%c16, %c0_17] : memref<160x128xf32, #tpu.memory_space<vmem>>, vector<128x128xf32>
    tpu.vector_store %arg11[%c16, %c0_17], %17 {strides = array<i32>} : memref<160x128xf32, #tpu.memory_space<vmem>>, vector<128x128xf32>,
    %cst_18 = arith.constant 0.000000e+00 : f32
    %19 = vector.broadcast %cst_18 : f32 to vector<128x128xf32>
    %c7 = arith.constant 7 : index
    %c0_19 = arith.constant 0 : index
    %20 = vector.load %arg11[%c7, %c0_19] : memref<160x128xf32, #tpu.memory_space<vmem>>, vector<128x128xf32>
    %21 = arith.truncf %20 : vector<128x128xf32> to vector<128x128xbf16>
    %c0_20 = arith.constant 0 : index
    %c0_21 = arith.constant 0 : index
    %c0_22 = arith.constant 0 : index
    %22 = vector.load %arg7[%c0_20, %c0_21, %c0_22] : memref<45x128x128xbf16, #tpu.memory_space<vmem>>, vector<1x128x128xbf16>
    %23 = vector.shape_cast %22 : vector<1x128x128xbf16> to vector<128x128xbf16>
    %cst_23 = arith.constant dense<0.000000e+00> : vector<128x128xf32>
    %24 = tpu.matmul %21, %23, %cst_23 {dimension_numbers = #tpu.dot_dimension_numbers<[1], [0], [0], [1], [0, 0, 1, 1], [], []>} : vector<128x128xbf16>, vector<128x128xbf16>, vector<128x128xf32> -> vector<128x128xf32>
    %c0_24 = arith.constant 0 : index
    %c0_25 = arith.constant 0 : index
    %c0_26 = arith.constant 0 : index
    %25 = vector.load %arg9[%c0_24, %c0_25, %c0_26] : memref<9x128x128xf32, #tpu.memory_space<vmem>>, vector<1x128x128xf32>
    %26 = vector.shape_cast %25 : vector<1x128x128xf32> to vector<128x128xf32>
    %27 = arith.mulf %26, %24 : vector<128x128xf32>
    %28 = arith.addf %19, %27 : vector<128x128xf32>
    %c8 = arith.constant 8 : index
    %c0_27 = arith.constant 0 : index
    %29 = vector.load %arg11[%c8, %c0_27] : memref<160x128xf32, #tpu.memory_space<vmem>>, vector<128x128xf32>
    %30 = arith.truncf %29 : vector<128x128xf32> to vector<128x128xbf16>
    %c1 = arith.constant 1 : index
    %c0_28 = arith.constant 0 : index
    %c0_29 = arith.constant 0 : index
    %31 = vector.load %arg7[%c1, %c0_28, %c0_29] : memref<45x128x128xbf16, #tpu.memory_space<vmem>>, vector<1x128x128xbf16>
    %32 = vector.shape_cast %31 : vector<1x128x128xbf16> to vector<128x128xbf16>
    %cst_30 = arith.constant dense<0.000000e+00> : vector<128x128xf32>
    %33 = tpu.matmul %30, %32, %cst_30 {dimension_numbers = #tpu.dot_dimension_numbers<[1], [0], [0], [1], [0, 0, 1, 1], [], []>} : vector<128x128xbf16>, vector<128x128xbf16>, vector<128x128xf32> -> vector<128x128xf32>
    %c1_31 = arith.constant 1 : index
    %c0_32 = arith.constant 0 : index
    %c0_33 = arith.constant 0 : index
    %34 = vector.load %arg9[%c1_31, %c0_32, %c0_33] : memref<9x128x128xf32, #tpu.memory_space<vmem>>, vector<1x128x128xf32>
    %35 = vector.shape_cast %34 : vector<1x128x128xf32> to vector<128x128xf32>
    %36 = arith.mulf %35, %33 : vector<128x128xf32>
    %37 = arith.addf %28, %36 : vector<128x128xf32>
    %c9 = arith.constant 9 : index
    %c0_34 = arith.constant 0 : index
    %38 = vector.load %arg11[%c9, %c0_34] : memref<160x128xf32, #tpu.memory_space<vmem>>, vector<128x128xf32>
    %39 = arith.truncf %38 : vector<128x128xf32> to vector<128x128xbf16>
    %c2 = arith.constant 2 : index
    %c0_35 = arith.constant 0 : index
    %c0_36 = arith.constant 0 : index
    %40 = vector.load %arg7[%c2, %c0_35, %c0_36] : memref<45x128x128xbf16, #tpu.memory_space<vmem>>, vector<1x128x128xbf16>
    %41 = vector.shape_cast %40 : vector<1x128x128xbf16> to vector<128x128xbf16>
    %cst_37 = arith.constant dense<0.000000e+00> : vector<128x128xf32>
    %42 = tpu.matmul %39, %41, %cst_37 {dimension_numbers = #tpu.dot_dimension_numbers<[1], [0], [0], [1], [0, 0, 1, 1], [], []>} : vector<128x128xbf16>, vector<128x128xbf16>, vector<128x128xf32> -> vector<128x128xf32>
    %c2_38 = arith.constant 2 : index
    %c0_39 = arith.constant 0 : index
    %c0_40 = arith.constant 0 : index
    %43 = vector.load %arg9[%c2_38, %c0_39, %c0_40] : memref<9x128x128xf32, #tpu.memory_space<vmem>>, vector<1x128x128xf32>
    %44 = vector.shape_cast %43 : vector<1x128x128xf32> to vector<128x128xf32>
    %45 = arith.mulf %44, %42 : vector<128x128xf32>
    %46 = arith.addf %37, %45 : vector<128x128xf32>
    %c15 = arith.constant 15 : index
    %c0_41 = arith.constant 0 : index
    %47 = vector.load %arg11[%c15, %c0_41] : memref<160x128xf32, #tpu.memory_space<vmem>>, vector<128x128xf32>
    %48 = arith.truncf %47 : vector<128x128xf32> to vector<128x128xbf16>
    %c3 = arith.constant 3 : index
    %c0_42 = arith.constant 0 : index
    %c0_43 = arith.constant 0 : index
    %49 = vector.load %arg7[%c3, %c0_42, %c0_43] : memref<45x128x128xbf16, #tpu.memory_space<vmem>>, vector<1x128x128xbf16>
    %50 = vector.shape_cast %49 : vector<1x128x128xbf16> to vector<128x128xbf16>
    %cst_44 = arith.constant dense<0.000000e+00> : vector<128x128xf32>
    %51 = tpu.matmul %48, %50, %cst_44 {dimension_numbers = #tpu.dot_dimension_numbers<[1], [0], [0], [1], [0, 0, 1, 1], [], []>} : vector<128x128xbf16>, vector<128x128xbf16>, vector<128x128xf32> -> vector<128x128xf32>
    %c3_45 = arith.constant 3 : index
    %c0_46 = arith.constant 0 : index
    %c0_47 = arith.constant 0 : index
    %52 = vector.load %arg9[%c3_45, %c0_46, %c0_47] : memref<9x128x128xf32, #tpu.memory_space<vmem>>, vector<1x128x128xf32>
    %53 = vector.shape_cast %52 : vector<1x128x128xf32> to vector<128x128xf32>
    %54 = arith.mulf %53, %51 : vector<128x128xf32>
    %55 = arith.addf %46, %54 : vector<128x128xf32>
    %c16_48 = arith.constant 16 : index
    %c0_49 = arith.constant 0 : index
    %56 = vector.load %arg11[%c16_48, %c0_49] : memref<160x128xf32, #tpu.memory_space<vmem>>, vector<128x128xf32>
    %57 = arith.truncf %56 : vector<128x128xf32> to vector<128x128xbf16>
    %c4 = arith.constant 4 : index
    %c0_50 = arith.constant 0 : index
    %c0_51 = arith.constant 0 : index
    %58 = vector.load %arg7[%c4, %c0_50, %c0_51] : memref<45x128x128xbf16, #tpu.memory_space<vmem>>, vector<1x128x128xbf16>
    %59 = vector.shape_cast %58 : vector<1x128x128xbf16> to vector<128x128xbf16>
    %cst_52 = arith.constant dense<0.000000e+00> : vector<128x128xf32>
    %60 = tpu.matmul %57, %59, %cst_52 {dimension_numbers = #tpu.dot_dimension_numbers<[1], [0], [0], [1], [0, 0, 1, 1], [], []>} : vector<128x128xbf16>, vector<128x128xbf16>, vector<128x128xf32> -> vector<128x128xf32>
    %c4_53 = arith.constant 4 : index
    %c0_54 = arith.constant 0 : index
    %c0_55 = arith.constant 0 : index
    %61 = vector.load %arg9[%c4_53, %c0_54, %c0_55] : memref<9x128x128xf32, #tpu.memory_space<vmem>>, vector<1x128x128xf32>
    %62 = vector.shape_cast %61 : vector<1x128x128xf32> to vector<128x128xf32>
    %63 = arith.mulf %62, %60 : vector<128x128xf32>
    %64 = arith.addf %55, %63 : vector<128x128xf32>
    %c17 = arith.constant 17 : index
    %c0_56 = arith.constant 0 : index
    %65 = vector.load %arg11[%c17, %c0_56] : memref<160x128xf32, #tpu.memory_space<vmem>>, vector<128x128xf32>
    %66 = arith.truncf %65 : vector<128x128xf32> to vector<128x128xbf16>
    %c5 = arith.constant 5 : index
    %c0_57 = arith.constant 0 : index
    %c0_58 = arith.constant 0 : index
    %67 = vector.load %arg7[%c5, %c0_57, %c0_58] : memref<45x128x128xbf16, #tpu.memory_space<vmem>>, vector<1x128x128xbf16>
    %68 = vector.shape_cast %67 : vector<1x128x128xbf16> to vector<128x128xbf16>
    %cst_59 = arith.constant dense<0.000000e+00> : vector<128x128xf32>
    %69 = tpu.matmul %66, %68, %cst_59 {dimension_numbers = #tpu.dot_dimension_numbers<[1], [0], [0], [1], [0, 0, 1, 1], [], []>} : vector<128x128xbf16>, vector<128x128xbf16>, vector<128x128xf32> -> vector<128x128xf32>
    %c5_60 = arith.constant 5 : index
    %c0_61 = arith.constant 0 : index
    %c0_62 = arith.constant 0 : index
    %70 = vector.load %arg9[%c5_60, %c0_61, %c0_62] : memref<9x128x128xf32, #tpu.memory_space<vmem>>, vector<1x128x128xf32>
    %71 = vector.shape_cast %70 : vector<1x128x128xf32> to vector<128x128xf32>
    %72 = arith.mulf %71, %69 : vector<128x128xf32>
    %73 = arith.addf %64, %72 : vector<128x128xf32>
    %c23 = arith.constant 23 : index
    %c0_63 = arith.constant 0 : index
    %74 = vector.load %arg11[%c23, %c0_63] : memref<160x128xf32, #tpu.memory_space<vmem>>, vector<128x128xf32>
    %75 = arith.truncf %74 : vector<128x128xf32> to vector<128x128xbf16>
    %c6 = arith.constant 6 : index
    %c0_64 = arith.constant 0 : index
    %c0_65 = arith.constant 0 : index
    %76 = vector.load %arg7[%c6, %c0_64, %c0_65] : memref<45x128x128xbf16, #tpu.memory_space<vmem>>, vector<1x128x128xbf16>
    %77 = vector.shape_cast %76 : vector<1x128x128xbf16> to vector<128x128xbf16>
    %cst_66 = arith.constant dense<0.000000e+00> : vector<128x128xf32>
    %78 = tpu.matmul %75, %77, %cst_66 {dimension_numbers = #tpu.dot_dimension_numbers<[1], [0], [0], [1], [0, 0, 1, 1], [], []>} : vector<128x128xbf16>, vector<128x128xbf16>, vector<128x128xf32> -> vector<128x128xf32>
    %c6_67 = arith.constant 6 : index
    %c0_68 = arith.constant 0 : index
    %c0_69 = arith.constant 0 : index
    %79 = vector.load %arg9[%c6_67, %c0_68, %c0_69] : memref<9x128x128xf32, #tpu.memory_space<vmem>>, vector<1x128x128xf32>
    %80 = vector.shape_cast %79 : vector<1x128x128xf32> to vector<128x128xf32>
    %81 = arith.mulf %80, %78 : vector<128x128xf32>
    %82 = arith.addf %73, %81 : vector<128x128xf32>
    %c24 = arith.constant 24 : index
    %c0_70 = arith.constant 0 : index
    %83 = vector.load %arg11[%c24, %c0_70] : memref<160x128xf32, #tpu.memory_space<vmem>>, vector<128x128xf32>
    %84 = arith.truncf %83 : vector<128x128xf32> to vector<128x128xbf16>
    %c7_71 = arith.constant 7 : index
    %c0_72 = arith.constant 0 : index
    %c0_73 = arith.constant 0 : index
    %85 = vector.load %arg7[%c7_71, %c0_72, %c0_73] : memref<45x128x128xbf16, #tpu.memory_space<vmem>>, vector<1x128x128xbf16>
    %86 = vector.shape_cast %85 : vector<1x128x128xbf16> to vector<128x128xbf16>
    %cst_74 = arith.constant dense<0.000000e+00> : vector<128x128xf32>
    %87 = tpu.matmul %84, %86, %cst_74 {dimension_numbers = #tpu.dot_dimension_numbers<[1], [0], [0], [1], [0, 0, 1, 1], [], []>} : vector<128x128xbf16>, vector<128x128xbf16>, vector<128x128xf32> -> vector<128x128xf32>
    %c7_75 = arith.constant 7 : index
    %c0_76 = arith.constant 0 : index
    %c0_77 = arith.constant 0 : index
    %88 = vector.load %arg9[%c7_75, %c0_76, %c0_77] : memref<9x128x128xf32, #tpu.memory_space<vmem>>, vector<1x128x128xf32>
    %89 = vector.shape_cast %88 : vector<1x128x128xf32> to vector<128x128xf32>
    %90 = arith.mulf %89, %87 : vector<128x128xf32>
    %91 = arith.addf %82, %90 : vector<128x128xf32>
    %c25 = arith.constant 25 : index
    %c0_78 = arith.constant 0 : index
    %92 = vector.load %arg11[%c25, %c0_78] : memref<160x128xf32, #tpu.memory_space<vmem>>, vector<128x128xf32>
    %93 = arith.truncf %92 : vector<128x128xf32> to vector<128x128xbf16>
    %c8_79 = arith.constant 8 : index
    %c0_80 = arith.constant 0 : index
    %c0_81 = arith.constant 0 : index
    %94 = vector.load %arg7[%c8_79, %c0_80, %c0_81] : memref<45x128x128xbf16, #tpu.memory_space<vmem>>, vector<1x128x128xbf16>
    %95 = vector.shape_cast %94 : vector<1x128x128xbf16> to vector<128x128xbf16>
    %cst_82 = arith.constant dense<0.000000e+00> : vector<128x128xf32>
    %96 = tpu.matmul %93, %95, %cst_82 {dimension_numbers = #tpu.dot_dimension_numbers<[1], [0], [0], [1], [0, 0, 1, 1], [], []>} : vector<128x128xbf16>, vector<128x128xbf16>, vector<128x128xf32> -> vector<128x128xf32>
    %c8_83 = arith.constant 8 : index
    %c0_84 = arith.constant 0 : index
    %c0_85 = arith.constant 0 : index
    %97 = vector.load %arg9[%c8_83, %c0_84, %c0_85] : memref<9x128x128xf32, #tpu.memory_space<vmem>>, vector<1x128x128xf32>
    %98 = vector.shape_cast %97 : vector<1x128x128xf32> to vector<128x128xf32>
    %99 = arith.mulf %98, %96 : vector<128x128xf32>
    %100 = arith.addf %91, %99 : vector<128x128xf32>
    %c0_86 = arith.constant 0 : index
    %c0_87 = arith.constant 0 : index
    %c0_88 = arith.constant 0 : index
    %101 = vector.load %arg8[%c0_86, %c0_87, %c0_88] : memref<5x1x128xf32, #tpu.memory_space<vmem>>, vector<1x1x128xf32>
    %102 = vector.shape_cast %101 : vector<1x1x128xf32> to vector<1x128xf32>
    %103 = vector.broadcast %102 : vector<1x128xf32> to vector<128x128xf32>
    %104 = arith.addf %100, %103 : vector<128x128xf32>
    %cst_89 = arith.constant 0.000000e+00 : f32
    %105 = vector.broadcast %cst_89 : f32 to vector<128x128xf32>
    %106 = arith.maximumf %104, %105 : vector<128x128xf32>
    %c16_90 = arith.constant 16 : index
    %c0_91 = arith.constant 0 : index
    %107 = vector.load %arg11[%c16_90, %c0_91] : memref<160x128xf32, #tpu.memory_space<vmem>>, vector<128x128xf32>
    tpu.vector_store %arg11[%c16_90, %c0_91], %106 {strides = array<i32>} : memref<160x128xf32, #tpu.memory_space<vmem>>, vector<128x128xf32>,
    %cst_92 = arith.constant 0.000000e+00 : f32
    %108 = vector.broadcast %cst_92 : f32 to vector<128x128xf32>
    %c7_93 = arith.constant 7 : index
    %c0_94 = arith.constant 0 : index
    %109 = vector.load %arg11[%c7_93, %c0_94] : memref<160x128xf32, #tpu.memory_space<vmem>>, vector<128x128xf32>
    %110 = arith.truncf %109 : vector<128x128xf32> to vector<128x128xbf16>
    %c9_95 = arith.constant 9 : index
    %c0_96 = arith.constant 0 : index
    %c0_97 = arith.constant 0 : index
    %111 = vector.load %arg7[%c9_95, %c0_96, %c0_97] : memref<45x128x128xbf16, #tpu.memory_space<vmem>>, vector<1x128x128xbf16>
    %112 = vector.shape_cast %111 : vector<1x128x128xbf16> to vector<128x128xbf16>
    %cst_98 = arith.constant dense<0.000000e+00> : vector<128x128xf32>
    %113 = tpu.matmul %110, %112, %cst_98 {dimension_numbers = #tpu.dot_dimension_numbers<[1], [0], [0], [1], [0, 0, 1, 1], [], []>} : vector<128x128xbf16>, vector<128x128xbf16>, vector<128x128xf32> -> vector<128x128xf32>
    %c0_99 = arith.constant 0 : index
    %c0_100 = arith.constant 0 : index
    %c0_101 = arith.constant 0 : index
    %114 = vector.load %arg9[%c0_99, %c0_100, %c0_101] : memref<9x128x128xf32, #tpu.memory_space<vmem>>, vector<1x128x128xf32>
    %115 = vector.shape_cast %114 : vector<1x128x128xf32> to vector<128x128xf32>
    %116 = arith.mulf %115, %113 : vector<128x128xf32>
    %117 = arith.addf %108, %116 : vector<128x128xf32>
    %c8_102 = arith.constant 8 : index
    %c0_103 = arith.constant 0 : index
    %118 = vector.load %arg11[%c8_102, %c0_103] : memref<160x128xf32, #tpu.memory_space<vmem>>, vector<128x128xf32>
    %119 = arith.truncf %118 : vector<128x128xf32> to vector<128x128xbf16>
    %c10 = arith.constant 10 : index
    %c0_104 = arith.constant 0 : index
    %c0_105 = arith.constant 0 : index
    %120 = vector.load %arg7[%c10, %c0_104, %c0_105] : memref<45x128x128xbf16, #tpu.memory_space<vmem>>, vector<1x128x128xbf16>
    %121 = vector.shape_cast %120 : vector<1x128x128xbf16> to vector<128x128xbf16>
    %cst_106 = arith.constant dense<0.000000e+00> : vector<128x128xf32>
    %122 = tpu.matmul %119, %121, %cst_106 {dimension_numbers = #tpu.dot_dimension_numbers<[1], [0], [0], [1], [0, 0, 1, 1], [], []>} : vector<128x128xbf16>, vector<128x128xbf16>, vector<128x128xf32> -> vector<128x128xf32>
    %c1_107 = arith.constant 1 : index
    %c0_108 = arith.constant 0 : index
    %c0_109 = arith.constant 0 : index
    %123 = vector.load %arg9[%c1_107, %c0_108, %c0_109] : memref<9x128x128xf32, #tpu.memory_space<vmem>>, vector<1x128x128xf32>
    %124 = vector.shape_cast %123 : vector<1x128x128xf32> to vector<128x128xf32>
    %125 = arith.mulf %124, %122 : vector<128x128xf32>
    %126 = arith.addf %117, %125 : vector<128x128xf32>
    %c9_110 = arith.constant 9 : index
    %c0_111 = arith.constant 0 : index
    %127 = vector.load %arg11[%c9_110, %c0_111] : memref<160x128xf32, #tpu.memory_space<vmem>>, vector<128x128xf32>
    %128 = arith.truncf %127 : vector<128x128xf32> to vector<128x128xbf16>
    %c11 = arith.constant 11 : index
    %c0_112 = arith.constant 0 : index
    %c0_113 = arith.constant 0 : index
    %129 = vector.load %arg7[%c11, %c0_112, %c0_113] : memref<45x128x128xbf16, #tpu.memory_space<vmem>>, vector<1x128x128xbf16>
    %130 = vector.shape_cast %129 : vector<1x128x128xbf16> to vector<128x128xbf16>
    %cst_114 = arith.constant dense<0.000000e+00> : vector<128x128xf32>
    %131 = tpu.matmul %128, %130, %cst_114 {dimension_numbers = #tpu.dot_dimension_numbers<[1], [0], [0], [1], [0, 0, 1, 1], [], []>} : vector<128x128xbf16>, vector<128x128xbf16>, vector<128x128xf32> -> vector<128x128xf32>
    %c2_115 = arith.constant 2 : index
    %c0_116 = arith.constant 0 : index
    %c0_117 = arith.constant 0 : index
    %132 = vector.load %arg9[%c2_115, %c0_116, %c0_117] : memref<9x128x128xf32, #tpu.memory_space<vmem>>, vector<1x128x128xf32>
    %133 = vector.shape_cast %132 : vector<1x128x128xf32> to vector<128x128xf32>
    %134 = arith.mulf %133, %131 : vector<128x128xf32>
    %135 = arith.addf %126, %134 : vector<128x128xf32>
    %c15_118 = arith.constant 15 : index
    %c0_119 = arith.constant 0 : index
    %136 = vector.load %arg11[%c15_118, %c0_119] : memref<160x128xf32, #tpu.memory_space<vmem>>, vector<128x128xf32>
    %137 = arith.truncf %136 : vector<128x128xf32> to vector<128x128xbf16>
    %c12 = arith.constant 12 : index
    %c0_120 = arith.constant 0 : index
    %c0_121 = arith.constant 0 : index
    %138 = vector.load %arg7[%c12, %c0_120, %c0_121] : memref<45x128x128xbf16, #tpu.memory_space<vmem>>, vector<1x128x128xbf16>
    %139 = vector.shape_cast %138 : vector<1x128x128xbf16> to vector<128x128xbf16>
    %cst_122 = arith.constant dense<0.000000e+00> : vector<128x128xf32>
    %140 = tpu.matmul %137, %139, %cst_122 {dimension_numbers = #tpu.dot_dimension_numbers<[1], [0], [0], [1], [0, 0, 1, 1], [], []>} : vector<128x128xbf16>, vector<128x128xbf16>, vector<128x128xf32> -> vector<128x128xf32>
    %c3_123 = arith.constant 3 : index
    %c0_124 = arith.constant 0 : index
    %c0_125 = arith.constant 0 : index
    %141 = vector.load %arg9[%c3_123, %c0_124, %c0_125] : memref<9x128x128xf32, #tpu.memory_space<vmem>>, vector<1x128x128xf32>
    %142 = vector.shape_cast %141 : vector<1x128x128xf32> to vector<128x128xf32>
    %143 = arith.mulf %142, %140 : vector<128x128xf32>
    %144 = arith.addf %135, %143 : vector<128x128xf32>
    %c16_126 = arith.constant 16 : index
    %c0_127 = arith.constant 0 : index
    %145 = vector.load %arg11[%c16_126, %c0_127] : memref<160x128xf32, #tpu.memory_space<vmem>>, vector<128x128xf32>
    %146 = arith.truncf %145 : vector<128x128xf32> to vector<128x128xbf16>
    %c13 = arith.constant 13 : index
    %c0_128 = arith.constant 0 : index
    %c0_129 = arith.constant 0 : index
    %147 = vector.load %arg7[%c13, %c0_128, %c0_129] : memref<45x128x128xbf16, #tpu.memory_space<vmem>>, vector<1x128x128xbf16>
    %148 = vector.shape_cast %147 : vector<1x128x128xbf16> to vector<128x128xbf16>
    %cst_130 = arith.constant dense<0.000000e+00> : vector<128x128xf32>
    %149 = tpu.matmul %146, %148, %cst_130 {dimension_numbers = #tpu.dot_dimension_numbers<[1], [0], [0], [1], [0, 0, 1, 1], [], []>} : vector<128x128xbf16>, vector<128x128xbf16>, vector<128x128xf32> -> vector<128x128xf32>
    %c4_131 = arith.constant 4 : index
    %c0_132 = arith.constant 0 : index
    %c0_133 = arith.constant 0 : index
    %150 = vector.load %arg9[%c4_131, %c0_132, %c0_133] : memref<9x128x128xf32, #tpu.memory_space<vmem>>, vector<1x128x128xf32>
    %151 = vector.shape_cast %150 : vector<1x128x128xf32> to vector<128x128xf32>
    %152 = arith.mulf %151, %149 : vector<128x128xf32>
    %153 = arith.addf %144, %152 : vector<128x128xf32>
    %c17_134 = arith.constant 17 : index
    %c0_135 = arith.constant 0 : index
    %154 = vector.load %arg11[%c17_134, %c0_135] : memref<160x128xf32, #tpu.memory_space<vmem>>, vector<128x128xf32>
    %155 = arith.truncf %154 : vector<128x128xf32> to vector<128x128xbf16>
    %c14 = arith.constant 14 : index
    %c0_136 = arith.constant 0 : index
    %c0_137 = arith.constant 0 : index
    %156 = vector.load %arg7[%c14, %c0_136, %c0_137] : memref<45x128x128xbf16, #tpu.memory_space<vmem>>, vector<1x128x128xbf16>
    %157 = vector.shape_cast %156 : vector<1x128x128xbf16> to vector<128x128xbf16>
    %cst_138 = arith.constant dense<0.000000e+00> : vector<128x128xf32>
    %158 = tpu.matmul %155, %157, %cst_138 {dimension_numbers = #tpu.dot_dimension_numbers<[1], [0], [0], [1], [0, 0, 1, 1], [], []>} : vector<128x128xbf16>, vector<128x128xbf16>, vector<128x128xf32> -> vector<128x128xf32>
    %c5_139 = arith.constant 5 : index
    %c0_140 = arith.constant 0 : index
    %c0_141 = arith.constant 0 : index
    %159 = vector.load %arg9[%c5_139, %c0_140, %c0_141] : memref<9x128x128xf32, #tpu.memory_space<vmem>>, vector<1x128x128xf32>
    %160 = vector.shape_cast %159 : vector<1x128x128xf32> to vector<128x128xf32>
    %161 = arith.mulf %160, %158 : vector<128x128xf32>
    %162 = arith.addf %153, %161 : vector<128x128xf32>
    %c23_142 = arith.constant 23 : index
    %c0_143 = arith.constant 0 : index
    %163 = vector.load %arg11[%c23_142, %c0_143] : memref<160x128xf32, #tpu.memory_space<vmem>>, vector<128x128xf32>
    %164 = arith.truncf %163 : vector<128x128xf32> to vector<128x128xbf16>
    %c15_144 = arith.constant 15 : index
    %c0_145 = arith.constant 0 : index
    %c0_146 = arith.constant 0 : index
    %165 = vector.load %arg7[%c15_144, %c0_145, %c0_146] : memref<45x128x128xbf16, #tpu.memory_space<vmem>>, vector<1x128x128xbf16>
    %166 = vector.shape_cast %165 : vector<1x128x128xbf16> to vector<128x128xbf16>
    %cst_147 = arith.constant dense<0.000000e+00> : vector<128x128xf32>
    %167 = tpu.matmul %164, %166, %cst_147 {dimension_numbers = #tpu.dot_dimension_numbers<[1], [0], [0], [1], [0, 0, 1, 1], [], []>} : vector<128x128xbf16>, vector<128x128xbf16>, vector<128x128xf32> -> vector<128x128xf32>
    %c6_148 = arith.constant 6 : index
    %c0_149 = arith.constant 0 : index
    %c0_150 = arith.constant 0 : index
    %168 = vector.load %arg9[%c6_148, %c0_149, %c0_150] : memref<9x128x128xf32, #tpu.memory_space<vmem>>, vector<1x128x128xf32>
    %169 = vector.shape_cast %168 : vector<1x128x128xf32> to vector<128x128xf32>
    %170 = arith.mulf %169, %167 : vector<128x128xf32>
    %171 = arith.addf %162, %170 : vector<128x128xf32>
    %c24_151 = arith.constant 24 : index
    %c0_152 = arith.constant 0 : index
    %172 = vector.load %arg11[%c24_151, %c0_152] : memref<160x128xf32, #tpu.memory_space<vmem>>, vector<128x128xf32>
    %173 = arith.truncf %172 : vector<128x128xf32> to vector<128x128xbf16>
    %c16_153 = arith.constant 16 : index
    %c0_154 = arith.constant 0 : index
    %c0_155 = arith.constant 0 : index
    %174 = vector.load %arg7[%c16_153, %c0_154, %c0_155] : memref<45x128x128xbf16, #tpu.memory_space<vmem>>, vector<1x128x128xbf16>
    %175 = vector.shape_cast %174 : vector<1x128x128xbf16> to vector<128x128xbf16>
    %cst_156 = arith.constant dense<0.000000e+00> : vector<128x128xf32>
    %176 = tpu.matmul %173, %175, %cst_156 {dimension_numbers = #tpu.dot_dimension_numbers<[1], [0], [0], [1], [0, 0, 1, 1], [], []>} : vector<128x128xbf16>, vector<128x128xbf16>, vector<128x128xf32> -> vector<128x128xf32>
    %c7_157 = arith.constant 7 : index
    %c0_158 = arith.constant 0 : index
    %c0_159 = arith.constant 0 : index
    %177 = vector.load %arg9[%c7_157, %c0_158, %c0_159] : memref<9x128x128xf32, #tpu.memory_space<vmem>>, vector<1x128x128xf32>
    %178 = vector.shape_cast %177 : vector<1x128x128xf32> to vector<128x128xf32>
    %179 = arith.mulf %178, %176 : vector<128x128xf32>
    %180 = arith.addf %171, %179 : vector<128x128xf32>
    %c25_160 = arith.constant 25 : index
    %c0_161 = arith.constant 0 : index
    %181 = vector.load %arg11[%c25_160, %c0_161] : memref<160x128xf32, #tpu.memory_space<vmem>>, vector<128x128xf32>
    %182 = arith.truncf %181 : vector<128x128xf32> to vector<128x128xbf16>
    %c17_162 = arith.constant 17 : index
    %c0_163 = arith.constant 0 : index
    %c0_164 = arith.constant 0 : index
    %183 = vector.load %arg7[%c17_162, %c0_163, %c0_164] : memref<45x128x128xbf16, #tpu.memory_space<vmem>>, vector<1x128x128xbf16>
    %184 = vector.shape_cast %183 : vector<1x128x128xbf16> to vector<128x128xbf16>
    %cst_165 = arith.constant dense<0.000000e+00> : vector<128x128xf32>
    %185 = tpu.matmul %182, %184, %cst_165 {dimension_numbers = #tpu.dot_dimension_numbers<[1], [0], [0], [1], [0, 0, 1, 1], [], []>} : vector<128x128xbf16>, vector<128x128xbf16>, vector<128x128xf32> -> vector<128x128xf32>
    %c8_166 = arith.constant 8 : index
    %c0_167 = arith.constant 0 : index
    %c0_168 = arith.constant 0 : index
    %186 = vector.load %arg9[%c8_166, %c0_167, %c0_168] : memref<9x128x128xf32, #tpu.memory_space<vmem>>, vector<1x128x128xf32>
    %187 = vector.shape_cast %186 : vector<1x128x128xf32> to vector<128x128xf32>
    %188 = arith.mulf %187, %185 : vector<128x128xf32>
    %189 = arith.addf %180, %188 : vector<128x128xf32>
    %c1_169 = arith.constant 1 : index
    %c0_170 = arith.constant 0 : index
    %c0_171 = arith.constant 0 : index
    %190 = vector.load %arg8[%c1_169, %c0_170, %c0_171] : memref<5x1x128xf32, #tpu.memory_space<vmem>>, vector<1x1x128xf32>
    %191 = vector.shape_cast %190 : vector<1x1x128xf32> to vector<1x128xf32>
    %192 = vector.broadcast %191 : vector<1x128xf32> to vector<128x128xf32>
    %193 = arith.addf %189, %192 : vector<128x128xf32>
    %cst_172 = arith.constant 0.000000e+00 : f32
    %194 = vector.broadcast %cst_172 : f32 to vector<128x128xf32>
    %195 = arith.maximumf %193, %194 : vector<128x128xf32>
    %c16_173 = arith.constant 16 : index
    %c0_174 = arith.constant 0 : index
    %196 = vector.load %arg11[%c16_173, %c0_174] : memref<160x128xf32, #tpu.memory_space<vmem>>, vector<128x128xf32>
    tpu.vector_store %arg11[%c16_173, %c0_174], %195 {strides = array<i32>} : memref<160x128xf32, #tpu.memory_space<vmem>>, vector<128x128xf32>,
    %cst_175 = arith.constant 0.000000e+00 : f32
    %197 = vector.broadcast %cst_175 : f32 to vector<128x128xf32>
    %c7_176 = arith.constant 7 : index
    %c0_177 = arith.constant 0 : index
    %198 = vector.load %arg11[%c7_176, %c0_177] : memref<160x128xf32, #tpu.memory_space<vmem>>, vector<128x128xf32>
    %199 = arith.truncf %198 : vector<128x128xf32> to vector<128x128xbf16>
    %c18 = arith.constant 18 : index
    %c0_178 = arith.constant 0 : index
    %c0_179 = arith.constant 0 : index
    %200 = vector.load %arg7[%c18, %c0_178, %c0_179] : memref<45x128x128xbf16, #tpu.memory_space<vmem>>, vector<1x128x128xbf16>
    %201 = vector.shape_cast %200 : vector<1x128x128xbf16> to vector<128x128xbf16>
    %cst_180 = arith.constant dense<0.000000e+00> : vector<128x128xf32>
    %202 = tpu.matmul %199, %201, %cst_180 {dimension_numbers = #tpu.dot_dimension_numbers<[1], [0], [0], [1], [0, 0, 1, 1], [], []>} : vector<128x128xbf16>, vector<128x128xbf16>, vector<128x128xf32> -> vector<128x128xf32>
    %c0_181 = arith.constant 0 : index
    %c0_182 = arith.constant 0 : index
    %c0_183 = arith.constant 0 : index
    %203 = vector.load %arg9[%c0_181, %c0_182, %c0_183] : memref<9x128x128xf32, #tpu.memory_space<vmem>>, vector<1x128x128xf32>
    %204 = vector.shape_cast %203 : vector<1x128x128xf32> to vector<128x128xf32>
    %205 = arith.mulf %204, %202 : vector<128x128xf32>
    %206 = arith.addf %197, %205 : vector<128x128xf32>
    %c8_184 = arith.constant 8 : index
    %c0_185 = arith.constant 0 : index
    %207 = vector.load %arg11[%c8_184, %c0_185] : memref<160x128xf32, #tpu.memory_space<vmem>>, vector<128x128xf32>
    %208 = arith.truncf %207 : vector<128x128xf32> to vector<128x128xbf16>
    %c19 = arith.constant 19 : index
    %c0_186 = arith.constant 0 : index
    %c0_187 = arith.constant 0 : index
    %209 = vector.load %arg7[%c19, %c0_186, %c0_187] : memref<45x128x128xbf16, #tpu.memory_space<vmem>>, vector<1x128x128xbf16>
    %210 = vector.shape_cast %209 : vector<1x128x128xbf16> to vector<128x128xbf16>
    %cst_188 = arith.constant dense<0.000000e+00> : vector<128x128xf32>
    %211 = tpu.matmul %208, %210, %cst_188 {dimension_numbers = #tpu.dot_dimension_numbers<[1], [0], [0], [1], [0, 0, 1, 1], [], []>} : vector<128x128xbf16>, vector<128x128xbf16>, vector<128x128xf32> -> vector<128x128xf32>
    %c1_189 = arith.constant 1 : index
    %c0_190 = arith.constant 0 : index
    %c0_191 = arith.constant 0 : index
    %212 = vector.load %arg9[%c1_189, %c0_190, %c0_191] : memref<9x128x128xf32, #tpu.memory_space<vmem>>, vector<1x128x128xf32>
    %213 = vector.shape_cast %212 : vector<1x128x128xf32> to vector<128x128xf32>
    %214 = arith.mulf %213, %211 : vector<128x128xf32>
    %215 = arith.addf %206, %214 : vector<128x128xf32>
    %c9_192 = arith.constant 9 : index
    %c0_193 = arith.constant 0 : index
    %216 = vector.load %arg11[%c9_192, %c0_193] : memref<160x128xf32, #tpu.memory_space<vmem>>, vector<128x128xf32>
    %217 = arith.truncf %216 : vector<128x128xf32> to vector<128x128xbf16>
    %c20 = arith.constant 20 : index
    %c0_194 = arith.constant 0 : index
    %c0_195 = arith.constant 0 : index
    %218 = vector.load %arg7[%c20, %c0_194, %c0_195] : memref<45x128x128xbf16, #tpu.memory_space<vmem>>, vector<1x128x128xbf16>
    %219 = vector.shape_cast %218 : vector<1x128x128xbf16> to vector<128x128xbf16>
    %cst_196 = arith.constant dense<0.000000e+00> : vector<128x128xf32>
    %220 = tpu.matmul %217, %219, %cst_196 {dimension_numbers = #tpu.dot_dimension_numbers<[1], [0], [0], [1], [0, 0, 1, 1], [], []>} : vector<128x128xbf16>, vector<128x128xbf16>, vector<128x128xf32> -> vector<128x128xf32>
    %c2_197 = arith.constant 2 : index
    %c0_198 = arith.constant 0 : index
    %c0_199 = arith.constant 0 : index
    %221 = vector.load %arg9[%c2_197, %c0_198, %c0_199] : memref<9x128x128xf32, #tpu.memory_space<vmem>>, vector<1x128x128xf32>
    %222 = vector.shape_cast %221 : vector<1x128x128xf32> to vector<128x128xf32>
    %223 = arith.mulf %222, %220 : vector<128x128xf32>
    %224 = arith.addf %215, %223 : vector<128x128xf32>
    %c15_200 = arith.constant 15 : index
    %c0_201 = arith.constant 0 : index
    %225 = vector.load %arg11[%c15_200, %c0_201] : memref<160x128xf32, #tpu.memory_space<vmem>>, vector<128x128xf32>
    %226 = arith.truncf %225 : vector<128x128xf32> to vector<128x128xbf16>
    %c21 = arith.constant 21 : index
    %c0_202 = arith.constant 0 : index
    %c0_203 = arith.constant 0 : index
    %227 = vector.load %arg7[%c21, %c0_202, %c0_203] : memref<45x128x128xbf16, #tpu.memory_space<vmem>>, vector<1x128x128xbf16>
    %228 = vector.shape_cast %227 : vector<1x128x128xbf16> to vector<128x128xbf16>
    %cst_204 = arith.constant dense<0.000000e+00> : vector<128x128xf32>
    %229 = tpu.matmul %226, %228, %cst_204 {dimension_numbers = #tpu.dot_dimension_numbers<[1], [0], [0], [1], [0, 0, 1, 1], [], []>} : vector<128x128xbf16>, vector<128x128xbf16>, vector<128x128xf32> -> vector<128x128xf32>
    %c3_205 = arith.constant 3 : index
    %c0_206 = arith.constant 0 : index
    %c0_207 = arith.constant 0 : index
    %230 = vector.load %arg9[%c3_205, %c0_206, %c0_207] : memref<9x128x128xf32, #tpu.memory_space<vmem>>, vector<1x128x128xf32>
    %231 = vector.shape_cast %230 : vector<1x128x128xf32> to vector<128x128xf32>
    %232 = arith.mulf %231, %229 : vector<128x128xf32>
    %233 = arith.addf %224, %232 : vector<128x128xf32>
    %c16_208 = arith.constant 16 : index
    %c0_209 = arith.constant 0 : index
    %234 = vector.load %arg11[%c16_208, %c0_209] : memref<160x128xf32, #tpu.memory_space<vmem>>, vector<128x128xf32>
    %235 = arith.truncf %234 : vector<128x128xf32> to vector<128x128xbf16>
    %c22 = arith.constant 22 : index
    %c0_210 = arith.constant 0 : index
    %c0_211 = arith.constant 0 : index
    %236 = vector.load %arg7[%c22, %c0_210, %c0_211] : memref<45x128x128xbf16, #tpu.memory_space<vmem>>, vector<1x128x128xbf16>
    %237 = vector.shape_cast %236 : vector<1x128x128xbf16> to vector<128x128xbf16>
    %cst_212 = arith.constant dense<0.000000e+00> : vector<128x128xf32>
    %238 = tpu.matmul %235, %237, %cst_212 {dimension_numbers = #tpu.dot_dimension_numbers<[1], [0], [0], [1], [0, 0, 1, 1], [], []>} : vector<128x128xbf16>, vector<128x128xbf16>, vector<128x128xf32> -> vector<128x128xf32>
    %c4_213 = arith.constant 4 : index
    %c0_214 = arith.constant 0 : index
    %c0_215 = arith.constant 0 : index
    %239 = vector.load %arg9[%c4_213, %c0_214, %c0_215] : memref<9x128x128xf32, #tpu.memory_space<vmem>>, vector<1x128x128xf32>
    %240 = vector.shape_cast %239 : vector<1x128x128xf32> to vector<128x128xf32>
    %241 = arith.mulf %240, %238 : vector<128x128xf32>
    %242 = arith.addf %233, %241 : vector<128x128xf32>
    %c17_216 = arith.constant 17 : index
    %c0_217 = arith.constant 0 : index
    %243 = vector.load %arg11[%c17_216, %c0_217] : memref<160x128xf32, #tpu.memory_space<vmem>>, vector<128x128xf32>
    %244 = arith.truncf %243 : vector<128x128xf32> to vector<128x128xbf16>
    %c23_218 = arith.constant 23 : index
    %c0_219 = arith.constant 0 : index
    %c0_220 = arith.constant 0 : index
    %245 = vector.load %arg7[%c23_218, %c0_219, %c0_220] : memref<45x128x128xbf16, #tpu.memory_space<vmem>>, vector<1x128x128xbf16>
    %246 = vector.shape_cast %245 : vector<1x128x128xbf16> to vector<128x128xbf16>
    %cst_221 = arith.constant dense<0.000000e+00> : vector<128x128xf32>
    %247 = tpu.matmul %244, %246, %cst_221 {dimension_numbers = #tpu.dot_dimension_numbers<[1], [0], [0], [1], [0, 0, 1, 1], [], []>} : vector<128x128xbf16>, vector<128x128xbf16>, vector<128x128xf32> -> vector<128x128xf32>
    %c5_222 = arith.constant 5 : index
    %c0_223 = arith.constant 0 : index
    %c0_224 = arith.constant 0 : index
    %248 = vector.load %arg9[%c5_222, %c0_223, %c0_224] : memref<9x128x128xf32, #tpu.memory_space<vmem>>, vector<1x128x128xf32>
    %249 = vector.shape_cast %248 : vector<1x128x128xf32> to vector<128x128xf32>
    %250 = arith.mulf %249, %247 : vector<128x128xf32>
    %251 = arith.addf %242, %250 : vector<128x128xf32>
    %c23_225 = arith.constant 23 : index
    %c0_226 = arith.constant 0 : index
    %252 = vector.load %arg11[%c23_225, %c0_226] : memref<160x128xf32, #tpu.memory_space<vmem>>, vector<128x128xf32>
    %253 = arith.truncf %252 : vector<128x128xf32> to vector<128x128xbf16>
    %c24_227 = arith.constant 24 : index
    %c0_228 = arith.constant 0 : index
    %c0_229 = arith.constant 0 : index
    %254 = vector.load %arg7[%c24_227, %c0_228, %c0_229] : memref<45x128x128xbf16, #tpu.memory_space<vmem>>, vector<1x128x128xbf16>
    %255 = vector.shape_cast %254 : vector<1x128x128xbf16> to vector<128x128xbf16>
    %cst_230 = arith.constant dense<0.000000e+00> : vector<128x128xf32>
    %256 = tpu.matmul %253, %255, %cst_230 {dimension_numbers = #tpu.dot_dimension_numbers<[1], [0], [0], [1], [0, 0, 1, 1], [], []>} : vector<128x128xbf16>, vector<128x128xbf16>, vector<128x128xf32> -> vector<128x128xf32>
    %c6_231 = arith.constant 6 : index
    %c0_232 = arith.constant 0 : index
    %c0_233 = arith.constant 0 : index
    %257 = vector.load %arg9[%c6_231, %c0_232, %c0_233] : memref<9x128x128xf32, #tpu.memory_space<vmem>>, vector<1x128x128xf32>
    %258 = vector.shape_cast %257 : vector<1x128x128xf32> to vector<128x128xf32>
    %259 = arith.mulf %258, %256 : vector<128x128xf32>
    %260 = arith.addf %251, %259 : vector<128x128xf32>
    %c24_234 = arith.constant 24 : index
    %c0_235 = arith.constant 0 : index
    %261 = vector.load %arg11[%c24_234, %c0_235] : memref<160x128xf32, #tpu.memory_space<vmem>>, vector<128x128xf32>
    %262 = arith.truncf %261 : vector<128x128xf32> to vector<128x128xbf16>
    %c25_236 = arith.constant 25 : index
    %c0_237 = arith.constant 0 : index
    %c0_238 = arith.constant 0 : index
    %263 = vector.load %arg7[%c25_236, %c0_237, %c0_238] : memref<45x128x128xbf16, #tpu.memory_space<vmem>>, vector<1x128x128xbf16>
    %264 = vector.shape_cast %263 : vector<1x128x128xbf16> to vector<128x128xbf16>
    %cst_239 = arith.constant dense<0.000000e+00> : vector<128x128xf32>
    %265 = tpu.matmul %262, %264, %cst_239 {dimension_numbers = #tpu.dot_dimension_numbers<[1], [0], [0], [1], [0, 0, 1, 1], [], []>} : vector<128x128xbf16>, vector<128x128xbf16>, vector<128x128xf32> -> vector<128x128xf32>
    %c7_240 = arith.constant 7 : index
    %c0_241 = arith.constant 0 : index
    %c0_242 = arith.constant 0 : index
    %266 = vector.load %arg9[%c7_240, %c0_241, %c0_242] : memref<9x128x128xf32, #tpu.memory_space<vmem>>, vector<1x128x128xf32>
    %267 = vector.shape_cast %266 : vector<1x128x128xf32> to vector<128x128xf32>
    %268 = arith.mulf %267, %265 : vector<128x128xf32>
    %269 = arith.addf %260, %268 : vector<128x128xf32>
    %c25_243 = arith.constant 25 : index
    %c0_244 = arith.constant 0 : index
    %270 = vector.load %arg11[%c25_243, %c0_244] : memref<160x128xf32, #tpu.memory_space<vmem>>, vector<128x128xf32>
    %271 = arith.truncf %270 : vector<128x128xf32> to vector<128x128xbf16>
    %c26 = arith.constant 26 : index
    %c0_245 = arith.constant 0 : index
    %c0_246 = arith.constant 0 : index
    %272 = vector.load %arg7[%c26, %c0_245, %c0_246] : memref<45x128x128xbf16, #tpu.memory_space<vmem>>, vector<1x128x128xbf16>
    %273 = vector.shape_cast %272 : vector<1x128x128xbf16> to vector<128x128xbf16>
    %cst_247 = arith.constant dense<0.000000e+00> : vector<128x128xf32>
    %274 = tpu.matmul %271, %273, %cst_247 {dimension_numbers = #tpu.dot_dimension_numbers<[1], [0], [0], [1], [0, 0, 1, 1], [], []>} : vector<128x128xbf16>, vector<128x128xbf16>, vector<128x128xf32> -> vector<128x128xf32>
    %c8_248 = arith.constant 8 : index
    %c0_249 = arith.constant 0 : index
    %c0_250 = arith.constant 0 : index
    %275 = vector.load %arg9[%c8_248, %c0_249, %c0_250] : memref<9x128x128xf32, #tpu.memory_space<vmem>>, vector<1x128x128xf32>
    %276 = vector.shape_cast %275 : vector<1x128x128xf32> to vector<128x128xf32>
    %277 = arith.mulf %276, %274 : vector<128x128xf32>
    %278 = arith.addf %269, %277 : vector<128x128xf32>
    %c2_251 = arith.constant 2 : index
    %c0_252 = arith.constant 0 : index
    %c0_253 = arith.constant 0 : index
    %279 = vector.load %arg8[%c2_251, %c0_252, %c0_253] : memref<5x1x128xf32, #tpu.memory_space<vmem>>, vector<1x1x128xf32>
    %280 = vector.shape_cast %279 : vector<1x1x128xf32> to vector<1x128xf32>
    %281 = vector.broadcast %280 : vector<1x128xf32> to vector<128x128xf32>
    %282 = arith.addf %278, %281 : vector<128x128xf32>
    %cst_254 = arith.constant 0.000000e+00 : f32
    %283 = vector.broadcast %cst_254 : f32 to vector<128x128xf32>
    %284 = arith.maximumf %282, %283 : vector<128x128xf32>
    %c16_255 = arith.constant 16 : index
    %c0_256 = arith.constant 0 : index
    %285 = vector.load %arg11[%c16_255, %c0_256] : memref<160x128xf32, #tpu.memory_space<vmem>>, vector<128x128xf32>
    tpu.vector_store %arg11[%c16_255, %c0_256], %284 {strides = array<i32>} : memref<160x128xf32, #tpu.memory_space<vmem>>, vector<128x128xf32>,
    %cst_257 = arith.constant 0.000000e+00 : f32
    %286 = vector.broadcast %cst_257 : f32 to vector<128x128xf32>
    %c7_258 = arith.constant 7 : index
    %c0_259 = arith.constant 0 : index
    %287 = vector.load %arg11[%c7_258, %c0_259] : memref<160x128xf32, #tpu.memory_space<vmem>>, vector<128x128xf32>
    %288 = arith.truncf %287 : vector<128x128xf32> to vector<128x128xbf16>
    %c27 = arith.constant 27 : index
    %c0_260 = arith.constant 0 : index
    %c0_261 = arith.constant 0 : index
    %289 = vector.load %arg7[%c27, %c0_260, %c0_261] : memref<45x128x128xbf16, #tpu.memory_space<vmem>>, vector<1x128x128xbf16>
    %290 = vector.shape_cast %289 : vector<1x128x128xbf16> to vector<128x128xbf16>
    %cst_262 = arith.constant dense<0.000000e+00> : vector<128x128xf32>
    %291 = tpu.matmul %288, %290, %cst_262 {dimension_numbers = #tpu.dot_dimension_numbers<[1], [0], [0], [1], [0, 0, 1, 1], [], []>} : vector<128x128xbf16>, vector<128x128xbf16>, vector<128x128xf32> -> vector<128x128xf32>
    %c0_263 = arith.constant 0 : index
    %c0_264 = arith.constant 0 : index
    %c0_265 = arith.constant 0 : index
    %292 = vector.load %arg9[%c0_263, %c0_264, %c0_265] : memref<9x128x128xf32, #tpu.memory_space<vmem>>, vector<1x128x128xf32>
    %293 = vector.shape_cast %292 : vector<1x128x128xf32> to vector<128x128xf32>
    %294 = arith.mulf %293, %291 : vector<128x128xf32>
    %295 = arith.addf %286, %294 : vector<128x128xf32>
    %c8_266 = arith.constant 8 : index
    %c0_267 = arith.constant 0 : index
    %296 = vector.load %arg11[%c8_266, %c0_267] : memref<160x128xf32, #tpu.memory_space<vmem>>, vector<128x128xf32>
    %297 = arith.truncf %296 : vector<128x128xf32> to vector<128x128xbf16>
    %c28 = arith.constant 28 : index
    %c0_268 = arith.constant 0 : index
    %c0_269 = arith.constant 0 : index
    %298 = vector.load %arg7[%c28, %c0_268, %c0_269] : memref<45x128x128xbf16, #tpu.memory_space<vmem>>, vector<1x128x128xbf16>
    %299 = vector.shape_cast %298 : vector<1x128x128xbf16> to vector<128x128xbf16>
    %cst_270 = arith.constant dense<0.000000e+00> : vector<128x128xf32>
    %300 = tpu.matmul %297, %299, %cst_270 {dimension_numbers = #tpu.dot_dimension_numbers<[1], [0], [0], [1], [0, 0, 1, 1], [], []>} : vector<128x128xbf16>, vector<128x128xbf16>, vector<128x128xf32> -> vector<128x128xf32>
    %c1_271 = arith.constant 1 : index
    %c0_272 = arith.constant 0 : index
    %c0_273 = arith.constant 0 : index
    %301 = vector.load %arg9[%c1_271, %c0_272, %c0_273] : memref<9x128x128xf32, #tpu.memory_space<vmem>>, vector<1x128x128xf32>
    %302 = vector.shape_cast %301 : vector<1x128x128xf32> to vector<128x128xf32>
    %303 = arith.mulf %302, %300 : vector<128x128xf32>
    %304 = arith.addf %295, %303 : vector<128x128xf32>
    %c9_274 = arith.constant 9 : index
    %c0_275 = arith.constant 0 : index
    %305 = vector.load %arg11[%c9_274, %c0_275] : memref<160x128xf32, #tpu.memory_space<vmem>>, vector<128x128xf32>
    %306 = arith.truncf %305 : vector<128x128xf32> to vector<128x128xbf16>
    %c29 = arith.constant 29 : index
    %c0_276 = arith.constant 0 : index
    %c0_277 = arith.constant 0 : index
    %307 = vector.load %arg7[%c29, %c0_276, %c0_277] : memref<45x128x128xbf16, #tpu.memory_space<vmem>>, vector<1x128x128xbf16>
    %308 = vector.shape_cast %307 : vector<1x128x128xbf16> to vector<128x128xbf16>
    %cst_278 = arith.constant dense<0.000000e+00> : vector<128x128xf32>
    %309 = tpu.matmul %306, %308, %cst_278 {dimension_numbers = #tpu.dot_dimension_numbers<[1], [0], [0], [1], [0, 0, 1, 1], [], []>} : vector<128x128xbf16>, vector<128x128xbf16>, vector<128x128xf32> -> vector<128x128xf32>
    %c2_279 = arith.constant 2 : index
    %c0_280 = arith.constant 0 : index
    %c0_281 = arith.constant 0 : index
    %310 = vector.load %arg9[%c2_279, %c0_280, %c0_281] : memref<9x128x128xf32, #tpu.memory_space<vmem>>, vector<1x128x128xf32>
    %311 = vector.shape_cast %310 : vector<1x128x128xf32> to vector<128x128xf32>
    %312 = arith.mulf %311, %309 : vector<128x128xf32>
    %313 = arith.addf %304, %312 : vector<128x128xf32>
    %c15_282 = arith.constant 15 : index
    %c0_283 = arith.constant 0 : index
    %314 = vector.load %arg11[%c15_282, %c0_283] : memref<160x128xf32, #tpu.memory_space<vmem>>, vector<128x128xf32>
    %315 = arith.truncf %314 : vector<128x128xf32> to vector<128x128xbf16>
    %c30 = arith.constant 30 : index
    %c0_284 = arith.constant 0 : index
    %c0_285 = arith.constant 0 : index
    %316 = vector.load %arg7[%c30, %c0_284, %c0_285] : memref<45x128x128xbf16, #tpu.memory_space<vmem>>, vector<1x128x128xbf16>
    %317 = vector.shape_cast %316 : vector<1x128x128xbf16> to vector<128x128xbf16>
    %cst_286 = arith.constant dense<0.000000e+00> : vector<128x128xf32>
    %318 = tpu.matmul %315, %317, %cst_286 {dimension_numbers = #tpu.dot_dimension_numbers<[1], [0], [0], [1], [0, 0, 1, 1], [], []>} : vector<128x128xbf16>, vector<128x128xbf16>, vector<128x128xf32> -> vector<128x128xf32>
    %c3_287 = arith.constant 3 : index
    %c0_288 = arith.constant 0 : index
    %c0_289 = arith.constant 0 : index
    %319 = vector.load %arg9[%c3_287, %c0_288, %c0_289] : memref<9x128x128xf32, #tpu.memory_space<vmem>>, vector<1x128x128xf32>
    %320 = vector.shape_cast %319 : vector<1x128x128xf32> to vector<128x128xf32>
    %321 = arith.mulf %320, %318 : vector<128x128xf32>
    %322 = arith.addf %313, %321 : vector<128x128xf32>
    %c16_290 = arith.constant 16 : index
    %c0_291 = arith.constant 0 : index
    %323 = vector.load %arg11[%c16_290, %c0_291] : memref<160x128xf32, #tpu.memory_space<vmem>>, vector<128x128xf32>
    %324 = arith.truncf %323 : vector<128x128xf32> to vector<128x128xbf16>
    %c31 = arith.constant 31 : index
    %c0_292 = arith.constant 0 : index
    %c0_293 = arith.constant 0 : index
    %325 = vector.load %arg7[%c31, %c0_292, %c0_293] : memref<45x128x128xbf16, #tpu.memory_space<vmem>>, vector<1x128x128xbf16>
    %326 = vector.shape_cast %325 : vector<1x128x128xbf16> to vector<128x128xbf16>
    %cst_294 = arith.constant dense<0.000000e+00> : vector<128x128xf32>
    %327 = tpu.matmul %324, %326, %cst_294 {dimension_numbers = #tpu.dot_dimension_numbers<[1], [0], [0], [1], [0, 0, 1, 1], [], []>} : vector<128x128xbf16>, vector<128x128xbf16>, vector<128x128xf32> -> vector<128x128xf32>
    %c4_295 = arith.constant 4 : index
    %c0_296 = arith.constant 0 : index
    %c0_297 = arith.constant 0 : index
    %328 = vector.load %arg9[%c4_295, %c0_296, %c0_297] : memref<9x128x128xf32, #tpu.memory_space<vmem>>, vector<1x128x128xf32>
    %329 = vector.shape_cast %328 : vector<1x128x128xf32> to vector<128x128xf32>
    %330 = arith.mulf %329, %327 : vector<128x128xf32>
    %331 = arith.addf %322, %330 : vector<128x128xf32>
    %c17_298 = arith.constant 17 : index
    %c0_299 = arith.constant 0 : index
    %332 = vector.load %arg11[%c17_298, %c0_299] : memref<160x128xf32, #tpu.memory_space<vmem>>, vector<128x128xf32>
    %333 = arith.truncf %332 : vector<128x128xf32> to vector<128x128xbf16>
    %c32 = arith.constant 32 : index
    %c0_300 = arith.constant 0 : index
    %c0_301 = arith.constant 0 : index
    %334 = vector.load %arg7[%c32, %c0_300, %c0_301] : memref<45x128x128xbf16, #tpu.memory_space<vmem>>, vector<1x128x128xbf16>
    %335 = vector.shape_cast %334 : vector<1x128x128xbf16> to vector<128x128xbf16>
    %cst_302 = arith.constant dense<0.000000e+00> : vector<128x128xf32>
    %336 = tpu.matmul %333, %335, %cst_302 {dimension_numbers = #tpu.dot_dimension_numbers<[1], [0], [0], [1], [0, 0, 1, 1], [], []>} : vector<128x128xbf16>, vector<128x128xbf16>, vector<128x128xf32> -> vector<128x128xf32>
    %c5_303 = arith.constant 5 : index
    %c0_304 = arith.constant 0 : index
    %c0_305 = arith.constant 0 : index
    %337 = vector.load %arg9[%c5_303, %c0_304, %c0_305] : memref<9x128x128xf32, #tpu.memory_space<vmem>>, vector<1x128x128xf32>
    %338 = vector.shape_cast %337 : vector<1x128x128xf32> to vector<128x128xf32>
    %339 = arith.mulf %338, %336 : vector<128x128xf32>
    %340 = arith.addf %331, %339 : vector<128x128xf32>
    %c23_306 = arith.constant 23 : index
    %c0_307 = arith.constant 0 : index
    %341 = vector.load %arg11[%c23_306, %c0_307] : memref<160x128xf32, #tpu.memory_space<vmem>>, vector<128x128xf32>
    %342 = arith.truncf %341 : vector<128x128xf32> to vector<128x128xbf16>
    %c33 = arith.constant 33 : index
    %c0_308 = arith.constant 0 : index
    %c0_309 = arith.constant 0 : index
    %343 = vector.load %arg7[%c33, %c0_308, %c0_309] : memref<45x128x128xbf16, #tpu.memory_space<vmem>>, vector<1x128x128xbf16>
    %344 = vector.shape_cast %343 : vector<1x128x128xbf16> to vector<128x128xbf16>
    %cst_310 = arith.constant dense<0.000000e+00> : vector<128x128xf32>
    %345 = tpu.matmul %342, %344, %cst_310 {dimension_numbers = #tpu.dot_dimension_numbers<[1], [0], [0], [1], [0, 0, 1, 1], [], []>} : vector<128x128xbf16>, vector<128x128xbf16>, vector<128x128xf32> -> vector<128x128xf32>
    %c6_311 = arith.constant 6 : index
    %c0_312 = arith.constant 0 : index
    %c0_313 = arith.constant 0 : index
    %346 = vector.load %arg9[%c6_311, %c0_312, %c0_313] : memref<9x128x128xf32, #tpu.memory_space<vmem>>, vector<1x128x128xf32>
    %347 = vector.shape_cast %346 : vector<1x128x128xf32> to vector<128x128xf32>
    %348 = arith.mulf %347, %345 : vector<128x128xf32>
    %349 = arith.addf %340, %348 : vector<128x128xf32>
    %c24_314 = arith.constant 24 : index
    %c0_315 = arith.constant 0 : index
    %350 = vector.load %arg11[%c24_314, %c0_315] : memref<160x128xf32, #tpu.memory_space<vmem>>, vector<128x128xf32>
    %351 = arith.truncf %350 : vector<128x128xf32> to vector<128x128xbf16>
    %c34 = arith.constant 34 : index
    %c0_316 = arith.constant 0 : index
    %c0_317 = arith.constant 0 : index
    %352 = vector.load %arg7[%c34, %c0_316, %c0_317] : memref<45x128x128xbf16, #tpu.memory_space<vmem>>, vector<1x128x128xbf16>
    %353 = vector.shape_cast %352 : vector<1x128x128xbf16> to vector<128x128xbf16>
    %cst_318 = arith.constant dense<0.000000e+00> : vector<128x128xf32>
    %354 = tpu.matmul %351, %353, %cst_318 {dimension_numbers = #tpu.dot_dimension_numbers<[1], [0], [0], [1], [0, 0, 1, 1], [], []>} : vector<128x128xbf16>, vector<128x128xbf16>, vector<128x128xf32> -> vector<128x128xf32>
    %c7_319 = arith.constant 7 : index
    %c0_320 = arith.constant 0 : index
    %c0_321 = arith.constant 0 : index
    %355 = vector.load %arg9[%c7_319, %c0_320, %c0_321] : memref<9x128x128xf32, #tpu.memory_space<vmem>>, vector<1x128x128xf32>
    %356 = vector.shape_cast %355 : vector<1x128x128xf32> to vector<128x128xf32>
    %357 = arith.mulf %356, %354 : vector<128x128xf32>
    %358 = arith.addf %349, %357 : vector<128x128xf32>
    %c25_322 = arith.constant 25 : index
    %c0_323 = arith.constant 0 : index
    %359 = vector.load %arg11[%c25_322, %c0_323] : memref<160x128xf32, #tpu.memory_space<vmem>>, vector<128x128xf32>
    %360 = arith.truncf %359 : vector<128x128xf32> to vector<128x128xbf16>
    %c35 = arith.constant 35 : index
    %c0_324 = arith.constant 0 : index
    %c0_325 = arith.constant 0 : index
    %361 = vector.load %arg7[%c35, %c0_324, %c0_325] : memref<45x128x128xbf16, #tpu.memory_space<vmem>>, vector<1x128x128xbf16>
    %362 = vector.shape_cast %361 : vector<1x128x128xbf16> to vector<128x128xbf16>
    %cst_326 = arith.constant dense<0.000000e+00> : vector<128x128xf32>
    %363 = tpu.matmul %360, %362, %cst_326 {dimension_numbers = #tpu.dot_dimension_numbers<[1], [0], [0], [1], [0, 0, 1, 1], [], []>} : vector<128x128xbf16>, vector<128x128xbf16>, vector<128x128xf32> -> vector<128x128xf32>
    %c8_327 = arith.constant 8 : index
    %c0_328 = arith.constant 0 : index
    %c0_329 = arith.constant 0 : index
    %364 = vector.load %arg9[%c8_327, %c0_328, %c0_329] : memref<9x128x128xf32, #tpu.memory_space<vmem>>, vector<1x128x128xf32>
    %365 = vector.shape_cast %364 : vector<1x128x128xf32> to vector<128x128xf32>
    %366 = arith.mulf %365, %363 : vector<128x128xf32>
    %367 = arith.addf %358, %366 : vector<128x128xf32>
    %c3_330 = arith.constant 3 : index
    %c0_331 = arith.constant 0 : index
    %c0_332 = arith.constant 0 : index
    %368 = vector.load %arg8[%c3_330, %c0_331, %c0_332] : memref<5x1x128xf32, #tpu.memory_space<vmem>>, vector<1x1x128xf32>
    %369 = vector.shape_cast %368 : vector<1x1x128xf32> to vector<1x128xf32>
    %370 = vector.broadcast %369 : vector<1x128xf32> to vector<128x128xf32>
    %371 = arith.addf %367, %370 : vector<128x128xf32>
    %cst_333 = arith.constant 0.000000e+00 : f32
    %372 = vector.broadcast %cst_333 : f32 to vector<128x128xf32>
    %373 = arith.maximumf %371, %372 : vector<128x128xf32>
    %c16_334 = arith.constant 16 : index
    %c0_335 = arith.constant 0 : index
    %374 = vector.load %arg11[%c16_334, %c0_335] : memref<160x128xf32, #tpu.memory_space<vmem>>, vector<128x128xf32>
    tpu.vector_store %arg11[%c16_334, %c0_335], %373 {strides = array<i32>} : memref<160x128xf32, #tpu.memory_space<vmem>>, vector<128x128xf32>,
    %cst_336 = arith.constant 0.000000e+00 : f32
    %375 = vector.broadcast %cst_336 : f32 to vector<128x128xf32>
    %c7_337 = arith.constant 7 : index
    %c0_338 = arith.constant 0 : index
    %376 = vector.load %arg11[%c7_337, %c0_338] : memref<160x128xf32, #tpu.memory_space<vmem>>, vector<128x128xf32>
    %377 = arith.truncf %376 : vector<128x128xf32> to vector<128x128xbf16>
    %c36 = arith.constant 36 : index
    %c0_339 = arith.constant 0 : index
    %c0_340 = arith.constant 0 : index
    %378 = vector.load %arg7[%c36, %c0_339, %c0_340] : memref<45x128x128xbf16, #tpu.memory_space<vmem>>, vector<1x128x128xbf16>
    %379 = vector.shape_cast %378 : vector<1x128x128xbf16> to vector<128x128xbf16>
    %cst_341 = arith.constant dense<0.000000e+00> : vector<128x128xf32>
    %380 = tpu.matmul %377, %379, %cst_341 {dimension_numbers = #tpu.dot_dimension_numbers<[1], [0], [0], [1], [0, 0, 1, 1], [], []>} : vector<128x128xbf16>, vector<128x128xbf16>, vector<128x128xf32> -> vector<128x128xf32>
    %c0_342 = arith.constant 0 : index
    %c0_343 = arith.constant 0 : index
    %c0_344 = arith.constant 0 : index
    %381 = vector.load %arg9[%c0_342, %c0_343, %c0_344] : memref<9x128x128xf32, #tpu.memory_space<vmem>>, vector<1x128x128xf32>
    %382 = vector.shape_cast %381 : vector<1x128x128xf32> to vector<128x128xf32>
    %383 = arith.mulf %382, %380 : vector<128x128xf32>
    %384 = arith.addf %375, %383 : vector<128x128xf32>
    %c8_345 = arith.constant 8 : index
    %c0_346 = arith.constant 0 : index
    %385 = vector.load %arg11[%c8_345, %c0_346] : memref<160x128xf32, #tpu.memory_space<vmem>>, vector<128x128xf32>
    %386 = arith.truncf %385 : vector<128x128xf32> to vector<128x128xbf16>
    %c37 = arith.constant 37 : index
    %c0_347 = arith.constant 0 : index
    %c0_348 = arith.constant 0 : index
    %387 = vector.load %arg7[%c37, %c0_347, %c0_348] : memref<45x128x128xbf16, #tpu.memory_space<vmem>>, vector<1x128x128xbf16>
    %388 = vector.shape_cast %387 : vector<1x128x128xbf16> to vector<128x128xbf16>
    %cst_349 = arith.constant dense<0.000000e+00> : vector<128x128xf32>
    %389 = tpu.matmul %386, %388, %cst_349 {dimension_numbers = #tpu.dot_dimension_numbers<[1], [0], [0], [1], [0, 0, 1, 1], [], []>} : vector<128x128xbf16>, vector<128x128xbf16>, vector<128x128xf32> -> vector<128x128xf32>
    %c1_350 = arith.constant 1 : index
    %c0_351 = arith.constant 0 : index
    %c0_352 = arith.constant 0 : index
    %390 = vector.load %arg9[%c1_350, %c0_351, %c0_352] : memref<9x128x128xf32, #tpu.memory_space<vmem>>, vector<1x128x128xf32>
    %391 = vector.shape_cast %390 : vector<1x128x128xf32> to vector<128x128xf32>
    %392 = arith.mulf %391, %389 : vector<128x128xf32>
    %393 = arith.addf %384, %392 : vector<128x128xf32>
    %c9_353 = arith.constant 9 : index
    %c0_354 = arith.constant 0 : index
    %394 = vector.load %arg11[%c9_353, %c0_354] : memref<160x128xf32, #tpu.memory_space<vmem>>, vector<128x128xf32>
    %395 = arith.truncf %394 : vector<128x128xf32> to vector<128x128xbf16>
    %c38 = arith.constant 38 : index
    %c0_355 = arith.constant 0 : index
    %c0_356 = arith.constant 0 : index
    %396 = vector.load %arg7[%c38, %c0_355, %c0_356] : memref<45x128x128xbf16, #tpu.memory_space<vmem>>, vector<1x128x128xbf16>
    %397 = vector.shape_cast %396 : vector<1x128x128xbf16> to vector<128x128xbf16>
    %cst_357 = arith.constant dense<0.000000e+00> : vector<128x128xf32>
    %398 = tpu.matmul %395, %397, %cst_357 {dimension_numbers = #tpu.dot_dimension_numbers<[1], [0], [0], [1], [0, 0, 1, 1], [], []>} : vector<128x128xbf16>, vector<128x128xbf16>, vector<128x128xf32> -> vector<128x128xf32>
    %c2_358 = arith.constant 2 : index
    %c0_359 = arith.constant 0 : index
    %c0_360 = arith.constant 0 : index
    %399 = vector.load %arg9[%c2_358, %c0_359, %c0_360] : memref<9x128x128xf32, #tpu.memory_space<vmem>>, vector<1x128x128xf32>
    %400 = vector.shape_cast %399 : vector<1x128x128xf32> to vector<128x128xf32>
    %401 = arith.mulf %400, %398 : vector<128x128xf32>
    %402 = arith.addf %393, %401 : vector<128x128xf32>
    %c15_361 = arith.constant 15 : index
    %c0_362 = arith.constant 0 : index
    %403 = vector.load %arg11[%c15_361, %c0_362] : memref<160x128xf32, #tpu.memory_space<vmem>>, vector<128x128xf32>
    %404 = arith.truncf %403 : vector<128x128xf32> to vector<128x128xbf16>
    %c39 = arith.constant 39 : index
    %c0_363 = arith.constant 0 : index
    %c0_364 = arith.constant 0 : index
    %405 = vector.load %arg7[%c39, %c0_363, %c0_364] : memref<45x128x128xbf16, #tpu.memory_space<vmem>>, vector<1x128x128xbf16>
    %406 = vector.shape_cast %405 : vector<1x128x128xbf16> to vector<128x128xbf16>
    %cst_365 = arith.constant dense<0.000000e+00> : vector<128x128xf32>
    %407 = tpu.matmul %404, %406, %cst_365 {dimension_numbers = #tpu.dot_dimension_numbers<[1], [0], [0], [1], [0, 0, 1, 1], [], []>} : vector<128x128xbf16>, vector<128x128xbf16>, vector<128x128xf32> -> vector<128x128xf32>
    %c3_366 = arith.constant 3 : index
    %c0_367 = arith.constant 0 : index
    %c0_368 = arith.constant 0 : index
    %408 = vector.load %arg9[%c3_366, %c0_367, %c0_368] : memref<9x128x128xf32, #tpu.memory_space<vmem>>, vector<1x128x128xf32>
    %409 = vector.shape_cast %408 : vector<1x128x128xf32> to vector<128x128xf32>
    %410 = arith.mulf %409, %407 : vector<128x128xf32>
    %411 = arith.addf %402, %410 : vector<128x128xf32>
    %c16_369 = arith.constant 16 : index
    %c0_370 = arith.constant 0 : index
    %412 = vector.load %arg11[%c16_369, %c0_370] : memref<160x128xf32, #tpu.memory_space<vmem>>, vector<128x128xf32>
    %413 = arith.truncf %412 : vector<128x128xf32> to vector<128x128xbf16>
    %c40 = arith.constant 40 : index
    %c0_371 = arith.constant 0 : index
    %c0_372 = arith.constant 0 : index
    %414 = vector.load %arg7[%c40, %c0_371, %c0_372] : memref<45x128x128xbf16, #tpu.memory_space<vmem>>, vector<1x128x128xbf16>
    %415 = vector.shape_cast %414 : vector<1x128x128xbf16> to vector<128x128xbf16>
    %cst_373 = arith.constant dense<0.000000e+00> : vector<128x128xf32>
    %416 = tpu.matmul %413, %415, %cst_373 {dimension_numbers = #tpu.dot_dimension_numbers<[1], [0], [0], [1], [0, 0, 1, 1], [], []>} : vector<128x128xbf16>, vector<128x128xbf16>, vector<128x128xf32> -> vector<128x128xf32>
    %c4_374 = arith.constant 4 : index
    %c0_375 = arith.constant 0 : index
    %c0_376 = arith.constant 0 : index
    %417 = vector.load %arg9[%c4_374, %c0_375, %c0_376] : memref<9x128x128xf32, #tpu.memory_space<vmem>>, vector<1x128x128xf32>
    %418 = vector.shape_cast %417 : vector<1x128x128xf32> to vector<128x128xf32>
    %419 = arith.mulf %418, %416 : vector<128x128xf32>
    %420 = arith.addf %411, %419 : vector<128x128xf32>
    %c17_377 = arith.constant 17 : index
    %c0_378 = arith.constant 0 : index
    %421 = vector.load %arg11[%c17_377, %c0_378] : memref<160x128xf32, #tpu.memory_space<vmem>>, vector<128x128xf32>
    %422 = arith.truncf %421 : vector<128x128xf32> to vector<128x128xbf16>
    %c41 = arith.constant 41 : index
    %c0_379 = arith.constant 0 : index
    %c0_380 = arith.constant 0 : index
    %423 = vector.load %arg7[%c41, %c0_379, %c0_380] : memref<45x128x128xbf16, #tpu.memory_space<vmem>>, vector<1x128x128xbf16>
    %424 = vector.shape_cast %423 : vector<1x128x128xbf16> to vector<128x128xbf16>
    %cst_381 = arith.constant dense<0.000000e+00> : vector<128x128xf32>
    %425 = tpu.matmul %422, %424, %cst_381 {dimension_numbers = #tpu.dot_dimension_numbers<[1], [0], [0], [1], [0, 0, 1, 1], [], []>} : vector<128x128xbf16>, vector<128x128xbf16>, vector<128x128xf32> -> vector<128x128xf32>
    %c5_382 = arith.constant 5 : index
    %c0_383 = arith.constant 0 : index
    %c0_384 = arith.constant 0 : index
    %426 = vector.load %arg9[%c5_382, %c0_383, %c0_384] : memref<9x128x128xf32, #tpu.memory_space<vmem>>, vector<1x128x128xf32>
    %427 = vector.shape_cast %426 : vector<1x128x128xf32> to vector<128x128xf32>
    %428 = arith.mulf %427, %425 : vector<128x128xf32>
    %429 = arith.addf %420, %428 : vector<128x128xf32>
    %c23_385 = arith.constant 23 : index
    %c0_386 = arith.constant 0 : index
    %430 = vector.load %arg11[%c23_385, %c0_386] : memref<160x128xf32, #tpu.memory_space<vmem>>, vector<128x128xf32>
    %431 = arith.truncf %430 : vector<128x128xf32> to vector<128x128xbf16>
    %c42 = arith.constant 42 : index
    %c0_387 = arith.constant 0 : index
    %c0_388 = arith.constant 0 : index
    %432 = vector.load %arg7[%c42, %c0_387, %c0_388] : memref<45x128x128xbf16, #tpu.memory_space<vmem>>, vector<1x128x128xbf16>
    %433 = vector.shape_cast %432 : vector<1x128x128xbf16> to vector<128x128xbf16>
    %cst_389 = arith.constant dense<0.000000e+00> : vector<128x128xf32>
    %434 = tpu.matmul %431, %433, %cst_389 {dimension_numbers = #tpu.dot_dimension_numbers<[1], [0], [0], [1], [0, 0, 1, 1], [], []>} : vector<128x128xbf16>, vector<128x128xbf16>, vector<128x128xf32> -> vector<128x128xf32>
    %c6_390 = arith.constant 6 : index
    %c0_391 = arith.constant 0 : index
    %c0_392 = arith.constant 0 : index
    %435 = vector.load %arg9[%c6_390, %c0_391, %c0_392] : memref<9x128x128xf32, #tpu.memory_space<vmem>>, vector<1x128x128xf32>
    %436 = vector.shape_cast %435 : vector<1x128x128xf32> to vector<128x128xf32>
    %437 = arith.mulf %436, %434 : vector<128x128xf32>
    %438 = arith.addf %429, %437 : vector<128x128xf32>
    %c24_393 = arith.constant 24 : index
    %c0_394 = arith.constant 0 : index
    %439 = vector.load %arg11[%c24_393, %c0_394] : memref<160x128xf32, #tpu.memory_space<vmem>>, vector<128x128xf32>
    %440 = arith.truncf %439 : vector<128x128xf32> to vector<128x128xbf16>
    %c43 = arith.constant 43 : index
    %c0_395 = arith.constant 0 : index
    %c0_396 = arith.constant 0 : index
    %441 = vector.load %arg7[%c43, %c0_395, %c0_396] : memref<45x128x128xbf16, #tpu.memory_space<vmem>>, vector<1x128x128xbf16>
    %442 = vector.shape_cast %441 : vector<1x128x128xbf16> to vector<128x128xbf16>
    %cst_397 = arith.constant dense<0.000000e+00> : vector<128x128xf32>
    %443 = tpu.matmul %440, %442, %cst_397 {dimension_numbers = #tpu.dot_dimension_numbers<[1], [0], [0], [1], [0, 0, 1, 1], [], []>} : vector<128x128xbf16>, vector<128x128xbf16>, vector<128x128xf32> -> vector<128x128xf32>
    %c7_398 = arith.constant 7 : index
    %c0_399 = arith.constant 0 : index
    %c0_400 = arith.constant 0 : index
    %444 = vector.load %arg9[%c7_398, %c0_399, %c0_400] : memref<9x128x128xf32, #tpu.memory_space<vmem>>, vector<1x128x128xf32>
    %445 = vector.shape_cast %444 : vector<1x128x128xf32> to vector<128x128xf32>
    %446 = arith.mulf %445, %443 : vector<128x128xf32>
    %447 = arith.addf %438, %446 : vector<128x128xf32>
    %c25_401 = arith.constant 25 : index
    %c0_402 = arith.constant 0 : index
    %448 = vector.load %arg11[%c25_401, %c0_402] : memref<160x128xf32, #tpu.memory_space<vmem>>, vector<128x128xf32>
    %449 = arith.truncf %448 : vector<128x128xf32> to vector<128x128xbf16>
    %c44 = arith.constant 44 : index
    %c0_403 = arith.constant 0 : index
    %c0_404 = arith.constant 0 : index
    %450 = vector.load %arg7[%c44, %c0_403, %c0_404] : memref<45x128x128xbf16, #tpu.memory_space<vmem>>, vector<1x128x128xbf16>
    %451 = vector.shape_cast %450 : vector<1x128x128xbf16> to vector<128x128xbf16>
    %cst_405 = arith.constant dense<0.000000e+00> : vector<128x128xf32>
    %452 = tpu.matmul %449, %451, %cst_405 {dimension_numbers = #tpu.dot_dimension_numbers<[1], [0], [0], [1], [0, 0, 1, 1], [], []>} : vector<128x128xbf16>, vector<128x128xbf16>, vector<128x128xf32> -> vector<128x128xf32>
    %c8_406 = arith.constant 8 : index
    %c0_407 = arith.constant 0 : index
    %c0_408 = arith.constant 0 : index
    %453 = vector.load %arg9[%c8_406, %c0_407, %c0_408] : memref<9x128x128xf32, #tpu.memory_space<vmem>>, vector<1x128x128xf32>
    %454 = vector.shape_cast %453 : vector<1x128x128xf32> to vector<128x128xf32>
    %455 = arith.mulf %454, %452 : vector<128x128xf32>
    %456 = arith.addf %447, %455 : vector<128x128xf32>
    %c4_409 = arith.constant 4 : index
    %c0_410 = arith.constant 0 : index
    %c0_411 = arith.constant 0 : index
    %457 = vector.load %arg8[%c4_409, %c0_410, %c0_411] : memref<5x1x128xf32, #tpu.memory_space<vmem>>, vector<1x1x128xf32>
    %458 = vector.shape_cast %457 : vector<1x1x128xf32> to vector<1x128xf32>
    %459 = vector.broadcast %458 : vector<1x128xf32> to vector<128x128xf32>
    %460 = arith.addf %456, %459 : vector<128x128xf32>
    %cst_412 = arith.constant 0.000000e+00 : f32
    %461 = vector.broadcast %cst_412 : f32 to vector<128x128xf32>
    %462 = arith.maximumf %460, %461 : vector<128x128xf32>
    %c0_413 = arith.constant 0 : index
    %c0_414 = arith.constant 0 : index
    %463 = vector.load %arg10[%c0_413, %c0_414] : memref<128x128xf32, #tpu.memory_space<vmem>>, vector<128x128xf32>
    tpu.vector_store %arg10[%c0_413, %c0_414], %462 {strides = array<i32>} : memref<128x128xf32, #tpu.memory_space<vmem>>, vector<128x128xf32>,
    return
  }
  func.func @transform_0(%arg0: i32) -> (i32, i32) {
    %c0_i32 = arith.constant 0 : i32
    %c0_i32_0 = arith.constant 0 : i32
    %c0_i32_1 = arith.constant 0 : i32
    return %c0_i32, %c0_i32_0 : i32, i32
  }
  func.func @transform_1(%arg0: i32) -> (i32, i32) {
    %c0_i32 = arith.constant 0 : i32
    %c0_i32_0 = arith.constant 0 : i32
    %c0_i32_1 = arith.constant 0 : i32
    return %c0_i32, %c0_i32_0 : i32, i32
  }
  func.func @transform_2(%arg0: i32) -> (i32, i32) {
    %c0_i32 = arith.constant 0 : i32
    %c0_i32_0 = arith.constant 0 : i32
    %c0_i32_1 = arith.constant 0 : i32
    return %c0_i32, %c0_i32_0 : i32, i32
  }
  func.func @transform_3(%arg0: i32) -> (i32, i32) {
    %c0_i32 = arith.constant 0 : i32
    %c0_i32_0 = arith.constant 0 : i32
    %c0_i32_1 = arith.constant 0 : i32
    return %c0_i32, %c0_i32_0 : i32, i32
  }
  func.func @transform_4(%arg0: i32) -> (i32, i32) {
    %c0_i32 = arith.constant 0 : i32
    %c0_i32_0 = arith.constant 0 : i32
    %c0_i32_1 = arith.constant 0 : i32
    return %c0_i32, %c0_i32_0 : i32, i32
  }
  func.func @transform_5(%arg0: i32) -> (i32, i32) {
    %c0_i32 = arith.constant 0 : i32
    %c0_i32_0 = arith.constant 0 : i32
    %c0_i32_1 = arith.constant 0 : i32
    return %c0_i32, %c0_i32_0 : i32, i32
  }
  func.func @transform_6(%arg0: i32) -> (i32, i32, i32) {
    %c0_i32 = arith.constant 0 : i32
    %c0_i32_0 = arith.constant 0 : i32
    %c0_i32_1 = arith.constant 0 : i32
    %c0_i32_2 = arith.constant 0 : i32
    return %c0_i32, %c0_i32_0, %c0_i32_1 : i32, i32, i32
  }
  func.func @transform_7(%arg0: i32) -> (i32, i32, i32) {
    %c0_i32 = arith.constant 0 : i32
    %c0_i32_0 = arith.constant 0 : i32
    %c0_i32_1 = arith.constant 0 : i32
    %c0_i32_2 = arith.constant 0 : i32
    return %c0_i32, %c0_i32_0, %c0_i32_1 : i32, i32, i32
  }
  func.func @transform_8(%arg0: i32) -> (i32, i32, i32) {
    %c0_i32 = arith.constant 0 : i32
    %c0_i32_0 = arith.constant 0 : i32
    %c0_i32_1 = arith.constant 0 : i32
    %c0_i32_2 = arith.constant 0 : i32
    return %c0_i32, %c0_i32_0, %c0_i32_1 : i32, i32, i32
  }
  func.func @transform_9(%arg0: i32) -> (i32, i32) {
    %c0_i32 = arith.constant 0 : i32
    %c0_i32_0 = arith.constant 0 : i32
    %c0_i32_1 = arith.constant 0 : i32
    return %c0_i32, %c0_i32_0 : i32, i32
  }
}

</mosaic_0001>

<llo_original>
// kernel: forward.1
$region0: #{forward.1}
  #allocation0 [shape = 'u32[]', space=smem, size = 0x4, offset = 0x4, fixed_abs, tag = 'smem constant byte address 0x4 - core index']
  #allocation1 [shape = 'u32[72,128]{1,0:T(1,128)}', space=vmem, size = 0x9000, scoped, tag = 'internal scratch']
  #allocation2 [shape = 'f32[160,128]{1,0:T(8,128)}', space=vmem, size = 0x14000, scoped, tag = 'scratch operand']
  %s0 = inlined_call_operand.vmem [shape: bf16[2,32], index: 0, kind: input, shape index: {}]
  %s1 = inlined_call_operand.hbm [shape: bf16[32,256], index: 1, kind: input, shape index: {}]
  %s2 = inlined_call_operand.hbm [shape: f32[1,256], index: 2, kind: input, shape index: {}]
  %s3 = inlined_call_operand.hbm [shape: bf16[128,2], index: 3, kind: input, shape index: {}]
  %s4 = inlined_call_operand.hbm [shape: f32[128,256], index: 4, kind: input, shape index: {}]
  %s5 = inlined_call_operand.hbm [shape: bf16[256,128], index: 5, kind: input, shape index: {}]
  %s6 = inlined_call_operand.hbm [shape: bf16[45,128,128], index: 6, kind: input, shape index: {}]
  %s7 = inlined_call_operand.hbm [shape: f32[5,1,128], index: 7, kind: input, shape index: {}]
  %s8 = inlined_call_operand.hbm [shape: f32[9,128,128], index: 8, kind: input, shape index: {}]
  %s9 = inlined_call_operand.vmem [shape: f32[128,128], index: 9, kind: output, shape index: {}]
  %s10 = sld [smem:[#allocation0]]
  $region78: #{forward.1} parent=0
    _
  %s12 = ssub.s32 1, %s10
  %s13 = scalar_select 0, %s12, %s10
  $region1: #{forward.1} parent=0
    #allocation3 [shape = 'u8[16384]{0}', space=vmem, size = 0x4000, scoped, tag = 'input window, operand 1, single buffered']
    #allocation4 [shape = 's32[1]{0}', space=sflag, size = 0x4, scoped, tag = 'scoped memory for forward.1']
    #allocation5 [shape = 'u8[1024]{0}', space=vmem, size = 0x400, scoped, tag = 'input window, operand 2, single buffered']
    #allocation6 [shape = 's32[1]{0}', space=sflag, size = 0x4, scoped, tag = 'scoped memory for forward.1']
    #allocation7 [shape = 'u8[32768]{0}', space=vmem, size = 0x8000, scoped, tag = 'input window, operand 3, single buffered']
    #allocation8 [shape = 'u8[131072]{0}', space=vmem, size = 0x20000, scoped, tag = 'input window, operand 4, single buffered']
    #allocation9 [shape = 's32[1]{0}', space=sflag, size = 0x4, scoped, tag = 'scoped memory for forward.1']
    #allocation10 [shape = 'u8[65536]{0}', space=vmem, size = 0x10000, scoped, tag = 'input window, operand 5, single buffered']
    #allocation11 [shape = 'u8[1474560]{0}', space=vmem, size = 0x168000, scoped, tag = 'input window, operand 6, single buffered']
    #allocation12 [shape = 's32[1]{0}', space=sflag, size = 0x4, scoped, tag = 'scoped memory for forward.1']
    #allocation13 [shape = 'u8[2560]{0}', space=vmem, size = 0xc00, scoped, tag = 'input window, operand 7, single buffered']
    #allocation14 [shape = 'u8[589824]{0}', space=vmem, size = 0x90000, scoped, tag = 'input window, operand 8, single buffered']
    #allocation15 [shape = 's32[1]{0}', space=sflag, size = 0x4, scoped, tag = 'scoped memory for forward.1']
    %14 = vsyncpa [#allocation4], 0
    %15 = vsyncpa [#allocation6], 0
    %16 = vsyncpa [#allocation9], 0
    %17 = vsyncpa [#allocation12], 0
    %18 = vsyncpa [#allocation15], 0
    // Predicated region
    $region2: #{forward.1} parent=1 // pred_check
      _
    $region3: #{forward.1} parent=1 // pred_check_branch
      %20 = sbr.rel (0) target = $region5
    $region4: #{forward.1} parent=1 // pred_region
      _
    $region5: #{forward.1} parent=1 // pred_fallthru
      _
    // Predicated region
    $region6: #{forward.1} parent=1 // pred_check
      _
    $region7: #{forward.1} parent=1 // pred_check_branch
      %22 = sbr.rel (0) target = $region9
    $region8: #{forward.1} parent=1 // pred_region
      %24 = vsyncadd [#allocation4], 0
      %s25 = sshll.u32 %s1, 4
      %s26 = int_to_ptr.hbm [resolvable:$true] %s25
      %s27 = sshll.u32 [#allocation3], 4
      %s28 = int_to_ptr.vmem [resolvable:$true] %s27
      %33 = dma.hbm_to_vmem [thread:$0]  %s26, 512, %s28, [#allocation4], 128, 128, 8
    $region9: #{forward.1} parent=1 // pred_fallthru
      _
    // Predicated region
    $region10: #{forward.1} parent=1 // pred_check
      _
    $region11: #{forward.1} parent=1 // pred_check_branch
      %35 = sbr.rel (0) target = $region13
    $region12: #{forward.1} parent=1 // pred_region
      %37 = vsyncadd [#allocation6], 0
      %s39 = sshll.u32 %s2, 4
      %s40 = int_to_ptr.hbm [resolvable:$true] %s39
      %s41 = sshll.u32 [#allocation5], 4
      %s42 = int_to_ptr.vmem [resolvable:$true] %s41
      %44 = dma.hbm_to_vmem [thread:$0]  %s40, 32, %s42, [#allocation6]
    $region13: #{forward.1} parent=1 // pred_fallthru
      _
    // Predicated region
    $region14: #{forward.1} parent=1 // pred_check
      _
    $region15: #{forward.1} parent=1 // pred_check_branch
      %46 = sbr.rel (0) target = $region17
    $region16: #{forward.1} parent=1 // pred_region
      %48 = vsyncadd [#allocation6], 0
      %s49 = sshll.u32 %s3, 4
      %s50 = int_to_ptr.hbm [resolvable:$true] %s49
      %s51 = sshll.u32 [#allocation7], 4
      %s52 = int_to_ptr.vmem [resolvable:$true] %s51
      %57 = dma.hbm_to_vmem [thread:$0]  %s50, 1024, %s52, [#allocation6], 64, 64, 4
    $region17: #{forward.1} parent=1 // pred_fallthru
      _
    // Predicated region
    $region18: #{forward.1} parent=1 // pred_check
      _
    $region19: #{forward.1} parent=1 // pred_check_branch
      %59 = sbr.rel (0) target = $region21
    $region20: #{forward.1} parent=1 // pred_region
      %61 = vsyncadd [#allocation9], 0
      %s62 = sshll.u32 %s4, 4
      %s63 = int_to_ptr.hbm [resolvable:$true] %s62
      %s64 = sshll.u32 [#allocation8], 4
      %s65 = int_to_ptr.vmem [resolvable:$true] %s64
      %70 = dma.hbm_to_vmem [thread:$0]  %s63, 4096, %s65, [#allocation9], 256, 256, 16
    $region21: #{forward.1} parent=1 // pred_fallthru
      _
    // Predicated region
    $region22: #{forward.1} parent=1 // pred_check
      _
    $region23: #{forward.1} parent=1 // pred_check_branch
      %72 = sbr.rel (0) target = $region25
    $region24: #{forward.1} parent=1 // pred_region
      %74 = vsyncadd [#allocation9], 0
      %s75 = sshll.u32 %s5, 4
      %s76 = int_to_ptr.hbm [resolvable:$true] %s75
      %s77 = sshll.u32 [#allocation10], 4
      %s78 = int_to_ptr.vmem [resolvable:$true] %s77
      %83 = dma.hbm_to_vmem [thread:$0]  %s76, 2048, %s78, [#allocation9], 64, 64, 4
    $region25: #{forward.1} parent=1 // pred_fallthru
      _
    // Predicated region
    $region26: #{forward.1} parent=1 // pred_check
      _
    $region27: #{forward.1} parent=1 // pred_check_branch
      %85 = sbr.rel (0) target = $region29
    $region28: #{forward.1} parent=1 // pred_region
      %87 = vsyncadd [#allocation12], 0
      %s88 = sshll.u32 %s6, 4
      %s89 = int_to_ptr.hbm [resolvable:$true] %s88
      %s90 = sshll.u32 [#allocation11], 4
      %s91 = int_to_ptr.vmem [resolvable:$true] %s90
      %96 = dma.hbm_to_vmem [thread:$0]  %s89, 46080, %s91, [#allocation12], 64, 64, 4
    $region29: #{forward.1} parent=1 // pred_fallthru
      _
    // Predicated region
    $region30: #{forward.1} parent=1 // pred_check
      _
    $region31: #{forward.1} parent=1 // pred_check_branch
      %98 = sbr.rel (0) target = $region33
    $region32: #{forward.1} parent=1 // pred_region
      %100 = vsyncadd [#allocation12], 0
      %s101 = sshll.u32 %s7, 4
      %s102 = int_to_ptr.hbm [resolvable:$true] %s101
      %s103 = sshll.u32 [#allocation13], 4
      %s104 = int_to_ptr.vmem [resolvable:$true] %s103
      %109 = dma.hbm_to_vmem [thread:$0]  %s102, 80, %s104, [#allocation12], 16, 16, 1
    $region33: #{forward.1} parent=1 // pred_fallthru
      _
    // Predicated region
    $region34: #{forward.1} parent=1 // pred_check
      _
    $region35: #{forward.1} parent=1 // pred_check_branch
      %111 = sbr.rel (0) target = $region37
    $region36: #{forward.1} parent=1 // pred_region
      %113 = vsyncadd [#allocation15], 0
      %s114 = sshll.u32 %s8, 4
      %s115 = int_to_ptr.hbm [resolvable:$true] %s114
      %s116 = sshll.u32 [#allocation14], 4
      %s117 = int_to_ptr.vmem [resolvable:$true] %s116
      %122 = dma.hbm_to_vmem [thread:$0]  %s115, 18432, %s117, [#allocation15], 128, 128, 8
    $region37: #{forward.1} parent=1 // pred_fallthru
      _
    // Predicated region
    $region38: #{forward.1} parent=1 // pred_check
      _
    $region39: #{forward.1} parent=1 // pred_check_branch
      %124 = sbr.rel (0) target = $region41
    $region40: #{forward.1} parent=1 // pred_region
      %126 = dma.done [#allocation4], 512
    $region41: #{forward.1} parent=1 // pred_fallthru
      _
    // Predicated region
    $region42: #{forward.1} parent=1 // pred_check
      _
    $region43: #{forward.1} parent=1 // pred_check_branch
      %128 = sbr.rel (0) target = $region45
    $region44: #{forward.1} parent=1 // pred_region
      %130 = dma.done [#allocation6], 32
    $region45: #{forward.1} parent=1 // pred_fallthru
      _
    // Predicated region
    $region46: #{forward.1} parent=1 // pred_check
      _
    $region47: #{forward.1} parent=1 // pred_check_branch
      %132 = sbr.rel (0) target = $region49
    $region48: #{forward.1} parent=1 // pred_region
      %134 = dma.done [#allocation6], 1024
    $region49: #{forward.1} parent=1 // pred_fallthru
      _
    // Predicated region
    $region50: #{forward.1} parent=1 // pred_check
      _
    $region51: #{forward.1} parent=1 // pred_check_branch
      %136 = sbr.rel (0) target = $region53
    $region52: #{forward.1} parent=1 // pred_region
      %138 = dma.done [#allocation9], 4096
    $region53: #{forward.1} parent=1 // pred_fallthru
      _
    // Predicated region
    $region54: #{forward.1} parent=1 // pred_check
      _
    $region55: #{forward.1} parent=1 // pred_check_branch
      %140 = sbr.rel (0) target = $region57
    $region56: #{forward.1} parent=1 // pred_region
      %142 = dma.done [#allocation9], 2048
    $region57: #{forward.1} parent=1 // pred_fallthru
      _
    // Predicated region
    $region58: #{forward.1} parent=1 // pred_check
      _
    $region59: #{forward.1} parent=1 // pred_check_branch
      %144 = sbr.rel (0) target = $region61
    $region60: #{forward.1} parent=1 // pred_region
      %146 = dma.done [#allocation12], 46080
    $region61: #{forward.1} parent=1 // pred_fallthru
      _
    // Predicated region
    $region62: #{forward.1} parent=1 // pred_check
      _
    $region63: #{forward.1} parent=1 // pred_check_branch
      %148 = sbr.rel (0) target = $region65
    $region64: #{forward.1} parent=1 // pred_region
      %150 = dma.done [#allocation12], 80
    $region65: #{forward.1} parent=1 // pred_fallthru
      _
    // Predicated region
    $region66: #{forward.1} parent=1 // pred_check
      _
    $region67: #{forward.1} parent=1 // pred_check_branch
      %152 = sbr.rel (0) target = $region69
    $region68: #{forward.1} parent=1 // pred_region
      %154 = dma.done [#allocation15], 18432
    $region69: #{forward.1} parent=1 // pred_fallthru
      _
    %156 = vst [vmem:[#allocation2] sm:$0xff] 0.0
    %157 = vst [vmem:[#allocation2 + $0x8] sm:$0xff] 0.0
    %158 = vst [vmem:[#allocation2 + $0x10] sm:$0xff] 0.0
    %159 = vst [vmem:[#allocation2 + $0x18] sm:$0xff] 0.0
    %160 = vst [vmem:[#allocation2 + $0x20] sm:$0xff] 0.0
    %161 = vst [vmem:[#allocation2 + $0x28] sm:$0xff] 0.0
    %162 = vst [vmem:[#allocation2 + $0x30] sm:$0xff] 0.0
    %163 = vst [vmem:[#allocation2 + $0x38] sm:$0xff] 0.0
    %164 = vst [vmem:[#allocation2 + $0x40] sm:$0xff] 0.0
    %165 = vst [vmem:[#allocation2 + $0x48] sm:$0xff] 0.0
    %166 = vst [vmem:[#allocation2 + $0x50] sm:$0xff] 0.0
    %167 = vst [vmem:[#allocation2 + $0x58] sm:$0xff] 0.0
    %168 = vst [vmem:[#allocation2 + $0x60] sm:$0xff] 0.0
    %169 = vst [vmem:[#allocation2 + $0x68] sm:$0xff] 0.0
    %170 = vst [vmem:[#allocation2 + $0x70] sm:$0xff] 0.0
    %171 = vst [vmem:[#allocation2 + $0x78] sm:$0xff] 0.0
    %172 = vst [vmem:[#allocation2 + $0x80] sm:$0xff] 0.0
    %173 = vst [vmem:[#allocation2 + $0x88] sm:$0xff] 0.0
    %174 = vst [vmem:[#allocation2 + $0x90] sm:$0xff] 0.0
    %175 = vst [vmem:[#allocation2 + $0x98] sm:$0xff] 0.0
    %v176 = vld [vmem:[#allocation7] sm:$0xf]
    %v177 = vld [vmem:[#allocation7 + $0x4] sm:$0xf]
    %v178 = vld [vmem:[#allocation7 + $0x8] sm:$0xf]
    %v179 = vld [vmem:[#allocation7 + $0xc] sm:$0xf]
    %v180 = vld [vmem:[#allocation7 + $0x10] sm:$0xf]
    %v181 = vld [vmem:[#allocation7 + $0x14] sm:$0xf]
    %v182 = vld [vmem:[#allocation7 + $0x18] sm:$0xf]
    %v183 = vld [vmem:[#allocation7 + $0x1c] sm:$0xf]
    %v184 = vld [vmem:[#allocation7 + $0x20] sm:$0xf]
    %v185 = vld [vmem:[#allocation7 + $0x24] sm:$0xf]
    %v186 = vld [vmem:[#allocation7 + $0x28] sm:$0xf]
    %v187 = vld [vmem:[#allocation7 + $0x2c] sm:$0xf]
    %v188 = vld [vmem:[#allocation7 + $0x30] sm:$0xf]
    %v189 = vld [vmem:[#allocation7 + $0x34] sm:$0xf]
    %v190 = vld [vmem:[#allocation7 + $0x38] sm:$0xf]
    %v191 = vld [vmem:[#allocation7 + $0x3c] sm:$0xf]
    %v192 = vld [vmem:[%s0] sm:$0x1]
    %v209 = vunpack.c.l.b16 %v176
    %v210 = vunpack.c.l.b16 %v177
    %v211 = vunpack.c.l.b16 %v178
    %v212 = vunpack.c.l.b16 %v179
    %v213 = vunpack.c.l.b16 %v180
    %v214 = vunpack.c.l.b16 %v181
    %v215 = vunpack.c.l.b16 %v182
    %v216 = vunpack.c.l.b16 %v183
    %v217 = vunpack.c.l.b16 %v184
    %v218 = vunpack.c.l.b16 %v185
    %v219 = vunpack.c.l.b16 %v186
    %v220 = vunpack.c.l.b16 %v187
    %v221 = vunpack.c.l.b16 %v188
    %v222 = vunpack.c.l.b16 %v189
    %v223 = vunpack.c.l.b16 %v190
    %v224 = vunpack.c.l.b16 %v191
    %v225 = vpack.c.b16 %v210, %v209
    %v226 = vpack.c.b16 %v212, %v211
    %v227 = vpack.c.b16 %v214, %v213
    %v228 = vpack.c.b16 %v216, %v215
    %v229 = vpack.c.b16 %v218, %v217
    %v230 = vpack.c.b16 %v220, %v219
    %v231 = vpack.c.b16 %v222, %v221
    %v232 = vpack.c.b16 %v224, %v223
    %vm233 = vcmask 15360
    %v235 = vsel %vm233, %v225, 0
    %v238 = vsel %vm233, %v226, 0
    %v241 = vsel %vm233, %v227, 0
    %v244 = vsel %vm233, %v228, 0
    %v247 = vsel %vm233, %v229, 0
    %v250 = vsel %vm233, %v230, 0
    %v253 = vsel %vm233, %v231, 0
    %v256 = vsel %vm233, %v232, 0
    %vm258 = vcmask 1040384
    %v260 = vsel %vm258, %v192, 0
    %262 = vmatpush.bf16.msra.mxu0 0
    %263 = vmatpush.bf16.msra.mxu0 0
    %264 = vmatpush.bf16.msra.mxu0 0
    %265 = vmatpush.bf16.msra.mxu0 0
    %266 = vmatpush.bf16.msra.mxu0 0
    %267 = vmatpush.bf16.msra.mxu0 0
    %268 = vmatpush.bf16.msra.mxu0 0
    %269 = vmatpush.bf16.msra.mxu0 %v260
    %270 = vmatmul.bf16.gmra.mxu0 %v235
    %v271 = vpop.f32.mrf.mxu0
    %v272 = vadd.f32 0.0, %v271
    %v273 = vpop.f32.mrf.mxu0
    %v274 = vadd.f32 0.0, %v273
    %275 = vmatmul.bf16.gmra.mxu0 %v238
    %v276 = vpop.f32.mrf.mxu0
    %v277 = vadd.f32 0.0, %v276
    %v278 = vpop.f32.mrf.mxu0
    %v279 = vadd.f32 0.0, %v278
    %280 = vmatmul.bf16.gmra.mxu0 %v241
    %v281 = vpop.f32.mrf.mxu0
    %v282 = vadd.f32 0.0, %v281
    %v283 = vpop.f32.mrf.mxu0
    %v284 = vadd.f32 0.0, %v283
    %285 = vmatmul.bf16.gmra.mxu0 %v244
    %v286 = vpop.f32.mrf.mxu0
    %v287 = vadd.f32 0.0, %v286
    %v288 = vpop.f32.mrf.mxu0
    %v289 = vadd.f32 0.0, %v288
    %290 = vmatmul.bf16.gmra.mxu0 %v247
    %v291 = vpop.f32.mrf.mxu0
    %v292 = vadd.f32 0.0, %v291
    %v293 = vpop.f32.mrf.mxu0
    %v294 = vadd.f32 0.0, %v293
    %295 = vmatmul.bf16.gmra.mxu0 %v250
    %v296 = vpop.f32.mrf.mxu0
    %v297 = vadd.f32 0.0, %v296
    %v298 = vpop.f32.mrf.mxu0
    %v299 = vadd.f32 0.0, %v298
    %300 = vmatmul.bf16.gmra.mxu0 %v253
    %v301 = vpop.f32.mrf.mxu0
    %v302 = vadd.f32 0.0, %v301
    %v303 = vpop.f32.mrf.mxu0
    %v304 = vadd.f32 0.0, %v303
    %305 = vmatmul.bf16.gmra.mxu0 %v256
    %v306 = vpop.f32.mrf.mxu0
    %v307 = vadd.f32 0.0, %v306
    %v308 = vpop.f32.mrf.mxu0
    %v309 = vadd.f32 0.0, %v308
    %310 = vdwg.mxu0
    %v311 = vpack.c.bf16 %v274, %v272
    %v312 = vpack.c.bf16 %v279, %v277
    %v313 = vpack.c.bf16 %v284, %v282
    %v314 = vpack.c.bf16 %v289, %v287
    %v315 = vpack.c.bf16 %v294, %v292
    %v316 = vpack.c.bf16 %v299, %v297
    %v317 = vpack.c.bf16 %v304, %v302
    %v318 = vpack.c.bf16 %v309, %v307
    %v319 = vld [vmem:[#allocation3] sm:$0xff]
    %v320 = vld [vmem:[#allocation3 + $0x8] sm:$0xff]
    %v321 = vld [vmem:[#allocation3 + $0x10] sm:$0xff]
    %v322 = vld [vmem:[#allocation3 + $0x18] sm:$0xff]
    %v323 = vld [vmem:[#allocation5] sm:$0x3]
    %v325 = vperm.slane %v323, 0
    %v326 = vperm.slane %v323, 1
    %v333 = vunpack.c.l.b16 %v319
    %v334 = vunpack.c.h.b16 %v319
    %v335 = vunpack.c.l.b16 %v320
    %v336 = vunpack.c.h.b16 %v320
    %v337 = vunpack.c.l.b16 %v321
    %v338 = vunpack.c.h.b16 %v321
    %v339 = vunpack.c.l.b16 %v322
    %v340 = vunpack.c.h.b16 %v322
    %v341 = vpack.c.b16 %v335, %v333
    %v342 = vpack.c.b16 %v336, %v334
    %v343 = vpack.c.b16 %v339, %v337
    %v344 = vpack.c.b16 %v340, %v338
    %vm349 = vcmask 261120
    %v351 = vsel %vm349, %v311, 0
    %v354 = vsel %vm349, %v312, 0
    %v357 = vsel %vm349, %v313, 0
    %v360 = vsel %vm349, %v314, 0
    %v363 = vsel %vm349, %v315, 0
    %v366 = vsel %vm349, %v316, 0
    %v369 = vsel %vm349, %v317, 0
    %v372 = vsel %vm349, %v318, 0
    %374 = vmatpush.bf16.msra.mxu0 0
    %375 = vmatpush.bf16.msra.mxu0 0
    %376 = vmatpush.bf16.msra.mxu0 0
    %377 = vmatpush.bf16.msra.mxu0 0
    %378 = vmatpush.bf16.msra.mxu0 0
    %379 = vmatpush.bf16.msra.mxu0 0
    %380 = vmatpush.bf16.msra.mxu0 %v343
    %381 = vmatpush.bf16.msra.mxu0 %v341
    %382 = vmatmul.bf16.gmra.mxu0 %v351
    %v383 = vpop.f32.mrf.mxu0
    %v384 = vadd.f32 %v325, %v383
    %v385 = vpop.f32.mrf.mxu0
    %v386 = vadd.f32 %v325, %v385
    %387 = vmatmul.bf16.gmra.mxu0 %v354
    %v388 = vpop.f32.mrf.mxu0
    %v389 = vadd.f32 %v325, %v388
    %v390 = vpop.f32.mrf.mxu0
    %v391 = vadd.f32 %v325, %v390
    %392 = vmatmul.bf16.gmra.mxu0 %v357
    %v393 = vpop.f32.mrf.mxu0
    %v394 = vadd.f32 %v325, %v393
    %v395 = vpop.f32.mrf.mxu0
    %v396 = vadd.f32 %v325, %v395
    %397 = vmatmul.bf16.gmra.mxu0 %v360
    %v398 = vpop.f32.mrf.mxu0
    %v399 = vadd.f32 %v325, %v398
    %v400 = vpop.f32.mrf.mxu0
    %v401 = vadd.f32 %v325, %v400
    %402 = vmatmul.bf16.gmra.mxu0 %v363
    %v403 = vpop.f32.mrf.mxu0
    %v404 = vadd.f32 %v325, %v403
    %v405 = vpop.f32.mrf.mxu0
    %v406 = vadd.f32 %v325, %v405
    %407 = vmatmul.bf16.gmra.mxu0 %v366
    %v408 = vpop.f32.mrf.mxu0
    %v409 = vadd.f32 %v325, %v408
    %v410 = vpop.f32.mrf.mxu0
    %v411 = vadd.f32 %v325, %v410
    %412 = vmatmul.bf16.gmra.mxu0 %v369
    %v413 = vpop.f32.mrf.mxu0
    %v414 = vadd.f32 %v325, %v413
    %v415 = vpop.f32.mrf.mxu0
    %v416 = vadd.f32 %v325, %v415
    %417 = vmatmul.bf16.gmra.mxu0 %v372
    %v418 = vpop.f32.mrf.mxu0
    %v419 = vadd.f32 %v325, %v418
    %v420 = vpop.f32.mrf.mxu0
    %v421 = vadd.f32 %v325, %v420
    %422 = vdwg.mxu0
    %423 = vmatpush.bf16.msra.mxu0 0
    %424 = vmatpush.bf16.msra.mxu0 0
    %425 = vmatpush.bf16.msra.mxu0 0
    %426 = vmatpush.bf16.msra.mxu0 0
    %427 = vmatpush.bf16.msra.mxu0 0
    %428 = vmatpush.bf16.msra.mxu0 0
    %429 = vmatpush.bf16.msra.mxu0 %v344
    %430 = vmatpush.bf16.msra.mxu0 %v342
    %431 = vmatmul.bf16.gmra.mxu0 %v351
    %v432 = vpop.f32.mrf.mxu0
    %v433 = vadd.f32 %v326, %v432
    %v434 = vpop.f32.mrf.mxu0
    %v435 = vadd.f32 %v326, %v434
    %436 = vmatmul.bf16.gmra.mxu0 %v354
    %v437 = vpop.f32.mrf.mxu0
    %v438 = vadd.f32 %v326, %v437
    %v439 = vpop.f32.mrf.mxu0
    %v440 = vadd.f32 %v326, %v439
    %441 = vmatmul.bf16.gmra.mxu0 %v357
    %v442 = vpop.f32.mrf.mxu0
    %v443 = vadd.f32 %v326, %v442
    %v444 = vpop.f32.mrf.mxu0
    %v445 = vadd.f32 %v326, %v444
    %446 = vmatmul.bf16.gmra.mxu0 %v360
    %v447 = vpop.f32.mrf.mxu0
    %v448 = vadd.f32 %v326, %v447
    %v449 = vpop.f32.mrf.mxu0
    %v450 = vadd.f32 %v326, %v449
    %451 = vmatmul.bf16.gmra.mxu0 %v363
    %v452 = vpop.f32.mrf.mxu0
    %v453 = vadd.f32 %v326, %v452
    %v454 = vpop.f32.mrf.mxu0
    %v455 = vadd.f32 %v326, %v454
    %456 = vmatmul.bf16.gmra.mxu0 %v366
    %v457 = vpop.f32.mrf.mxu0
    %v458 = vadd.f32 %v326, %v457
    %v459 = vpop.f32.mrf.mxu0
    %v460 = vadd.f32 %v326, %v459
    %461 = vmatmul.bf16.gmra.mxu0 %v369
    %v462 = vpop.f32.mrf.mxu0
    %v463 = vadd.f32 %v326, %v462
    %v464 = vpop.f32.mrf.mxu0
    %v465 = vadd.f32 %v326, %v464
    %466 = vmatmul.bf16.gmra.mxu0 %v372
    %v467 = vpop.f32.mrf.mxu0
    %v468 = vadd.f32 %v326, %v467
    %v469 = vpop.f32.mrf.mxu0
    %v470 = vadd.f32 %v326, %v469
    %471 = vdwg.mxu0
    %v472 = vmax.f32 %v384, 0.0
    %v473 = vmax.f32 %v433, 0.0
    %v474 = vmax.f32 %v386, 0.0
    %v475 = vmax.f32 %v435, 0.0
    %v476 = vmax.f32 %v389, 0.0
    %v477 = vmax.f32 %v438, 0.0
    %v478 = vmax.f32 %v391, 0.0
    %v479 = vmax.f32 %v440, 0.0
    %v480 = vmax.f32 %v394, 0.0
    %v481 = vmax.f32 %v443, 0.0
    %v482 = vmax.f32 %v396, 0.0
    %v483 = vmax.f32 %v445, 0.0
    %v484 = vmax.f32 %v399, 0.0
    %v485 = vmax.f32 %v448, 0.0
    %v486 = vmax.f32 %v401, 0.0
    %v487 = vmax.f32 %v450, 0.0
    %v488 = vmax.f32 %v404, 0.0
    %v489 = vmax.f32 %v453, 0.0
    %v490 = vmax.f32 %v406, 0.0
    %v491 = vmax.f32 %v455, 0.0
    %v492 = vmax.f32 %v409, 0.0
    %v493 = vmax.f32 %v458, 0.0
    %v494 = vmax.f32 %v411, 0.0
    %v495 = vmax.f32 %v460, 0.0
    %v496 = vmax.f32 %v414, 0.0
    %v497 = vmax.f32 %v463, 0.0
    %v498 = vmax.f32 %v416, 0.0
    %v499 = vmax.f32 %v465, 0.0
    %v500 = vmax.f32 %v419, 0.0
    %v501 = vmax.f32 %v468, 0.0
    %v502 = vmax.f32 %v421, 0.0
    %v503 = vmax.f32 %v470, 0.0
    %v504 = vld [vmem:[#allocation8] sm:$0xff]
    %v505 = vld [vmem:[#allocation8 + $0x8] sm:$0xff]
    %v506 = vld [vmem:[#allocation8 + $0x10] sm:$0xff]
    %v507 = vld [vmem:[#allocation8 + $0x18] sm:$0xff]
    %v508 = vld [vmem:[#allocation8 + $0x20] sm:$0xff]
    %v509 = vld [vmem:[#allocation8 + $0x28] sm:$0xff]
    %v510 = vld [vmem:[#allocation8 + $0x30] sm:$0xff]
    %v511 = vld [vmem:[#allocation8 + $0x38] sm:$0xff]
    %v512 = vld [vmem:[#allocation8 + $0x40] sm:$0xff]
    %v513 = vld [vmem:[#allocation8 + $0x48] sm:$0xff]
    %v514 = vld [vmem:[#allocation8 + $0x50] sm:$0xff]
    %v515 = vld [vmem:[#allocation8 + $0x58] sm:$0xff]
    %v516 = vld [vmem:[#allocation8 + $0x60] sm:$0xff]
    %v517 = vld [vmem:[#allocation8 + $0x68] sm:$0xff]
    %v518 = vld [vmem:[#allocation8 + $0x70] sm:$0xff]
    %v519 = vld [vmem:[#allocation8 + $0x78] sm:$0xff]
    %v520 = vld [vmem:[#allocation8 + $0x80] sm:$0xff]
    %v521 = vld [vmem:[#allocation8 + $0x88] sm:$0xff]
    %v522 = vld [vmem:[#allocation8 + $0x90] sm:$0xff]
    %v523 = vld [vmem:[#allocation8 + $0x98] sm:$0xff]
    %v524 = vld [vmem:[#allocation8 + $0xa0] sm:$0xff]
    %v525 = vld [vmem:[#allocation8 + $0xa8] sm:$0xff]
    %v526 = vld [vmem:[#allocation8 + $0xb0] sm:$0xff]
    %v527 = vld [vmem:[#allocation8 + $0xb8] sm:$0xff]
    %v528 = vld [vmem:[#allocation8 + $0xc0] sm:$0xff]
    %v529 = vld [vmem:[#allocation8 + $0xc8] sm:$0xff]
    %v530 = vld [vmem:[#allocation8 + $0xd0] sm:$0xff]
    %v531 = vld [vmem:[#allocation8 + $0xd8] sm:$0xff]
    %v532 = vld [vmem:[#allocation8 + $0xe0] sm:$0xff]
    %v533 = vld [vmem:[#allocation8 + $0xe8] sm:$0xff]
    %v534 = vld [vmem:[#allocation8 + $0xf0] sm:$0xff]
    %v535 = vld [vmem:[#allocation8 + $0xf8] sm:$0xff]
    %v536 = vmul.f32 %v472, %v504
    %v537 = vmul.f32 %v473, %v505
    %v538 = vmul.f32 %v474, %v506
    %v539 = vmul.f32 %v475, %v507
    %v540 = vmul.f32 %v476, %v508
    %v541 = vmul.f32 %v477, %v509
    %v542 = vmul.f32 %v478, %v510
    %v543 = vmul.f32 %v479, %v511
    %v544 = vmul.f32 %v480, %v512
    %v545 = vmul.f32 %v481, %v513
    %v546 = vmul.f32 %v482, %v514
    %v547 = vmul.f32 %v483, %v515
    %v548 = vmul.f32 %v484, %v516
    %v549 = vmul.f32 %v485, %v517
    %v550 = vmul.f32 %v486, %v518
    %v551 = vmul.f32 %v487, %v519
    %v552 = vmul.f32 %v488, %v520
    %v553 = vmul.f32 %v489, %v521
    %v554 = vmul.f32 %v490, %v522
    %v555 = vmul.f32 %v491, %v523
    %v556 = vmul.f32 %v492, %v524
    %v557 = vmul.f32 %v493, %v525
    %v558 = vmul.f32 %v494, %v526
    %v559 = vmul.f32 %v495, %v527
    %v560 = vmul.f32 %v496, %v528
    %v561 = vmul.f32 %v497, %v529
    %v562 = vmul.f32 %v498, %v530
    %v563 = vmul.f32 %v499, %v531
    %v564 = vmul.f32 %v500, %v532
    %v565 = vmul.f32 %v501, %v533
    %v566 = vmul.f32 %v502, %v534
    %v567 = vmul.f32 %v503, %v535
    %v568 = vpack.c.bf16 %v538, %v536
    %v569 = vpack.c.bf16 %v539, %v537
    %v570 = vpack.c.bf16 %v542, %v540
    %v571 = vpack.c.bf16 %v543, %v541
    %v572 = vpack.c.bf16 %v546, %v544
    %v573 = vpack.c.bf16 %v547, %v545
    %v574 = vpack.c.bf16 %v550, %v548
    %v575 = vpack.c.bf16 %v551, %v549
    %v576 = vpack.c.bf16 %v554, %v552
    %v577 = vpack.c.bf16 %v555, %v553
    %v578 = vpack.c.bf16 %v558, %v556
    %v579 = vpack.c.bf16 %v559, %v557
    %v580 = vpack.c.bf16 %v562, %v560
    %v581 = vpack.c.bf16 %v563, %v561
    %v582 = vpack.c.bf16 %v566, %v564
    %v583 = vpack.c.bf16 %v567, %v565
    %v584 = vld [vmem:[#allocation10] sm:$0xf]
    %v585 = vld [vmem:[#allocation10 + $0x4] sm:$0xf]
    %v586 = vld [vmem:[#allocation10 + $0x8] sm:$0xf]
    %v587 = vld [vmem:[#allocation10 + $0xc] sm:$0xf]
    %v588 = vld [vmem:[#allocation10 + $0x10] sm:$0xf]
    %v589 = vld [vmem:[#allocation10 + $0x14] sm:$0xf]
    %v590 = vld [vmem:[#allocation10 + $0x18] sm:$0xf]
    %v591 = vld [vmem:[#allocation10 + $0x1c] sm:$0xf]
    %v592 = vld [vmem:[#allocation10 + $0x20] sm:$0xf]
    %v593 = vld [vmem:[#allocation10 + $0x24] sm:$0xf]
    %v594 = vld [vmem:[#allocation10 + $0x28] sm:$0xf]
    %v595 = vld [vmem:[#allocation10 + $0x2c] sm:$0xf]
    %v596 = vld [vmem:[#allocation10 + $0x30] sm:$0xf]
    %v597 = vld [vmem:[#allocation10 + $0x34] sm:$0xf]
    %v598 = vld [vmem:[#allocation10 + $0x38] sm:$0xf]
    %v599 = vld [vmem:[#allocation10 + $0x3c] sm:$0xf]
    %v600 = vld [vmem:[#allocation10 + $0x40] sm:$0xf]
    %v601 = vld [vmem:[#allocation10 + $0x44] sm:$0xf]
    %v602 = vld [vmem:[#allocation10 + $0x48] sm:$0xf]
    %v603 = vld [vmem:[#allocation10 + $0x4c] sm:$0xf]
    %v604 = vld [vmem:[#allocation10 + $0x50] sm:$0xf]
    %v605 = vld [vmem:[#allocation10 + $0x54] sm:$0xf]
    %v606 = vld [vmem:[#allocation10 + $0x58] sm:$0xf]
    %v607 = vld [vmem:[#allocation10 + $0x5c] sm:$0xf]
    %v608 = vld [vmem:[#allocation10 + $0x60] sm:$0xf]
    %v609 = vld [vmem:[#allocation10 + $0x64] sm:$0xf]
    %v610 = vld [vmem:[#allocation10 + $0x68] sm:$0xf]
    %v611 = vld [vmem:[#allocation10 + $0x6c] sm:$0xf]
    %v612 = vld [vmem:[#allocation10 + $0x70] sm:$0xf]
    %v613 = vld [vmem:[#allocation10 + $0x74] sm:$0xf]
    %v614 = vld [vmem:[#allocation10 + $0x78] sm:$0xf]
    %v615 = vld [vmem:[#allocation10 + $0x7c] sm:$0xf]
    %v648 = vunpack.c.l.b16 %v584
    %v649 = vunpack.c.l.b16 %v585
    %v650 = vunpack.c.l.b16 %v586
    %v651 = vunpack.c.l.b16 %v587
    %v652 = vunpack.c.l.b16 %v588
    %v653 = vunpack.c.l.b16 %v589
    %v654 = vunpack.c.l.b16 %v590
    %v655 = vunpack.c.l.b16 %v591
    %v656 = vunpack.c.l.b16 %v592
    %v657 = vunpack.c.l.b16 %v593
    %v658 = vunpack.c.l.b16 %v594
    %v659 = vunpack.c.l.b16 %v595
    %v660 = vunpack.c.l.b16 %v596
    %v661 = vunpack.c.l.b16 %v597
    %v662 = vunpack.c.l.b16 %v598
    %v663 = vunpack.c.l.b16 %v599
    %v664 = vunpack.c.l.b16 %v600
    %v665 = vunpack.c.l.b16 %v601
    %v666 = vunpack.c.l.b16 %v602
    %v667 = vunpack.c.l.b16 %v603
    %v668 = vunpack.c.l.b16 %v604
    %v669 = vunpack.c.l.b16 %v605
    %v670 = vunpack.c.l.b16 %v606
    %v671 = vunpack.c.l.b16 %v607
    %v672 = vunpack.c.l.b16 %v608
    %v673 = vunpack.c.l.b16 %v609
    %v674 = vunpack.c.l.b16 %v610
    %v675 = vunpack.c.l.b16 %v611
    %v676 = vunpack.c.l.b16 %v612
    %v677 = vunpack.c.l.b16 %v613
    %v678 = vunpack.c.l.b16 %v614
    %v679 = vunpack.c.l.b16 %v615
    %v680 = vpack.c.b16 %v649, %v648
    %v681 = vpack.c.b16 %v651, %v650
    %v682 = vpack.c.b16 %v653, %v652
    %v683 = vpack.c.b16 %v655, %v654
    %v684 = vpack.c.b16 %v657, %v656
    %v685 = vpack.c.b16 %v659, %v658
    %v686 = vpack.c.b16 %v661, %v660
    %v687 = vpack.c.b16 %v663, %v662
    %v688 = vpack.c.b16 %v665, %v664
    %v689 = vpack.c.b16 %v667, %v666
    %v690 = vpack.c.b16 %v669, %v668
    %v691 = vpack.c.b16 %v671, %v670
    %v692 = vpack.c.b16 %v673, %v672
    %v693 = vpack.c.b16 %v675, %v674
    %v694 = vpack.c.b16 %v677, %v676
    %v695 = vpack.c.b16 %v679, %v678
    %712 = vmatpush.bf16.msra.mxu0 %v687
    %713 = vmatpush.bf16.msra.mxu0 %v686
    %714 = vmatpush.bf16.msra.mxu0 %v685
    %715 = vmatpush.bf16.msra.mxu0 %v684
    %716 = vmatpush.bf16.msra.mxu0 %v683
    %717 = vmatpush.bf16.msra.mxu0 %v682
    %718 = vmatpush.bf16.msra.mxu0 %v681
    %719 = vmatpush.bf16.msra.mxu0 %v680
    %720 = vmatmul.bf16.gmra.mxu0 %v568
    %v721 = vpop.f32.mrf.mxu0
    %v722 = vadd.f32 0.0, %v721
    %v723 = vpop.f32.mrf.mxu0
    %v724 = vadd.f32 0.0, %v723
    %725 = vmatmul.bf16.gmra.mxu0 %v570
    %v726 = vpop.f32.mrf.mxu0
    %v727 = vadd.f32 0.0, %v726
    %v728 = vpop.f32.mrf.mxu0
    %v729 = vadd.f32 0.0, %v728
    %730 = vmatmul.bf16.gmra.mxu0 %v572
    %v731 = vpop.f32.mrf.mxu0
    %v732 = vadd.f32 0.0, %v731
    %v733 = vpop.f32.mrf.mxu0
    %v734 = vadd.f32 0.0, %v733
    %735 = vmatmul.bf16.gmra.mxu0 %v574
    %v736 = vpop.f32.mrf.mxu0
    %v737 = vadd.f32 0.0, %v736
    %v738 = vpop.f32.mrf.mxu0
    %v739 = vadd.f32 0.0, %v738
    %740 = vmatmul.bf16.gmra.mxu0 %v576
    %v741 = vpop.f32.mrf.mxu0
    %v742 = vadd.f32 0.0, %v741
    %v743 = vpop.f32.mrf.mxu0
    %v744 = vadd.f32 0.0, %v743
    %745 = vmatmul.bf16.gmra.mxu0 %v578
    %v746 = vpop.f32.mrf.mxu0
    %v747 = vadd.f32 0.0, %v746
    %v748 = vpop.f32.mrf.mxu0
    %v749 = vadd.f32 0.0, %v748
    %750 = vmatmul.bf16.gmra.mxu0 %v580
    %v751 = vpop.f32.mrf.mxu0
    %v752 = vadd.f32 0.0, %v751
    %v753 = vpop.f32.mrf.mxu0
    %v754 = vadd.f32 0.0, %v753
    %755 = vmatmul.bf16.gmra.mxu0 %v582
    %v756 = vpop.f32.mrf.mxu0
    %v757 = vadd.f32 0.0, %v756
    %v758 = vpop.f32.mrf.mxu0
    %v759 = vadd.f32 0.0, %v758
    %760 = vdwg.mxu0
    %761 = vmatpush.bf16.msra.mxu0 %v695
    %762 = vmatpush.bf16.msra.mxu0 %v694
    %763 = vmatpush.bf16.msra.mxu0 %v693
    %764 = vmatpush.bf16.msra.mxu0 %v692
    %765 = vmatpush.bf16.msra.mxu0 %v691
    %766 = vmatpush.bf16.msra.mxu0 %v690
    %767 = vmatpush.bf16.msra.mxu0 %v689
    %768 = vmatpush.bf16.msra.mxu0 %v688
    %769 = vmatmul.bf16.gmra.mxu0 %v569
    %v770 = vpop.f32.mrf.mxu0
    %v771 = vadd.f32 %v722, %v770
    %v772 = vpop.f32.mrf.mxu0
    %v773 = vadd.f32 %v724, %v772
    %774 = vmatmul.bf16.gmra.mxu0 %v571
    %v775 = vpop.f32.mrf.mxu0
    %v776 = vadd.f32 %v727, %v775
    %v777 = vpop.f32.mrf.mxu0
    %v778 = vadd.f32 %v729, %v777
    %779 = vmatmul.bf16.gmra.mxu0 %v573
    %v780 = vpop.f32.mrf.mxu0
    %v781 = vadd.f32 %v732, %v780
    %v782 = vpop.f32.mrf.mxu0
    %v783 = vadd.f32 %v734, %v782
    %784 = vmatmul.bf16.gmra.mxu0 %v575
    %v785 = vpop.f32.mrf.mxu0
    %v786 = vadd.f32 %v737, %v785
    %v787 = vpop.f32.mrf.mxu0
    %v788 = vadd.f32 %v739, %v787
    %789 = vmatmul.bf16.gmra.mxu0 %v577
    %v790 = vpop.f32.mrf.mxu0
    %v791 = vadd.f32 %v742, %v790
    %v792 = vpop.f32.mrf.mxu0
    %v793 = vadd.f32 %v744, %v792
    %794 = vmatmul.bf16.gmra.mxu0 %v579
    %v795 = vpop.f32.mrf.mxu0
    %v796 = vadd.f32 %v747, %v795
    %v797 = vpop.f32.mrf.mxu0
    %v798 = vadd.f32 %v749, %v797
    %799 = vmatmul.bf16.gmra.mxu0 %v581
    %v800 = vpop.f32.mrf.mxu0
    %v801 = vadd.f32 %v752, %v800
    %v802 = vpop.f32.mrf.mxu0
    %v803 = vadd.f32 %v754, %v802
    %804 = vmatmul.bf16.gmra.mxu0 %v583
    %v805 = vpop.f32.mrf.mxu0
    %v806 = vadd.f32 %v757, %v805
    %v807 = vpop.f32.mrf.mxu0
    %v808 = vadd.f32 %v759, %v807
    %809 = vdwg.mxu0
    %810 = vst [vmem:[#allocation2 + $0x10] sm:$0xff] %v771
    %811 = vst [vmem:[#allocation2 + $0x18] sm:$0xff] %v773
    %812 = vst [vmem:[#allocation2 + $0x20] sm:$0xff] %v776
    %813 = vst [vmem:[#allocation2 + $0x28] sm:$0xff] %v778
    %814 = vst [vmem:[#allocation2 + $0x30] sm:$0xff] %v781
    %815 = vst [vmem:[#allocation2 + $0x38] sm:$0xff] %v783
    %816 = vst [vmem:[#allocation2 + $0x40] sm:$0xff] %v786
    %817 = vst [vmem:[#allocation2 + $0x48] sm:$0xff] %v788
    %818 = vst [vmem:[#allocation2 + $0x50] sm:$0xff] %v791
    %819 = vst [vmem:[#allocation2 + $0x58] sm:$0xff] %v793
    %820 = vst [vmem:[#allocation2 + $0x60] sm:$0xff] %v796
    %821 = vst [vmem:[#allocation2 + $0x68] sm:$0xff] %v798
    %822 = vst [vmem:[#allocation2 + $0x70] sm:$0xff] %v801
    %823 = vst [vmem:[#allocation2 + $0x78] sm:$0xff] %v803
    %824 = vst [vmem:[#allocation2 + $0x80] sm:$0xff] %v806
    %825 = vst [vmem:[#allocation2 + $0x88] sm:$0xff] %v808
    %v826 = vld [vmem:[#allocation2 + $0x7] sm:$0xff]
    %v827 = vld [vmem:[#allocation2 + $0xf] sm:$0xff]
    %v828 = vld [vmem:[#allocation2 + $0x17] sm:$0xff]
    %v829 = vld [vmem:[#allocation2 + $0x1f] sm:$0xff]
    %v830 = vld [vmem:[#allocation2 + $0x27] sm:$0xff]
    %v831 = vld [vmem:[#allocation2 + $0x2f] sm:$0xff]
    %v832 = vld [vmem:[#allocation2 + $0x37] sm:$0xff]
    %v833 = vld [vmem:[#allocation2 + $0x3f] sm:$0xff]
    %v834 = vld [vmem:[#allocation2 + $0x47] sm:$0xff]
    %v835 = vld [vmem:[#allocation2 + $0x4f] sm:$0xff]
    %v836 = vld [vmem:[#allocation2 + $0x57] sm:$0xff]
    %v837 = vld [vmem:[#allocation2 + $0x5f] sm:$0xff]
    %v838 = vld [vmem:[#allocation2 + $0x67] sm:$0xff]
    %v839 = vld [vmem:[#allocation2 + $0x6f] sm:$0xff]
    %v840 = vld [vmem:[#allocation2 + $0x77] sm:$0xff]
    %v841 = vld [vmem:[#allocation2 + $0x7f] sm:$0xff]
    %v842 = vpack.c.bf16 %v827, %v826
    %v843 = vpack.c.bf16 %v829, %v828
    %v844 = vpack.c.bf16 %v831, %v830
    %v845 = vpack.c.bf16 %v833, %v832
    %v846 = vpack.c.bf16 %v835, %v834
    %v847 = vpack.c.bf16 %v837, %v836
    %v848 = vpack.c.bf16 %v839, %v838
    %v849 = vpack.c.bf16 %v841, %v840
    %v850 = vld [vmem:[#allocation11] sm:$0xf]
    %v851 = vld [vmem:[#allocation11 + $0x4] sm:$0xf]
    %v852 = vld [vmem:[#allocation11 + $0x8] sm:$0xf]
    %v853 = vld [vmem:[#allocation11 + $0xc] sm:$0xf]
    %v854 = vld [vmem:[#allocation11 + $0x10] sm:$0xf]
    %v855 = vld [vmem:[#allocation11 + $0x14] sm:$0xf]
    %v856 = vld [vmem:[#allocation11 + $0x18] sm:$0xf]
    %v857 = vld [vmem:[#allocation11 + $0x1c] sm:$0xf]
    %v858 = vld [vmem:[#allocation11 + $0x20] sm:$0xf]
    %v859 = vld [vmem:[#allocation11 + $0x24] sm:$0xf]
    %v860 = vld [vmem:[#allocation11 + $0x28] sm:$0xf]
    %v861 = vld [vmem:[#allocation11 + $0x2c] sm:$0xf]
    %v862 = vld [vmem:[#allocation11 + $0x30] sm:$0xf]
    %v863 = vld [vmem:[#allocation11 + $0x34] sm:$0xf]
    %v864 = vld [vmem:[#allocation11 + $0x38] sm:$0xf]
    %v865 = vld [vmem:[#allocation11 + $0x3c] sm:$0xf]
    %v882 = vunpack.c.l.b16 %v850
    %v883 = vunpack.c.l.b16 %v851
    %v884 = vunpack.c.l.b16 %v852
    %v885 = vunpack.c.l.b16 %v853
    %v886 = vunpack.c.l.b16 %v854
    %v887 = vunpack.c.l.b16 %v855
    %v888 = vunpack.c.l.b16 %v856
    %v889 = vunpack.c.l.b16 %v857
    %v890 = vunpack.c.l.b16 %v858
    %v891 = vunpack.c.l.b16 %v859
    %v892 = vunpack.c.l.b16 %v860
    %v893 = vunpack.c.l.b16 %v861
    %v894 = vunpack.c.l.b16 %v862
    %v895 = vunpack.c.l.b16 %v863
    %v896 = vunpack.c.l.b16 %v864
    %v897 = vunpack.c.l.b16 %v865
    %v898 = vpack.c.b16 %v883, %v882
    %v899 = vpack.c.b16 %v885, %v884
    %v900 = vpack.c.b16 %v887, %v886
    %v901 = vpack.c.b16 %v889, %v888
    %v902 = vpack.c.b16 %v891, %v890
    %v903 = vpack.c.b16 %v893, %v892
    %v904 = vpack.c.b16 %v895, %v894
    %v905 = vpack.c.b16 %v897, %v896
    %914 = vmatpush.bf16.msra.mxu0 %v905
    %915 = vmatpush.bf16.msra.mxu0 %v904
    %916 = vmatpush.bf16.msra.mxu0 %v903
    %917 = vmatpush.bf16.msra.mxu0 %v902
    %918 = vmatpush.bf16.msra.mxu0 %v901
    %919 = vmatpush.bf16.msra.mxu0 %v900
    %920 = vmatpush.bf16.msra.mxu0 %v899
    %921 = vmatpush.bf16.msra.mxu0 %v898
    %922 = vmatmul.bf16.gmra.mxu0 %v842
    %v923 = vpop.f32.mrf.mxu0
    %v924 = vadd.f32 0.0, %v923
    %v925 = vpop.f32.mrf.mxu0
    %v926 = vadd.f32 0.0, %v925
    %927 = vmatmul.bf16.gmra.mxu0 %v843
    %v928 = vpop.f32.mrf.mxu0
    %v929 = vadd.f32 0.0, %v928
    %v930 = vpop.f32.mrf.mxu0
    %v931 = vadd.f32 0.0, %v930
    %932 = vmatmul.bf16.gmra.mxu0 %v844
    %v933 = vpop.f32.mrf.mxu0
    %v934 = vadd.f32 0.0, %v933
    %v935 = vpop.f32.mrf.mxu0
    %v936 = vadd.f32 0.0, %v935
    %937 = vmatmul.bf16.gmra.mxu0 %v845
    %v938 = vpop.f32.mrf.mxu0
    %v939 = vadd.f32 0.0, %v938
    %v940 = vpop.f32.mrf.mxu0
    %v941 = vadd.f32 0.0, %v940
    %942 = vmatmul.bf16.gmra.mxu0 %v846
    %v943 = vpop.f32.mrf.mxu0
    %v944 = vadd.f32 0.0, %v943
    %v945 = vpop.f32.mrf.mxu0
    %v946 = vadd.f32 0.0, %v945
    %947 = vmatmul.bf16.gmra.mxu0 %v847
    %v948 = vpop.f32.mrf.mxu0
    %v949 = vadd.f32 0.0, %v948
    %v950 = vpop.f32.mrf.mxu0
    %v951 = vadd.f32 0.0, %v950
    %952 = vmatmul.bf16.gmra.mxu0 %v848
    %v953 = vpop.f32.mrf.mxu0
    %v954 = vadd.f32 0.0, %v953
    %v955 = vpop.f32.mrf.mxu0
    %v956 = vadd.f32 0.0, %v955
    %957 = vmatmul.bf16.gmra.mxu0 %v849
    %v958 = vpop.f32.mrf.mxu0
    %v959 = vadd.f32 0.0, %v958
    %v960 = vpop.f32.mrf.mxu0
    %v961 = vadd.f32 0.0, %v960
    %962 = vdwg.mxu0
    %v963 = vld [vmem:[#allocation14] sm:$0xff]
    %v964 = vld [vmem:[#allocation14 + $0x8] sm:$0xff]
    %v965 = vld [vmem:[#allocation14 + $0x10] sm:$0xff]
    %v966 = vld [vmem:[#allocation14 + $0x18] sm:$0xff]
    %v967 = vld [vmem:[#allocation14 + $0x20] sm:$0xff]
    %v968 = vld [vmem:[#allocation14 + $0x28] sm:$0xff]
    %v969 = vld [vmem:[#allocation14 + $0x30] sm:$0xff]
    %v970 = vld [vmem:[#allocation14 + $0x38] sm:$0xff]
    %v971 = vld [vmem:[#allocation14 + $0x40] sm:$0xff]
    %v972 = vld [vmem:[#allocation14 + $0x48] sm:$0xff]
    %v973 = vld [vmem:[#allocation14 + $0x50] sm:$0xff]
    %v974 = vld [vmem:[#allocation14 + $0x58] sm:$0xff]
    %v975 = vld [vmem:[#allocation14 + $0x60] sm:$0xff]
    %v976 = vld [vmem:[#allocation14 + $0x68] sm:$0xff]
    %v977 = vld [vmem:[#allocation14 + $0x70] sm:$0xff]
    %v978 = vld [vmem:[#allocation14 + $0x78] sm:$0xff]
    %v979 = vmul.f32 %v963, %v924
    %v980 = vmul.f32 %v964, %v926
    %v981 = vmul.f32 %v965, %v929
    %v982 = vmul.f32 %v966, %v931
    %v983 = vmul.f32 %v967, %v934
    %v984 = vmul.f32 %v968, %v936
    %v985 = vmul.f32 %v969, %v939
    %v986 = vmul.f32 %v970, %v941
    %v987 = vmul.f32 %v971, %v944
    %v988 = vmul.f32 %v972, %v946
    %v989 = vmul.f32 %v973, %v949
    %v990 = vmul.f32 %v974, %v951
    %v991 = vmul.f32 %v975, %v954
    %v992 = vmul.f32 %v976, %v956
    %v993 = vmul.f32 %v977, %v959
    %v994 = vmul.f32 %v978, %v961
    %v995 = vadd.f32 %v979, 0.0
    %v996 = vadd.f32 %v980, 0.0
    %v997 = vadd.f32 %v981, 0.0
    %v998 = vadd.f32 %v982, 0.0
    %v999 = vadd.f32 %v983, 0.0
    %v1000 = vadd.f32 %v984, 0.0
    %v1001 = vadd.f32 %v985, 0.0
    %v1002 = vadd.f32 %v986, 0.0
    %v1003 = vadd.f32 %v987, 0.0
    %v1004 = vadd.f32 %v988, 0.0
    %v1005 = vadd.f32 %v989, 0.0
    %v1006 = vadd.f32 %v990, 0.0
    %v1007 = vadd.f32 %v991, 0.0
    %v1008 = vadd.f32 %v992, 0.0
    %v1009 = vadd.f32 %v993, 0.0
    %v1010 = vadd.f32 %v994, 0.0
    %v1011 = vld [vmem:[#allocation2 + $0x8] sm:$0xff]
    %v1012 = vld [vmem:[#allocation2 + $0x10] sm:$0xff]
    %v1013 = vld [vmem:[#allocation2 + $0x18] sm:$0xff]
    %v1014 = vld [vmem:[#allocation2 + $0x20] sm:$0xff]
    %v1015 = vld [vmem:[#allocation2 + $0x28] sm:$0xff]
    %v1016 = vld [vmem:[#allocation2 + $0x30] sm:$0xff]
    %v1017 = vld [vmem:[#allocation2 + $0x38] sm:$0xff]
    %v1018 = vld [vmem:[#allocation2 + $0x40] sm:$0xff]
    %v1019 = vld [vmem:[#allocation2 + $0x48] sm:$0xff]
    %v1020 = vld [vmem:[#allocation2 + $0x50] sm:$0xff]
    %v1021 = vld [vmem:[#allocation2 + $0x58] sm:$0xff]
    %v1022 = vld [vmem:[#allocation2 + $0x60] sm:$0xff]
    %v1023 = vld [vmem:[#allocation2 + $0x68] sm:$0xff]
    %v1024 = vld [vmem:[#allocation2 + $0x70] sm:$0xff]
    %v1025 = vld [vmem:[#allocation2 + $0x78] sm:$0xff]
    %v1026 = vld [vmem:[#allocation2 + $0x80] sm:$0xff]
    %v1027 = vpack.c.bf16 %v1012, %v1011
    %v1028 = vpack.c.bf16 %v1014, %v1013
    %v1029 = vpack.c.bf16 %v1016, %v1015
    %v1030 = vpack.c.bf16 %v1018, %v1017
    %v1031 = vpack.c.bf16 %v1020, %v1019
    %v1032 = vpack.c.bf16 %v1022, %v1021
    %v1033 = vpack.c.bf16 %v1024, %v1023
    %v1034 = vpack.c.bf16 %v1026, %v1025
    %s1035 = scalar_lea.vmem [#allocation11], 64
    %v1036 = vld [vmem:[%s1035] sm:$0xf]
    %v1037 = vld [vmem:[%s1035 + $0x4] sm:$0xf]
    %v1038 = vld [vmem:[%s1035 + $0x8] sm:$0xf]
    %v1039 = vld [vmem:[%s1035 + $0xc] sm:$0xf]
    %v1040 = vld [vmem:[%s1035 + $0x10] sm:$0xf]
    %v1041 = vld [vmem:[%s1035 + $0x14] sm:$0xf]
    %v1042 = vld [vmem:[%s1035 + $0x18] sm:$0xf]
    %v1043 = vld [vmem:[%s1035 + $0x1c] sm:$0xf]
    %v1044 = vld [vmem:[%s1035 + $0x20] sm:$0xf]
    %v1045 = vld [vmem:[%s1035 + $0x24] sm:$0xf]
    %v1046 = vld [vmem:[%s1035 + $0x28] sm:$0xf]
    %v1047 = vld [vmem:[%s1035 + $0x2c] sm:$0xf]
    %v1048 = vld [vmem:[%s1035 + $0x30] sm:$0xf]
    %v1049 = vld [vmem:[%s1035 + $0x34] sm:$0xf]
    %v1050 = vld [vmem:[%s1035 + $0x38] sm:$0xf]
    %v1051 = vld [vmem:[%s1035 + $0x3c] sm:$0xf]
    %v1068 = vunpack.c.l.b16 %v1036
    %v1069 = vunpack.c.l.b16 %v1037
    %v1070 = vunpack.c.l.b16 %v1038
    %v1071 = vunpack.c.l.b16 %v1039
    %v1072 = vunpack.c.l.b16 %v1040
    %v1073 = vunpack.c.l.b16 %v1041
    %v1074 = vunpack.c.l.b16 %v1042
    %v1075 = vunpack.c.l.b16 %v1043
    %v1076 = vunpack.c.l.b16 %v1044
    %v1077 = vunpack.c.l.b16 %v1045
    %v1078 = vunpack.c.l.b16 %v1046
    %v1079 = vunpack.c.l.b16 %v1047
    %v1080 = vunpack.c.l.b16 %v1048
    %v1081 = vunpack.c.l.b16 %v1049
    %v1082 = vunpack.c.l.b16 %v1050
    %v1083 = vunpack.c.l.b16 %v1051
    %v1084 = vpack.c.b16 %v1069, %v1068
    %v1085 = vpack.c.b16 %v1071, %v1070
    %v1086 = vpack.c.b16 %v1073, %v1072
    %v1087 = vpack.c.b16 %v1075, %v1074
    %v1088 = vpack.c.b16 %v1077, %v1076
    %v1089 = vpack.c.b16 %v1079, %v1078
    %v1090 = vpack.c.b16 %v1081, %v1080
    %v1091 = vpack.c.b16 %v1083, %v1082
    %1100 = vmatpush.bf16.msra.mxu0 %v1091
    %1101 = vmatpush.bf16.msra.mxu0 %v1090
    %1102 = vmatpush.bf16.msra.mxu0 %v1089
    %1103 = vmatpush.bf16.msra.mxu0 %v1088
    %1104 = vmatpush.bf16.msra.mxu0 %v1087
    %1105 = vmatpush.bf16.msra.mxu0 %v1086
    %1106 = vmatpush.bf16.msra.mxu0 %v1085
    %1107 = vmatpush.bf16.msra.mxu0 %v1084
    %1108 = vmatmul.bf16.gmra.mxu0 %v1027
    %v1109 = vpop.f32.mrf.mxu0
    %v1110 = vadd.f32 0.0, %v1109
    %v1111 = vpop.f32.mrf.mxu0
    %v1112 = vadd.f32 0.0, %v1111
    %1113 = vmatmul.bf16.gmra.mxu0 %v1028
    %v1114 = vpop.f32.mrf.mxu0
    %v1115 = vadd.f32 0.0, %v1114
    %v1116 = vpop.f32.mrf.mxu0
    %v1117 = vadd.f32 0.0, %v1116
    %1118 = vmatmul.bf16.gmra.mxu0 %v1029
    %v1119 = vpop.f32.mrf.mxu0
    %v1120 = vadd.f32 0.0, %v1119
    %v1121 = vpop.f32.mrf.mxu0
    %v1122 = vadd.f32 0.0, %v1121
    %1123 = vmatmul.bf16.gmra.mxu0 %v1030
    %v1124 = vpop.f32.mrf.mxu0
    %v1125 = vadd.f32 0.0, %v1124
    %v1126 = vpop.f32.mrf.mxu0
    %v1127 = vadd.f32 0.0, %v1126
    %1128 = vmatmul.bf16.gmra.mxu0 %v1031
    %v1129 = vpop.f32.mrf.mxu0
    %v1130 = vadd.f32 0.0, %v1129
    %v1131 = vpop.f32.mrf.mxu0
    %v1132 = vadd.f32 0.0, %v1131
    %1133 = vmatmul.bf16.gmra.mxu0 %v1032
    %v1134 = vpop.f32.mrf.mxu0
    %v1135 = vadd.f32 0.0, %v1134
    %v1136 = vpop.f32.mrf.mxu0
    %v1137 = vadd.f32 0.0, %v1136
    %1138 = vmatmul.bf16.gmra.mxu0 %v1033
    %v1139 = vpop.f32.mrf.mxu0
    %v1140 = vadd.f32 0.0, %v1139
    %v1141 = vpop.f32.mrf.mxu0
    %v1142 = vadd.f32 0.0, %v1141
    %1143 = vmatmul.bf16.gmra.mxu0 %v1034
    %v1144 = vpop.f32.mrf.mxu0
    %v1145 = vadd.f32 0.0, %v1144
    %v1146 = vpop.f32.mrf.mxu0
    %v1147 = vadd.f32 0.0, %v1146
    %1148 = vdwg.mxu0
    %s1149 = scalar_lea.vmem [#allocation14], 128
    %v1150 = vld [vmem:[%s1149] sm:$0xff]
    %v1151 = vld [vmem:[%s1149 + $0x8] sm:$0xff]
    %v1152 = vld [vmem:[%s1149 + $0x10] sm:$0xff]
    %v1153 = vld [vmem:[%s1149 + $0x18] sm:$0xff]
    %v1154 = vld [vmem:[%s1149 + $0x20] sm:$0xff]
    %v1155 = vld [vmem:[%s1149 + $0x28] sm:$0xff]
    %v1156 = vld [vmem:[%s1149 + $0x30] sm:$0xff]
    %v1157 = vld [vmem:[%s1149 + $0x38] sm:$0xff]
    %v1158 = vld [vmem:[%s1149 + $0x40] sm:$0xff]
    %v1159 = vld [vmem:[%s1149 + $0x48] sm:$0xff]
    %v1160 = vld [vmem:[%s1149 + $0x50] sm:$0xff]
    %v1161 = vld [vmem:[%s1149 + $0x58] sm:$0xff]
    %v1162 = vld [vmem:[%s1149 + $0x60] sm:$0xff]
    %v1163 = vld [vmem:[%s1149 + $0x68] sm:$0xff]
    %v1164 = vld [vmem:[%s1149 + $0x70] sm:$0xff]
    %v1165 = vld [vmem:[%s1149 + $0x78] sm:$0xff]
    %v1166 = vmul.f32 %v1150, %v1110
    %v1167 = vmul.f32 %v1151, %v1112
    %v1168 = vmul.f32 %v1152, %v1115
    %v1169 = vmul.f32 %v1153, %v1117
    %v1170 = vmul.f32 %v1154, %v1120
    %v1171 = vmul.f32 %v1155, %v1122
    %v1172 = vmul.f32 %v1156, %v1125
    %v1173 = vmul.f32 %v1157, %v1127
    %v1174 = vmul.f32 %v1158, %v1130
    %v1175 = vmul.f32 %v1159, %v1132
    %v1176 = vmul.f32 %v1160, %v1135
    %v1177 = vmul.f32 %v1161, %v1137
    %v1178 = vmul.f32 %v1162, %v1140
    %v1179 = vmul.f32 %v1163, %v1142
    %v1180 = vmul.f32 %v1164, %v1145
    %v1181 = vmul.f32 %v1165, %v1147
    %v1182 = vadd.f32 %v995, %v1166
    %v1183 = vadd.f32 %v996, %v1167
    %v1184 = vadd.f32 %v997, %v1168
    %v1185 = vadd.f32 %v998, %v1169
    %v1186 = vadd.f32 %v999, %v1170
    %v1187 = vadd.f32 %v1000, %v1171
    %v1188 = vadd.f32 %v1001, %v1172
    %v1189 = vadd.f32 %v1002, %v1173
    %v1190 = vadd.f32 %v1003, %v1174
    %v1191 = vadd.f32 %v1004, %v1175
    %v1192 = vadd.f32 %v1005, %v1176
    %v1193 = vadd.f32 %v1006, %v1177
    %v1194 = vadd.f32 %v1007, %v1178
    %v1195 = vadd.f32 %v1008, %v1179
    %v1196 = vadd.f32 %v1009, %v1180
    %v1197 = vadd.f32 %v1010, %v1181
    %v1198 = vld [vmem:[#allocation2 + $0x9] sm:$0xff]
    %v1199 = vld [vmem:[#allocation2 + $0x11] sm:$0xff]
    %v1200 = vld [vmem:[#allocation2 + $0x19] sm:$0xff]
    %v1201 = vld [vmem:[#allocation2 + $0x21] sm:$0xff]
    %v1202 = vld [vmem:[#allocation2 + $0x29] sm:$0xff]
    %v1203 = vld [vmem:[#allocation2 + $0x31] sm:$0xff]
    %v1204 = vld [vmem:[#allocation2 + $0x39] sm:$0xff]
    %v1205 = vld [vmem:[#allocation2 + $0x41] sm:$0xff]
    %v1206 = vld [vmem:[#allocation2 + $0x49] sm:$0xff]
    %v1207 = vld [vmem:[#allocation2 + $0x51] sm:$0xff]
    %v1208 = vld [vmem:[#allocation2 + $0x59] sm:$0xff]
    %v1209 = vld [vmem:[#allocation2 + $0x61] sm:$0xff]
    %v1210 = vld [vmem:[#allocation2 + $0x69] sm:$0xff]
    %v1211 = vld [vmem:[#allocation2 + $0x71] sm:$0xff]
    %v1212 = vld [vmem:[#allocation2 + $0x79] sm:$0xff]
    %v1213 = vld [vmem:[#allocation2 + $0x81] sm:$0xff]
    %v1214 = vpack.c.bf16 %v1199, %v1198
    %v1215 = vpack.c.bf16 %v1201, %v1200
    %v1216 = vpack.c.bf16 %v1203, %v1202
    %v1217 = vpack.c.bf16 %v1205, %v1204
    %v1218 = vpack.c.bf16 %v1207, %v1206
    %v1219 = vpack.c.bf16 %v1209, %v1208
    %v1220 = vpack.c.bf16 %v1211, %v1210
    %v1221 = vpack.c.bf16 %v1213, %v1212
    %s1222 = scalar_lea.vmem [#allocation11], 128
    %v1223 = vld [vmem:[%s1222] sm:$0xf]
    %v1224 = vld [vmem:[%s1222 + $0x4] sm:$0xf]
    %v1225 = vld [vmem:[%s1222 + $0x8] sm:$0xf]
    %v1226 = vld [vmem:[%s1222 + $0xc] sm:$0xf]
    %v1227 = vld [vmem:[%s1222 + $0x10] sm:$0xf]
    %v1228 = vld [vmem:[%s1222 + $0x14] sm:$0xf]
    %v1229 = vld [vmem:[%s1222 + $0x18] sm:$0xf]
    %v1230 = vld [vmem:[%s1222 + $0x1c] sm:$0xf]
    %v1231 = vld [vmem:[%s1222 + $0x20] sm:$0xf]
    %v1232 = vld [vmem:[%s1222 + $0x24] sm:$0xf]
    %v1233 = vld [vmem:[%s1222 + $0x28] sm:$0xf]
    %v1234 = vld [vmem:[%s1222 + $0x2c] sm:$0xf]
    %v1235 = vld [vmem:[%s1222 + $0x30] sm:$0xf]
    %v1236 = vld [vmem:[%s1222 + $0x34] sm:$0xf]
    %v1237 = vld [vmem:[%s1222 + $0x38] sm:$0xf]
    %v1238 = vld [vmem:[%s1222 + $0x3c] sm:$0xf]
    %v1255 = vunpack.c.l.b16 %v1223
    %v1256 = vunpack.c.l.b16 %v1224
    %v1257 = vunpack.c.l.b16 %v1225
    %v1258 = vunpack.c.l.b16 %v1226
    %v1259 = vunpack.c.l.b16 %v1227
    %v1260 = vunpack.c.l.b16 %v1228
    %v1261 = vunpack.c.l.b16 %v1229
    %v1262 = vunpack.c.l.b16 %v1230
    %v1263 = vunpack.c.l.b16 %v1231
    %v1264 = vunpack.c.l.b16 %v1232
    %v1265 = vunpack.c.l.b16 %v1233
    %v1266 = vunpack.c.l.b16 %v1234
    %v1267 = vunpack.c.l.b16 %v1235
    %v1268 = vunpack.c.l.b16 %v1236
    %v1269 = vunpack.c.l.b16 %v1237
    %v1270 = vunpack.c.l.b16 %v1238
    %v1271 = vpack.c.b16 %v1256, %v1255
    %v1272 = vpack.c.b16 %v1258, %v1257
    %v1273 = vpack.c.b16 %v1260, %v1259
    %v1274 = vpack.c.b16 %v1262, %v1261
    %v1275 = vpack.c.b16 %v1264, %v1263
    %v1276 = vpack.c.b16 %v1266, %v1265
    %v1277 = vpack.c.b16 %v1268, %v1267
    %v1278 = vpack.c.b16 %v1270, %v1269
    %1287 = vmatpush.bf16.msra.mxu0 %v1278
    %1288 = vmatpush.bf16.msra.mxu0 %v1277
    %1289 = vmatpush.bf16.msra.mxu0 %v1276
    %1290 = vmatpush.bf16.msra.mxu0 %v1275
    %1291 = vmatpush.bf16.msra.mxu0 %v1274
    %1292 = vmatpush.bf16.msra.mxu0 %v1273
    %1293 = vmatpush.bf16.msra.mxu0 %v1272
    %1294 = vmatpush.bf16.msra.mxu0 %v1271
    %1295 = vmatmul.bf16.gmra.mxu0 %v1214
    %v1296 = vpop.f32.mrf.mxu0
    %v1297 = vadd.f32 0.0, %v1296
    %v1298 = vpop.f32.mrf.mxu0
    %v1299 = vadd.f32 0.0, %v1298
    %1300 = vmatmul.bf16.gmra.mxu0 %v1215
    %v1301 = vpop.f32.mrf.mxu0
    %v1302 = vadd.f32 0.0, %v1301
    %v1303 = vpop.f32.mrf.mxu0
    %v1304 = vadd.f32 0.0, %v1303
    %1305 = vmatmul.bf16.gmra.mxu0 %v1216
    %v1306 = vpop.f32.mrf.mxu0
    %v1307 = vadd.f32 0.0, %v1306
    %v1308 = vpop.f32.mrf.mxu0
    %v1309 = vadd.f32 0.0, %v1308
    %1310 = vmatmul.bf16.gmra.mxu0 %v1217
    %v1311 = vpop.f32.mrf.mxu0
    %v1312 = vadd.f32 0.0, %v1311
    %v1313 = vpop.f32.mrf.mxu0
    %v1314 = vadd.f32 0.0, %v1313
    %1315 = vmatmul.bf16.gmra.mxu0 %v1218
    %v1316 = vpop.f32.mrf.mxu0
    %v1317 = vadd.f32 0.0, %v1316
    %v1318 = vpop.f32.mrf.mxu0
    %v1319 = vadd.f32 0.0, %v1318
    %1320 = vmatmul.bf16.gmra.mxu0 %v1219
    %v1321 = vpop.f32.mrf.mxu0
    %v1322 = vadd.f32 0.0, %v1321
    %v1323 = vpop.f32.mrf.mxu0
    %v1324 = vadd.f32 0.0, %v1323
    %1325 = vmatmul.bf16.gmra.mxu0 %v1220
    %v1326 = vpop.f32.mrf.mxu0
    %v1327 = vadd.f32 0.0, %v1326
    %v1328 = vpop.f32.mrf.mxu0
    %v1329 = vadd.f32 0.0, %v1328
    %1330 = vmatmul.bf16.gmra.mxu0 %v1221
    %v1331 = vpop.f32.mrf.mxu0
    %v1332 = vadd.f32 0.0, %v1331
    %v1333 = vpop.f32.mrf.mxu0
    %v1334 = vadd.f32 0.0, %v1333
    %1335 = vdwg.mxu0
    %s1336 = scalar_lea.vmem [#allocation14], 256
    %v1337 = vld [vmem:[%s1336] sm:$0xff]
    %v1338 = vld [vmem:[%s1336 + $0x8] sm:$0xff]
    %v1339 = vld [vmem:[%s1336 + $0x10] sm:$0xff]
    %v1340 = vld [vmem:[%s1336 + $0x18] sm:$0xff]
    %v1341 = vld [vmem:[%s1336 + $0x20] sm:$0xff]
    %v1342 = vld [vmem:[%s1336 + $0x28] sm:$0xff]
    %v1343 = vld [vmem:[%s1336 + $0x30] sm:$0xff]
    %v1344 = vld [vmem:[%s1336 + $0x38] sm:$0xff]
    %v1345 = vld [vmem:[%s1336 + $0x40] sm:$0xff]
    %v1346 = vld [vmem:[%s1336 + $0x48] sm:$0xff]
    %v1347 = vld [vmem:[%s1336 + $0x50] sm:$0xff]
    %v1348 = vld [vmem:[%s1336 + $0x58] sm:$0xff]
    %v1349 = vld [vmem:[%s1336 + $0x60] sm:$0xff]
    %v1350 = vld [vmem:[%s1336 + $0x68] sm:$0xff]
    %v1351 = vld [vmem:[%s1336 + $0x70] sm:$0xff]
    %v1352 = vld [vmem:[%s1336 + $0x78] sm:$0xff]
    %v1353 = vmul.f32 %v1337, %v1297
    %v1354 = vmul.f32 %v1338, %v1299
    %v1355 = vmul.f32 %v1339, %v1302
    %v1356 = vmul.f32 %v1340, %v1304
    %v1357 = vmul.f32 %v1341, %v1307
    %v1358 = vmul.f32 %v1342, %v1309
    %v1359 = vmul.f32 %v1343, %v1312
    %v1360 = vmul.f32 %v1344, %v1314
    %v1361 = vmul.f32 %v1345, %v1317
    %v1362 = vmul.f32 %v1346, %v1319
    %v1363 = vmul.f32 %v1347, %v1322
    %v1364 = vmul.f32 %v1348, %v1324
    %v1365 = vmul.f32 %v1349, %v1327
    %v1366 = vmul.f32 %v1350, %v1329
    %v1367 = vmul.f32 %v1351, %v1332
    %v1368 = vmul.f32 %v1352, %v1334
    %v1369 = vadd.f32 %v1182, %v1353
    %v1370 = vadd.f32 %v1183, %v1354
    %v1371 = vadd.f32 %v1184, %v1355
    %v1372 = vadd.f32 %v1185, %v1356
    %v1373 = vadd.f32 %v1186, %v1357
    %v1374 = vadd.f32 %v1187, %v1358
    %v1375 = vadd.f32 %v1188, %v1359
    %v1376 = vadd.f32 %v1189, %v1360
    %v1377 = vadd.f32 %v1190, %v1361
    %v1378 = vadd.f32 %v1191, %v1362
    %v1379 = vadd.f32 %v1192, %v1363
    %v1380 = vadd.f32 %v1193, %v1364
    %v1381 = vadd.f32 %v1194, %v1365
    %v1382 = vadd.f32 %v1195, %v1366
    %v1383 = vadd.f32 %v1196, %v1367
    %v1384 = vadd.f32 %v1197, %v1368
    %v1385 = vld [vmem:[#allocation2 + $0xf] sm:$0xff]
    %v1386 = vld [vmem:[#allocation2 + $0x17] sm:$0xff]
    %v1387 = vld [vmem:[#allocation2 + $0x1f] sm:$0xff]
    %v1388 = vld [vmem:[#allocation2 + $0x27] sm:$0xff]
    %v1389 = vld [vmem:[#allocation2 + $0x2f] sm:$0xff]
    %v1390 = vld [vmem:[#allocation2 + $0x37] sm:$0xff]
    %v1391 = vld [vmem:[#allocation2 + $0x3f] sm:$0xff]
    %v1392 = vld [vmem:[#allocation2 + $0x47] sm:$0xff]
    %v1393 = vld [vmem:[#allocation2 + $0x4f] sm:$0xff]
    %v1394 = vld [vmem:[#allocation2 + $0x57] sm:$0xff]
    %v1395 = vld [vmem:[#allocation2 + $0x5f] sm:$0xff]
    %v1396 = vld [vmem:[#allocation2 + $0x67] sm:$0xff]
    %v1397 = vld [vmem:[#allocation2 + $0x6f] sm:$0xff]
    %v1398 = vld [vmem:[#allocation2 + $0x77] sm:$0xff]
    %v1399 = vld [vmem:[#allocation2 + $0x7f] sm:$0xff]
    %v1400 = vld [vmem:[#allocation2 + $0x87] sm:$0xff]
    %v1401 = vpack.c.bf16 %v1386, %v1385
    %v1402 = vpack.c.bf16 %v1388, %v1387
    %v1403 = vpack.c.bf16 %v1390, %v1389
    %v1404 = vpack.c.bf16 %v1392, %v1391
    %v1405 = vpack.c.bf16 %v1394, %v1393
    %v1406 = vpack.c.bf16 %v1396, %v1395
    %v1407 = vpack.c.bf16 %v1398, %v1397
    %v1408 = vpack.c.bf16 %v1400, %v1399
    %s1409 = scalar_lea.vmem [#allocation11], 192
    %v1410 = vld [vmem:[%s1409] sm:$0xf]
    %v1411 = vld [vmem:[%s1409 + $0x4] sm:$0xf]
    %v1412 = vld [vmem:[%s1409 + $0x8] sm:$0xf]
    %v1413 = vld [vmem:[%s1409 + $0xc] sm:$0xf]
    %v1414 = vld [vmem:[%s1409 + $0x10] sm:$0xf]
    %v1415 = vld [vmem:[%s1409 + $0x14] sm:$0xf]
    %v1416 = vld [vmem:[%s1409 + $0x18] sm:$0xf]
    %v1417 = vld [vmem:[%s1409 + $0x1c] sm:$0xf]
    %v1418 = vld [vmem:[%s1409 + $0x20] sm:$0xf]
    %v1419 = vld [vmem:[%s1409 + $0x24] sm:$0xf]
    %v1420 = vld [vmem:[%s1409 + $0x28] sm:$0xf]
    %v1421 = vld [vmem:[%s1409 + $0x2c] sm:$0xf]
    %v1422 = vld [vmem:[%s1409 + $0x30] sm:$0xf]
    %v1423 = vld [vmem:[%s1409 + $0x34] sm:$0xf]
    %v1424 = vld [vmem:[%s1409 + $0x38] sm:$0xf]
    %v1425 = vld [vmem:[%s1409 + $0x3c] sm:$0xf]
    %v1442 = vunpack.c.l.b16 %v1410
    %v1443 = vunpack.c.l.b16 %v1411
    %v1444 = vunpack.c.l.b16 %v1412
    %v1445 = vunpack.c.l.b16 %v1413
    %v1446 = vunpack.c.l.b16 %v1414
    %v1447 = vunpack.c.l.b16 %v1415
    %v1448 = vunpack.c.l.b16 %v1416
    %v1449 = vunpack.c.l.b16 %v1417
    %v1450 = vunpack.c.l.b16 %v1418
    %v1451 = vunpack.c.l.b16 %v1419
    %v1452 = vunpack.c.l.b16 %v1420
    %v1453 = vunpack.c.l.b16 %v1421
    %v1454 = vunpack.c.l.b16 %v1422
    %v1455 = vunpack.c.l.b16 %v1423
    %v1456 = vunpack.c.l.b16 %v1424
    %v1457 = vunpack.c.l.b16 %v1425
    %v1458 = vpack.c.b16 %v1443, %v1442
    %v1459 = vpack.c.b16 %v1445, %v1444
    %v1460 = vpack.c.b16 %v1447, %v1446
    %v1461 = vpack.c.b16 %v1449, %v1448
    %v1462 = vpack.c.b16 %v1451, %v1450
    %v1463 = vpack.c.b16 %v1453, %v1452
    %v1464 = vpack.c.b16 %v1455, %v1454
    %v1465 = vpack.c.b16 %v1457, %v1456
    %1474 = vmatpush.bf16.msra.mxu0 %v1465
    %1475 = vmatpush.bf16.msra.mxu0 %v1464
    %1476 = vmatpush.bf16.msra.mxu0 %v1463
    %1477 = vmatpush.bf16.msra.mxu0 %v1462
    %1478 = vmatpush.bf16.msra.mxu0 %v1461
    %1479 = vmatpush.bf16.msra.mxu0 %v1460
    %1480 = vmatpush.bf16.msra.mxu0 %v1459
    %1481 = vmatpush.bf16.msra.mxu0 %v1458
    %1482 = vmatmul.bf16.gmra.mxu0 %v1401
    %v1483 = vpop.f32.mrf.mxu0
    %v1484 = vadd.f32 0.0, %v1483
    %v1485 = vpop.f32.mrf.mxu0
    %v1486 = vadd.f32 0.0, %v1485
    %1487 = vmatmul.bf16.gmra.mxu0 %v1402
    %v1488 = vpop.f32.mrf.mxu0
    %v1489 = vadd.f32 0.0, %v1488
    %v1490 = vpop.f32.mrf.mxu0
    %v1491 = vadd.f32 0.0, %v1490
    %1492 = vmatmul.bf16.gmra.mxu0 %v1403
    %v1493 = vpop.f32.mrf.mxu0
    %v1494 = vadd.f32 0.0, %v1493
    %v1495 = vpop.f32.mrf.mxu0
    %v1496 = vadd.f32 0.0, %v1495
    %1497 = vmatmul.bf16.gmra.mxu0 %v1404
    %v1498 = vpop.f32.mrf.mxu0
    %v1499 = vadd.f32 0.0, %v1498
    %v1500 = vpop.f32.mrf.mxu0
    %v1501 = vadd.f32 0.0, %v1500
    %1502 = vmatmul.bf16.gmra.mxu0 %v1405
    %v1503 = vpop.f32.mrf.mxu0
    %v1504 = vadd.f32 0.0, %v1503
    %v1505 = vpop.f32.mrf.mxu0
    %v1506 = vadd.f32 0.0, %v1505
    %1507 = vmatmul.bf16.gmra.mxu0 %v1406
    %v1508 = vpop.f32.mrf.mxu0
    %v1509 = vadd.f32 0.0, %v1508
    %v1510 = vpop.f32.mrf.mxu0
    %v1511 = vadd.f32 0.0, %v1510
    %1512 = vmatmul.bf16.gmra.mxu0 %v1407
    %v1513 = vpop.f32.mrf.mxu0
    %v1514 = vadd.f32 0.0, %v1513
    %v1515 = vpop.f32.mrf.mxu0
    %v1516 = vadd.f32 0.0, %v1515
    %1517 = vmatmul.bf16.gmra.mxu0 %v1408
    %v1518 = vpop.f32.mrf.mxu0
    %v1519 = vadd.f32 0.0, %v1518
    %v1520 = vpop.f32.mrf.mxu0
    %v1521 = vadd.f32 0.0, %v1520
    %1522 = vdwg.mxu0
    %s1523 = scalar_lea.vmem [#allocation14], 384
    %v1524 = vld [vmem:[%s1523] sm:$0xff]
    %v1525 = vld [vmem:[%s1523 + $0x8] sm:$0xff]
    %v1526 = vld [vmem:[%s1523 + $0x10] sm:$0xff]
    %v1527 = vld [vmem:[%s1523 + $0x18] sm:$0xff]
    %v1528 = vld [vmem:[%s1523 + $0x20] sm:$0xff]
    %v1529 = vld [vmem:[%s1523 + $0x28] sm:$0xff]
    %v1530 = vld [vmem:[%s1523 + $0x30] sm:$0xff]
    %v1531 = vld [vmem:[%s1523 + $0x38] sm:$0xff]
    %v1532 = vld [vmem:[%s1523 + $0x40] sm:$0xff]
    %v1533 = vld [vmem:[%s1523 + $0x48] sm:$0xff]
    %v1534 = vld [vmem:[%s1523 + $0x50] sm:$0xff]
    %v1535 = vld [vmem:[%s1523 + $0x58] sm:$0xff]
    %v1536 = vld [vmem:[%s1523 + $0x60] sm:$0xff]
    %v1537 = vld [vmem:[%s1523 + $0x68] sm:$0xff]
    %v1538 = vld [vmem:[%s1523 + $0x70] sm:$0xff]
    %v1539 = vld [vmem:[%s1523 + $0x78] sm:$0xff]
    %v1540 = vmul.f32 %v1524, %v1484
    %v1541 = vmul.f32 %v1525, %v1486
    %v1542 = vmul.f32 %v1526, %v1489
    %v1543 = vmul.f32 %v1527, %v1491
    %v1544 = vmul.f32 %v1528, %v1494
    %v1545 = vmul.f32 %v1529, %v1496
    %v1546 = vmul.f32 %v1530, %v1499
    %v1547 = vmul.f32 %v1531, %v1501
    %v1548 = vmul.f32 %v1532, %v1504
    %v1549 = vmul.f32 %v1533, %v1506
    %v1550 = vmul.f32 %v1534, %v1509
    %v1551 = vmul.f32 %v1535, %v1511
    %v1552 = vmul.f32 %v1536, %v1514
    %v1553 = vmul.f32 %v1537, %v1516
    %v1554 = vmul.f32 %v1538, %v1519
    %v1555 = vmul.f32 %v1539, %v1521
    %v1556 = vadd.f32 %v1369, %v1540
    %v1557 = vadd.f32 %v1370, %v1541
    %v1558 = vadd.f32 %v1371, %v1542
    %v1559 = vadd.f32 %v1372, %v1543
    %v1560 = vadd.f32 %v1373, %v1544
    %v1561 = vadd.f32 %v1374, %v1545
    %v1562 = vadd.f32 %v1375, %v1546
    %v1563 = vadd.f32 %v1376, %v1547
    %v1564 = vadd.f32 %v1377, %v1548
    %v1565 = vadd.f32 %v1378, %v1549
    %v1566 = vadd.f32 %v1379, %v1550
    %v1567 = vadd.f32 %v1380, %v1551
    %v1568 = vadd.f32 %v1381, %v1552
    %v1569 = vadd.f32 %v1382, %v1553
    %v1570 = vadd.f32 %v1383, %v1554
    %v1571 = vadd.f32 %v1384, %v1555
    %v1572 = vld [vmem:[#allocation2 + $0x10] sm:$0xff]
    %v1573 = vld [vmem:[#allocation2 + $0x18] sm:$0xff]
    %v1574 = vld [vmem:[#allocation2 + $0x20] sm:$0xff]
    %v1575 = vld [vmem:[#allocation2 + $0x28] sm:$0xff]
    %v1576 = vld [vmem:[#allocation2 + $0x30] sm:$0xff]
    %v1577 = vld [vmem:[#allocation2 + $0x38] sm:$0xff]
    %v1578 = vld [vmem:[#allocation2 + $0x40] sm:$0xff]
    %v1579 = vld [vmem:[#allocation2 + $0x48] sm:$0xff]
    %v1580 = vld [vmem:[#allocation2 + $0x50] sm:$0xff]
    %v1581 = vld [vmem:[#allocation2 + $0x58] sm:$0xff]
    %v1582 = vld [vmem:[#allocation2 + $0x60] sm:$0xff]
    %v1583 = vld [vmem:[#allocation2 + $0x68] sm:$0xff]
    %v1584 = vld [vmem:[#allocation2 + $0x70] sm:$0xff]
    %v1585 = vld [vmem:[#allocation2 + $0x78] sm:$0xff]
    %v1586 = vld [vmem:[#allocation2 + $0x80] sm:$0xff]
    %v1587 = vld [vmem:[#allocation2 + $0x88] sm:$0xff]
    %v1588 = vpack.c.bf16 %v1573, %v1572
    %v1589 = vpack.c.bf16 %v1575, %v1574
    %v1590 = vpack.c.bf16 %v1577, %v1576
    %v1591 = vpack.c.bf16 %v1579, %v1578
    %v1592 = vpack.c.bf16 %v1581, %v1580
    %v1593 = vpack.c.bf16 %v1583, %v1582
    %v1594 = vpack.c.bf16 %v1585, %v1584
    %v1595 = vpack.c.bf16 %v1587, %v1586
    %s1596 = scalar_lea.vmem [#allocation11], 256
    %v1597 = vld [vmem:[%s1596] sm:$0xf]
    %v1598 = vld [vmem:[%s1596 + $0x4] sm:$0xf]
    %v1599 = vld [vmem:[%s1596 + $0x8] sm:$0xf]
    %v1600 = vld [vmem:[%s1596 + $0xc] sm:$0xf]
    %v1601 = vld [vmem:[%s1596 + $0x10] sm:$0xf]
    %v1602 = vld [vmem:[%s1596 + $0x14] sm:$0xf]
    %v1603 = vld [vmem:[%s1596 + $0x18] sm:$0xf]
    %v1604 = vld [vmem:[%s1596 + $0x1c] sm:$0xf]
    %v1605 = vld [vmem:[%s1596 + $0x20] sm:$0xf]
    %v1606 = vld [vmem:[%s1596 + $0x24] sm:$0xf]
    %v1607 = vld [vmem:[%s1596 + $0x28] sm:$0xf]
    %v1608 = vld [vmem:[%s1596 + $0x2c] sm:$0xf]
    %v1609 = vld [vmem:[%s1596 + $0x30] sm:$0xf]
    %v1610 = vld [vmem:[%s1596 + $0x34] sm:$0xf]
    %v1611 = vld [vmem:[%s1596 + $0x38] sm:$0xf]
    %v1612 = vld [vmem:[%s1596 + $0x3c] sm:$0xf]
    %v1629 = vunpack.c.l.b16 %v1597
    %v1630 = vunpack.c.l.b16 %v1598
    %v1631 = vunpack.c.l.b16 %v1599
    %v1632 = vunpack.c.l.b16 %v1600
    %v1633 = vunpack.c.l.b16 %v1601
    %v1634 = vunpack.c.l.b16 %v1602
    %v1635 = vunpack.c.l.b16 %v1603
    %v1636 = vunpack.c.l.b16 %v1604
    %v1637 = vunpack.c.l.b16 %v1605
    %v1638 = vunpack.c.l.b16 %v1606
    %v1639 = vunpack.c.l.b16 %v1607
    %v1640 = vunpack.c.l.b16 %v1608
    %v1641 = vunpack.c.l.b16 %v1609
    %v1642 = vunpack.c.l.b16 %v1610
    %v1643 = vunpack.c.l.b16 %v1611
    %v1644 = vunpack.c.l.b16 %v1612
    %v1645 = vpack.c.b16 %v1630, %v1629
    %v1646 = vpack.c.b16 %v1632, %v1631
    %v1647 = vpack.c.b16 %v1634, %v1633
    %v1648 = vpack.c.b16 %v1636, %v1635
    %v1649 = vpack.c.b16 %v1638, %v1637
    %v1650 = vpack.c.b16 %v1640, %v1639
    %v1651 = vpack.c.b16 %v1642, %v1641
    %v1652 = vpack.c.b16 %v1644, %v1643
    %1661 = vmatpush.bf16.msra.mxu0 %v1652
    %1662 = vmatpush.bf16.msra.mxu0 %v1651
    %1663 = vmatpush.bf16.msra.mxu0 %v1650
    %1664 = vmatpush.bf16.msra.mxu0 %v1649
    %1665 = vmatpush.bf16.msra.mxu0 %v1648
    %1666 = vmatpush.bf16.msra.mxu0 %v1647
    %1667 = vmatpush.bf16.msra.mxu0 %v1646
    %1668 = vmatpush.bf16.msra.mxu0 %v1645
    %1669 = vmatmul.bf16.gmra.mxu0 %v1588
    %v1670 = vpop.f32.mrf.mxu0
    %v1671 = vadd.f32 0.0, %v1670
    %v1672 = vpop.f32.mrf.mxu0
    %v1673 = vadd.f32 0.0, %v1672
    %1674 = vmatmul.bf16.gmra.mxu0 %v1589
    %v1675 = vpop.f32.mrf.mxu0
    %v1676 = vadd.f32 0.0, %v1675
    %v1677 = vpop.f32.mrf.mxu0
    %v1678 = vadd.f32 0.0, %v1677
    %1679 = vmatmul.bf16.gmra.mxu0 %v1590
    %v1680 = vpop.f32.mrf.mxu0
    %v1681 = vadd.f32 0.0, %v1680
    %v1682 = vpop.f32.mrf.mxu0
    %v1683 = vadd.f32 0.0, %v1682
    %1684 = vmatmul.bf16.gmra.mxu0 %v1591
    %v1685 = vpop.f32.mrf.mxu0
    %v1686 = vadd.f32 0.0, %v1685
    %v1687 = vpop.f32.mrf.mxu0
    %v1688 = vadd.f32 0.0, %v1687
    %1689 = vmatmul.bf16.gmra.mxu0 %v1592
    %v1690 = vpop.f32.mrf.mxu0
    %v1691 = vadd.f32 0.0, %v1690
    %v1692 = vpop.f32.mrf.mxu0
    %v1693 = vadd.f32 0.0, %v1692
    %1694 = vmatmul.bf16.gmra.mxu0 %v1593
    %v1695 = vpop.f32.mrf.mxu0
    %v1696 = vadd.f32 0.0, %v1695
    %v1697 = vpop.f32.mrf.mxu0
    %v1698 = vadd.f32 0.0, %v1697
    %1699 = vmatmul.bf16.gmra.mxu0 %v1594
    %v1700 = vpop.f32.mrf.mxu0
    %v1701 = vadd.f32 0.0, %v1700
    %v1702 = vpop.f32.mrf.mxu0
    %v1703 = vadd.f32 0.0, %v1702
    %1704 = vmatmul.bf16.gmra.mxu0 %v1595
    %v1705 = vpop.f32.mrf.mxu0
    %v1706 = vadd.f32 0.0, %v1705
    %v1707 = vpop.f32.mrf.mxu0
    %v1708 = vadd.f32 0.0, %v1707
    %1709 = vdwg.mxu0
    %s1710 = scalar_lea.vmem [#allocation14], 512
    %v1711 = vld [vmem:[%s1710] sm:$0xff]
    %v1712 = vld [vmem:[%s1710 + $0x8] sm:$0xff]
    %v1713 = vld [vmem:[%s1710 + $0x10] sm:$0xff]
    %v1714 = vld [vmem:[%s1710 + $0x18] sm:$0xff]
    %v1715 = vld [vmem:[%s1710 + $0x20] sm:$0xff]
    %v1716 = vld [vmem:[%s1710 + $0x28] sm:$0xff]
    %v1717 = vld [vmem:[%s1710 + $0x30] sm:$0xff]
    %v1718 = vld [vmem:[%s1710 + $0x38] sm:$0xff]
    %v1719 = vld [vmem:[%s1710 + $0x40] sm:$0xff]
    %v1720 = vld [vmem:[%s1710 + $0x48] sm:$0xff]
    %v1721 = vld [vmem:[%s1710 + $0x50] sm:$0xff]
    %v1722 = vld [vmem:[%s1710 + $0x58] sm:$0xff]
    %v1723 = vld [vmem:[%s1710 + $0x60] sm:$0xff]
    %v1724 = vld [vmem:[%s1710 + $0x68] sm:$0xff]
    %v1725 = vld [vmem:[%s1710 + $0x70] sm:$0xff]
    %v1726 = vld [vmem:[%s1710 + $0x78] sm:$0xff]
    %v1727 = vmul.f32 %v1711, %v1671
    %v1728 = vmul.f32 %v1712, %v1673
    %v1729 = vmul.f32 %v1713, %v1676
    %v1730 = vmul.f32 %v1714, %v1678
    %v1731 = vmul.f32 %v1715, %v1681
    %v1732 = vmul.f32 %v1716, %v1683
    %v1733 = vmul.f32 %v1717, %v1686
    %v1734 = vmul.f32 %v1718, %v1688
    %v1735 = vmul.f32 %v1719, %v1691
    %v1736 = vmul.f32 %v1720, %v1693
    %v1737 = vmul.f32 %v1721, %v1696
    %v1738 = vmul.f32 %v1722, %v1698
    %v1739 = vmul.f32 %v1723, %v1701
    %v1740 = vmul.f32 %v1724, %v1703
    %v1741 = vmul.f32 %v1725, %v1706
    %v1742 = vmul.f32 %v1726, %v1708
    %v1743 = vadd.f32 %v1556, %v1727
    %v1744 = vadd.f32 %v1557, %v1728
    %v1745 = vadd.f32 %v1558, %v1729
    %v1746 = vadd.f32 %v1559, %v1730
    %v1747 = vadd.f32 %v1560, %v1731
    %v1748 = vadd.f32 %v1561, %v1732
    %v1749 = vadd.f32 %v1562, %v1733
    %v1750 = vadd.f32 %v1563, %v1734
    %v1751 = vadd.f32 %v1564, %v1735
    %v1752 = vadd.f32 %v1565, %v1736
    %v1753 = vadd.f32 %v1566, %v1737
    %v1754 = vadd.f32 %v1567, %v1738
    %v1755 = vadd.f32 %v1568, %v1739
    %v1756 = vadd.f32 %v1569, %v1740
    %v1757 = vadd.f32 %v1570, %v1741
    %v1758 = vadd.f32 %v1571, %v1742
    %v1759 = vld [vmem:[#allocation2 + $0x11] sm:$0xff]
    %v1760 = vld [vmem:[#allocation2 + $0x19] sm:$0xff]
    %v1761 = vld [vmem:[#allocation2 + $0x21] sm:$0xff]
    %v1762 = vld [vmem:[#allocation2 + $0x29] sm:$0xff]
    %v1763 = vld [vmem:[#allocation2 + $0x31] sm:$0xff]
    %v1764 = vld [vmem:[#allocation2 + $0x39] sm:$0xff]
    %v1765 = vld [vmem:[#allocation2 + $0x41] sm:$0xff]
    %v1766 = vld [vmem:[#allocation2 + $0x49] sm:$0xff]
    %v1767 = vld [vmem:[#allocation2 + $0x51] sm:$0xff]
    %v1768 = vld [vmem:[#allocation2 + $0x59] sm:$0xff]
    %v1769 = vld [vmem:[#allocation2 + $0x61] sm:$0xff]
    %v1770 = vld [vmem:[#allocation2 + $0x69] sm:$0xff]
    %v1771 = vld [vmem:[#allocation2 + $0x71] sm:$0xff]
    %v1772 = vld [vmem:[#allocation2 + $0x79] sm:$0xff]
    %v1773 = vld [vmem:[#allocation2 + $0x81] sm:$0xff]
    %v1774 = vld [vmem:[#allocation2 + $0x89] sm:$0xff]
    %v1775 = vpack.c.bf16 %v1760, %v1759
    %v1776 = vpack.c.bf16 %v1762, %v1761
    %v1777 = vpack.c.bf16 %v1764, %v1763
    %v1778 = vpack.c.bf16 %v1766, %v1765
    %v1779 = vpack.c.bf16 %v1768, %v1767
    %v1780 = vpack.c.bf16 %v1770, %v1769
    %v1781 = vpack.c.bf16 %v1772, %v1771
    %v1782 = vpack.c.bf16 %v1774, %v1773
    %s1783 = scalar_lea.vmem [#allocation11], 320
    %v1784 = vld [vmem:[%s1783] sm:$0xf]
    %v1785 = vld [vmem:[%s1783 + $0x4] sm:$0xf]
    %v1786 = vld [vmem:[%s1783 + $0x8] sm:$0xf]
    %v1787 = vld [vmem:[%s1783 + $0xc] sm:$0xf]
    %v1788 = vld [vmem:[%s1783 + $0x10] sm:$0xf]
    %v1789 = vld [vmem:[%s1783 + $0x14] sm:$0xf]
    %v1790 = vld [vmem:[%s1783 + $0x18] sm:$0xf]
    %v1791 = vld [vmem:[%s1783 + $0x1c] sm:$0xf]
    %v1792 = vld [vmem:[%s1783 + $0x20] sm:$0xf]
    %v1793 = vld [vmem:[%s1783 + $0x24] sm:$0xf]
    %v1794 = vld [vmem:[%s1783 + $0x28] sm:$0xf]
    %v1795 = vld [vmem:[%s1783 + $0x2c] sm:$0xf]
    %v1796 = vld [vmem:[%s1783 + $0x30] sm:$0xf]
    %v1797 = vld [vmem:[%s1783 + $0x34] sm:$0xf]
    %v1798 = vld [vmem:[%s1783 + $0x38] sm:$0xf]
    %v1799 = vld [vmem:[%s1783 + $0x3c] sm:$0xf]
    %v1816 = vunpack.c.l.b16 %v1784
    %v1817 = vunpack.c.l.b16 %v1785
    %v1818 = vunpack.c.l.b16 %v1786
    %v1819 = vunpack.c.l.b16 %v1787
    %v1820 = vunpack.c.l.b16 %v1788
    %v1821 = vunpack.c.l.b16 %v1789
    %v1822 = vunpack.c.l.b16 %v1790
    %v1823 = vunpack.c.l.b16 %v1791
    %v1824 = vunpack.c.l.b16 %v1792
    %v1825 = vunpack.c.l.b16 %v1793
    %v1826 = vunpack.c.l.b16 %v1794
    %v1827 = vunpack.c.l.b16 %v1795
    %v1828 = vunpack.c.l.b16 %v1796
    %v1829 = vunpack.c.l.b16 %v1797
    %v1830 = vunpack.c.l.b16 %v1798
    %v1831 = vunpack.c.l.b16 %v1799
    %v1832 = vpack.c.b16 %v1817, %v1816
    %v1833 = vpack.c.b16 %v1819, %v1818
    %v1834 = vpack.c.b16 %v1821, %v1820
    %v1835 = vpack.c.b16 %v1823, %v1822
    %v1836 = vpack.c.b16 %v1825, %v1824
    %v1837 = vpack.c.b16 %v1827, %v1826
    %v1838 = vpack.c.b16 %v1829, %v1828
    %v1839 = vpack.c.b16 %v1831, %v1830
    %1848 = vmatpush.bf16.msra.mxu0 %v1839
    %1849 = vmatpush.bf16.msra.mxu0 %v1838
    %1850 = vmatpush.bf16.msra.mxu0 %v1837
    %1851 = vmatpush.bf16.msra.mxu0 %v1836
    %1852 = vmatpush.bf16.msra.mxu0 %v1835
    %1853 = vmatpush.bf16.msra.mxu0 %v1834
    %1854 = vmatpush.bf16.msra.mxu0 %v1833
    %1855 = vmatpush.bf16.msra.mxu0 %v1832
    %1856 = vmatmul.bf16.gmra.mxu0 %v1775
    %v1857 = vpop.f32.mrf.mxu0
    %v1858 = vadd.f32 0.0, %v1857
    %v1859 = vpop.f32.mrf.mxu0
    %v1860 = vadd.f32 0.0, %v1859
    %1861 = vmatmul.bf16.gmra.mxu0 %v1776
    %v1862 = vpop.f32.mrf.mxu0
    %v1863 = vadd.f32 0.0, %v1862
    %v1864 = vpop.f32.mrf.mxu0
    %v1865 = vadd.f32 0.0, %v1864
    %1866 = vmatmul.bf16.gmra.mxu0 %v1777
    %v1867 = vpop.f32.mrf.mxu0
    %v1868 = vadd.f32 0.0, %v1867
    %v1869 = vpop.f32.mrf.mxu0
    %v1870 = vadd.f32 0.0, %v1869
    %1871 = vmatmul.bf16.gmra.mxu0 %v1778
    %v1872 = vpop.f32.mrf.mxu0
    %v1873 = vadd.f32 0.0, %v1872
    %v1874 = vpop.f32.mrf.mxu0
    %v1875 = vadd.f32 0.0, %v1874
    %1876 = vmatmul.bf16.gmra.mxu0 %v1779
    %v1877 = vpop.f32.mrf.mxu0
    %v1878 = vadd.f32 0.0, %v1877
    %v1879 = vpop.f32.mrf.mxu0
    %v1880 = vadd.f32 0.0, %v1879
    %1881 = vmatmul.bf16.gmra.mxu0 %v1780
    %v1882 = vpop.f32.mrf.mxu0
    %v1883 = vadd.f32 0.0, %v1882
    %v1884 = vpop.f32.mrf.mxu0
    %v1885 = vadd.f32 0.0, %v1884
    %1886 = vmatmul.bf16.gmra.mxu0 %v1781
    %v1887 = vpop.f32.mrf.mxu0
    %v1888 = vadd.f32 0.0, %v1887
    %v1889 = vpop.f32.mrf.mxu0
    %v1890 = vadd.f32 0.0, %v1889
    %1891 = vmatmul.bf16.gmra.mxu0 %v1782
    %v1892 = vpop.f32.mrf.mxu0
    %v1893 = vadd.f32 0.0, %v1892
    %v1894 = vpop.f32.mrf.mxu0
    %v1895 = vadd.f32 0.0, %v1894
    %1896 = vdwg.mxu0
    %s1897 = scalar_lea.vmem [#allocation14], 640
    %v1898 = vld [vmem:[%s1897] sm:$0xff]
    %v1899 = vld [vmem:[%s1897 + $0x8] sm:$0xff]
    %v1900 = vld [vmem:[%s1897 + $0x10] sm:$0xff]
    %v1901 = vld [vmem:[%s1897 + $0x18] sm:$0xff]
    %v1902 = vld [vmem:[%s1897 + $0x20] sm:$0xff]
    %v1903 = vld [vmem:[%s1897 + $0x28] sm:$0xff]
    %v1904 = vld [vmem:[%s1897 + $0x30] sm:$0xff]
    %v1905 = vld [vmem:[%s1897 + $0x38] sm:$0xff]
    %v1906 = vld [vmem:[%s1897 + $0x40] sm:$0xff]
    %v1907 = vld [vmem:[%s1897 + $0x48] sm:$0xff]
    %v1908 = vld [vmem:[%s1897 + $0x50] sm:$0xff]
    %v1909 = vld [vmem:[%s1897 + $0x58] sm:$0xff]
    %v1910 = vld [vmem:[%s1897 + $0x60] sm:$0xff]
    %v1911 = vld [vmem:[%s1897 + $0x68] sm:$0xff]
    %v1912 = vld [vmem:[%s1897 + $0x70] sm:$0xff]
    %v1913 = vld [vmem:[%s1897 + $0x78] sm:$0xff]
    %v1914 = vmul.f32 %v1898, %v1858
    %v1915 = vmul.f32 %v1899, %v1860
    %v1916 = vmul.f32 %v1900, %v1863
    %v1917 = vmul.f32 %v1901, %v1865
    %v1918 = vmul.f32 %v1902, %v1868
    %v1919 = vmul.f32 %v1903, %v1870
    %v1920 = vmul.f32 %v1904, %v1873
    %v1921 = vmul.f32 %v1905, %v1875
    %v1922 = vmul.f32 %v1906, %v1878
    %v1923 = vmul.f32 %v1907, %v1880
    %v1924 = vmul.f32 %v1908, %v1883
    %v1925 = vmul.f32 %v1909, %v1885
    %v1926 = vmul.f32 %v1910, %v1888
    %v1927 = vmul.f32 %v1911, %v1890
    %v1928 = vmul.f32 %v1912, %v1893
    %v1929 = vmul.f32 %v1913, %v1895
    %v1930 = vadd.f32 %v1743, %v1914
    %v1931 = vadd.f32 %v1744, %v1915
    %v1932 = vadd.f32 %v1745, %v1916
    %v1933 = vadd.f32 %v1746, %v1917
    %v1934 = vadd.f32 %v1747, %v1918
    %v1935 = vadd.f32 %v1748, %v1919
    %v1936 = vadd.f32 %v1749, %v1920
    %v1937 = vadd.f32 %v1750, %v1921
    %v1938 = vadd.f32 %v1751, %v1922
    %v1939 = vadd.f32 %v1752, %v1923
    %v1940 = vadd.f32 %v1753, %v1924
    %v1941 = vadd.f32 %v1754, %v1925
    %v1942 = vadd.f32 %v1755, %v1926
    %v1943 = vadd.f32 %v1756, %v1927
    %v1944 = vadd.f32 %v1757, %v1928
    %v1945 = vadd.f32 %v1758, %v1929
    %v1946 = vld [vmem:[#allocation2 + $0x17] sm:$0xff]
    %v1947 = vld [vmem:[#allocation2 + $0x1f] sm:$0xff]
    %v1948 = vld [vmem:[#allocation2 + $0x27] sm:$0xff]
    %v1949 = vld [vmem:[#allocation2 + $0x2f] sm:$0xff]
    %v1950 = vld [vmem:[#allocation2 + $0x37] sm:$0xff]
    %v1951 = vld [vmem:[#allocation2 + $0x3f] sm:$0xff]
    %v1952 = vld [vmem:[#allocation2 + $0x47] sm:$0xff]
    %v1953 = vld [vmem:[#allocation2 + $0x4f] sm:$0xff]
    %v1954 = vld [vmem:[#allocation2 + $0x57] sm:$0xff]
    %v1955 = vld [vmem:[#allocation2 + $0x5f] sm:$0xff]
    %v1956 = vld [vmem:[#allocation2 + $0x67] sm:$0xff]
    %v1957 = vld [vmem:[#allocation2 + $0x6f] sm:$0xff]
    %v1958 = vld [vmem:[#allocation2 + $0x77] sm:$0xff]
    %v1959 = vld [vmem:[#allocation2 + $0x7f] sm:$0xff]
    %v1960 = vld [vmem:[#allocation2 + $0x87] sm:$0xff]
    %v1961 = vld [vmem:[#allocation2 + $0x8f] sm:$0xff]
    %v1962 = vpack.c.bf16 %v1947, %v1946
    %v1963 = vpack.c.bf16 %v1949, %v1948
    %v1964 = vpack.c.bf16 %v1951, %v1950
    %v1965 = vpack.c.bf16 %v1953, %v1952
    %v1966 = vpack.c.bf16 %v1955, %v1954
    %v1967 = vpack.c.bf16 %v1957, %v1956
    %v1968 = vpack.c.bf16 %v1959, %v1958
    %v1969 = vpack.c.bf16 %v1961, %v1960
    %s1970 = scalar_lea.vmem [#allocation11], 384
    %v1971 = vld [vmem:[%s1970] sm:$0xf]
    %v1972 = vld [vmem:[%s1970 + $0x4] sm:$0xf]
    %v1973 = vld [vmem:[%s1970 + $0x8] sm:$0xf]
    %v1974 = vld [vmem:[%s1970 + $0xc] sm:$0xf]
    %v1975 = vld [vmem:[%s1970 + $0x10] sm:$0xf]
    %v1976 = vld [vmem:[%s1970 + $0x14] sm:$0xf]
    %v1977 = vld [vmem:[%s1970 + $0x18] sm:$0xf]
    %v1978 = vld [vmem:[%s1970 + $0x1c] sm:$0xf]
    %v1979 = vld [vmem:[%s1970 + $0x20] sm:$0xf]
    %v1980 = vld [vmem:[%s1970 + $0x24] sm:$0xf]
    %v1981 = vld [vmem:[%s1970 + $0x28] sm:$0xf]
    %v1982 = vld [vmem:[%s1970 + $0x2c] sm:$0xf]
    %v1983 = vld [vmem:[%s1970 + $0x30] sm:$0xf]
    %v1984 = vld [vmem:[%s1970 + $0x34] sm:$0xf]
    %v1985 = vld [vmem:[%s1970 + $0x38] sm:$0xf]
    %v1986 = vld [vmem:[%s1970 + $0x3c] sm:$0xf]
    %v2003 = vunpack.c.l.b16 %v1971
    %v2004 = vunpack.c.l.b16 %v1972
    %v2005 = vunpack.c.l.b16 %v1973
    %v2006 = vunpack.c.l.b16 %v1974
    %v2007 = vunpack.c.l.b16 %v1975
    %v2008 = vunpack.c.l.b16 %v1976
    %v2009 = vunpack.c.l.b16 %v1977
    %v2010 = vunpack.c.l.b16 %v1978
    %v2011 = vunpack.c.l.b16 %v1979
    %v2012 = vunpack.c.l.b16 %v1980
    %v2013 = vunpack.c.l.b16 %v1981
    %v2014 = vunpack.c.l.b16 %v1982
    %v2015 = vunpack.c.l.b16 %v1983
    %v2016 = vunpack.c.l.b16 %v1984
    %v2017 = vunpack.c.l.b16 %v1985
    %v2018 = vunpack.c.l.b16 %v1986
    %v2019 = vpack.c.b16 %v2004, %v2003
    %v2020 = vpack.c.b16 %v2006, %v2005
    %v2021 = vpack.c.b16 %v2008, %v2007
    %v2022 = vpack.c.b16 %v2010, %v2009
    %v2023 = vpack.c.b16 %v2012, %v2011
    %v2024 = vpack.c.b16 %v2014, %v2013
    %v2025 = vpack.c.b16 %v2016, %v2015
    %v2026 = vpack.c.b16 %v2018, %v2017
    %2035 = vmatpush.bf16.msra.mxu0 %v2026
    %2036 = vmatpush.bf16.msra.mxu0 %v2025
    %2037 = vmatpush.bf16.msra.mxu0 %v2024
    %2038 = vmatpush.bf16.msra.mxu0 %v2023
    %2039 = vmatpush.bf16.msra.mxu0 %v2022
    %2040 = vmatpush.bf16.msra.mxu0 %v2021
    %2041 = vmatpush.bf16.msra.mxu0 %v2020
    %2042 = vmatpush.bf16.msra.mxu0 %v2019
    %2043 = vmatmul.bf16.gmra.mxu0 %v1962
    %v2044 = vpop.f32.mrf.mxu0
    %v2045 = vadd.f32 0.0, %v2044
    %v2046 = vpop.f32.mrf.mxu0
    %v2047 = vadd.f32 0.0, %v2046
    %2048 = vmatmul.bf16.gmra.mxu0 %v1963
    %v2049 = vpop.f32.mrf.mxu0
    %v2050 = vadd.f32 0.0, %v2049
    %v2051 = vpop.f32.mrf.mxu0
    %v2052 = vadd.f32 0.0, %v2051
    %2053 = vmatmul.bf16.gmra.mxu0 %v1964
    %v2054 = vpop.f32.mrf.mxu0
    %v2055 = vadd.f32 0.0, %v2054
    %v2056 = vpop.f32.mrf.mxu0
    %v2057 = vadd.f32 0.0, %v2056
    %2058 = vmatmul.bf16.gmra.mxu0 %v1965
    %v2059 = vpop.f32.mrf.mxu0
    %v2060 = vadd.f32 0.0, %v2059
    %v2061 = vpop.f32.mrf.mxu0
    %v2062 = vadd.f32 0.0, %v2061
    %2063 = vmatmul.bf16.gmra.mxu0 %v1966
    %v2064 = vpop.f32.mrf.mxu0
    %v2065 = vadd.f32 0.0, %v2064
    %v2066 = vpop.f32.mrf.mxu0
    %v2067 = vadd.f32 0.0, %v2066
    %2068 = vmatmul.bf16.gmra.mxu0 %v1967
    %v2069 = vpop.f32.mrf.mxu0
    %v2070 = vadd.f32 0.0, %v2069
    %v2071 = vpop.f32.mrf.mxu0
    %v2072 = vadd.f32 0.0, %v2071
    %2073 = vmatmul.bf16.gmra.mxu0 %v1968
    %v2074 = vpop.f32.mrf.mxu0
    %v2075 = vadd.f32 0.0, %v2074
    %v2076 = vpop.f32.mrf.mxu0
    %v2077 = vadd.f32 0.0, %v2076
    %2078 = vmatmul.bf16.gmra.mxu0 %v1969
    %v2079 = vpop.f32.mrf.mxu0
    %v2080 = vadd.f32 0.0, %v2079
    %v2081 = vpop.f32.mrf.mxu0
    %v2082 = vadd.f32 0.0, %v2081
    %2083 = vdwg.mxu0
    %s2084 = scalar_lea.vmem [#allocation14], 768
    %v2085 = vld [vmem:[%s2084] sm:$0xff]
    %v2086 = vld [vmem:[%s2084 + $0x8] sm:$0xff]
    %v2087 = vld [vmem:[%s2084 + $0x10] sm:$0xff]
    %v2088 = vld [vmem:[%s2084 + $0x18] sm:$0xff]
    %v2089 = vld [vmem:[%s2084 + $0x20] sm:$0xff]
    %v2090 = vld [vmem:[%s2084 + $0x28] sm:$0xff]
    %v2091 = vld [vmem:[%s2084 + $0x30] sm:$0xff]
    %v2092 = vld [vmem:[%s2084 + $0x38] sm:$0xff]
    %v2093 = vld [vmem:[%s2084 + $0x40] sm:$0xff]
    %v2094 = vld [vmem:[%s2084 + $0x48] sm:$0xff]
    %v2095 = vld [vmem:[%s2084 + $0x50] sm:$0xff]
    %v2096 = vld [vmem:[%s2084 + $0x58] sm:$0xff]
    %v2097 = vld [vmem:[%s2084 + $0x60] sm:$0xff]
    %v2098 = vld [vmem:[%s2084 + $0x68] sm:$0xff]
    %v2099 = vld [vmem:[%s2084 + $0x70] sm:$0xff]
    %v2100 = vld [vmem:[%s2084 + $0x78] sm:$0xff]
    %v2101 = vmul.f32 %v2085, %v2045
    %v2102 = vmul.f32 %v2086, %v2047
    %v2103 = vmul.f32 %v2087, %v2050
    %v2104 = vmul.f32 %v2088, %v2052
    %v2105 = vmul.f32 %v2089, %v2055
    %v2106 = vmul.f32 %v2090, %v2057
    %v2107 = vmul.f32 %v2091, %v2060
    %v2108 = vmul.f32 %v2092, %v2062
    %v2109 = vmul.f32 %v2093, %v2065
    %v2110 = vmul.f32 %v2094, %v2067
    %v2111 = vmul.f32 %v2095, %v2070
    %v2112 = vmul.f32 %v2096, %v2072
    %v2113 = vmul.f32 %v2097, %v2075
    %v2114 = vmul.f32 %v2098, %v2077
    %v2115 = vmul.f32 %v2099, %v2080
    %v2116 = vmul.f32 %v2100, %v2082
    %v2117 = vadd.f32 %v1930, %v2101
    %v2118 = vadd.f32 %v1931, %v2102
    %v2119 = vadd.f32 %v1932, %v2103
    %v2120 = vadd.f32 %v1933, %v2104
    %v2121 = vadd.f32 %v1934, %v2105
    %v2122 = vadd.f32 %v1935, %v2106
    %v2123 = vadd.f32 %v1936, %v2107
    %v2124 = vadd.f32 %v1937, %v2108
    %v2125 = vadd.f32 %v1938, %v2109
    %v2126 = vadd.f32 %v1939, %v2110
    %v2127 = vadd.f32 %v1940, %v2111
    %v2128 = vadd.f32 %v1941, %v2112
    %v2129 = vadd.f32 %v1942, %v2113
    %v2130 = vadd.f32 %v1943, %v2114
    %v2131 = vadd.f32 %v1944, %v2115
    %v2132 = vadd.f32 %v1945, %v2116
    %v2133 = vld [vmem:[#allocation2 + $0x18] sm:$0xff]
    %v2134 = vld [vmem:[#allocation2 + $0x20] sm:$0xff]
    %v2135 = vld [vmem:[#allocation2 + $0x28] sm:$0xff]
    %v2136 = vld [vmem:[#allocation2 + $0x30] sm:$0xff]
    %v2137 = vld [vmem:[#allocation2 + $0x38] sm:$0xff]
    %v2138 = vld [vmem:[#allocation2 + $0x40] sm:$0xff]
    %v2139 = vld [vmem:[#allocation2 + $0x48] sm:$0xff]
    %v2140 = vld [vmem:[#allocation2 + $0x50] sm:$0xff]
    %v2141 = vld [vmem:[#allocation2 + $0x58] sm:$0xff]
    %v2142 = vld [vmem:[#allocation2 + $0x60] sm:$0xff]
    %v2143 = vld [vmem:[#allocation2 + $0x68] sm:$0xff]
    %v2144 = vld [vmem:[#allocation2 + $0x70] sm:$0xff]
    %v2145 = vld [vmem:[#allocation2 + $0x78] sm:$0xff]
    %v2146 = vld [vmem:[#allocation2 + $0x80] sm:$0xff]
    %v2147 = vld [vmem:[#allocation2 + $0x88] sm:$0xff]
    %v2148 = vld [vmem:[#allocation2 + $0x90] sm:$0xff]
    %v2149 = vpack.c.bf16 %v2134, %v2133
    %v2150 = vpack.c.bf16 %v2136, %v2135
    %v2151 = vpack.c.bf16 %v2138, %v2137
    %v2152 = vpack.c.bf16 %v2140, %v2139
    %v2153 = vpack.c.bf16 %v2142, %v2141
    %v2154 = vpack.c.bf16 %v2144, %v2143
    %v2155 = vpack.c.bf16 %v2146, %v2145
    %v2156 = vpack.c.bf16 %v2148, %v2147
    %s2157 = scalar_lea.vmem [#allocation11], 448
    %v2158 = vld [vmem:[%s2157] sm:$0xf]
    %v2159 = vld [vmem:[%s2157 + $0x4] sm:$0xf]
    %v2160 = vld [vmem:[%s2157 + $0x8] sm:$0xf]
    %v2161 = vld [vmem:[%s2157 + $0xc] sm:$0xf]
    %v2162 = vld [vmem:[%s2157 + $0x10] sm:$0xf]
    %v2163 = vld [vmem:[%s2157 + $0x14] sm:$0xf]
    %v2164 = vld [vmem:[%s2157 + $0x18] sm:$0xf]
    %v2165 = vld [vmem:[%s2157 + $0x1c] sm:$0xf]
    %v2166 = vld [vmem:[%s2157 + $0x20] sm:$0xf]
    %v2167 = vld [vmem:[%s2157 + $0x24] sm:$0xf]
    %v2168 = vld [vmem:[%s2157 + $0x28] sm:$0xf]
    %v2169 = vld [vmem:[%s2157 + $0x2c] sm:$0xf]
    %v2170 = vld [vmem:[%s2157 + $0x30] sm:$0xf]
    %v2171 = vld [vmem:[%s2157 + $0x34] sm:$0xf]
    %v2172 = vld [vmem:[%s2157 + $0x38] sm:$0xf]
    %v2173 = vld [vmem:[%s2157 + $0x3c] sm:$0xf]
    %v2190 = vunpack.c.l.b16 %v2158
    %v2191 = vunpack.c.l.b16 %v2159
    %v2192 = vunpack.c.l.b16 %v2160
    %v2193 = vunpack.c.l.b16 %v2161
    %v2194 = vunpack.c.l.b16 %v2162
    %v2195 = vunpack.c.l.b16 %v2163
    %v2196 = vunpack.c.l.b16 %v2164
    %v2197 = vunpack.c.l.b16 %v2165
    %v2198 = vunpack.c.l.b16 %v2166
    %v2199 = vunpack.c.l.b16 %v2167
    %v2200 = vunpack.c.l.b16 %v2168
    %v2201 = vunpack.c.l.b16 %v2169
    %v2202 = vunpack.c.l.b16 %v2170
    %v2203 = vunpack.c.l.b16 %v2171
    %v2204 = vunpack.c.l.b16 %v2172
    %v2205 = vunpack.c.l.b16 %v2173
    %v2206 = vpack.c.b16 %v2191, %v2190
    %v2207 = vpack.c.b16 %v2193, %v2192
    %v2208 = vpack.c.b16 %v2195, %v2194
    %v2209 = vpack.c.b16 %v2197, %v2196
    %v2210 = vpack.c.b16 %v2199, %v2198
    %v2211 = vpack.c.b16 %v2201, %v2200
    %v2212 = vpack.c.b16 %v2203, %v2202
    %v2213 = vpack.c.b16 %v2205, %v2204
    %2222 = vmatpush.bf16.msra.mxu0 %v2213
    %2223 = vmatpush.bf16.msra.mxu0 %v2212
    %2224 = vmatpush.bf16.msra.mxu0 %v2211
    %2225 = vmatpush.bf16.msra.mxu0 %v2210
    %2226 = vmatpush.bf16.msra.mxu0 %v2209
    %2227 = vmatpush.bf16.msra.mxu0 %v2208
    %2228 = vmatpush.bf16.msra.mxu0 %v2207
    %2229 = vmatpush.bf16.msra.mxu0 %v2206
    %2230 = vmatmul.bf16.gmra.mxu0 %v2149
    %v2231 = vpop.f32.mrf.mxu0
    %v2232 = vadd.f32 0.0, %v2231
    %v2233 = vpop.f32.mrf.mxu0
    %v2234 = vadd.f32 0.0, %v2233
    %2235 = vmatmul.bf16.gmra.mxu0 %v2150
    %v2236 = vpop.f32.mrf.mxu0
    %v2237 = vadd.f32 0.0, %v2236
    %v2238 = vpop.f32.mrf.mxu0
    %v2239 = vadd.f32 0.0, %v2238
    %2240 = vmatmul.bf16.gmra.mxu0 %v2151
    %v2241 = vpop.f32.mrf.mxu0
    %v2242 = vadd.f32 0.0, %v2241
    %v2243 = vpop.f32.mrf.mxu0
    %v2244 = vadd.f32 0.0, %v2243
    %2245 = vmatmul.bf16.gmra.mxu0 %v2152
    %v2246 = vpop.f32.mrf.mxu0
    %v2247 = vadd.f32 0.0, %v2246
    %v2248 = vpop.f32.mrf.mxu0
    %v2249 = vadd.f32 0.0, %v2248
    %2250 = vmatmul.bf16.gmra.mxu0 %v2153
    %v2251 = vpop.f32.mrf.mxu0
    %v2252 = vadd.f32 0.0, %v2251
    %v2253 = vpop.f32.mrf.mxu0
    %v2254 = vadd.f32 0.0, %v2253
    %2255 = vmatmul.bf16.gmra.mxu0 %v2154
    %v2256 = vpop.f32.mrf.mxu0
    %v2257 = vadd.f32 0.0, %v2256
    %v2258 = vpop.f32.mrf.mxu0
    %v2259 = vadd.f32 0.0, %v2258
    %2260 = vmatmul.bf16.gmra.mxu0 %v2155
    %v2261 = vpop.f32.mrf.mxu0
    %v2262 = vadd.f32 0.0, %v2261
    %v2263 = vpop.f32.mrf.mxu0
    %v2264 = vadd.f32 0.0, %v2263
    %2265 = vmatmul.bf16.gmra.mxu0 %v2156
    %v2266 = vpop.f32.mrf.mxu0
    %v2267 = vadd.f32 0.0, %v2266
    %v2268 = vpop.f32.mrf.mxu0
    %v2269 = vadd.f32 0.0, %v2268
    %2270 = vdwg.mxu0
    %s2271 = scalar_lea.vmem [#allocation14], 896
    %v2272 = vld [vmem:[%s2271] sm:$0xff]
    %v2273 = vld [vmem:[%s2271 + $0x8] sm:$0xff]
    %v2274 = vld [vmem:[%s2271 + $0x10] sm:$0xff]
    %v2275 = vld [vmem:[%s2271 + $0x18] sm:$0xff]
    %v2276 = vld [vmem:[%s2271 + $0x20] sm:$0xff]
    %v2277 = vld [vmem:[%s2271 + $0x28] sm:$0xff]
    %v2278 = vld [vmem:[%s2271 + $0x30] sm:$0xff]
    %v2279 = vld [vmem:[%s2271 + $0x38] sm:$0xff]
    %v2280 = vld [vmem:[%s2271 + $0x40] sm:$0xff]
    %v2281 = vld [vmem:[%s2271 + $0x48] sm:$0xff]
    %v2282 = vld [vmem:[%s2271 + $0x50] sm:$0xff]
    %v2283 = vld [vmem:[%s2271 + $0x58] sm:$0xff]
    %v2284 = vld [vmem:[%s2271 + $0x60] sm:$0xff]
    %v2285 = vld [vmem:[%s2271 + $0x68] sm:$0xff]
    %v2286 = vld [vmem:[%s2271 + $0x70] sm:$0xff]
    %v2287 = vld [vmem:[%s2271 + $0x78] sm:$0xff]
    %v2288 = vmul.f32 %v2272, %v2232
    %v2289 = vmul.f32 %v2273, %v2234
    %v2290 = vmul.f32 %v2274, %v2237
    %v2291 = vmul.f32 %v2275, %v2239
    %v2292 = vmul.f32 %v2276, %v2242
    %v2293 = vmul.f32 %v2277, %v2244
    %v2294 = vmul.f32 %v2278, %v2247
    %v2295 = vmul.f32 %v2279, %v2249
    %v2296 = vmul.f32 %v2280, %v2252
    %v2297 = vmul.f32 %v2281, %v2254
    %v2298 = vmul.f32 %v2282, %v2257
    %v2299 = vmul.f32 %v2283, %v2259
    %v2300 = vmul.f32 %v2284, %v2262
    %v2301 = vmul.f32 %v2285, %v2264
    %v2302 = vmul.f32 %v2286, %v2267
    %v2303 = vmul.f32 %v2287, %v2269
    %v2304 = vadd.f32 %v2117, %v2288
    %v2305 = vadd.f32 %v2118, %v2289
    %v2306 = vadd.f32 %v2119, %v2290
    %v2307 = vadd.f32 %v2120, %v2291
    %v2308 = vadd.f32 %v2121, %v2292
    %v2309 = vadd.f32 %v2122, %v2293
    %v2310 = vadd.f32 %v2123, %v2294
    %v2311 = vadd.f32 %v2124, %v2295
    %v2312 = vadd.f32 %v2125, %v2296
    %v2313 = vadd.f32 %v2126, %v2297
    %v2314 = vadd.f32 %v2127, %v2298
    %v2315 = vadd.f32 %v2128, %v2299
    %v2316 = vadd.f32 %v2129, %v2300
    %v2317 = vadd.f32 %v2130, %v2301
    %v2318 = vadd.f32 %v2131, %v2302
    %v2319 = vadd.f32 %v2132, %v2303
    %v2320 = vld [vmem:[#allocation2 + $0x19] sm:$0xff]
    %v2321 = vld [vmem:[#allocation2 + $0x21] sm:$0xff]
    %v2322 = vld [vmem:[#allocation2 + $0x29] sm:$0xff]
    %v2323 = vld [vmem:[#allocation2 + $0x31] sm:$0xff]
    %v2324 = vld [vmem:[#allocation2 + $0x39] sm:$0xff]
    %v2325 = vld [vmem:[#allocation2 + $0x41] sm:$0xff]
    %v2326 = vld [vmem:[#allocation2 + $0x49] sm:$0xff]
    %v2327 = vld [vmem:[#allocation2 + $0x51] sm:$0xff]
    %v2328 = vld [vmem:[#allocation2 + $0x59] sm:$0xff]
    %v2329 = vld [vmem:[#allocation2 + $0x61] sm:$0xff]
    %v2330 = vld [vmem:[#allocation2 + $0x69] sm:$0xff]
    %v2331 = vld [vmem:[#allocation2 + $0x71] sm:$0xff]
    %v2332 = vld [vmem:[#allocation2 + $0x79] sm:$0xff]
    %v2333 = vld [vmem:[#allocation2 + $0x81] sm:$0xff]
    %v2334 = vld [vmem:[#allocation2 + $0x89] sm:$0xff]
    %v2335 = vld [vmem:[#allocation2 + $0x91] sm:$0xff]
    %v2336 = vpack.c.bf16 %v2321, %v2320
    %v2337 = vpack.c.bf16 %v2323, %v2322
    %v2338 = vpack.c.bf16 %v2325, %v2324
    %v2339 = vpack.c.bf16 %v2327, %v2326
    %v2340 = vpack.c.bf16 %v2329, %v2328
    %v2341 = vpack.c.bf16 %v2331, %v2330
    %v2342 = vpack.c.bf16 %v2333, %v2332
    %v2343 = vpack.c.bf16 %v2335, %v2334
    %s2344 = scalar_lea.vmem [#allocation11], 512
    %v2345 = vld [vmem:[%s2344] sm:$0xf]
    %v2346 = vld [vmem:[%s2344 + $0x4] sm:$0xf]
    %v2347 = vld [vmem:[%s2344 + $0x8] sm:$0xf]
    %v2348 = vld [vmem:[%s2344 + $0xc] sm:$0xf]
    %v2349 = vld [vmem:[%s2344 + $0x10] sm:$0xf]
    %v2350 = vld [vmem:[%s2344 + $0x14] sm:$0xf]
    %v2351 = vld [vmem:[%s2344 + $0x18] sm:$0xf]
    %v2352 = vld [vmem:[%s2344 + $0x1c] sm:$0xf]
    %v2353 = vld [vmem:[%s2344 + $0x20] sm:$0xf]
    %v2354 = vld [vmem:[%s2344 + $0x24] sm:$0xf]
    %v2355 = vld [vmem:[%s2344 + $0x28] sm:$0xf]
    %v2356 = vld [vmem:[%s2344 + $0x2c] sm:$0xf]
    %v2357 = vld [vmem:[%s2344 + $0x30] sm:$0xf]
    %v2358 = vld [vmem:[%s2344 + $0x34] sm:$0xf]
    %v2359 = vld [vmem:[%s2344 + $0x38] sm:$0xf]
    %v2360 = vld [vmem:[%s2344 + $0x3c] sm:$0xf]
    %v2377 = vunpack.c.l.b16 %v2345
    %v2378 = vunpack.c.l.b16 %v2346
    %v2379 = vunpack.c.l.b16 %v2347
    %v2380 = vunpack.c.l.b16 %v2348
    %v2381 = vunpack.c.l.b16 %v2349
    %v2382 = vunpack.c.l.b16 %v2350
    %v2383 = vunpack.c.l.b16 %v2351
    %v2384 = vunpack.c.l.b16 %v2352
    %v2385 = vunpack.c.l.b16 %v2353
    %v2386 = vunpack.c.l.b16 %v2354
    %v2387 = vunpack.c.l.b16 %v2355
    %v2388 = vunpack.c.l.b16 %v2356
    %v2389 = vunpack.c.l.b16 %v2357
    %v2390 = vunpack.c.l.b16 %v2358
    %v2391 = vunpack.c.l.b16 %v2359
    %v2392 = vunpack.c.l.b16 %v2360
    %v2393 = vpack.c.b16 %v2378, %v2377
    %v2394 = vpack.c.b16 %v2380, %v2379
    %v2395 = vpack.c.b16 %v2382, %v2381
    %v2396 = vpack.c.b16 %v2384, %v2383
    %v2397 = vpack.c.b16 %v2386, %v2385
    %v2398 = vpack.c.b16 %v2388, %v2387
    %v2399 = vpack.c.b16 %v2390, %v2389
    %v2400 = vpack.c.b16 %v2392, %v2391
    %2409 = vmatpush.bf16.msra.mxu0 %v2400
    %2410 = vmatpush.bf16.msra.mxu0 %v2399
    %2411 = vmatpush.bf16.msra.mxu0 %v2398
    %2412 = vmatpush.bf16.msra.mxu0 %v2397
    %2413 = vmatpush.bf16.msra.mxu0 %v2396
    %2414 = vmatpush.bf16.msra.mxu0 %v2395
    %2415 = vmatpush.bf16.msra.mxu0 %v2394
    %2416 = vmatpush.bf16.msra.mxu0 %v2393
    %2417 = vmatmul.bf16.gmra.mxu0 %v2336
    %v2418 = vpop.f32.mrf.mxu0
    %v2419 = vadd.f32 0.0, %v2418
    %v2420 = vpop.f32.mrf.mxu0
    %v2421 = vadd.f32 0.0, %v2420
    %2422 = vmatmul.bf16.gmra.mxu0 %v2337
    %v2423 = vpop.f32.mrf.mxu0
    %v2424 = vadd.f32 0.0, %v2423
    %v2425 = vpop.f32.mrf.mxu0
    %v2426 = vadd.f32 0.0, %v2425
    %2427 = vmatmul.bf16.gmra.mxu0 %v2338
    %v2428 = vpop.f32.mrf.mxu0
    %v2429 = vadd.f32 0.0, %v2428
    %v2430 = vpop.f32.mrf.mxu0
    %v2431 = vadd.f32 0.0, %v2430
    %2432 = vmatmul.bf16.gmra.mxu0 %v2339
    %v2433 = vpop.f32.mrf.mxu0
    %v2434 = vadd.f32 0.0, %v2433
    %v2435 = vpop.f32.mrf.mxu0
    %v2436 = vadd.f32 0.0, %v2435
    %2437 = vmatmul.bf16.gmra.mxu0 %v2340
    %v2438 = vpop.f32.mrf.mxu0
    %v2439 = vadd.f32 0.0, %v2438
    %v2440 = vpop.f32.mrf.mxu0
    %v2441 = vadd.f32 0.0, %v2440
    %2442 = vmatmul.bf16.gmra.mxu0 %v2341
    %v2443 = vpop.f32.mrf.mxu0
    %v2444 = vadd.f32 0.0, %v2443
    %v2445 = vpop.f32.mrf.mxu0
    %v2446 = vadd.f32 0.0, %v2445
    %2447 = vmatmul.bf16.gmra.mxu0 %v2342
    %v2448 = vpop.f32.mrf.mxu0
    %v2449 = vadd.f32 0.0, %v2448
    %v2450 = vpop.f32.mrf.mxu0
    %v2451 = vadd.f32 0.0, %v2450
    %2452 = vmatmul.bf16.gmra.mxu0 %v2343
    %v2453 = vpop.f32.mrf.mxu0
    %v2454 = vadd.f32 0.0, %v2453
    %v2455 = vpop.f32.mrf.mxu0
    %v2456 = vadd.f32 0.0, %v2455
    %2457 = vdwg.mxu0
    %s2458 = scalar_lea.vmem [#allocation14], 1024
    %v2459 = vld [vmem:[%s2458] sm:$0xff]
    %v2460 = vld [vmem:[%s2458 + $0x8] sm:$0xff]
    %v2461 = vld [vmem:[%s2458 + $0x10] sm:$0xff]
    %v2462 = vld [vmem:[%s2458 + $0x18] sm:$0xff]
    %v2463 = vld [vmem:[%s2458 + $0x20] sm:$0xff]
    %v2464 = vld [vmem:[%s2458 + $0x28] sm:$0xff]
    %v2465 = vld [vmem:[%s2458 + $0x30] sm:$0xff]
    %v2466 = vld [vmem:[%s2458 + $0x38] sm:$0xff]
    %v2467 = vld [vmem:[%s2458 + $0x40] sm:$0xff]
    %v2468 = vld [vmem:[%s2458 + $0x48] sm:$0xff]
    %v2469 = vld [vmem:[%s2458 + $0x50] sm:$0xff]
    %v2470 = vld [vmem:[%s2458 + $0x58] sm:$0xff]
    %v2471 = vld [vmem:[%s2458 + $0x60] sm:$0xff]
    %v2472 = vld [vmem:[%s2458 + $0x68] sm:$0xff]
    %v2473 = vld [vmem:[%s2458 + $0x70] sm:$0xff]
    %v2474 = vld [vmem:[%s2458 + $0x78] sm:$0xff]
    %v2475 = vmul.f32 %v2459, %v2419
    %v2476 = vmul.f32 %v2460, %v2421
    %v2477 = vmul.f32 %v2461, %v2424
    %v2478 = vmul.f32 %v2462, %v2426
    %v2479 = vmul.f32 %v2463, %v2429
    %v2480 = vmul.f32 %v2464, %v2431
    %v2481 = vmul.f32 %v2465, %v2434
    %v2482 = vmul.f32 %v2466, %v2436
    %v2483 = vmul.f32 %v2467, %v2439
    %v2484 = vmul.f32 %v2468, %v2441
    %v2485 = vmul.f32 %v2469, %v2444
    %v2486 = vmul.f32 %v2470, %v2446
    %v2487 = vmul.f32 %v2471, %v2449
    %v2488 = vmul.f32 %v2472, %v2451
    %v2489 = vmul.f32 %v2473, %v2454
    %v2490 = vmul.f32 %v2474, %v2456
    %v2491 = vadd.f32 %v2304, %v2475
    %v2492 = vadd.f32 %v2305, %v2476
    %v2493 = vadd.f32 %v2306, %v2477
    %v2494 = vadd.f32 %v2307, %v2478
    %v2495 = vadd.f32 %v2308, %v2479
    %v2496 = vadd.f32 %v2309, %v2480
    %v2497 = vadd.f32 %v2310, %v2481
    %v2498 = vadd.f32 %v2311, %v2482
    %v2499 = vadd.f32 %v2312, %v2483
    %v2500 = vadd.f32 %v2313, %v2484
    %v2501 = vadd.f32 %v2314, %v2485
    %v2502 = vadd.f32 %v2315, %v2486
    %v2503 = vadd.f32 %v2316, %v2487
    %v2504 = vadd.f32 %v2317, %v2488
    %v2505 = vadd.f32 %v2318, %v2489
    %v2506 = vadd.f32 %v2319, %v2490
    %v2507 = vld [vmem:[#allocation13] sm:$0x1]
    %v2509 = vperm.slane %v2507, 0
    %v2511 = vadd.f32 %v2491, %v2509
    %v2512 = vadd.f32 %v2492, %v2509
    %v2513 = vadd.f32 %v2493, %v2509
    %v2514 = vadd.f32 %v2494, %v2509
    %v2515 = vadd.f32 %v2495, %v2509
    %v2516 = vadd.f32 %v2496, %v2509
    %v2517 = vadd.f32 %v2497, %v2509
    %v2518 = vadd.f32 %v2498, %v2509
    %v2519 = vadd.f32 %v2499, %v2509
    %v2520 = vadd.f32 %v2500, %v2509
    %v2521 = vadd.f32 %v2501, %v2509
    %v2522 = vadd.f32 %v2502, %v2509
    %v2523 = vadd.f32 %v2503, %v2509
    %v2524 = vadd.f32 %v2504, %v2509
    %v2525 = vadd.f32 %v2505, %v2509
    %v2526 = vadd.f32 %v2506, %v2509
    %v2527 = vmax.f32 %v2511, 0.0
    %v2528 = vmax.f32 %v2512, 0.0
    %v2529 = vmax.f32 %v2513, 0.0
    %v2530 = vmax.f32 %v2514, 0.0
    %v2531 = vmax.f32 %v2515, 0.0
    %v2532 = vmax.f32 %v2516, 0.0
    %v2533 = vmax.f32 %v2517, 0.0
    %v2534 = vmax.f32 %v2518, 0.0
    %v2535 = vmax.f32 %v2519, 0.0
    %v2536 = vmax.f32 %v2520, 0.0
    %v2537 = vmax.f32 %v2521, 0.0
    %v2538 = vmax.f32 %v2522, 0.0
    %v2539 = vmax.f32 %v2523, 0.0
    %v2540 = vmax.f32 %v2524, 0.0
    %v2541 = vmax.f32 %v2525, 0.0
    %v2542 = vmax.f32 %v2526, 0.0
    %2543 = vst [vmem:[#allocation2 + $0x10] sm:$0xff] %v2527
    %2544 = vst [vmem:[#allocation2 + $0x18] sm:$0xff] %v2528
    %2545 = vst [vmem:[#allocation2 + $0x20] sm:$0xff] %v2529
    %2546 = vst [vmem:[#allocation2 + $0x28] sm:$0xff] %v2530
    %2547 = vst [vmem:[#allocation2 + $0x30] sm:$0xff] %v2531
    %2548 = vst [vmem:[#allocation2 + $0x38] sm:$0xff] %v2532
    %2549 = vst [vmem:[#allocation2 + $0x40] sm:$0xff] %v2533
    %2550 = vst [vmem:[#allocation2 + $0x48] sm:$0xff] %v2534
    %2551 = vst [vmem:[#allocation2 + $0x50] sm:$0xff] %v2535
    %2552 = vst [vmem:[#allocation2 + $0x58] sm:$0xff] %v2536
    %2553 = vst [vmem:[#allocation2 + $0x60] sm:$0xff] %v2537
    %2554 = vst [vmem:[#allocation2 + $0x68] sm:$0xff] %v2538
    %2555 = vst [vmem:[#allocation2 + $0x70] sm:$0xff] %v2539
    %2556 = vst [vmem:[#allocation2 + $0x78] sm:$0xff] %v2540
    %2557 = vst [vmem:[#allocation2 + $0x80] sm:$0xff] %v2541
    %2558 = vst [vmem:[#allocation2 + $0x88] sm:$0xff] %v2542
    %v2559 = vld [vmem:[#allocation2 + $0x7] sm:$0xff]
    %v2560 = vld [vmem:[#allocation2 + $0xf] sm:$0xff]
    %v2561 = vld [vmem:[#allocation2 + $0x17] sm:$0xff]
    %v2562 = vld [vmem:[#allocation2 + $0x1f] sm:$0xff]
    %v2563 = vld [vmem:[#allocation2 + $0x27] sm:$0xff]
    %v2564 = vld [vmem:[#allocation2 + $0x2f] sm:$0xff]
    %v2565 = vld [vmem:[#allocation2 + $0x37] sm:$0xff]
    %v2566 = vld [vmem:[#allocation2 + $0x3f] sm:$0xff]
    %v2567 = vld [vmem:[#allocation2 + $0x47] sm:$0xff]
    %v2568 = vld [vmem:[#allocation2 + $0x4f] sm:$0xff]
    %v2569 = vld [vmem:[#allocation2 + $0x57] sm:$0xff]
    %v2570 = vld [vmem:[#allocation2 + $0x5f] sm:$0xff]
    %v2571 = vld [vmem:[#allocation2 + $0x67] sm:$0xff]
    %v2572 = vld [vmem:[#allocation2 + $0x6f] sm:$0xff]
    %v2573 = vld [vmem:[#allocation2 + $0x77] sm:$0xff]
    %v2574 = vld [vmem:[#allocation2 + $0x7f] sm:$0xff]
    %v2575 = vpack.c.bf16 %v2560, %v2559
    %v2576 = vpack.c.bf16 %v2562, %v2561
    %v2577 = vpack.c.bf16 %v2564, %v2563
    %v2578 = vpack.c.bf16 %v2566, %v2565
    %v2579 = vpack.c.bf16 %v2568, %v2567
    %v2580 = vpack.c.bf16 %v2570, %v2569
    %v2581 = vpack.c.bf16 %v2572, %v2571
    %v2582 = vpack.c.bf16 %v2574, %v2573
    %s2583 = scalar_lea.vmem [#allocation11], 576
    %v2584 = vld [vmem:[%s2583] sm:$0xf]
    %v2585 = vld [vmem:[%s2583 + $0x4] sm:$0xf]
    %v2586 = vld [vmem:[%s2583 + $0x8] sm:$0xf]
    %v2587 = vld [vmem:[%s2583 + $0xc] sm:$0xf]
    %v2588 = vld [vmem:[%s2583 + $0x10] sm:$0xf]
    %v2589 = vld [vmem:[%s2583 + $0x14] sm:$0xf]
    %v2590 = vld [vmem:[%s2583 + $0x18] sm:$0xf]
    %v2591 = vld [vmem:[%s2583 + $0x1c] sm:$0xf]
    %v2592 = vld [vmem:[%s2583 + $0x20] sm:$0xf]
    %v2593 = vld [vmem:[%s2583 + $0x24] sm:$0xf]
    %v2594 = vld [vmem:[%s2583 + $0x28] sm:$0xf]
    %v2595 = vld [vmem:[%s2583 + $0x2c] sm:$0xf]
    %v2596 = vld [vmem:[%s2583 + $0x30] sm:$0xf]
    %v2597 = vld [vmem:[%s2583 + $0x34] sm:$0xf]
    %v2598 = vld [vmem:[%s2583 + $0x38] sm:$0xf]
    %v2599 = vld [vmem:[%s2583 + $0x3c] sm:$0xf]
    %v2616 = vunpack.c.l.b16 %v2584
    %v2617 = vunpack.c.l.b16 %v2585
    %v2618 = vunpack.c.l.b16 %v2586
    %v2619 = vunpack.c.l.b16 %v2587
    %v2620 = vunpack.c.l.b16 %v2588
    %v2621 = vunpack.c.l.b16 %v2589
    %v2622 = vunpack.c.l.b16 %v2590
    %v2623 = vunpack.c.l.b16 %v2591
    %v2624 = vunpack.c.l.b16 %v2592
    %v2625 = vunpack.c.l.b16 %v2593
    %v2626 = vunpack.c.l.b16 %v2594
    %v2627 = vunpack.c.l.b16 %v2595
    %v2628 = vunpack.c.l.b16 %v2596
    %v2629 = vunpack.c.l.b16 %v2597
    %v2630 = vunpack.c.l.b16 %v2598
    %v2631 = vunpack.c.l.b16 %v2599
    %v2632 = vpack.c.b16 %v2617, %v2616
    %v2633 = vpack.c.b16 %v2619, %v2618
    %v2634 = vpack.c.b16 %v2621, %v2620
    %v2635 = vpack.c.b16 %v2623, %v2622
    %v2636 = vpack.c.b16 %v2625, %v2624
    %v2637 = vpack.c.b16 %v2627, %v2626
    %v2638 = vpack.c.b16 %v2629, %v2628
    %v2639 = vpack.c.b16 %v2631, %v2630
    %2648 = vmatpush.bf16.msra.mxu0 %v2639
    %2649 = vmatpush.bf16.msra.mxu0 %v2638
    %2650 = vmatpush.bf16.msra.mxu0 %v2637
    %2651 = vmatpush.bf16.msra.mxu0 %v2636
    %2652 = vmatpush.bf16.msra.mxu0 %v2635
    %2653 = vmatpush.bf16.msra.mxu0 %v2634
    %2654 = vmatpush.bf16.msra.mxu0 %v2633
    %2655 = vmatpush.bf16.msra.mxu0 %v2632
    %2656 = vmatmul.bf16.gmra.mxu0 %v2575
    %v2657 = vpop.f32.mrf.mxu0
    %v2658 = vadd.f32 0.0, %v2657
    %v2659 = vpop.f32.mrf.mxu0
    %v2660 = vadd.f32 0.0, %v2659
    %2661 = vmatmul.bf16.gmra.mxu0 %v2576
    %v2662 = vpop.f32.mrf.mxu0
    %v2663 = vadd.f32 0.0, %v2662
    %v2664 = vpop.f32.mrf.mxu0
    %v2665 = vadd.f32 0.0, %v2664
    %2666 = vmatmul.bf16.gmra.mxu0 %v2577
    %v2667 = vpop.f32.mrf.mxu0
    %v2668 = vadd.f32 0.0, %v2667
    %v2669 = vpop.f32.mrf.mxu0
    %v2670 = vadd.f32 0.0, %v2669
    %2671 = vmatmul.bf16.gmra.mxu0 %v2578
    %v2672 = vpop.f32.mrf.mxu0
    %v2673 = vadd.f32 0.0, %v2672
    %v2674 = vpop.f32.mrf.mxu0
    %v2675 = vadd.f32 0.0, %v2674
    %2676 = vmatmul.bf16.gmra.mxu0 %v2579
    %v2677 = vpop.f32.mrf.mxu0
    %v2678 = vadd.f32 0.0, %v2677
    %v2679 = vpop.f32.mrf.mxu0
    %v2680 = vadd.f32 0.0, %v2679
    %2681 = vmatmul.bf16.gmra.mxu0 %v2580
    %v2682 = vpop.f32.mrf.mxu0
    %v2683 = vadd.f32 0.0, %v2682
    %v2684 = vpop.f32.mrf.mxu0
    %v2685 = vadd.f32 0.0, %v2684
    %2686 = vmatmul.bf16.gmra.mxu0 %v2581
    %v2687 = vpop.f32.mrf.mxu0
    %v2688 = vadd.f32 0.0, %v2687
    %v2689 = vpop.f32.mrf.mxu0
    %v2690 = vadd.f32 0.0, %v2689
    %2691 = vmatmul.bf16.gmra.mxu0 %v2582
    %v2692 = vpop.f32.mrf.mxu0
    %v2693 = vadd.f32 0.0, %v2692
    %v2694 = vpop.f32.mrf.mxu0
    %v2695 = vadd.f32 0.0, %v2694
    %2696 = vdwg.mxu0
    %v2697 = vld [vmem:[#allocation14] sm:$0xff]
    %v2698 = vld [vmem:[#allocation14 + $0x8] sm:$0xff]
    %v2699 = vld [vmem:[#allocation14 + $0x10] sm:$0xff]
    %v2700 = vld [vmem:[#allocation14 + $0x18] sm:$0xff]
    %v2701 = vld [vmem:[#allocation14 + $0x20] sm:$0xff]
    %v2702 = vld [vmem:[#allocation14 + $0x28] sm:$0xff]
    %v2703 = vld [vmem:[#allocation14 + $0x30] sm:$0xff]
    %v2704 = vld [vmem:[#allocation14 + $0x38] sm:$0xff]
    %v2705 = vld [vmem:[#allocation14 + $0x40] sm:$0xff]
    %v2706 = vld [vmem:[#allocation14 + $0x48] sm:$0xff]
    %v2707 = vld [vmem:[#allocation14 + $0x50] sm:$0xff]
    %v2708 = vld [vmem:[#allocation14 + $0x58] sm:$0xff]
    %v2709 = vld [vmem:[#allocation14 + $0x60] sm:$0xff]
    %v2710 = vld [vmem:[#allocation14 + $0x68] sm:$0xff]
    %v2711 = vld [vmem:[#allocation14 + $0x70] sm:$0xff]
    %v2712 = vld [vmem:[#allocation14 + $0x78] sm:$0xff]
    %v2713 = vmul.f32 %v2697, %v2658
    %v2714 = vmul.f32 %v2698, %v2660
    %v2715 = vmul.f32 %v2699, %v2663
    %v2716 = vmul.f32 %v2700, %v2665
    %v2717 = vmul.f32 %v2701, %v2668
    %v2718 = vmul.f32 %v2702, %v2670
    %v2719 = vmul.f32 %v2703, %v2673
    %v2720 = vmul.f32 %v2704, %v2675
    %v2721 = vmul.f32 %v2705, %v2678
    %v2722 = vmul.f32 %v2706, %v2680
    %v2723 = vmul.f32 %v2707, %v2683
    %v2724 = vmul.f32 %v2708, %v2685
    %v2725 = vmul.f32 %v2709, %v2688
    %v2726 = vmul.f32 %v2710, %v2690
    %v2727 = vmul.f32 %v2711, %v2693
    %v2728 = vmul.f32 %v2712, %v2695
    %v2729 = vadd.f32 %v2713, 0.0
    %v2730 = vadd.f32 %v2714, 0.0
    %v2731 = vadd.f32 %v2715, 0.0
    %v2732 = vadd.f32 %v2716, 0.0
    %v2733 = vadd.f32 %v2717, 0.0
    %v2734 = vadd.f32 %v2718, 0.0
    %v2735 = vadd.f32 %v2719, 0.0
    %v2736 = vadd.f32 %v2720, 0.0
    %v2737 = vadd.f32 %v2721, 0.0
    %v2738 = vadd.f32 %v2722, 0.0
    %v2739 = vadd.f32 %v2723, 0.0
    %v2740 = vadd.f32 %v2724, 0.0
    %v2741 = vadd.f32 %v2725, 0.0
    %v2742 = vadd.f32 %v2726, 0.0
    %v2743 = vadd.f32 %v2727, 0.0
    %v2744 = vadd.f32 %v2728, 0.0
    %v2745 = vld [vmem:[#allocation2 + $0x8] sm:$0xff]
    %v2746 = vld [vmem:[#allocation2 + $0x10] sm:$0xff]
    %v2747 = vld [vmem:[#allocation2 + $0x18] sm:$0xff]
    %v2748 = vld [vmem:[#allocation2 + $0x20] sm:$0xff]
    %v2749 = vld [vmem:[#allocation2 + $0x28] sm:$0xff]
    %v2750 = vld [vmem:[#allocation2 + $0x30] sm:$0xff]
    %v2751 = vld [vmem:[#allocation2 + $0x38] sm:$0xff]
    %v2752 = vld [vmem:[#allocation2 + $0x40] sm:$0xff]
    %v2753 = vld [vmem:[#allocation2 + $0x48] sm:$0xff]
    %v2754 = vld [vmem:[#allocation2 + $0x50] sm:$0xff]
    %v2755 = vld [vmem:[#allocation2 + $0x58] sm:$0xff]
    %v2756 = vld [vmem:[#allocation2 + $0x60] sm:$0xff]
    %v2757 = vld [vmem:[#allocation2 + $0x68] sm:$0xff]
    %v2758 = vld [vmem:[#allocation2 + $0x70] sm:$0xff]
    %v2759 = vld [vmem:[#allocation2 + $0x78] sm:$0xff]
    %v2760 = vld [vmem:[#allocation2 + $0x80] sm:$0xff]
    %v2761 = vpack.c.bf16 %v2746, %v2745
    %v2762 = vpack.c.bf16 %v2748, %v2747
    %v2763 = vpack.c.bf16 %v2750, %v2749
    %v2764 = vpack.c.bf16 %v2752, %v2751
    %v2765 = vpack.c.bf16 %v2754, %v2753
    %v2766 = vpack.c.bf16 %v2756, %v2755
    %v2767 = vpack.c.bf16 %v2758, %v2757
    %v2768 = vpack.c.bf16 %v2760, %v2759
    %s2769 = scalar_lea.vmem [#allocation11], 640
    %v2770 = vld [vmem:[%s2769] sm:$0xf]
    %v2771 = vld [vmem:[%s2769 + $0x4] sm:$0xf]
    %v2772 = vld [vmem:[%s2769 + $0x8] sm:$0xf]
    %v2773 = vld [vmem:[%s2769 + $0xc] sm:$0xf]
    %v2774 = vld [vmem:[%s2769 + $0x10] sm:$0xf]
    %v2775 = vld [vmem:[%s2769 + $0x14] sm:$0xf]
    %v2776 = vld [vmem:[%s2769 + $0x18] sm:$0xf]
    %v2777 = vld [vmem:[%s2769 + $0x1c] sm:$0xf]
    %v2778 = vld [vmem:[%s2769 + $0x20] sm:$0xf]
    %v2779 = vld [vmem:[%s2769 + $0x24] sm:$0xf]
    %v2780 = vld [vmem:[%s2769 + $0x28] sm:$0xf]
    %v2781 = vld [vmem:[%s2769 + $0x2c] sm:$0xf]
    %v2782 = vld [vmem:[%s2769 + $0x30] sm:$0xf]
    %v2783 = vld [vmem:[%s2769 + $0x34] sm:$0xf]
    %v2784 = vld [vmem:[%s2769 + $0x38] sm:$0xf]
    %v2785 = vld [vmem:[%s2769 + $0x3c] sm:$0xf]
    %v2802 = vunpack.c.l.b16 %v2770
    %v2803 = vunpack.c.l.b16 %v2771
    %v2804 = vunpack.c.l.b16 %v2772
    %v2805 = vunpack.c.l.b16 %v2773
    %v2806 = vunpack.c.l.b16 %v2774
    %v2807 = vunpack.c.l.b16 %v2775
    %v2808 = vunpack.c.l.b16 %v2776
    %v2809 = vunpack.c.l.b16 %v2777
    %v2810 = vunpack.c.l.b16 %v2778
    %v2811 = vunpack.c.l.b16 %v2779
    %v2812 = vunpack.c.l.b16 %v2780
    %v2813 = vunpack.c.l.b16 %v2781
    %v2814 = vunpack.c.l.b16 %v2782
    %v2815 = vunpack.c.l.b16 %v2783
    %v2816 = vunpack.c.l.b16 %v2784
    %v2817 = vunpack.c.l.b16 %v2785
    %v2818 = vpack.c.b16 %v2803, %v2802
    %v2819 = vpack.c.b16 %v2805, %v2804
    %v2820 = vpack.c.b16 %v2807, %v2806
    %v2821 = vpack.c.b16 %v2809, %v2808
    %v2822 = vpack.c.b16 %v2811, %v2810
    %v2823 = vpack.c.b16 %v2813, %v2812
    %v2824 = vpack.c.b16 %v2815, %v2814
    %v2825 = vpack.c.b16 %v2817, %v2816
    %2834 = vmatpush.bf16.msra.mxu0 %v2825
    %2835 = vmatpush.bf16.msra.mxu0 %v2824
    %2836 = vmatpush.bf16.msra.mxu0 %v2823
    %2837 = vmatpush.bf16.msra.mxu0 %v2822
    %2838 = vmatpush.bf16.msra.mxu0 %v2821
    %2839 = vmatpush.bf16.msra.mxu0 %v2820
    %2840 = vmatpush.bf16.msra.mxu0 %v2819
    %2841 = vmatpush.bf16.msra.mxu0 %v2818
    %2842 = vmatmul.bf16.gmra.mxu0 %v2761
    %v2843 = vpop.f32.mrf.mxu0
    %v2844 = vadd.f32 0.0, %v2843
    %v2845 = vpop.f32.mrf.mxu0
    %v2846 = vadd.f32 0.0, %v2845
    %2847 = vmatmul.bf16.gmra.mxu0 %v2762
    %v2848 = vpop.f32.mrf.mxu0
    %v2849 = vadd.f32 0.0, %v2848
    %v2850 = vpop.f32.mrf.mxu0
    %v2851 = vadd.f32 0.0, %v2850
    %2852 = vmatmul.bf16.gmra.mxu0 %v2763
    %v2853 = vpop.f32.mrf.mxu0
    %v2854 = vadd.f32 0.0, %v2853
    %v2855 = vpop.f32.mrf.mxu0
    %v2856 = vadd.f32 0.0, %v2855
    %2857 = vmatmul.bf16.gmra.mxu0 %v2764
    %v2858 = vpop.f32.mrf.mxu0
    %v2859 = vadd.f32 0.0, %v2858
    %v2860 = vpop.f32.mrf.mxu0
    %v2861 = vadd.f32 0.0, %v2860
    %2862 = vmatmul.bf16.gmra.mxu0 %v2765
    %v2863 = vpop.f32.mrf.mxu0
    %v2864 = vadd.f32 0.0, %v2863
    %v2865 = vpop.f32.mrf.mxu0
    %v2866 = vadd.f32 0.0, %v2865
    %2867 = vmatmul.bf16.gmra.mxu0 %v2766
    %v2868 = vpop.f32.mrf.mxu0
    %v2869 = vadd.f32 0.0, %v2868
    %v2870 = vpop.f32.mrf.mxu0
    %v2871 = vadd.f32 0.0, %v2870
    %2872 = vmatmul.bf16.gmra.mxu0 %v2767
    %v2873 = vpop.f32.mrf.mxu0
    %v2874 = vadd.f32 0.0, %v2873
    %v2875 = vpop.f32.mrf.mxu0
    %v2876 = vadd.f32 0.0, %v2875
    %2877 = vmatmul.bf16.gmra.mxu0 %v2768
    %v2878 = vpop.f32.mrf.mxu0
    %v2879 = vadd.f32 0.0, %v2878
    %v2880 = vpop.f32.mrf.mxu0
    %v2881 = vadd.f32 0.0, %v2880
    %2882 = vdwg.mxu0
    %v2883 = vld [vmem:[%s1149] sm:$0xff]
    %v2884 = vld [vmem:[%s1149 + $0x8] sm:$0xff]
    %v2885 = vld [vmem:[%s1149 + $0x10] sm:$0xff]
    %v2886 = vld [vmem:[%s1149 + $0x18] sm:$0xff]
    %v2887 = vld [vmem:[%s1149 + $0x20] sm:$0xff]
    %v2888 = vld [vmem:[%s1149 + $0x28] sm:$0xff]
    %v2889 = vld [vmem:[%s1149 + $0x30] sm:$0xff]
    %v2890 = vld [vmem:[%s1149 + $0x38] sm:$0xff]
    %v2891 = vld [vmem:[%s1149 + $0x40] sm:$0xff]
    %v2892 = vld [vmem:[%s1149 + $0x48] sm:$0xff]
    %v2893 = vld [vmem:[%s1149 + $0x50] sm:$0xff]
    %v2894 = vld [vmem:[%s1149 + $0x58] sm:$0xff]
    %v2895 = vld [vmem:[%s1149 + $0x60] sm:$0xff]
    %v2896 = vld [vmem:[%s1149 + $0x68] sm:$0xff]
    %v2897 = vld [vmem:[%s1149 + $0x70] sm:$0xff]
    %v2898 = vld [vmem:[%s1149 + $0x78] sm:$0xff]
    %v2899 = vmul.f32 %v2883, %v2844
    %v2900 = vmul.f32 %v2884, %v2846
    %v2901 = vmul.f32 %v2885, %v2849
    %v2902 = vmul.f32 %v2886, %v2851
    %v2903 = vmul.f32 %v2887, %v2854
    %v2904 = vmul.f32 %v2888, %v2856
    %v2905 = vmul.f32 %v2889, %v2859
    %v2906 = vmul.f32 %v2890, %v2861
    %v2907 = vmul.f32 %v2891, %v2864
    %v2908 = vmul.f32 %v2892, %v2866
    %v2909 = vmul.f32 %v2893, %v2869
    %v2910 = vmul.f32 %v2894, %v2871
    %v2911 = vmul.f32 %v2895, %v2874
    %v2912 = vmul.f32 %v2896, %v2876
    %v2913 = vmul.f32 %v2897, %v2879
    %v2914 = vmul.f32 %v2898, %v2881
    %v2915 = vadd.f32 %v2729, %v2899
    %v2916 = vadd.f32 %v2730, %v2900
    %v2917 = vadd.f32 %v2731, %v2901
    %v2918 = vadd.f32 %v2732, %v2902
    %v2919 = vadd.f32 %v2733, %v2903
    %v2920 = vadd.f32 %v2734, %v2904
    %v2921 = vadd.f32 %v2735, %v2905
    %v2922 = vadd.f32 %v2736, %v2906
    %v2923 = vadd.f32 %v2737, %v2907
    %v2924 = vadd.f32 %v2738, %v2908
    %v2925 = vadd.f32 %v2739, %v2909
    %v2926 = vadd.f32 %v2740, %v2910
    %v2927 = vadd.f32 %v2741, %v2911
    %v2928 = vadd.f32 %v2742, %v2912
    %v2929 = vadd.f32 %v2743, %v2913
    %v2930 = vadd.f32 %v2744, %v2914
    %v2931 = vld [vmem:[#allocation2 + $0x9] sm:$0xff]
    %v2932 = vld [vmem:[#allocation2 + $0x11] sm:$0xff]
    %v2933 = vld [vmem:[#allocation2 + $0x19] sm:$0xff]
    %v2934 = vld [vmem:[#allocation2 + $0x21] sm:$0xff]
    %v2935 = vld [vmem:[#allocation2 + $0x29] sm:$0xff]
    %v2936 = vld [vmem:[#allocation2 + $0x31] sm:$0xff]
    %v2937 = vld [vmem:[#allocation2 + $0x39] sm:$0xff]
    %v2938 = vld [vmem:[#allocation2 + $0x41] sm:$0xff]
    %v2939 = vld [vmem:[#allocation2 + $0x49] sm:$0xff]
    %v2940 = vld [vmem:[#allocation2 + $0x51] sm:$0xff]
    %v2941 = vld [vmem:[#allocation2 + $0x59] sm:$0xff]
    %v2942 = vld [vmem:[#allocation2 + $0x61] sm:$0xff]
    %v2943 = vld [vmem:[#allocation2 + $0x69] sm:$0xff]
    %v2944 = vld [vmem:[#allocation2 + $0x71] sm:$0xff]
    %v2945 = vld [vmem:[#allocation2 + $0x79] sm:$0xff]
    %v2946 = vld [vmem:[#allocation2 + $0x81] sm:$0xff]
    %v2947 = vpack.c.bf16 %v2932, %v2931
    %v2948 = vpack.c.bf16 %v2934, %v2933
    %v2949 = vpack.c.bf16 %v2936, %v2935
    %v2950 = vpack.c.bf16 %v2938, %v2937
    %v2951 = vpack.c.bf16 %v2940, %v2939
    %v2952 = vpack.c.bf16 %v2942, %v2941
    %v2953 = vpack.c.bf16 %v2944, %v2943
    %v2954 = vpack.c.bf16 %v2946, %v2945
    %s2955 = scalar_lea.vmem [#allocation11], 704
    %v2956 = vld [vmem:[%s2955] sm:$0xf]
    %v2957 = vld [vmem:[%s2955 + $0x4] sm:$0xf]
    %v2958 = vld [vmem:[%s2955 + $0x8] sm:$0xf]
    %v2959 = vld [vmem:[%s2955 + $0xc] sm:$0xf]
    %v2960 = vld [vmem:[%s2955 + $0x10] sm:$0xf]
    %v2961 = vld [vmem:[%s2955 + $0x14] sm:$0xf]
    %v2962 = vld [vmem:[%s2955 + $0x18] sm:$0xf]
    %v2963 = vld [vmem:[%s2955 + $0x1c] sm:$0xf]
    %v2964 = vld [vmem:[%s2955 + $0x20] sm:$0xf]
    %v2965 = vld [vmem:[%s2955 + $0x24] sm:$0xf]
    %v2966 = vld [vmem:[%s2955 + $0x28] sm:$0xf]
    %v2967 = vld [vmem:[%s2955 + $0x2c] sm:$0xf]
    %v2968 = vld [vmem:[%s2955 + $0x30] sm:$0xf]
    %v2969 = vld [vmem:[%s2955 + $0x34] sm:$0xf]
    %v2970 = vld [vmem:[%s2955 + $0x38] sm:$0xf]
    %v2971 = vld [vmem:[%s2955 + $0x3c] sm:$0xf]
    %v2988 = vunpack.c.l.b16 %v2956
    %v2989 = vunpack.c.l.b16 %v2957
    %v2990 = vunpack.c.l.b16 %v2958
    %v2991 = vunpack.c.l.b16 %v2959
    %v2992 = vunpack.c.l.b16 %v2960
    %v2993 = vunpack.c.l.b16 %v2961
    %v2994 = vunpack.c.l.b16 %v2962
    %v2995 = vunpack.c.l.b16 %v2963
    %v2996 = vunpack.c.l.b16 %v2964
    %v2997 = vunpack.c.l.b16 %v2965
    %v2998 = vunpack.c.l.b16 %v2966
    %v2999 = vunpack.c.l.b16 %v2967
    %v3000 = vunpack.c.l.b16 %v2968
    %v3001 = vunpack.c.l.b16 %v2969
    %v3002 = vunpack.c.l.b16 %v2970
    %v3003 = vunpack.c.l.b16 %v2971
    %v3004 = vpack.c.b16 %v2989, %v2988
    %v3005 = vpack.c.b16 %v2991, %v2990
    %v3006 = vpack.c.b16 %v2993, %v2992
    %v3007 = vpack.c.b16 %v2995, %v2994
    %v3008 = vpack.c.b16 %v2997, %v2996
    %v3009 = vpack.c.b16 %v2999, %v2998
    %v3010 = vpack.c.b16 %v3001, %v3000
    %v3011 = vpack.c.b16 %v3003, %v3002
    %3020 = vmatpush.bf16.msra.mxu0 %v3011
    %3021 = vmatpush.bf16.msra.mxu0 %v3010
    %3022 = vmatpush.bf16.msra.mxu0 %v3009
    %3023 = vmatpush.bf16.msra.mxu0 %v3008
    %3024 = vmatpush.bf16.msra.mxu0 %v3007
    %3025 = vmatpush.bf16.msra.mxu0 %v3006
    %3026 = vmatpush.bf16.msra.mxu0 %v3005
    %3027 = vmatpush.bf16.msra.mxu0 %v3004
    %3028 = vmatmul.bf16.gmra.mxu0 %v2947
    %v3029 = vpop.f32.mrf.mxu0
    %v3030 = vadd.f32 0.0, %v3029
    %v3031 = vpop.f32.mrf.mxu0
    %v3032 = vadd.f32 0.0, %v3031
    %3033 = vmatmul.bf16.gmra.mxu0 %v2948
    %v3034 = vpop.f32.mrf.mxu0
    %v3035 = vadd.f32 0.0, %v3034
    %v3036 = vpop.f32.mrf.mxu0
    %v3037 = vadd.f32 0.0, %v3036
    %3038 = vmatmul.bf16.gmra.mxu0 %v2949
    %v3039 = vpop.f32.mrf.mxu0
    %v3040 = vadd.f32 0.0, %v3039
    %v3041 = vpop.f32.mrf.mxu0
    %v3042 = vadd.f32 0.0, %v3041
    %3043 = vmatmul.bf16.gmra.mxu0 %v2950
    %v3044 = vpop.f32.mrf.mxu0
    %v3045 = vadd.f32 0.0, %v3044
    %v3046 = vpop.f32.mrf.mxu0
    %v3047 = vadd.f32 0.0, %v3046
    %3048 = vmatmul.bf16.gmra.mxu0 %v2951
    %v3049 = vpop.f32.mrf.mxu0
    %v3050 = vadd.f32 0.0, %v3049
    %v3051 = vpop.f32.mrf.mxu0
    %v3052 = vadd.f32 0.0, %v3051
    %3053 = vmatmul.bf16.gmra.mxu0 %v2952
    %v3054 = vpop.f32.mrf.mxu0
    %v3055 = vadd.f32 0.0, %v3054
    %v3056 = vpop.f32.mrf.mxu0
    %v3057 = vadd.f32 0.0, %v3056
    %3058 = vmatmul.bf16.gmra.mxu0 %v2953
    %v3059 = vpop.f32.mrf.mxu0
    %v3060 = vadd.f32 0.0, %v3059
    %v3061 = vpop.f32.mrf.mxu0
    %v3062 = vadd.f32 0.0, %v3061
    %3063 = vmatmul.bf16.gmra.mxu0 %v2954
    %v3064 = vpop.f32.mrf.mxu0
    %v3065 = vadd.f32 0.0, %v3064
    %v3066 = vpop.f32.mrf.mxu0
    %v3067 = vadd.f32 0.0, %v3066
    %3068 = vdwg.mxu0
    %v3069 = vld [vmem:[%s1336] sm:$0xff]
    %v3070 = vld [vmem:[%s1336 + $0x8] sm:$0xff]
    %v3071 = vld [vmem:[%s1336 + $0x10] sm:$0xff]
    %v3072 = vld [vmem:[%s1336 + $0x18] sm:$0xff]
    %v3073 = vld [vmem:[%s1336 + $0x20] sm:$0xff]
    %v3074 = vld [vmem:[%s1336 + $0x28] sm:$0xff]
    %v3075 = vld [vmem:[%s1336 + $0x30] sm:$0xff]
    %v3076 = vld [vmem:[%s1336 + $0x38] sm:$0xff]
    %v3077 = vld [vmem:[%s1336 + $0x40] sm:$0xff]
    %v3078 = vld [vmem:[%s1336 + $0x48] sm:$0xff]
    %v3079 = vld [vmem:[%s1336 + $0x50] sm:$0xff]
    %v3080 = vld [vmem:[%s1336 + $0x58] sm:$0xff]
    %v3081 = vld [vmem:[%s1336 + $0x60] sm:$0xff]
    %v3082 = vld [vmem:[%s1336 + $0x68] sm:$0xff]
    %v3083 = vld [vmem:[%s1336 + $0x70] sm:$0xff]
    %v3084 = vld [vmem:[%s1336 + $0x78] sm:$0xff]
    %v3085 = vmul.f32 %v3069, %v3030
    %v3086 = vmul.f32 %v3070, %v3032
    %v3087 = vmul.f32 %v3071, %v3035
    %v3088 = vmul.f32 %v3072, %v3037
    %v3089 = vmul.f32 %v3073, %v3040
    %v3090 = vmul.f32 %v3074, %v3042
    %v3091 = vmul.f32 %v3075, %v3045
    %v3092 = vmul.f32 %v3076, %v3047
    %v3093 = vmul.f32 %v3077, %v3050
    %v3094 = vmul.f32 %v3078, %v3052
    %v3095 = vmul.f32 %v3079, %v3055
    %v3096 = vmul.f32 %v3080, %v3057
    %v3097 = vmul.f32 %v3081, %v3060
    %v3098 = vmul.f32 %v3082, %v3062
    %v3099 = vmul.f32 %v3083, %v3065
    %v3100 = vmul.f32 %v3084, %v3067
    %v3101 = vadd.f32 %v2915, %v3085
    %v3102 = vadd.f32 %v2916, %v3086
    %v3103 = vadd.f32 %v2917, %v3087
    %v3104 = vadd.f32 %v2918, %v3088
    %v3105 = vadd.f32 %v2919, %v3089
    %v3106 = vadd.f32 %v2920, %v3090
    %v3107 = vadd.f32 %v2921, %v3091
    %v3108 = vadd.f32 %v2922, %v3092
    %v3109 = vadd.f32 %v2923, %v3093
    %v3110 = vadd.f32 %v2924, %v3094
    %v3111 = vadd.f32 %v2925, %v3095
    %v3112 = vadd.f32 %v2926, %v3096
    %v3113 = vadd.f32 %v2927, %v3097
    %v3114 = vadd.f32 %v2928, %v3098
    %v3115 = vadd.f32 %v2929, %v3099
    %v3116 = vadd.f32 %v2930, %v3100
    %v3117 = vld [vmem:[#allocation2 + $0xf] sm:$0xff]
    %v3118 = vld [vmem:[#allocation2 + $0x17] sm:$0xff]
    %v3119 = vld [vmem:[#allocation2 + $0x1f] sm:$0xff]
    %v3120 = vld [vmem:[#allocation2 + $0x27] sm:$0xff]
    %v3121 = vld [vmem:[#allocation2 + $0x2f] sm:$0xff]
    %v3122 = vld [vmem:[#allocation2 + $0x37] sm:$0xff]
    %v3123 = vld [vmem:[#allocation2 + $0x3f] sm:$0xff]
    %v3124 = vld [vmem:[#allocation2 + $0x47] sm:$0xff]
    %v3125 = vld [vmem:[#allocation2 + $0x4f] sm:$0xff]
    %v3126 = vld [vmem:[#allocation2 + $0x57] sm:$0xff]
    %v3127 = vld [vmem:[#allocation2 + $0x5f] sm:$0xff]
    %v3128 = vld [vmem:[#allocation2 + $0x67] sm:$0xff]
    %v3129 = vld [vmem:[#allocation2 + $0x6f] sm:$0xff]
    %v3130 = vld [vmem:[#allocation2 + $0x77] sm:$0xff]
    %v3131 = vld [vmem:[#allocation2 + $0x7f] sm:$0xff]
    %v3132 = vld [vmem:[#allocation2 + $0x87] sm:$0xff]
    %v3133 = vpack.c.bf16 %v3118, %v3117
    %v3134 = vpack.c.bf16 %v3120, %v3119
    %v3135 = vpack.c.bf16 %v3122, %v3121
    %v3136 = vpack.c.bf16 %v3124, %v3123
    %v3137 = vpack.c.bf16 %v3126, %v3125
    %v3138 = vpack.c.bf16 %v3128, %v3127
    %v3139 = vpack.c.bf16 %v3130, %v3129
    %v3140 = vpack.c.bf16 %v3132, %v3131
    %s3141 = scalar_lea.vmem [#allocation11], 768
    %v3142 = vld [vmem:[%s3141] sm:$0xf]
    %v3143 = vld [vmem:[%s3141 + $0x4] sm:$0xf]
    %v3144 = vld [vmem:[%s3141 + $0x8] sm:$0xf]
    %v3145 = vld [vmem:[%s3141 + $0xc] sm:$0xf]
    %v3146 = vld [vmem:[%s3141 + $0x10] sm:$0xf]
    %v3147 = vld [vmem:[%s3141 + $0x14] sm:$0xf]
    %v3148 = vld [vmem:[%s3141 + $0x18] sm:$0xf]
    %v3149 = vld [vmem:[%s3141 + $0x1c] sm:$0xf]
    %v3150 = vld [vmem:[%s3141 + $0x20] sm:$0xf]
    %v3151 = vld [vmem:[%s3141 + $0x24] sm:$0xf]
    %v3152 = vld [vmem:[%s3141 + $0x28] sm:$0xf]
    %v3153 = vld [vmem:[%s3141 + $0x2c] sm:$0xf]
    %v3154 = vld [vmem:[%s3141 + $0x30] sm:$0xf]
    %v3155 = vld [vmem:[%s3141 + $0x34] sm:$0xf]
    %v3156 = vld [vmem:[%s3141 + $0x38] sm:$0xf]
    %v3157 = vld [vmem:[%s3141 + $0x3c] sm:$0xf]
    %v3174 = vunpack.c.l.b16 %v3142
    %v3175 = vunpack.c.l.b16 %v3143
    %v3176 = vunpack.c.l.b16 %v3144
    %v3177 = vunpack.c.l.b16 %v3145
    %v3178 = vunpack.c.l.b16 %v3146
    %v3179 = vunpack.c.l.b16 %v3147
    %v3180 = vunpack.c.l.b16 %v3148
    %v3181 = vunpack.c.l.b16 %v3149
    %v3182 = vunpack.c.l.b16 %v3150
    %v3183 = vunpack.c.l.b16 %v3151
    %v3184 = vunpack.c.l.b16 %v3152
    %v3185 = vunpack.c.l.b16 %v3153
    %v3186 = vunpack.c.l.b16 %v3154
    %v3187 = vunpack.c.l.b16 %v3155
    %v3188 = vunpack.c.l.b16 %v3156
    %v3189 = vunpack.c.l.b16 %v3157
    %v3190 = vpack.c.b16 %v3175, %v3174
    %v3191 = vpack.c.b16 %v3177, %v3176
    %v3192 = vpack.c.b16 %v3179, %v3178
    %v3193 = vpack.c.b16 %v3181, %v3180
    %v3194 = vpack.c.b16 %v3183, %v3182
    %v3195 = vpack.c.b16 %v3185, %v3184
    %v3196 = vpack.c.b16 %v3187, %v3186
    %v3197 = vpack.c.b16 %v3189, %v3188
    %3206 = vmatpush.bf16.msra.mxu0 %v3197
    %3207 = vmatpush.bf16.msra.mxu0 %v3196
    %3208 = vmatpush.bf16.msra.mxu0 %v3195
    %3209 = vmatpush.bf16.msra.mxu0 %v3194
    %3210 = vmatpush.bf16.msra.mxu0 %v3193
    %3211 = vmatpush.bf16.msra.mxu0 %v3192
    %3212 = vmatpush.bf16.msra.mxu0 %v3191
    %3213 = vmatpush.bf16.msra.mxu0 %v3190
    %3214 = vmatmul.bf16.gmra.mxu0 %v3133
    %v3215 = vpop.f32.mrf.mxu0
    %v3216 = vadd.f32 0.0, %v3215
    %v3217 = vpop.f32.mrf.mxu0
    %v3218 = vadd.f32 0.0, %v3217
    %3219 = vmatmul.bf16.gmra.mxu0 %v3134
    %v3220 = vpop.f32.mrf.mxu0
    %v3221 = vadd.f32 0.0, %v3220
    %v3222 = vpop.f32.mrf.mxu0
    %v3223 = vadd.f32 0.0, %v3222
    %3224 = vmatmul.bf16.gmra.mxu0 %v3135
    %v3225 = vpop.f32.mrf.mxu0
    %v3226 = vadd.f32 0.0, %v3225
    %v3227 = vpop.f32.mrf.mxu0
    %v3228 = vadd.f32 0.0, %v3227
    %3229 = vmatmul.bf16.gmra.mxu0 %v3136
    %v3230 = vpop.f32.mrf.mxu0
    %v3231 = vadd.f32 0.0, %v3230
    %v3232 = vpop.f32.mrf.mxu0
    %v3233 = vadd.f32 0.0, %v3232
    %3234 = vmatmul.bf16.gmra.mxu0 %v3137
    %v3235 = vpop.f32.mrf.mxu0
    %v3236 = vadd.f32 0.0, %v3235
    %v3237 = vpop.f32.mrf.mxu0
    %v3238 = vadd.f32 0.0, %v3237
    %3239 = vmatmul.bf16.gmra.mxu0 %v3138
    %v3240 = vpop.f32.mrf.mxu0
    %v3241 = vadd.f32 0.0, %v3240
    %v3242 = vpop.f32.mrf.mxu0
    %v3243 = vadd.f32 0.0, %v3242
    %3244 = vmatmul.bf16.gmra.mxu0 %v3139
    %v3245 = vpop.f32.mrf.mxu0
    %v3246 = vadd.f32 0.0, %v3245
    %v3247 = vpop.f32.mrf.mxu0
    %v3248 = vadd.f32 0.0, %v3247
    %3249 = vmatmul.bf16.gmra.mxu0 %v3140
    %v3250 = vpop.f32.mrf.mxu0
    %v3251 = vadd.f32 0.0, %v3250
    %v3252 = vpop.f32.mrf.mxu0
    %v3253 = vadd.f32 0.0, %v3252
    %3254 = vdwg.mxu0
    %v3255 = vld [vmem:[%s1523] sm:$0xff]
    %v3256 = vld [vmem:[%s1523 + $0x8] sm:$0xff]
    %v3257 = vld [vmem:[%s1523 + $0x10] sm:$0xff]
    %v3258 = vld [vmem:[%s1523 + $0x18] sm:$0xff]
    %v3259 = vld [vmem:[%s1523 + $0x20] sm:$0xff]
    %v3260 = vld [vmem:[%s1523 + $0x28] sm:$0xff]
    %v3261 = vld [vmem:[%s1523 + $0x30] sm:$0xff]
    %v3262 = vld [vmem:[%s1523 + $0x38] sm:$0xff]
    %v3263 = vld [vmem:[%s1523 + $0x40] sm:$0xff]
    %v3264 = vld [vmem:[%s1523 + $0x48] sm:$0xff]
    %v3265 = vld [vmem:[%s1523 + $0x50] sm:$0xff]
    %v3266 = vld [vmem:[%s1523 + $0x58] sm:$0xff]
    %v3267 = vld [vmem:[%s1523 + $0x60] sm:$0xff]
    %v3268 = vld [vmem:[%s1523 + $0x68] sm:$0xff]
    %v3269 = vld [vmem:[%s1523 + $0x70] sm:$0xff]
    %v3270 = vld [vmem:[%s1523 + $0x78] sm:$0xff]
    %v3271 = vmul.f32 %v3255, %v3216
    %v3272 = vmul.f32 %v3256, %v3218
    %v3273 = vmul.f32 %v3257, %v3221
    %v3274 = vmul.f32 %v3258, %v3223
    %v3275 = vmul.f32 %v3259, %v3226
    %v3276 = vmul.f32 %v3260, %v3228
    %v3277 = vmul.f32 %v3261, %v3231
    %v3278 = vmul.f32 %v3262, %v3233
    %v3279 = vmul.f32 %v3263, %v3236
    %v3280 = vmul.f32 %v3264, %v3238
    %v3281 = vmul.f32 %v3265, %v3241
    %v3282 = vmul.f32 %v3266, %v3243
    %v3283 = vmul.f32 %v3267, %v3246
    %v3284 = vmul.f32 %v3268, %v3248
    %v3285 = vmul.f32 %v3269, %v3251
    %v3286 = vmul.f32 %v3270, %v3253
    %v3287 = vadd.f32 %v3101, %v3271
    %v3288 = vadd.f32 %v3102, %v3272
    %v3289 = vadd.f32 %v3103, %v3273
    %v3290 = vadd.f32 %v3104, %v3274
    %v3291 = vadd.f32 %v3105, %v3275
    %v3292 = vadd.f32 %v3106, %v3276
    %v3293 = vadd.f32 %v3107, %v3277
    %v3294 = vadd.f32 %v3108, %v3278
    %v3295 = vadd.f32 %v3109, %v3279
    %v3296 = vadd.f32 %v3110, %v3280
    %v3297 = vadd.f32 %v3111, %v3281
    %v3298 = vadd.f32 %v3112, %v3282
    %v3299 = vadd.f32 %v3113, %v3283
    %v3300 = vadd.f32 %v3114, %v3284
    %v3301 = vadd.f32 %v3115, %v3285
    %v3302 = vadd.f32 %v3116, %v3286
    %v3303 = vld [vmem:[#allocation2 + $0x10] sm:$0xff]
    %v3304 = vld [vmem:[#allocation2 + $0x18] sm:$0xff]
    %v3305 = vld [vmem:[#allocation2 + $0x20] sm:$0xff]
    %v3306 = vld [vmem:[#allocation2 + $0x28] sm:$0xff]
    %v3307 = vld [vmem:[#allocation2 + $0x30] sm:$0xff]
    %v3308 = vld [vmem:[#allocation2 + $0x38] sm:$0xff]
    %v3309 = vld [vmem:[#allocation2 + $0x40] sm:$0xff]
    %v3310 = vld [vmem:[#allocation2 + $0x48] sm:$0xff]
    %v3311 = vld [vmem:[#allocation2 + $0x50] sm:$0xff]
    %v3312 = vld [vmem:[#allocation2 + $0x58] sm:$0xff]
    %v3313 = vld [vmem:[#allocation2 + $0x60] sm:$0xff]
    %v3314 = vld [vmem:[#allocation2 + $0x68] sm:$0xff]
    %v3315 = vld [vmem:[#allocation2 + $0x70] sm:$0xff]
    %v3316 = vld [vmem:[#allocation2 + $0x78] sm:$0xff]
    %v3317 = vld [vmem:[#allocation2 + $0x80] sm:$0xff]
    %v3318 = vld [vmem:[#allocation2 + $0x88] sm:$0xff]
    %v3319 = vpack.c.bf16 %v3304, %v3303
    %v3320 = vpack.c.bf16 %v3306, %v3305
    %v3321 = vpack.c.bf16 %v3308, %v3307
    %v3322 = vpack.c.bf16 %v3310, %v3309
    %v3323 = vpack.c.bf16 %v3312, %v3311
    %v3324 = vpack.c.bf16 %v3314, %v3313
    %v3325 = vpack.c.bf16 %v3316, %v3315
    %v3326 = vpack.c.bf16 %v3318, %v3317
    %s3327 = scalar_lea.vmem [#allocation11], 832
    %v3328 = vld [vmem:[%s3327] sm:$0xf]
    %v3329 = vld [vmem:[%s3327 + $0x4] sm:$0xf]
    %v3330 = vld [vmem:[%s3327 + $0x8] sm:$0xf]
    %v3331 = vld [vmem:[%s3327 + $0xc] sm:$0xf]
    %v3332 = vld [vmem:[%s3327 + $0x10] sm:$0xf]
    %v3333 = vld [vmem:[%s3327 + $0x14] sm:$0xf]
    %v3334 = vld [vmem:[%s3327 + $0x18] sm:$0xf]
    %v3335 = vld [vmem:[%s3327 + $0x1c] sm:$0xf]
    %v3336 = vld [vmem:[%s3327 + $0x20] sm:$0xf]
    %v3337 = vld [vmem:[%s3327 + $0x24] sm:$0xf]
    %v3338 = vld [vmem:[%s3327 + $0x28] sm:$0xf]
    %v3339 = vld [vmem:[%s3327 + $0x2c] sm:$0xf]
    %v3340 = vld [vmem:[%s3327 + $0x30] sm:$0xf]
    %v3341 = vld [vmem:[%s3327 + $0x34] sm:$0xf]
    %v3342 = vld [vmem:[%s3327 + $0x38] sm:$0xf]
    %v3343 = vld [vmem:[%s3327 + $0x3c] sm:$0xf]
    %v3360 = vunpack.c.l.b16 %v3328
    %v3361 = vunpack.c.l.b16 %v3329
    %v3362 = vunpack.c.l.b16 %v3330
    %v3363 = vunpack.c.l.b16 %v3331
    %v3364 = vunpack.c.l.b16 %v3332
    %v3365 = vunpack.c.l.b16 %v3333
    %v3366 = vunpack.c.l.b16 %v3334
    %v3367 = vunpack.c.l.b16 %v3335
    %v3368 = vunpack.c.l.b16 %v3336
    %v3369 = vunpack.c.l.b16 %v3337
    %v3370 = vunpack.c.l.b16 %v3338
    %v3371 = vunpack.c.l.b16 %v3339
    %v3372 = vunpack.c.l.b16 %v3340
    %v3373 = vunpack.c.l.b16 %v3341
    %v3374 = vunpack.c.l.b16 %v3342
    %v3375 = vunpack.c.l.b16 %v3343
    %v3376 = vpack.c.b16 %v3361, %v3360
    %v3377 = vpack.c.b16 %v3363, %v3362
    %v3378 = vpack.c.b16 %v3365, %v3364
    %v3379 = vpack.c.b16 %v3367, %v3366
    %v3380 = vpack.c.b16 %v3369, %v3368
    %v3381 = vpack.c.b16 %v3371, %v3370
    %v3382 = vpack.c.b16 %v3373, %v3372
    %v3383 = vpack.c.b16 %v3375, %v3374
    %3392 = vmatpush.bf16.msra.mxu0 %v3383
    %3393 = vmatpush.bf16.msra.mxu0 %v3382
    %3394 = vmatpush.bf16.msra.mxu0 %v3381
    %3395 = vmatpush.bf16.msra.mxu0 %v3380
    %3396 = vmatpush.bf16.msra.mxu0 %v3379
    %3397 = vmatpush.bf16.msra.mxu0 %v3378
    %3398 = vmatpush.bf16.msra.mxu0 %v3377
    %3399 = vmatpush.bf16.msra.mxu0 %v3376
    %3400 = vmatmul.bf16.gmra.mxu0 %v3319
    %v3401 = vpop.f32.mrf.mxu0
    %v3402 = vadd.f32 0.0, %v3401
    %v3403 = vpop.f32.mrf.mxu0
    %v3404 = vadd.f32 0.0, %v3403
    %3405 = vmatmul.bf16.gmra.mxu0 %v3320
    %v3406 = vpop.f32.mrf.mxu0
    %v3407 = vadd.f32 0.0, %v3406
    %v3408 = vpop.f32.mrf.mxu0
    %v3409 = vadd.f32 0.0, %v3408
    %3410 = vmatmul.bf16.gmra.mxu0 %v3321
    %v3411 = vpop.f32.mrf.mxu0
    %v3412 = vadd.f32 0.0, %v3411
    %v3413 = vpop.f32.mrf.mxu0
    %v3414 = vadd.f32 0.0, %v3413
    %3415 = vmatmul.bf16.gmra.mxu0 %v3322
    %v3416 = vpop.f32.mrf.mxu0
    %v3417 = vadd.f32 0.0, %v3416
    %v3418 = vpop.f32.mrf.mxu0
    %v3419 = vadd.f32 0.0, %v3418
    %3420 = vmatmul.bf16.gmra.mxu0 %v3323
    %v3421 = vpop.f32.mrf.mxu0
    %v3422 = vadd.f32 0.0, %v3421
    %v3423 = vpop.f32.mrf.mxu0
    %v3424 = vadd.f32 0.0, %v3423
    %3425 = vmatmul.bf16.gmra.mxu0 %v3324
    %v3426 = vpop.f32.mrf.mxu0
    %v3427 = vadd.f32 0.0, %v3426
    %v3428 = vpop.f32.mrf.mxu0
    %v3429 = vadd.f32 0.0, %v3428
    %3430 = vmatmul.bf16.gmra.mxu0 %v3325
    %v3431 = vpop.f32.mrf.mxu0
    %v3432 = vadd.f32 0.0, %v3431
    %v3433 = vpop.f32.mrf.mxu0
    %v3434 = vadd.f32 0.0, %v3433
    %3435 = vmatmul.bf16.gmra.mxu0 %v3326
    %v3436 = vpop.f32.mrf.mxu0
    %v3437 = vadd.f32 0.0, %v3436
    %v3438 = vpop.f32.mrf.mxu0
    %v3439 = vadd.f32 0.0, %v3438
    %3440 = vdwg.mxu0
    %v3441 = vld [vmem:[%s1710] sm:$0xff]
    %v3442 = vld [vmem:[%s1710 + $0x8] sm:$0xff]
    %v3443 = vld [vmem:[%s1710 + $0x10] sm:$0xff]
    %v3444 = vld [vmem:[%s1710 + $0x18] sm:$0xff]
    %v3445 = vld [vmem:[%s1710 + $0x20] sm:$0xff]
    %v3446 = vld [vmem:[%s1710 + $0x28] sm:$0xff]
    %v3447 = vld [vmem:[%s1710 + $0x30] sm:$0xff]
    %v3448 = vld [vmem:[%s1710 + $0x38] sm:$0xff]
    %v3449 = vld [vmem:[%s1710 + $0x40] sm:$0xff]
    %v3450 = vld [vmem:[%s1710 + $0x48] sm:$0xff]
    %v3451 = vld [vmem:[%s1710 + $0x50] sm:$0xff]
    %v3452 = vld [vmem:[%s1710 + $0x58] sm:$0xff]
    %v3453 = vld [vmem:[%s1710 + $0x60] sm:$0xff]
    %v3454 = vld [vmem:[%s1710 + $0x68] sm:$0xff]
    %v3455 = vld [vmem:[%s1710 + $0x70] sm:$0xff]
    %v3456 = vld [vmem:[%s1710 + $0x78] sm:$0xff]
    %v3457 = vmul.f32 %v3441, %v3402
    %v3458 = vmul.f32 %v3442, %v3404
    %v3459 = vmul.f32 %v3443, %v3407
    %v3460 = vmul.f32 %v3444, %v3409
    %v3461 = vmul.f32 %v3445, %v3412
    %v3462 = vmul.f32 %v3446, %v3414
    %v3463 = vmul.f32 %v3447, %v3417
    %v3464 = vmul.f32 %v3448, %v3419
    %v3465 = vmul.f32 %v3449, %v3422
    %v3466 = vmul.f32 %v3450, %v3424
    %v3467 = vmul.f32 %v3451, %v3427
    %v3468 = vmul.f32 %v3452, %v3429
    %v3469 = vmul.f32 %v3453, %v3432
    %v3470 = vmul.f32 %v3454, %v3434
    %v3471 = vmul.f32 %v3455, %v3437
    %v3472 = vmul.f32 %v3456, %v3439
    %v3473 = vadd.f32 %v3287, %v3457
    %v3474 = vadd.f32 %v3288, %v3458
    %v3475 = vadd.f32 %v3289, %v3459
    %v3476 = vadd.f32 %v3290, %v3460
    %v3477 = vadd.f32 %v3291, %v3461
    %v3478 = vadd.f32 %v3292, %v3462
    %v3479 = vadd.f32 %v3293, %v3463
    %v3480 = vadd.f32 %v3294, %v3464
    %v3481 = vadd.f32 %v3295, %v3465
    %v3482 = vadd.f32 %v3296, %v3466
    %v3483 = vadd.f32 %v3297, %v3467
    %v3484 = vadd.f32 %v3298, %v3468
    %v3485 = vadd.f32 %v3299, %v3469
    %v3486 = vadd.f32 %v3300, %v3470
    %v3487 = vadd.f32 %v3301, %v3471
    %v3488 = vadd.f32 %v3302, %v3472
    %v3489 = vld [vmem:[#allocation2 + $0x11] sm:$0xff]
    %v3490 = vld [vmem:[#allocation2 + $0x19] sm:$0xff]
    %v3491 = vld [vmem:[#allocation2 + $0x21] sm:$0xff]
    %v3492 = vld [vmem:[#allocation2 + $0x29] sm:$0xff]
    %v3493 = vld [vmem:[#allocation2 + $0x31] sm:$0xff]
    %v3494 = vld [vmem:[#allocation2 + $0x39] sm:$0xff]
    %v3495 = vld [vmem:[#allocation2 + $0x41] sm:$0xff]
    %v3496 = vld [vmem:[#allocation2 + $0x49] sm:$0xff]
    %v3497 = vld [vmem:[#allocation2 + $0x51] sm:$0xff]
    %v3498 = vld [vmem:[#allocation2 + $0x59] sm:$0xff]
    %v3499 = vld [vmem:[#allocation2 + $0x61] sm:$0xff]
    %v3500 = vld [vmem:[#allocation2 + $0x69] sm:$0xff]
    %v3501 = vld [vmem:[#allocation2 + $0x71] sm:$0xff]
    %v3502 = vld [vmem:[#allocation2 + $0x79] sm:$0xff]
    %v3503 = vld [vmem:[#allocation2 + $0x81] sm:$0xff]
    %v3504 = vld [vmem:[#allocation2 + $0x89] sm:$0xff]
    %v3505 = vpack.c.bf16 %v3490, %v3489
    %v3506 = vpack.c.bf16 %v3492, %v3491
    %v3507 = vpack.c.bf16 %v3494, %v3493
    %v3508 = vpack.c.bf16 %v3496, %v3495
    %v3509 = vpack.c.bf16 %v3498, %v3497
    %v3510 = vpack.c.bf16 %v3500, %v3499
    %v3511 = vpack.c.bf16 %v3502, %v3501
    %v3512 = vpack.c.bf16 %v3504, %v3503
    %s3513 = scalar_lea.vmem [#allocation11], 896
    %v3514 = vld [vmem:[%s3513] sm:$0xf]
    %v3515 = vld [vmem:[%s3513 + $0x4] sm:$0xf]
    %v3516 = vld [vmem:[%s3513 + $0x8] sm:$0xf]
    %v3517 = vld [vmem:[%s3513 + $0xc] sm:$0xf]
    %v3518 = vld [vmem:[%s3513 + $0x10] sm:$0xf]
    %v3519 = vld [vmem:[%s3513 + $0x14] sm:$0xf]
    %v3520 = vld [vmem:[%s3513 + $0x18] sm:$0xf]
    %v3521 = vld [vmem:[%s3513 + $0x1c] sm:$0xf]
    %v3522 = vld [vmem:[%s3513 + $0x20] sm:$0xf]
    %v3523 = vld [vmem:[%s3513 + $0x24] sm:$0xf]
    %v3524 = vld [vmem:[%s3513 + $0x28] sm:$0xf]
    %v3525 = vld [vmem:[%s3513 + $0x2c] sm:$0xf]
    %v3526 = vld [vmem:[%s3513 + $0x30] sm:$0xf]
    %v3527 = vld [vmem:[%s3513 + $0x34] sm:$0xf]
    %v3528 = vld [vmem:[%s3513 + $0x38] sm:$0xf]
    %v3529 = vld [vmem:[%s3513 + $0x3c] sm:$0xf]
    %v3546 = vunpack.c.l.b16 %v3514
    %v3547 = vunpack.c.l.b16 %v3515
    %v3548 = vunpack.c.l.b16 %v3516
    %v3549 = vunpack.c.l.b16 %v3517
    %v3550 = vunpack.c.l.b16 %v3518
    %v3551 = vunpack.c.l.b16 %v3519
    %v3552 = vunpack.c.l.b16 %v3520
    %v3553 = vunpack.c.l.b16 %v3521
    %v3554 = vunpack.c.l.b16 %v3522
    %v3555 = vunpack.c.l.b16 %v3523
    %v3556 = vunpack.c.l.b16 %v3524
    %v3557 = vunpack.c.l.b16 %v3525
    %v3558 = vunpack.c.l.b16 %v3526
    %v3559 = vunpack.c.l.b16 %v3527
    %v3560 = vunpack.c.l.b16 %v3528
    %v3561 = vunpack.c.l.b16 %v3529
    %v3562 = vpack.c.b16 %v3547, %v3546
    %v3563 = vpack.c.b16 %v3549, %v3548
    %v3564 = vpack.c.b16 %v3551, %v3550
    %v3565 = vpack.c.b16 %v3553, %v3552
    %v3566 = vpack.c.b16 %v3555, %v3554
    %v3567 = vpack.c.b16 %v3557, %v3556
    %v3568 = vpack.c.b16 %v3559, %v3558
    %v3569 = vpack.c.b16 %v3561, %v3560
    %3578 = vmatpush.bf16.msra.mxu0 %v3569
    %3579 = vmatpush.bf16.msra.mxu0 %v3568
    %3580 = vmatpush.bf16.msra.mxu0 %v3567
    %3581 = vmatpush.bf16.msra.mxu0 %v3566
    %3582 = vmatpush.bf16.msra.mxu0 %v3565
    %3583 = vmatpush.bf16.msra.mxu0 %v3564
    %3584 = vmatpush.bf16.msra.mxu0 %v3563
    %3585 = vmatpush.bf16.msra.mxu0 %v3562
    %3586 = vmatmul.bf16.gmra.mxu0 %v3505
    %v3587 = vpop.f32.mrf.mxu0
    %v3588 = vadd.f32 0.0, %v3587
    %v3589 = vpop.f32.mrf.mxu0
    %v3590 = vadd.f32 0.0, %v3589
    %3591 = vmatmul.bf16.gmra.mxu0 %v3506
    %v3592 = vpop.f32.mrf.mxu0
    %v3593 = vadd.f32 0.0, %v3592
    %v3594 = vpop.f32.mrf.mxu0
    %v3595 = vadd.f32 0.0, %v3594
    %3596 = vmatmul.bf16.gmra.mxu0 %v3507
    %v3597 = vpop.f32.mrf.mxu0
    %v3598 = vadd.f32 0.0, %v3597
    %v3599 = vpop.f32.mrf.mxu0
    %v3600 = vadd.f32 0.0, %v3599
    %3601 = vmatmul.bf16.gmra.mxu0 %v3508
    %v3602 = vpop.f32.mrf.mxu0
    %v3603 = vadd.f32 0.0, %v3602
    %v3604 = vpop.f32.mrf.mxu0
    %v3605 = vadd.f32 0.0, %v3604
    %3606 = vmatmul.bf16.gmra.mxu0 %v3509
    %v3607 = vpop.f32.mrf.mxu0
    %v3608 = vadd.f32 0.0, %v3607
    %v3609 = vpop.f32.mrf.mxu0
    %v3610 = vadd.f32 0.0, %v3609
    %3611 = vmatmul.bf16.gmra.mxu0 %v3510
    %v3612 = vpop.f32.mrf.mxu0
    %v3613 = vadd.f32 0.0, %v3612
    %v3614 = vpop.f32.mrf.mxu0
    %v3615 = vadd.f32 0.0, %v3614
    %3616 = vmatmul.bf16.gmra.mxu0 %v3511
    %v3617 = vpop.f32.mrf.mxu0
    %v3618 = vadd.f32 0.0, %v3617
    %v3619 = vpop.f32.mrf.mxu0
    %v3620 = vadd.f32 0.0, %v3619
    %3621 = vmatmul.bf16.gmra.mxu0 %v3512
    %v3622 = vpop.f32.mrf.mxu0
    %v3623 = vadd.f32 0.0, %v3622
    %v3624 = vpop.f32.mrf.mxu0
    %v3625 = vadd.f32 0.0, %v3624
    %3626 = vdwg.mxu0
    %v3627 = vld [vmem:[%s1897] sm:$0xff]
    %v3628 = vld [vmem:[%s1897 + $0x8] sm:$0xff]
    %v3629 = vld [vmem:[%s1897 + $0x10] sm:$0xff]
    %v3630 = vld [vmem:[%s1897 + $0x18] sm:$0xff]
    %v3631 = vld [vmem:[%s1897 + $0x20] sm:$0xff]
    %v3632 = vld [vmem:[%s1897 + $0x28] sm:$0xff]
    %v3633 = vld [vmem:[%s1897 + $0x30] sm:$0xff]
    %v3634 = vld [vmem:[%s1897 + $0x38] sm:$0xff]
    %v3635 = vld [vmem:[%s1897 + $0x40] sm:$0xff]
    %v3636 = vld [vmem:[%s1897 + $0x48] sm:$0xff]
    %v3637 = vld [vmem:[%s1897 + $0x50] sm:$0xff]
    %v3638 = vld [vmem:[%s1897 + $0x58] sm:$0xff]
    %v3639 = vld [vmem:[%s1897 + $0x60] sm:$0xff]
    %v3640 = vld [vmem:[%s1897 + $0x68] sm:$0xff]
    %v3641 = vld [vmem:[%s1897 + $0x70] sm:$0xff]
    %v3642 = vld [vmem:[%s1897 + $0x78] sm:$0xff]
    %v3643 = vmul.f32 %v3627, %v3588
    %v3644 = vmul.f32 %v3628, %v3590
    %v3645 = vmul.f32 %v3629, %v3593
    %v3646 = vmul.f32 %v3630, %v3595
    %v3647 = vmul.f32 %v3631, %v3598
    %v3648 = vmul.f32 %v3632, %v3600
    %v3649 = vmul.f32 %v3633, %v3603
    %v3650 = vmul.f32 %v3634, %v3605
    %v3651 = vmul.f32 %v3635, %v3608
    %v3652 = vmul.f32 %v3636, %v3610
    %v3653 = vmul.f32 %v3637, %v3613
    %v3654 = vmul.f32 %v3638, %v3615
    %v3655 = vmul.f32 %v3639, %v3618
    %v3656 = vmul.f32 %v3640, %v3620
    %v3657 = vmul.f32 %v3641, %v3623
    %v3658 = vmul.f32 %v3642, %v3625
    %v3659 = vadd.f32 %v3473, %v3643
    %v3660 = vadd.f32 %v3474, %v3644
    %v3661 = vadd.f32 %v3475, %v3645
    %v3662 = vadd.f32 %v3476, %v3646
    %v3663 = vadd.f32 %v3477, %v3647
    %v3664 = vadd.f32 %v3478, %v3648
    %v3665 = vadd.f32 %v3479, %v3649
    %v3666 = vadd.f32 %v3480, %v3650
    %v3667 = vadd.f32 %v3481, %v3651
    %v3668 = vadd.f32 %v3482, %v3652
    %v3669 = vadd.f32 %v3483, %v3653
    %v3670 = vadd.f32 %v3484, %v3654
    %v3671 = vadd.f32 %v3485, %v3655
    %v3672 = vadd.f32 %v3486, %v3656
    %v3673 = vadd.f32 %v3487, %v3657
    %v3674 = vadd.f32 %v3488, %v3658
    %v3675 = vld [vmem:[#allocation2 + $0x17] sm:$0xff]
    %v3676 = vld [vmem:[#allocation2 + $0x1f] sm:$0xff]
    %v3677 = vld [vmem:[#allocation2 + $0x27] sm:$0xff]
    %v3678 = vld [vmem:[#allocation2 + $0x2f] sm:$0xff]
    %v3679 = vld [vmem:[#allocation2 + $0x37] sm:$0xff]
    %v3680 = vld [vmem:[#allocation2 + $0x3f] sm:$0xff]
    %v3681 = vld [vmem:[#allocation2 + $0x47] sm:$0xff]
    %v3682 = vld [vmem:[#allocation2 + $0x4f] sm:$0xff]
    %v3683 = vld [vmem:[#allocation2 + $0x57] sm:$0xff]
    %v3684 = vld [vmem:[#allocation2 + $0x5f] sm:$0xff]
    %v3685 = vld [vmem:[#allocation2 + $0x67] sm:$0xff]
    %v3686 = vld [vmem:[#allocation2 + $0x6f] sm:$0xff]
    %v3687 = vld [vmem:[#allocation2 + $0x77] sm:$0xff]
    %v3688 = vld [vmem:[#allocation2 + $0x7f] sm:$0xff]
    %v3689 = vld [vmem:[#allocation2 + $0x87] sm:$0xff]
    %v3690 = vld [vmem:[#allocation2 + $0x8f] sm:$0xff]
    %v3691 = vpack.c.bf16 %v3676, %v3675
    %v3692 = vpack.c.bf16 %v3678, %v3677
    %v3693 = vpack.c.bf16 %v3680, %v3679
    %v3694 = vpack.c.bf16 %v3682, %v3681
    %v3695 = vpack.c.bf16 %v3684, %v3683
    %v3696 = vpack.c.bf16 %v3686, %v3685
    %v3697 = vpack.c.bf16 %v3688, %v3687
    %v3698 = vpack.c.bf16 %v3690, %v3689
    %s3699 = scalar_lea.vmem [#allocation11], 960
    %v3700 = vld [vmem:[%s3699] sm:$0xf]
    %v3701 = vld [vmem:[%s3699 + $0x4] sm:$0xf]
    %v3702 = vld [vmem:[%s3699 + $0x8] sm:$0xf]
    %v3703 = vld [vmem:[%s3699 + $0xc] sm:$0xf]
    %v3704 = vld [vmem:[%s3699 + $0x10] sm:$0xf]
    %v3705 = vld [vmem:[%s3699 + $0x14] sm:$0xf]
    %v3706 = vld [vmem:[%s3699 + $0x18] sm:$0xf]
    %v3707 = vld [vmem:[%s3699 + $0x1c] sm:$0xf]
    %v3708 = vld [vmem:[%s3699 + $0x20] sm:$0xf]
    %v3709 = vld [vmem:[%s3699 + $0x24] sm:$0xf]
    %v3710 = vld [vmem:[%s3699 + $0x28] sm:$0xf]
    %v3711 = vld [vmem:[%s3699 + $0x2c] sm:$0xf]
    %v3712 = vld [vmem:[%s3699 + $0x30] sm:$0xf]
    %v3713 = vld [vmem:[%s3699 + $0x34] sm:$0xf]
    %v3714 = vld [vmem:[%s3699 + $0x38] sm:$0xf]
    %v3715 = vld [vmem:[%s3699 + $0x3c] sm:$0xf]
    %v3732 = vunpack.c.l.b16 %v3700
    %v3733 = vunpack.c.l.b16 %v3701
    %v3734 = vunpack.c.l.b16 %v3702
    %v3735 = vunpack.c.l.b16 %v3703
    %v3736 = vunpack.c.l.b16 %v3704
    %v3737 = vunpack.c.l.b16 %v3705
    %v3738 = vunpack.c.l.b16 %v3706
    %v3739 = vunpack.c.l.b16 %v3707
    %v3740 = vunpack.c.l.b16 %v3708
    %v3741 = vunpack.c.l.b16 %v3709
    %v3742 = vunpack.c.l.b16 %v3710
    %v3743 = vunpack.c.l.b16 %v3711
    %v3744 = vunpack.c.l.b16 %v3712
    %v3745 = vunpack.c.l.b16 %v3713
    %v3746 = vunpack.c.l.b16 %v3714
    %v3747 = vunpack.c.l.b16 %v3715
    %v3748 = vpack.c.b16 %v3733, %v3732
    %v3749 = vpack.c.b16 %v3735, %v3734
    %v3750 = vpack.c.b16 %v3737, %v3736
    %v3751 = vpack.c.b16 %v3739, %v3738
    %v3752 = vpack.c.b16 %v3741, %v3740
    %v3753 = vpack.c.b16 %v3743, %v3742
    %v3754 = vpack.c.b16 %v3745, %v3744
    %v3755 = vpack.c.b16 %v3747, %v3746
    %3764 = vmatpush.bf16.msra.mxu0 %v3755
    %3765 = vmatpush.bf16.msra.mxu0 %v3754
    %3766 = vmatpush.bf16.msra.mxu0 %v3753
    %3767 = vmatpush.bf16.msra.mxu0 %v3752
    %3768 = vmatpush.bf16.msra.mxu0 %v3751
    %3769 = vmatpush.bf16.msra.mxu0 %v3750
    %3770 = vmatpush.bf16.msra.mxu0 %v3749
    %3771 = vmatpush.bf16.msra.mxu0 %v3748
    %3772 = vmatmul.bf16.gmra.mxu0 %v3691
    %v3773 = vpop.f32.mrf.mxu0
    %v3774 = vadd.f32 0.0, %v3773
    %v3775 = vpop.f32.mrf.mxu0
    %v3776 = vadd.f32 0.0, %v3775
    %3777 = vmatmul.bf16.gmra.mxu0 %v3692
    %v3778 = vpop.f32.mrf.mxu0
    %v3779 = vadd.f32 0.0, %v3778
    %v3780 = vpop.f32.mrf.mxu0
    %v3781 = vadd.f32 0.0, %v3780
    %3782 = vmatmul.bf16.gmra.mxu0 %v3693
    %v3783 = vpop.f32.mrf.mxu0
    %v3784 = vadd.f32 0.0, %v3783
    %v3785 = vpop.f32.mrf.mxu0
    %v3786 = vadd.f32 0.0, %v3785
    %3787 = vmatmul.bf16.gmra.mxu0 %v3694
    %v3788 = vpop.f32.mrf.mxu0
    %v3789 = vadd.f32 0.0, %v3788
    %v3790 = vpop.f32.mrf.mxu0
    %v3791 = vadd.f32 0.0, %v3790
    %3792 = vmatmul.bf16.gmra.mxu0 %v3695
    %v3793 = vpop.f32.mrf.mxu0
    %v3794 = vadd.f32 0.0, %v3793
    %v3795 = vpop.f32.mrf.mxu0
    %v3796 = vadd.f32 0.0, %v3795
    %3797 = vmatmul.bf16.gmra.mxu0 %v3696
    %v3798 = vpop.f32.mrf.mxu0
    %v3799 = vadd.f32 0.0, %v3798
    %v3800 = vpop.f32.mrf.mxu0
    %v3801 = vadd.f32 0.0, %v3800
    %3802 = vmatmul.bf16.gmra.mxu0 %v3697
    %v3803 = vpop.f32.mrf.mxu0
    %v3804 = vadd.f32 0.0, %v3803
    %v3805 = vpop.f32.mrf.mxu0
    %v3806 = vadd.f32 0.0, %v3805
    %3807 = vmatmul.bf16.gmra.mxu0 %v3698
    %v3808 = vpop.f32.mrf.mxu0
    %v3809 = vadd.f32 0.0, %v3808
    %v3810 = vpop.f32.mrf.mxu0
    %v3811 = vadd.f32 0.0, %v3810
    %3812 = vdwg.mxu0
    %v3813 = vld [vmem:[%s2084] sm:$0xff]
    %v3814 = vld [vmem:[%s2084 + $0x8] sm:$0xff]
    %v3815 = vld [vmem:[%s2084 + $0x10] sm:$0xff]
    %v3816 = vld [vmem:[%s2084 + $0x18] sm:$0xff]
    %v3817 = vld [vmem:[%s2084 + $0x20] sm:$0xff]
    %v3818 = vld [vmem:[%s2084 + $0x28] sm:$0xff]
    %v3819 = vld [vmem:[%s2084 + $0x30] sm:$0xff]
    %v3820 = vld [vmem:[%s2084 + $0x38] sm:$0xff]
    %v3821 = vld [vmem:[%s2084 + $0x40] sm:$0xff]
    %v3822 = vld [vmem:[%s2084 + $0x48] sm:$0xff]
    %v3823 = vld [vmem:[%s2084 + $0x50] sm:$0xff]
    %v3824 = vld [vmem:[%s2084 + $0x58] sm:$0xff]
    %v3825 = vld [vmem:[%s2084 + $0x60] sm:$0xff]
    %v3826 = vld [vmem:[%s2084 + $0x68] sm:$0xff]
    %v3827 = vld [vmem:[%s2084 + $0x70] sm:$0xff]
    %v3828 = vld [vmem:[%s2084 + $0x78] sm:$0xff]
    %v3829 = vmul.f32 %v3813, %v3774
    %v3830 = vmul.f32 %v3814, %v3776
    %v3831 = vmul.f32 %v3815, %v3779
    %v3832 = vmul.f32 %v3816, %v3781
    %v3833 = vmul.f32 %v3817, %v3784
    %v3834 = vmul.f32 %v3818, %v3786
    %v3835 = vmul.f32 %v3819, %v3789
    %v3836 = vmul.f32 %v3820, %v3791
    %v3837 = vmul.f32 %v3821, %v3794
    %v3838 = vmul.f32 %v3822, %v3796
    %v3839 = vmul.f32 %v3823, %v3799
    %v3840 = vmul.f32 %v3824, %v3801
    %v3841 = vmul.f32 %v3825, %v3804
    %v3842 = vmul.f32 %v3826, %v3806
    %v3843 = vmul.f32 %v3827, %v3809
    %v3844 = vmul.f32 %v3828, %v3811
    %v3845 = vadd.f32 %v3659, %v3829
    %v3846 = vadd.f32 %v3660, %v3830
    %v3847 = vadd.f32 %v3661, %v3831
    %v3848 = vadd.f32 %v3662, %v3832
    %v3849 = vadd.f32 %v3663, %v3833
    %v3850 = vadd.f32 %v3664, %v3834
    %v3851 = vadd.f32 %v3665, %v3835
    %v3852 = vadd.f32 %v3666, %v3836
    %v3853 = vadd.f32 %v3667, %v3837
    %v3854 = vadd.f32 %v3668, %v3838
    %v3855 = vadd.f32 %v3669, %v3839
    %v3856 = vadd.f32 %v3670, %v3840
    %v3857 = vadd.f32 %v3671, %v3841
    %v3858 = vadd.f32 %v3672, %v3842
    %v3859 = vadd.f32 %v3673, %v3843
    %v3860 = vadd.f32 %v3674, %v3844
    %v3861 = vld [vmem:[#allocation2 + $0x18] sm:$0xff]
    %v3862 = vld [vmem:[#allocation2 + $0x20] sm:$0xff]
    %v3863 = vld [vmem:[#allocation2 + $0x28] sm:$0xff]
    %v3864 = vld [vmem:[#allocation2 + $0x30] sm:$0xff]
    %v3865 = vld [vmem:[#allocation2 + $0x38] sm:$0xff]
    %v3866 = vld [vmem:[#allocation2 + $0x40] sm:$0xff]
    %v3867 = vld [vmem:[#allocation2 + $0x48] sm:$0xff]
    %v3868 = vld [vmem:[#allocation2 + $0x50] sm:$0xff]
    %v3869 = vld [vmem:[#allocation2 + $0x58] sm:$0xff]
    %v3870 = vld [vmem:[#allocation2 + $0x60] sm:$0xff]
    %v3871 = vld [vmem:[#allocation2 + $0x68] sm:$0xff]
    %v3872 = vld [vmem:[#allocation2 + $0x70] sm:$0xff]
    %v3873 = vld [vmem:[#allocation2 + $0x78] sm:$0xff]
    %v3874 = vld [vmem:[#allocation2 + $0x80] sm:$0xff]
    %v3875 = vld [vmem:[#allocation2 + $0x88] sm:$0xff]
    %v3876 = vld [vmem:[#allocation2 + $0x90] sm:$0xff]
    %v3877 = vpack.c.bf16 %v3862, %v3861
    %v3878 = vpack.c.bf16 %v3864, %v3863
    %v3879 = vpack.c.bf16 %v3866, %v3865
    %v3880 = vpack.c.bf16 %v3868, %v3867
    %v3881 = vpack.c.bf16 %v3870, %v3869
    %v3882 = vpack.c.bf16 %v3872, %v3871
    %v3883 = vpack.c.bf16 %v3874, %v3873
    %v3884 = vpack.c.bf16 %v3876, %v3875
    %s3885 = scalar_lea.vmem [#allocation11], 1024
    %v3886 = vld [vmem:[%s3885] sm:$0xf]
    %v3887 = vld [vmem:[%s3885 + $0x4] sm:$0xf]
    %v3888 = vld [vmem:[%s3885 + $0x8] sm:$0xf]
    %v3889 = vld [vmem:[%s3885 + $0xc] sm:$0xf]
    %v3890 = vld [vmem:[%s3885 + $0x10] sm:$0xf]
    %v3891 = vld [vmem:[%s3885 + $0x14] sm:$0xf]
    %v3892 = vld [vmem:[%s3885 + $0x18] sm:$0xf]
    %v3893 = vld [vmem:[%s3885 + $0x1c] sm:$0xf]
    %v3894 = vld [vmem:[%s3885 + $0x20] sm:$0xf]
    %v3895 = vld [vmem:[%s3885 + $0x24] sm:$0xf]
    %v3896 = vld [vmem:[%s3885 + $0x28] sm:$0xf]
    %v3897 = vld [vmem:[%s3885 + $0x2c] sm:$0xf]
    %v3898 = vld [vmem:[%s3885 + $0x30] sm:$0xf]
    %v3899 = vld [vmem:[%s3885 + $0x34] sm:$0xf]
    %v3900 = vld [vmem:[%s3885 + $0x38] sm:$0xf]
    %v3901 = vld [vmem:[%s3885 + $0x3c] sm:$0xf]
    %v3918 = vunpack.c.l.b16 %v3886
    %v3919 = vunpack.c.l.b16 %v3887
    %v3920 = vunpack.c.l.b16 %v3888
    %v3921 = vunpack.c.l.b16 %v3889
    %v3922 = vunpack.c.l.b16 %v3890
    %v3923 = vunpack.c.l.b16 %v3891
    %v3924 = vunpack.c.l.b16 %v3892
    %v3925 = vunpack.c.l.b16 %v3893
    %v3926 = vunpack.c.l.b16 %v3894
    %v3927 = vunpack.c.l.b16 %v3895
    %v3928 = vunpack.c.l.b16 %v3896
    %v3929 = vunpack.c.l.b16 %v3897
    %v3930 = vunpack.c.l.b16 %v3898
    %v3931 = vunpack.c.l.b16 %v3899
    %v3932 = vunpack.c.l.b16 %v3900
    %v3933 = vunpack.c.l.b16 %v3901
    %v3934 = vpack.c.b16 %v3919, %v3918
    %v3935 = vpack.c.b16 %v3921, %v3920
    %v3936 = vpack.c.b16 %v3923, %v3922
    %v3937 = vpack.c.b16 %v3925, %v3924
    %v3938 = vpack.c.b16 %v3927, %v3926
    %v3939 = vpack.c.b16 %v3929, %v3928
    %v3940 = vpack.c.b16 %v3931, %v3930
    %v3941 = vpack.c.b16 %v3933, %v3932
    %3950 = vmatpush.bf16.msra.mxu0 %v3941
    %3951 = vmatpush.bf16.msra.mxu0 %v3940
    %3952 = vmatpush.bf16.msra.mxu0 %v3939
    %3953 = vmatpush.bf16.msra.mxu0 %v3938
    %3954 = vmatpush.bf16.msra.mxu0 %v3937
    %3955 = vmatpush.bf16.msra.mxu0 %v3936
    %3956 = vmatpush.bf16.msra.mxu0 %v3935
    %3957 = vmatpush.bf16.msra.mxu0 %v3934
    %3958 = vmatmul.bf16.gmra.mxu0 %v3877
    %v3959 = vpop.f32.mrf.mxu0
    %v3960 = vadd.f32 0.0, %v3959
    %v3961 = vpop.f32.mrf.mxu0
    %v3962 = vadd.f32 0.0, %v3961
    %3963 = vmatmul.bf16.gmra.mxu0 %v3878
    %v3964 = vpop.f32.mrf.mxu0
    %v3965 = vadd.f32 0.0, %v3964
    %v3966 = vpop.f32.mrf.mxu0
    %v3967 = vadd.f32 0.0, %v3966
    %3968 = vmatmul.bf16.gmra.mxu0 %v3879
    %v3969 = vpop.f32.mrf.mxu0
    %v3970 = vadd.f32 0.0, %v3969
    %v3971 = vpop.f32.mrf.mxu0
    %v3972 = vadd.f32 0.0, %v3971
    %3973 = vmatmul.bf16.gmra.mxu0 %v3880
    %v3974 = vpop.f32.mrf.mxu0
    %v3975 = vadd.f32 0.0, %v3974
    %v3976 = vpop.f32.mrf.mxu0
    %v3977 = vadd.f32 0.0, %v3976
    %3978 = vmatmul.bf16.gmra.mxu0 %v3881
    %v3979 = vpop.f32.mrf.mxu0
    %v3980 = vadd.f32 0.0, %v3979
    %v3981 = vpop.f32.mrf.mxu0
    %v3982 = vadd.f32 0.0, %v3981
    %3983 = vmatmul.bf16.gmra.mxu0 %v3882
    %v3984 = vpop.f32.mrf.mxu0
    %v3985 = vadd.f32 0.0, %v3984
    %v3986 = vpop.f32.mrf.mxu0
    %v3987 = vadd.f32 0.0, %v3986
    %3988 = vmatmul.bf16.gmra.mxu0 %v3883
    %v3989 = vpop.f32.mrf.mxu0
    %v3990 = vadd.f32 0.0, %v3989
    %v3991 = vpop.f32.mrf.mxu0
    %v3992 = vadd.f32 0.0, %v3991
    %3993 = vmatmul.bf16.gmra.mxu0 %v3884
    %v3994 = vpop.f32.mrf.mxu0
    %v3995 = vadd.f32 0.0, %v3994
    %v3996 = vpop.f32.mrf.mxu0
    %v3997 = vadd.f32 0.0, %v3996
    %3998 = vdwg.mxu0
    %v3999 = vld [vmem:[%s2271] sm:$0xff]
    %v4000 = vld [vmem:[%s2271 + $0x8] sm:$0xff]
    %v4001 = vld [vmem:[%s2271 + $0x10] sm:$0xff]
    %v4002 = vld [vmem:[%s2271 + $0x18] sm:$0xff]
    %v4003 = vld [vmem:[%s2271 + $0x20] sm:$0xff]
    %v4004 = vld [vmem:[%s2271 + $0x28] sm:$0xff]
    %v4005 = vld [vmem:[%s2271 + $0x30] sm:$0xff]
    %v4006 = vld [vmem:[%s2271 + $0x38] sm:$0xff]
    %v4007 = vld [vmem:[%s2271 + $0x40] sm:$0xff]
    %v4008 = vld [vmem:[%s2271 + $0x48] sm:$0xff]
    %v4009 = vld [vmem:[%s2271 + $0x50] sm:$0xff]
    %v4010 = vld [vmem:[%s2271 + $0x58] sm:$0xff]
    %v4011 = vld [vmem:[%s2271 + $0x60] sm:$0xff]
    %v4012 = vld [vmem:[%s2271 + $0x68] sm:$0xff]
    %v4013 = vld [vmem:[%s2271 + $0x70] sm:$0xff]
    %v4014 = vld [vmem:[%s2271 + $0x78] sm:$0xff]
    %v4015 = vmul.f32 %v3999, %v3960
    %v4016 = vmul.f32 %v4000, %v3962
    %v4017 = vmul.f32 %v4001, %v3965
    %v4018 = vmul.f32 %v4002, %v3967
    %v4019 = vmul.f32 %v4003, %v3970
    %v4020 = vmul.f32 %v4004, %v3972
    %v4021 = vmul.f32 %v4005, %v3975
    %v4022 = vmul.f32 %v4006, %v3977
    %v4023 = vmul.f32 %v4007, %v3980
    %v4024 = vmul.f32 %v4008, %v3982
    %v4025 = vmul.f32 %v4009, %v3985
    %v4026 = vmul.f32 %v4010, %v3987
    %v4027 = vmul.f32 %v4011, %v3990
    %v4028 = vmul.f32 %v4012, %v3992
    %v4029 = vmul.f32 %v4013, %v3995
    %v4030 = vmul.f32 %v4014, %v3997
    %v4031 = vadd.f32 %v3845, %v4015
    %v4032 = vadd.f32 %v3846, %v4016
    %v4033 = vadd.f32 %v3847, %v4017
    %v4034 = vadd.f32 %v3848, %v4018
    %v4035 = vadd.f32 %v3849, %v4019
    %v4036 = vadd.f32 %v3850, %v4020
    %v4037 = vadd.f32 %v3851, %v4021
    %v4038 = vadd.f32 %v3852, %v4022
    %v4039 = vadd.f32 %v3853, %v4023
    %v4040 = vadd.f32 %v3854, %v4024
    %v4041 = vadd.f32 %v3855, %v4025
    %v4042 = vadd.f32 %v3856, %v4026
    %v4043 = vadd.f32 %v3857, %v4027
    %v4044 = vadd.f32 %v3858, %v4028
    %v4045 = vadd.f32 %v3859, %v4029
    %v4046 = vadd.f32 %v3860, %v4030
    %v4047 = vld [vmem:[#allocation2 + $0x19] sm:$0xff]
    %v4048 = vld [vmem:[#allocation2 + $0x21] sm:$0xff]
    %v4049 = vld [vmem:[#allocation2 + $0x29] sm:$0xff]
    %v4050 = vld [vmem:[#allocation2 + $0x31] sm:$0xff]
    %v4051 = vld [vmem:[#allocation2 + $0x39] sm:$0xff]
    %v4052 = vld [vmem:[#allocation2 + $0x41] sm:$0xff]
    %v4053 = vld [vmem:[#allocation2 + $0x49] sm:$0xff]
    %v4054 = vld [vmem:[#allocation2 + $0x51] sm:$0xff]
    %v4055 = vld [vmem:[#allocation2 + $0x59] sm:$0xff]
    %v4056 = vld [vmem:[#allocation2 + $0x61] sm:$0xff]
    %v4057 = vld [vmem:[#allocation2 + $0x69] sm:$0xff]
    %v4058 = vld [vmem:[#allocation2 + $0x71] sm:$0xff]
    %v4059 = vld [vmem:[#allocation2 + $0x79] sm:$0xff]
    %v4060 = vld [vmem:[#allocation2 + $0x81] sm:$0xff]
    %v4061 = vld [vmem:[#allocation2 + $0x89] sm:$0xff]
    %v4062 = vld [vmem:[#allocation2 + $0x91] sm:$0xff]
    %v4063 = vpack.c.bf16 %v4048, %v4047
    %v4064 = vpack.c.bf16 %v4050, %v4049
    %v4065 = vpack.c.bf16 %v4052, %v4051
    %v4066 = vpack.c.bf16 %v4054, %v4053
    %v4067 = vpack.c.bf16 %v4056, %v4055
    %v4068 = vpack.c.bf16 %v4058, %v4057
    %v4069 = vpack.c.bf16 %v4060, %v4059
    %v4070 = vpack.c.bf16 %v4062, %v4061
    %s4071 = scalar_lea.vmem [#allocation11], 1088
    %v4072 = vld [vmem:[%s4071] sm:$0xf]
    %v4073 = vld [vmem:[%s4071 + $0x4] sm:$0xf]
    %v4074 = vld [vmem:[%s4071 + $0x8] sm:$0xf]
    %v4075 = vld [vmem:[%s4071 + $0xc] sm:$0xf]
    %v4076 = vld [vmem:[%s4071 + $0x10] sm:$0xf]
    %v4077 = vld [vmem:[%s4071 + $0x14] sm:$0xf]
    %v4078 = vld [vmem:[%s4071 + $0x18] sm:$0xf]
    %v4079 = vld [vmem:[%s4071 + $0x1c] sm:$0xf]
    %v4080 = vld [vmem:[%s4071 + $0x20] sm:$0xf]
    %v4081 = vld [vmem:[%s4071 + $0x24] sm:$0xf]
    %v4082 = vld [vmem:[%s4071 + $0x28] sm:$0xf]
    %v4083 = vld [vmem:[%s4071 + $0x2c] sm:$0xf]
    %v4084 = vld [vmem:[%s4071 + $0x30] sm:$0xf]
    %v4085 = vld [vmem:[%s4071 + $0x34] sm:$0xf]
    %v4086 = vld [vmem:[%s4071 + $0x38] sm:$0xf]
    %v4087 = vld [vmem:[%s4071 + $0x3c] sm:$0xf]
    %v4104 = vunpack.c.l.b16 %v4072
    %v4105 = vunpack.c.l.b16 %v4073
    %v4106 = vunpack.c.l.b16 %v4074
    %v4107 = vunpack.c.l.b16 %v4075
    %v4108 = vunpack.c.l.b16 %v4076
    %v4109 = vunpack.c.l.b16 %v4077
    %v4110 = vunpack.c.l.b16 %v4078
    %v4111 = vunpack.c.l.b16 %v4079
    %v4112 = vunpack.c.l.b16 %v4080
    %v4113 = vunpack.c.l.b16 %v4081
    %v4114 = vunpack.c.l.b16 %v4082
    %v4115 = vunpack.c.l.b16 %v4083
    %v4116 = vunpack.c.l.b16 %v4084
    %v4117 = vunpack.c.l.b16 %v4085
    %v4118 = vunpack.c.l.b16 %v4086
    %v4119 = vunpack.c.l.b16 %v4087
    %v4120 = vpack.c.b16 %v4105, %v4104
    %v4121 = vpack.c.b16 %v4107, %v4106
    %v4122 = vpack.c.b16 %v4109, %v4108
    %v4123 = vpack.c.b16 %v4111, %v4110
    %v4124 = vpack.c.b16 %v4113, %v4112
    %v4125 = vpack.c.b16 %v4115, %v4114
    %v4126 = vpack.c.b16 %v4117, %v4116
    %v4127 = vpack.c.b16 %v4119, %v4118
    %4136 = vmatpush.bf16.msra.mxu0 %v4127
    %4137 = vmatpush.bf16.msra.mxu0 %v4126
    %4138 = vmatpush.bf16.msra.mxu0 %v4125
    %4139 = vmatpush.bf16.msra.mxu0 %v4124
    %4140 = vmatpush.bf16.msra.mxu0 %v4123
    %4141 = vmatpush.bf16.msra.mxu0 %v4122
    %4142 = vmatpush.bf16.msra.mxu0 %v4121
    %4143 = vmatpush.bf16.msra.mxu0 %v4120
    %4144 = vmatmul.bf16.gmra.mxu0 %v4063
    %v4145 = vpop.f32.mrf.mxu0
    %v4146 = vadd.f32 0.0, %v4145
    %v4147 = vpop.f32.mrf.mxu0
    %v4148 = vadd.f32 0.0, %v4147
    %4149 = vmatmul.bf16.gmra.mxu0 %v4064
    %v4150 = vpop.f32.mrf.mxu0
    %v4151 = vadd.f32 0.0, %v4150
    %v4152 = vpop.f32.mrf.mxu0
    %v4153 = vadd.f32 0.0, %v4152
    %4154 = vmatmul.bf16.gmra.mxu0 %v4065
    %v4155 = vpop.f32.mrf.mxu0
    %v4156 = vadd.f32 0.0, %v4155
    %v4157 = vpop.f32.mrf.mxu0
    %v4158 = vadd.f32 0.0, %v4157
    %4159 = vmatmul.bf16.gmra.mxu0 %v4066
    %v4160 = vpop.f32.mrf.mxu0
    %v4161 = vadd.f32 0.0, %v4160
    %v4162 = vpop.f32.mrf.mxu0
    %v4163 = vadd.f32 0.0, %v4162
    %4164 = vmatmul.bf16.gmra.mxu0 %v4067
    %v4165 = vpop.f32.mrf.mxu0
    %v4166 = vadd.f32 0.0, %v4165
    %v4167 = vpop.f32.mrf.mxu0
    %v4168 = vadd.f32 0.0, %v4167
    %4169 = vmatmul.bf16.gmra.mxu0 %v4068
    %v4170 = vpop.f32.mrf.mxu0
    %v4171 = vadd.f32 0.0, %v4170
    %v4172 = vpop.f32.mrf.mxu0
    %v4173 = vadd.f32 0.0, %v4172
    %4174 = vmatmul.bf16.gmra.mxu0 %v4069
    %v4175 = vpop.f32.mrf.mxu0
    %v4176 = vadd.f32 0.0, %v4175
    %v4177 = vpop.f32.mrf.mxu0
    %v4178 = vadd.f32 0.0, %v4177
    %4179 = vmatmul.bf16.gmra.mxu0 %v4070
    %v4180 = vpop.f32.mrf.mxu0
    %v4181 = vadd.f32 0.0, %v4180
    %v4182 = vpop.f32.mrf.mxu0
    %v4183 = vadd.f32 0.0, %v4182
    %4184 = vdwg.mxu0
    %v4185 = vld [vmem:[%s2458] sm:$0xff]
    %v4186 = vld [vmem:[%s2458 + $0x8] sm:$0xff]
    %v4187 = vld [vmem:[%s2458 + $0x10] sm:$0xff]
    %v4188 = vld [vmem:[%s2458 + $0x18] sm:$0xff]
    %v4189 = vld [vmem:[%s2458 + $0x20] sm:$0xff]
    %v4190 = vld [vmem:[%s2458 + $0x28] sm:$0xff]
    %v4191 = vld [vmem:[%s2458 + $0x30] sm:$0xff]
    %v4192 = vld [vmem:[%s2458 + $0x38] sm:$0xff]
    %v4193 = vld [vmem:[%s2458 + $0x40] sm:$0xff]
    %v4194 = vld [vmem:[%s2458 + $0x48] sm:$0xff]
    %v4195 = vld [vmem:[%s2458 + $0x50] sm:$0xff]
    %v4196 = vld [vmem:[%s2458 + $0x58] sm:$0xff]
    %v4197 = vld [vmem:[%s2458 + $0x60] sm:$0xff]
    %v4198 = vld [vmem:[%s2458 + $0x68] sm:$0xff]
    %v4199 = vld [vmem:[%s2458 + $0x70] sm:$0xff]
    %v4200 = vld [vmem:[%s2458 + $0x78] sm:$0xff]
    %v4201 = vmul.f32 %v4185, %v4146
    %v4202 = vmul.f32 %v4186, %v4148
    %v4203 = vmul.f32 %v4187, %v4151
    %v4204 = vmul.f32 %v4188, %v4153
    %v4205 = vmul.f32 %v4189, %v4156
    %v4206 = vmul.f32 %v4190, %v4158
    %v4207 = vmul.f32 %v4191, %v4161
    %v4208 = vmul.f32 %v4192, %v4163
    %v4209 = vmul.f32 %v4193, %v4166
    %v4210 = vmul.f32 %v4194, %v4168
    %v4211 = vmul.f32 %v4195, %v4171
    %v4212 = vmul.f32 %v4196, %v4173
    %v4213 = vmul.f32 %v4197, %v4176
    %v4214 = vmul.f32 %v4198, %v4178
    %v4215 = vmul.f32 %v4199, %v4181
    %v4216 = vmul.f32 %v4200, %v4183
    %v4217 = vadd.f32 %v4031, %v4201
    %v4218 = vadd.f32 %v4032, %v4202
    %v4219 = vadd.f32 %v4033, %v4203
    %v4220 = vadd.f32 %v4034, %v4204
    %v4221 = vadd.f32 %v4035, %v4205
    %v4222 = vadd.f32 %v4036, %v4206
    %v4223 = vadd.f32 %v4037, %v4207
    %v4224 = vadd.f32 %v4038, %v4208
    %v4225 = vadd.f32 %v4039, %v4209
    %v4226 = vadd.f32 %v4040, %v4210
    %v4227 = vadd.f32 %v4041, %v4211
    %v4228 = vadd.f32 %v4042, %v4212
    %v4229 = vadd.f32 %v4043, %v4213
    %v4230 = vadd.f32 %v4044, %v4214
    %v4231 = vadd.f32 %v4045, %v4215
    %v4232 = vadd.f32 %v4046, %v4216
    %s4233 = scalar_lea.vmem [#allocation13], 1
    %v4234 = vld [vmem:[%s4233] sm:$0x1]
    %v4236 = vperm.slane %v4234, 0
    %v4238 = vadd.f32 %v4217, %v4236
    %v4239 = vadd.f32 %v4218, %v4236
    %v4240 = vadd.f32 %v4219, %v4236
    %v4241 = vadd.f32 %v4220, %v4236
    %v4242 = vadd.f32 %v4221, %v4236
    %v4243 = vadd.f32 %v4222, %v4236
    %v4244 = vadd.f32 %v4223, %v4236
    %v4245 = vadd.f32 %v4224, %v4236
    %v4246 = vadd.f32 %v4225, %v4236
    %v4247 = vadd.f32 %v4226, %v4236
    %v4248 = vadd.f32 %v4227, %v4236
    %v4249 = vadd.f32 %v4228, %v4236
    %v4250 = vadd.f32 %v4229, %v4236
    %v4251 = vadd.f32 %v4230, %v4236
    %v4252 = vadd.f32 %v4231, %v4236
    %v4253 = vadd.f32 %v4232, %v4236
    %v4254 = vmax.f32 %v4238, 0.0
    %v4255 = vmax.f32 %v4239, 0.0
    %v4256 = vmax.f32 %v4240, 0.0
    %v4257 = vmax.f32 %v4241, 0.0
    %v4258 = vmax.f32 %v4242, 0.0
    %v4259 = vmax.f32 %v4243, 0.0
    %v4260 = vmax.f32 %v4244, 0.0
    %v4261 = vmax.f32 %v4245, 0.0
    %v4262 = vmax.f32 %v4246, 0.0
    %v4263 = vmax.f32 %v4247, 0.0
    %v4264 = vmax.f32 %v4248, 0.0
    %v4265 = vmax.f32 %v4249, 0.0
    %v4266 = vmax.f32 %v4250, 0.0
    %v4267 = vmax.f32 %v4251, 0.0
    %v4268 = vmax.f32 %v4252, 0.0
    %v4269 = vmax.f32 %v4253, 0.0
    %4270 = vst [vmem:[#allocation2 + $0x10] sm:$0xff] %v4254
    %4271 = vst [vmem:[#allocation2 + $0x18] sm:$0xff] %v4255
    %4272 = vst [vmem:[#allocation2 + $0x20] sm:$0xff] %v4256
    %4273 = vst [vmem:[#allocation2 + $0x28] sm:$0xff] %v4257
    %4274 = vst [vmem:[#allocation2 + $0x30] sm:$0xff] %v4258
    %4275 = vst [vmem:[#allocation2 + $0x38] sm:$0xff] %v4259
    %4276 = vst [vmem:[#allocation2 + $0x40] sm:$0xff] %v4260
    %4277 = vst [vmem:[#allocation2 + $0x48] sm:$0xff] %v4261
    %4278 = vst [vmem:[#allocation2 + $0x50] sm:$0xff] %v4262
    %4279 = vst [vmem:[#allocation2 + $0x58] sm:$0xff] %v4263
    %4280 = vst [vmem:[#allocation2 + $0x60] sm:$0xff] %v4264
    %4281 = vst [vmem:[#allocation2 + $0x68] sm:$0xff] %v4265
    %4282 = vst [vmem:[#allocation2 + $0x70] sm:$0xff] %v4266
    %4283 = vst [vmem:[#allocation2 + $0x78] sm:$0xff] %v4267
    %4284 = vst [vmem:[#allocation2 + $0x80] sm:$0xff] %v4268
    %4285 = vst [vmem:[#allocation2 + $0x88] sm:$0xff] %v4269
    %v4286 = vld [vmem:[#allocation2 + $0x7] sm:$0xff]
    %v4287 = vld [vmem:[#allocation2 + $0xf] sm:$0xff]
    %v4288 = vld [vmem:[#allocation2 + $0x17] sm:$0xff]
    %v4289 = vld [vmem:[#allocation2 + $0x1f] sm:$0xff]
    %v4290 = vld [vmem:[#allocation2 + $0x27] sm:$0xff]
    %v4291 = vld [vmem:[#allocation2 + $0x2f] sm:$0xff]
    %v4292 = vld [vmem:[#allocation2 + $0x37] sm:$0xff]
    %v4293 = vld [vmem:[#allocation2 + $0x3f] sm:$0xff]
    %v4294 = vld [vmem:[#allocation2 + $0x47] sm:$0xff]
    %v4295 = vld [vmem:[#allocation2 + $0x4f] sm:$0xff]
    %v4296 = vld [vmem:[#allocation2 + $0x57] sm:$0xff]
    %v4297 = vld [vmem:[#allocation2 + $0x5f] sm:$0xff]
    %v4298 = vld [vmem:[#allocation2 + $0x67] sm:$0xff]
    %v4299 = vld [vmem:[#allocation2 + $0x6f] sm:$0xff]
    %v4300 = vld [vmem:[#allocation2 + $0x77] sm:$0xff]
    %v4301 = vld [vmem:[#allocation2 + $0x7f] sm:$0xff]
    %v4302 = vpack.c.bf16 %v4287, %v4286
    %v4303 = vpack.c.bf16 %v4289, %v4288
    %v4304 = vpack.c.bf16 %v4291, %v4290
    %v4305 = vpack.c.bf16 %v4293, %v4292
    %v4306 = vpack.c.bf16 %v4295, %v4294
    %v4307 = vpack.c.bf16 %v4297, %v4296
    %v4308 = vpack.c.bf16 %v4299, %v4298
    %v4309 = vpack.c.bf16 %v4301, %v4300
    %s4310 = scalar_lea.vmem [#allocation11], 1152
    %v4311 = vld [vmem:[%s4310] sm:$0xf]
    %v4312 = vld [vmem:[%s4310 + $0x4] sm:$0xf]
    %v4313 = vld [vmem:[%s4310 + $0x8] sm:$0xf]
    %v4314 = vld [vmem:[%s4310 + $0xc] sm:$0xf]
    %v4315 = vld [vmem:[%s4310 + $0x10] sm:$0xf]
    %v4316 = vld [vmem:[%s4310 + $0x14] sm:$0xf]
    %v4317 = vld [vmem:[%s4310 + $0x18] sm:$0xf]
    %v4318 = vld [vmem:[%s4310 + $0x1c] sm:$0xf]
    %v4319 = vld [vmem:[%s4310 + $0x20] sm:$0xf]
    %v4320 = vld [vmem:[%s4310 + $0x24] sm:$0xf]
    %v4321 = vld [vmem:[%s4310 + $0x28] sm:$0xf]
    %v4322 = vld [vmem:[%s4310 + $0x2c] sm:$0xf]
    %v4323 = vld [vmem:[%s4310 + $0x30] sm:$0xf]
    %v4324 = vld [vmem:[%s4310 + $0x34] sm:$0xf]
    %v4325 = vld [vmem:[%s4310 + $0x38] sm:$0xf]
    %v4326 = vld [vmem:[%s4310 + $0x3c] sm:$0xf]
    %v4343 = vunpack.c.l.b16 %v4311
    %v4344 = vunpack.c.l.b16 %v4312
    %v4345 = vunpack.c.l.b16 %v4313
    %v4346 = vunpack.c.l.b16 %v4314
    %v4347 = vunpack.c.l.b16 %v4315
    %v4348 = vunpack.c.l.b16 %v4316
    %v4349 = vunpack.c.l.b16 %v4317
    %v4350 = vunpack.c.l.b16 %v4318
    %v4351 = vunpack.c.l.b16 %v4319
    %v4352 = vunpack.c.l.b16 %v4320
    %v4353 = vunpack.c.l.b16 %v4321
    %v4354 = vunpack.c.l.b16 %v4322
    %v4355 = vunpack.c.l.b16 %v4323
    %v4356 = vunpack.c.l.b16 %v4324
    %v4357 = vunpack.c.l.b16 %v4325
    %v4358 = vunpack.c.l.b16 %v4326
    %v4359 = vpack.c.b16 %v4344, %v4343
    %v4360 = vpack.c.b16 %v4346, %v4345
    %v4361 = vpack.c.b16 %v4348, %v4347
    %v4362 = vpack.c.b16 %v4350, %v4349
    %v4363 = vpack.c.b16 %v4352, %v4351
    %v4364 = vpack.c.b16 %v4354, %v4353
    %v4365 = vpack.c.b16 %v4356, %v4355
    %v4366 = vpack.c.b16 %v4358, %v4357
    %4375 = vmatpush.bf16.msra.mxu0 %v4366
    %4376 = vmatpush.bf16.msra.mxu0 %v4365
    %4377 = vmatpush.bf16.msra.mxu0 %v4364
    %4378 = vmatpush.bf16.msra.mxu0 %v4363
    %4379 = vmatpush.bf16.msra.mxu0 %v4362
    %4380 = vmatpush.bf16.msra.mxu0 %v4361
    %4381 = vmatpush.bf16.msra.mxu0 %v4360
    %4382 = vmatpush.bf16.msra.mxu0 %v4359
    %4383 = vmatmul.bf16.gmra.mxu0 %v4302
    %v4384 = vpop.f32.mrf.mxu0
    %v4385 = vadd.f32 0.0, %v4384
    %v4386 = vpop.f32.mrf.mxu0
    %v4387 = vadd.f32 0.0, %v4386
    %4388 = vmatmul.bf16.gmra.mxu0 %v4303
    %v4389 = vpop.f32.mrf.mxu0
    %v4390 = vadd.f32 0.0, %v4389
    %v4391 = vpop.f32.mrf.mxu0
    %v4392 = vadd.f32 0.0, %v4391
    %4393 = vmatmul.bf16.gmra.mxu0 %v4304
    %v4394 = vpop.f32.mrf.mxu0
    %v4395 = vadd.f32 0.0, %v4394
    %v4396 = vpop.f32.mrf.mxu0
    %v4397 = vadd.f32 0.0, %v4396
    %4398 = vmatmul.bf16.gmra.mxu0 %v4305
    %v4399 = vpop.f32.mrf.mxu0
    %v4400 = vadd.f32 0.0, %v4399
    %v4401 = vpop.f32.mrf.mxu0
    %v4402 = vadd.f32 0.0, %v4401
    %4403 = vmatmul.bf16.gmra.mxu0 %v4306
    %v4404 = vpop.f32.mrf.mxu0
    %v4405 = vadd.f32 0.0, %v4404
    %v4406 = vpop.f32.mrf.mxu0
    %v4407 = vadd.f32 0.0, %v4406
    %4408 = vmatmul.bf16.gmra.mxu0 %v4307
    %v4409 = vpop.f32.mrf.mxu0
    %v4410 = vadd.f32 0.0, %v4409
    %v4411 = vpop.f32.mrf.mxu0
    %v4412 = vadd.f32 0.0, %v4411
    %4413 = vmatmul.bf16.gmra.mxu0 %v4308
    %v4414 = vpop.f32.mrf.mxu0
    %v4415 = vadd.f32 0.0, %v4414
    %v4416 = vpop.f32.mrf.mxu0
    %v4417 = vadd.f32 0.0, %v4416
    %4418 = vmatmul.bf16.gmra.mxu0 %v4309
    %v4419 = vpop.f32.mrf.mxu0
    %v4420 = vadd.f32 0.0, %v4419
    %v4421 = vpop.f32.mrf.mxu0
    %v4422 = vadd.f32 0.0, %v4421
    %4423 = vdwg.mxu0
    %v4424 = vld [vmem:[#allocation14] sm:$0xff]
    %v4425 = vld [vmem:[#allocation14 + $0x8] sm:$0xff]
    %v4426 = vld [vmem:[#allocation14 + $0x10] sm:$0xff]
    %v4427 = vld [vmem:[#allocation14 + $0x18] sm:$0xff]
    %v4428 = vld [vmem:[#allocation14 + $0x20] sm:$0xff]
    %v4429 = vld [vmem:[#allocation14 + $0x28] sm:$0xff]
    %v4430 = vld [vmem:[#allocation14 + $0x30] sm:$0xff]
    %v4431 = vld [vmem:[#allocation14 + $0x38] sm:$0xff]
    %v4432 = vld [vmem:[#allocation14 + $0x40] sm:$0xff]
    %v4433 = vld [vmem:[#allocation14 + $0x48] sm:$0xff]
    %v4434 = vld [vmem:[#allocation14 + $0x50] sm:$0xff]
    %v4435 = vld [vmem:[#allocation14 + $0x58] sm:$0xff]
    %v4436 = vld [vmem:[#allocation14 + $0x60] sm:$0xff]
    %v4437 = vld [vmem:[#allocation14 + $0x68] sm:$0xff]
    %v4438 = vld [vmem:[#allocation14 + $0x70] sm:$0xff]
    %v4439 = vld [vmem:[#allocation14 + $0x78] sm:$0xff]
    %v4440 = vmul.f32 %v4424, %v4385
    %v4441 = vmul.f32 %v4425, %v4387
    %v4442 = vmul.f32 %v4426, %v4390
    %v4443 = vmul.f32 %v4427, %v4392
    %v4444 = vmul.f32 %v4428, %v4395
    %v4445 = vmul.f32 %v4429, %v4397
    %v4446 = vmul.f32 %v4430, %v4400
    %v4447 = vmul.f32 %v4431, %v4402
    %v4448 = vmul.f32 %v4432, %v4405
    %v4449 = vmul.f32 %v4433, %v4407
    %v4450 = vmul.f32 %v4434, %v4410
    %v4451 = vmul.f32 %v4435, %v4412
    %v4452 = vmul.f32 %v4436, %v4415
    %v4453 = vmul.f32 %v4437, %v4417
    %v4454 = vmul.f32 %v4438, %v4420
    %v4455 = vmul.f32 %v4439, %v4422
    %v4456 = vadd.f32 %v4440, 0.0
    %v4457 = vadd.f32 %v4441, 0.0
    %v4458 = vadd.f32 %v4442, 0.0
    %v4459 = vadd.f32 %v4443, 0.0
    %v4460 = vadd.f32 %v4444, 0.0
    %v4461 = vadd.f32 %v4445, 0.0
    %v4462 = vadd.f32 %v4446, 0.0
    %v4463 = vadd.f32 %v4447, 0.0
    %v4464 = vadd.f32 %v4448, 0.0
    %v4465 = vadd.f32 %v4449, 0.0
    %v4466 = vadd.f32 %v4450, 0.0
    %v4467 = vadd.f32 %v4451, 0.0
    %v4468 = vadd.f32 %v4452, 0.0
    %v4469 = vadd.f32 %v4453, 0.0
    %v4470 = vadd.f32 %v4454, 0.0
    %v4471 = vadd.f32 %v4455, 0.0
    %v4472 = vld [vmem:[#allocation2 + $0x8] sm:$0xff]
    %v4473 = vld [vmem:[#allocation2 + $0x10] sm:$0xff]
    %v4474 = vld [vmem:[#allocation2 + $0x18] sm:$0xff]
    %v4475 = vld [vmem:[#allocation2 + $0x20] sm:$0xff]
    %v4476 = vld [vmem:[#allocation2 + $0x28] sm:$0xff]
    %v4477 = vld [vmem:[#allocation2 + $0x30] sm:$0xff]
    %v4478 = vld [vmem:[#allocation2 + $0x38] sm:$0xff]
    %v4479 = vld [vmem:[#allocation2 + $0x40] sm:$0xff]
    %v4480 = vld [vmem:[#allocation2 + $0x48] sm:$0xff]
    %v4481 = vld [vmem:[#allocation2 + $0x50] sm:$0xff]
    %v4482 = vld [vmem:[#allocation2 + $0x58] sm:$0xff]
    %v4483 = vld [vmem:[#allocation2 + $0x60] sm:$0xff]
    %v4484 = vld [vmem:[#allocation2 + $0x68] sm:$0xff]
    %v4485 = vld [vmem:[#allocation2 + $0x70] sm:$0xff]
    %v4486 = vld [vmem:[#allocation2 + $0x78] sm:$0xff]
    %v4487 = vld [vmem:[#allocation2 + $0x80] sm:$0xff]
    %v4488 = vpack.c.bf16 %v4473, %v4472
    %v4489 = vpack.c.bf16 %v4475, %v4474
    %v4490 = vpack.c.bf16 %v4477, %v4476
    %v4491 = vpack.c.bf16 %v4479, %v4478
    %v4492 = vpack.c.bf16 %v4481, %v4480
    %v4493 = vpack.c.bf16 %v4483, %v4482
    %v4494 = vpack.c.bf16 %v4485, %v4484
    %v4495 = vpack.c.bf16 %v4487, %v4486
    %s4496 = scalar_lea.vmem [#allocation11], 1216
    %v4497 = vld [vmem:[%s4496] sm:$0xf]
    %v4498 = vld [vmem:[%s4496 + $0x4] sm:$0xf]
    %v4499 = vld [vmem:[%s4496 + $0x8] sm:$0xf]
    %v4500 = vld [vmem:[%s4496 + $0xc] sm:$0xf]
    %v4501 = vld [vmem:[%s4496 + $0x10] sm:$0xf]
    %v4502 = vld [vmem:[%s4496 + $0x14] sm:$0xf]
    %v4503 = vld [vmem:[%s4496 + $0x18] sm:$0xf]
    %v4504 = vld [vmem:[%s4496 + $0x1c] sm:$0xf]
    %v4505 = vld [vmem:[%s4496 + $0x20] sm:$0xf]
    %v4506 = vld [vmem:[%s4496 + $0x24] sm:$0xf]
    %v4507 = vld [vmem:[%s4496 + $0x28] sm:$0xf]
    %v4508 = vld [vmem:[%s4496 + $0x2c] sm:$0xf]
    %v4509 = vld [vmem:[%s4496 + $0x30] sm:$0xf]
    %v4510 = vld [vmem:[%s4496 + $0x34] sm:$0xf]
    %v4511 = vld [vmem:[%s4496 + $0x38] sm:$0xf]
    %v4512 = vld [vmem:[%s4496 + $0x3c] sm:$0xf]
    %v4529 = vunpack.c.l.b16 %v4497
    %v4530 = vunpack.c.l.b16 %v4498
    %v4531 = vunpack.c.l.b16 %v4499
    %v4532 = vunpack.c.l.b16 %v4500
    %v4533 = vunpack.c.l.b16 %v4501
    %v4534 = vunpack.c.l.b16 %v4502
    %v4535 = vunpack.c.l.b16 %v4503
    %v4536 = vunpack.c.l.b16 %v4504
    %v4537 = vunpack.c.l.b16 %v4505
    %v4538 = vunpack.c.l.b16 %v4506
    %v4539 = vunpack.c.l.b16 %v4507
    %v4540 = vunpack.c.l.b16 %v4508
    %v4541 = vunpack.c.l.b16 %v4509
    %v4542 = vunpack.c.l.b16 %v4510
    %v4543 = vunpack.c.l.b16 %v4511
    %v4544 = vunpack.c.l.b16 %v4512
    %v4545 = vpack.c.b16 %v4530, %v4529
    %v4546 = vpack.c.b16 %v4532, %v4531
    %v4547 = vpack.c.b16 %v4534, %v4533
    %v4548 = vpack.c.b16 %v4536, %v4535
    %v4549 = vpack.c.b16 %v4538, %v4537
    %v4550 = vpack.c.b16 %v4540, %v4539
    %v4551 = vpack.c.b16 %v4542, %v4541
    %v4552 = vpack.c.b16 %v4544, %v4543
    %4561 = vmatpush.bf16.msra.mxu0 %v4552
    %4562 = vmatpush.bf16.msra.mxu0 %v4551
    %4563 = vmatpush.bf16.msra.mxu0 %v4550
    %4564 = vmatpush.bf16.msra.mxu0 %v4549
    %4565 = vmatpush.bf16.msra.mxu0 %v4548
    %4566 = vmatpush.bf16.msra.mxu0 %v4547
    %4567 = vmatpush.bf16.msra.mxu0 %v4546
    %4568 = vmatpush.bf16.msra.mxu0 %v4545
    %4569 = vmatmul.bf16.gmra.mxu0 %v4488
    %v4570 = vpop.f32.mrf.mxu0
    %v4571 = vadd.f32 0.0, %v4570
    %v4572 = vpop.f32.mrf.mxu0
    %v4573 = vadd.f32 0.0, %v4572
    %4574 = vmatmul.bf16.gmra.mxu0 %v4489
    %v4575 = vpop.f32.mrf.mxu0
    %v4576 = vadd.f32 0.0, %v4575
    %v4577 = vpop.f32.mrf.mxu0
    %v4578 = vadd.f32 0.0, %v4577
    %4579 = vmatmul.bf16.gmra.mxu0 %v4490
    %v4580 = vpop.f32.mrf.mxu0
    %v4581 = vadd.f32 0.0, %v4580
    %v4582 = vpop.f32.mrf.mxu0
    %v4583 = vadd.f32 0.0, %v4582
    %4584 = vmatmul.bf16.gmra.mxu0 %v4491
    %v4585 = vpop.f32.mrf.mxu0
    %v4586 = vadd.f32 0.0, %v4585
    %v4587 = vpop.f32.mrf.mxu0
    %v4588 = vadd.f32 0.0, %v4587
    %4589 = vmatmul.bf16.gmra.mxu0 %v4492
    %v4590 = vpop.f32.mrf.mxu0
    %v4591 = vadd.f32 0.0, %v4590
    %v4592 = vpop.f32.mrf.mxu0
    %v4593 = vadd.f32 0.0, %v4592
    %4594 = vmatmul.bf16.gmra.mxu0 %v4493
    %v4595 = vpop.f32.mrf.mxu0
    %v4596 = vadd.f32 0.0, %v4595
    %v4597 = vpop.f32.mrf.mxu0
    %v4598 = vadd.f32 0.0, %v4597
    %4599 = vmatmul.bf16.gmra.mxu0 %v4494
    %v4600 = vpop.f32.mrf.mxu0
    %v4601 = vadd.f32 0.0, %v4600
    %v4602 = vpop.f32.mrf.mxu0
    %v4603 = vadd.f32 0.0, %v4602
    %4604 = vmatmul.bf16.gmra.mxu0 %v4495
    %v4605 = vpop.f32.mrf.mxu0
    %v4606 = vadd.f32 0.0, %v4605
    %v4607 = vpop.f32.mrf.mxu0
    %v4608 = vadd.f32 0.0, %v4607
    %4609 = vdwg.mxu0
    %v4610 = vld [vmem:[%s1149] sm:$0xff]
    %v4611 = vld [vmem:[%s1149 + $0x8] sm:$0xff]
    %v4612 = vld [vmem:[%s1149 + $0x10] sm:$0xff]
    %v4613 = vld [vmem:[%s1149 + $0x18] sm:$0xff]
    %v4614 = vld [vmem:[%s1149 + $0x20] sm:$0xff]
    %v4615 = vld [vmem:[%s1149 + $0x28] sm:$0xff]
    %v4616 = vld [vmem:[%s1149 + $0x30] sm:$0xff]
    %v4617 = vld [vmem:[%s1149 + $0x38] sm:$0xff]
    %v4618 = vld [vmem:[%s1149 + $0x40] sm:$0xff]
    %v4619 = vld [vmem:[%s1149 + $0x48] sm:$0xff]
    %v4620 = vld [vmem:[%s1149 + $0x50] sm:$0xff]
    %v4621 = vld [vmem:[%s1149 + $0x58] sm:$0xff]
    %v4622 = vld [vmem:[%s1149 + $0x60] sm:$0xff]
    %v4623 = vld [vmem:[%s1149 + $0x68] sm:$0xff]
    %v4624 = vld [vmem:[%s1149 + $0x70] sm:$0xff]
    %v4625 = vld [vmem:[%s1149 + $0x78] sm:$0xff]
    %v4626 = vmul.f32 %v4610, %v4571
    %v4627 = vmul.f32 %v4611, %v4573
    %v4628 = vmul.f32 %v4612, %v4576
    %v4629 = vmul.f32 %v4613, %v4578
    %v4630 = vmul.f32 %v4614, %v4581
    %v4631 = vmul.f32 %v4615, %v4583
    %v4632 = vmul.f32 %v4616, %v4586
    %v4633 = vmul.f32 %v4617, %v4588
    %v4634 = vmul.f32 %v4618, %v4591
    %v4635 = vmul.f32 %v4619, %v4593
    %v4636 = vmul.f32 %v4620, %v4596
    %v4637 = vmul.f32 %v4621, %v4598
    %v4638 = vmul.f32 %v4622, %v4601
    %v4639 = vmul.f32 %v4623, %v4603
    %v4640 = vmul.f32 %v4624, %v4606
    %v4641 = vmul.f32 %v4625, %v4608
    %v4642 = vadd.f32 %v4456, %v4626
    %v4643 = vadd.f32 %v4457, %v4627
    %v4644 = vadd.f32 %v4458, %v4628
    %v4645 = vadd.f32 %v4459, %v4629
    %v4646 = vadd.f32 %v4460, %v4630
    %v4647 = vadd.f32 %v4461, %v4631
    %v4648 = vadd.f32 %v4462, %v4632
    %v4649 = vadd.f32 %v4463, %v4633
    %v4650 = vadd.f32 %v4464, %v4634
    %v4651 = vadd.f32 %v4465, %v4635
    %v4652 = vadd.f32 %v4466, %v4636
    %v4653 = vadd.f32 %v4467, %v4637
    %v4654 = vadd.f32 %v4468, %v4638
    %v4655 = vadd.f32 %v4469, %v4639
    %v4656 = vadd.f32 %v4470, %v4640
    %v4657 = vadd.f32 %v4471, %v4641
    %v4658 = vld [vmem:[#allocation2 + $0x9] sm:$0xff]
    %v4659 = vld [vmem:[#allocation2 + $0x11] sm:$0xff]
    %v4660 = vld [vmem:[#allocation2 + $0x19] sm:$0xff]
    %v4661 = vld [vmem:[#allocation2 + $0x21] sm:$0xff]
    %v4662 = vld [vmem:[#allocation2 + $0x29] sm:$0xff]
    %v4663 = vld [vmem:[#allocation2 + $0x31] sm:$0xff]
    %v4664 = vld [vmem:[#allocation2 + $0x39] sm:$0xff]
    %v4665 = vld [vmem:[#allocation2 + $0x41] sm:$0xff]
    %v4666 = vld [vmem:[#allocation2 + $0x49] sm:$0xff]
    %v4667 = vld [vmem:[#allocation2 + $0x51] sm:$0xff]
    %v4668 = vld [vmem:[#allocation2 + $0x59] sm:$0xff]
    %v4669 = vld [vmem:[#allocation2 + $0x61] sm:$0xff]
    %v4670 = vld [vmem:[#allocation2 + $0x69] sm:$0xff]
    %v4671 = vld [vmem:[#allocation2 + $0x71] sm:$0xff]
    %v4672 = vld [vmem:[#allocation2 + $0x79] sm:$0xff]
    %v4673 = vld [vmem:[#allocation2 + $0x81] sm:$0xff]
    %v4674 = vpack.c.bf16 %v4659, %v4658
    %v4675 = vpack.c.bf16 %v4661, %v4660
    %v4676 = vpack.c.bf16 %v4663, %v4662
    %v4677 = vpack.c.bf16 %v4665, %v4664
    %v4678 = vpack.c.bf16 %v4667, %v4666
    %v4679 = vpack.c.bf16 %v4669, %v4668
    %v4680 = vpack.c.bf16 %v4671, %v4670
    %v4681 = vpack.c.bf16 %v4673, %v4672
    %s4682 = scalar_lea.vmem [#allocation11], 1280
    %v4683 = vld [vmem:[%s4682] sm:$0xf]
    %v4684 = vld [vmem:[%s4682 + $0x4] sm:$0xf]
    %v4685 = vld [vmem:[%s4682 + $0x8] sm:$0xf]
    %v4686 = vld [vmem:[%s4682 + $0xc] sm:$0xf]
    %v4687 = vld [vmem:[%s4682 + $0x10] sm:$0xf]
    %v4688 = vld [vmem:[%s4682 + $0x14] sm:$0xf]
    %v4689 = vld [vmem:[%s4682 + $0x18] sm:$0xf]
    %v4690 = vld [vmem:[%s4682 + $0x1c] sm:$0xf]
    %v4691 = vld [vmem:[%s4682 + $0x20] sm:$0xf]
    %v4692 = vld [vmem:[%s4682 + $0x24] sm:$0xf]
    %v4693 = vld [vmem:[%s4682 + $0x28] sm:$0xf]
    %v4694 = vld [vmem:[%s4682 + $0x2c] sm:$0xf]
    %v4695 = vld [vmem:[%s4682 + $0x30] sm:$0xf]
    %v4696 = vld [vmem:[%s4682 + $0x34] sm:$0xf]
    %v4697 = vld [vmem:[%s4682 + $0x38] sm:$0xf]
    %v4698 = vld [vmem:[%s4682 + $0x3c] sm:$0xf]
    %v4715 = vunpack.c.l.b16 %v4683
    %v4716 = vunpack.c.l.b16 %v4684
    %v4717 = vunpack.c.l.b16 %v4685
    %v4718 = vunpack.c.l.b16 %v4686
    %v4719 = vunpack.c.l.b16 %v4687
    %v4720 = vunpack.c.l.b16 %v4688
    %v4721 = vunpack.c.l.b16 %v4689
    %v4722 = vunpack.c.l.b16 %v4690
    %v4723 = vunpack.c.l.b16 %v4691
    %v4724 = vunpack.c.l.b16 %v4692
    %v4725 = vunpack.c.l.b16 %v4693
    %v4726 = vunpack.c.l.b16 %v4694
    %v4727 = vunpack.c.l.b16 %v4695
    %v4728 = vunpack.c.l.b16 %v4696
    %v4729 = vunpack.c.l.b16 %v4697
    %v4730 = vunpack.c.l.b16 %v4698
    %v4731 = vpack.c.b16 %v4716, %v4715
    %v4732 = vpack.c.b16 %v4718, %v4717
    %v4733 = vpack.c.b16 %v4720, %v4719
    %v4734 = vpack.c.b16 %v4722, %v4721
    %v4735 = vpack.c.b16 %v4724, %v4723
    %v4736 = vpack.c.b16 %v4726, %v4725
    %v4737 = vpack.c.b16 %v4728, %v4727
    %v4738 = vpack.c.b16 %v4730, %v4729
    %4747 = vmatpush.bf16.msra.mxu0 %v4738
    %4748 = vmatpush.bf16.msra.mxu0 %v4737
    %4749 = vmatpush.bf16.msra.mxu0 %v4736
    %4750 = vmatpush.bf16.msra.mxu0 %v4735
    %4751 = vmatpush.bf16.msra.mxu0 %v4734
    %4752 = vmatpush.bf16.msra.mxu0 %v4733
    %4753 = vmatpush.bf16.msra.mxu0 %v4732
    %4754 = vmatpush.bf16.msra.mxu0 %v4731
    %4755 = vmatmul.bf16.gmra.mxu0 %v4674
    %v4756 = vpop.f32.mrf.mxu0
    %v4757 = vadd.f32 0.0, %v4756
    %v4758 = vpop.f32.mrf.mxu0
    %v4759 = vadd.f32 0.0, %v4758
    %4760 = vmatmul.bf16.gmra.mxu0 %v4675
    %v4761 = vpop.f32.mrf.mxu0
    %v4762 = vadd.f32 0.0, %v4761
    %v4763 = vpop.f32.mrf.mxu0
    %v4764 = vadd.f32 0.0, %v4763
    %4765 = vmatmul.bf16.gmra.mxu0 %v4676
    %v4766 = vpop.f32.mrf.mxu0
    %v4767 = vadd.f32 0.0, %v4766
    %v4768 = vpop.f32.mrf.mxu0
    %v4769 = vadd.f32 0.0, %v4768
    %4770 = vmatmul.bf16.gmra.mxu0 %v4677
    %v4771 = vpop.f32.mrf.mxu0
    %v4772 = vadd.f32 0.0, %v4771
    %v4773 = vpop.f32.mrf.mxu0
    %v4774 = vadd.f32 0.0, %v4773
    %4775 = vmatmul.bf16.gmra.mxu0 %v4678
    %v4776 = vpop.f32.mrf.mxu0
    %v4777 = vadd.f32 0.0, %v4776
    %v4778 = vpop.f32.mrf.mxu0
    %v4779 = vadd.f32 0.0, %v4778
    %4780 = vmatmul.bf16.gmra.mxu0 %v4679
    %v4781 = vpop.f32.mrf.mxu0
    %v4782 = vadd.f32 0.0, %v4781
    %v4783 = vpop.f32.mrf.mxu0
    %v4784 = vadd.f32 0.0, %v4783
    %4785 = vmatmul.bf16.gmra.mxu0 %v4680
    %v4786 = vpop.f32.mrf.mxu0
    %v4787 = vadd.f32 0.0, %v4786
    %v4788 = vpop.f32.mrf.mxu0
    %v4789 = vadd.f32 0.0, %v4788
    %4790 = vmatmul.bf16.gmra.mxu0 %v4681
    %v4791 = vpop.f32.mrf.mxu0
    %v4792 = vadd.f32 0.0, %v4791
    %v4793 = vpop.f32.mrf.mxu0
    %v4794 = vadd.f32 0.0, %v4793
    %4795 = vdwg.mxu0
    %v4796 = vld [vmem:[%s1336] sm:$0xff]
    %v4797 = vld [vmem:[%s1336 + $0x8] sm:$0xff]
    %v4798 = vld [vmem:[%s1336 + $0x10] sm:$0xff]
    %v4799 = vld [vmem:[%s1336 + $0x18] sm:$0xff]
    %v4800 = vld [vmem:[%s1336 + $0x20] sm:$0xff]
    %v4801 = vld [vmem:[%s1336 + $0x28] sm:$0xff]
    %v4802 = vld [vmem:[%s1336 + $0x30] sm:$0xff]
    %v4803 = vld [vmem:[%s1336 + $0x38] sm:$0xff]
    %v4804 = vld [vmem:[%s1336 + $0x40] sm:$0xff]
    %v4805 = vld [vmem:[%s1336 + $0x48] sm:$0xff]
    %v4806 = vld [vmem:[%s1336 + $0x50] sm:$0xff]
    %v4807 = vld [vmem:[%s1336 + $0x58] sm:$0xff]
    %v4808 = vld [vmem:[%s1336 + $0x60] sm:$0xff]
    %v4809 = vld [vmem:[%s1336 + $0x68] sm:$0xff]
    %v4810 = vld [vmem:[%s1336 + $0x70] sm:$0xff]
    %v4811 = vld [vmem:[%s1336 + $0x78] sm:$0xff]
    %v4812 = vmul.f32 %v4796, %v4757
    %v4813 = vmul.f32 %v4797, %v4759
    %v4814 = vmul.f32 %v4798, %v4762
    %v4815 = vmul.f32 %v4799, %v4764
    %v4816 = vmul.f32 %v4800, %v4767
    %v4817 = vmul.f32 %v4801, %v4769
    %v4818 = vmul.f32 %v4802, %v4772
    %v4819 = vmul.f32 %v4803, %v4774
    %v4820 = vmul.f32 %v4804, %v4777
    %v4821 = vmul.f32 %v4805, %v4779
    %v4822 = vmul.f32 %v4806, %v4782
    %v4823 = vmul.f32 %v4807, %v4784
    %v4824 = vmul.f32 %v4808, %v4787
    %v4825 = vmul.f32 %v4809, %v4789
    %v4826 = vmul.f32 %v4810, %v4792
    %v4827 = vmul.f32 %v4811, %v4794
    %v4828 = vadd.f32 %v4642, %v4812
    %v4829 = vadd.f32 %v4643, %v4813
    %v4830 = vadd.f32 %v4644, %v4814
    %v4831 = vadd.f32 %v4645, %v4815
    %v4832 = vadd.f32 %v4646, %v4816
    %v4833 = vadd.f32 %v4647, %v4817
    %v4834 = vadd.f32 %v4648, %v4818
    %v4835 = vadd.f32 %v4649, %v4819
    %v4836 = vadd.f32 %v4650, %v4820
    %v4837 = vadd.f32 %v4651, %v4821
    %v4838 = vadd.f32 %v4652, %v4822
    %v4839 = vadd.f32 %v4653, %v4823
    %v4840 = vadd.f32 %v4654, %v4824
    %v4841 = vadd.f32 %v4655, %v4825
    %v4842 = vadd.f32 %v4656, %v4826
    %v4843 = vadd.f32 %v4657, %v4827
    %v4844 = vld [vmem:[#allocation2 + $0xf] sm:$0xff]
    %v4845 = vld [vmem:[#allocation2 + $0x17] sm:$0xff]
    %v4846 = vld [vmem:[#allocation2 + $0x1f] sm:$0xff]
    %v4847 = vld [vmem:[#allocation2 + $0x27] sm:$0xff]
    %v4848 = vld [vmem:[#allocation2 + $0x2f] sm:$0xff]
    %v4849 = vld [vmem:[#allocation2 + $0x37] sm:$0xff]
    %v4850 = vld [vmem:[#allocation2 + $0x3f] sm:$0xff]
    %v4851 = vld [vmem:[#allocation2 + $0x47] sm:$0xff]
    %v4852 = vld [vmem:[#allocation2 + $0x4f] sm:$0xff]
    %v4853 = vld [vmem:[#allocation2 + $0x57] sm:$0xff]
    %v4854 = vld [vmem:[#allocation2 + $0x5f] sm:$0xff]
    %v4855 = vld [vmem:[#allocation2 + $0x67] sm:$0xff]
    %v4856 = vld [vmem:[#allocation2 + $0x6f] sm:$0xff]
    %v4857 = vld [vmem:[#allocation2 + $0x77] sm:$0xff]
    %v4858 = vld [vmem:[#allocation2 + $0x7f] sm:$0xff]
    %v4859 = vld [vmem:[#allocation2 + $0x87] sm:$0xff]
    %v4860 = vpack.c.bf16 %v4845, %v4844
    %v4861 = vpack.c.bf16 %v4847, %v4846
    %v4862 = vpack.c.bf16 %v4849, %v4848
    %v4863 = vpack.c.bf16 %v4851, %v4850
    %v4864 = vpack.c.bf16 %v4853, %v4852
    %v4865 = vpack.c.bf16 %v4855, %v4854
    %v4866 = vpack.c.bf16 %v4857, %v4856
    %v4867 = vpack.c.bf16 %v4859, %v4858
    %s4868 = scalar_lea.vmem [#allocation11], 1344
    %v4869 = vld [vmem:[%s4868] sm:$0xf]
    %v4870 = vld [vmem:[%s4868 + $0x4] sm:$0xf]
    %v4871 = vld [vmem:[%s4868 + $0x8] sm:$0xf]
    %v4872 = vld [vmem:[%s4868 + $0xc] sm:$0xf]
    %v4873 = vld [vmem:[%s4868 + $0x10] sm:$0xf]
    %v4874 = vld [vmem:[%s4868 + $0x14] sm:$0xf]
    %v4875 = vld [vmem:[%s4868 + $0x18] sm:$0xf]
    %v4876 = vld [vmem:[%s4868 + $0x1c] sm:$0xf]
    %v4877 = vld [vmem:[%s4868 + $0x20] sm:$0xf]
    %v4878 = vld [vmem:[%s4868 + $0x24] sm:$0xf]
    %v4879 = vld [vmem:[%s4868 + $0x28] sm:$0xf]
    %v4880 = vld [vmem:[%s4868 + $0x2c] sm:$0xf]
    %v4881 = vld [vmem:[%s4868 + $0x30] sm:$0xf]
    %v4882 = vld [vmem:[%s4868 + $0x34] sm:$0xf]
    %v4883 = vld [vmem:[%s4868 + $0x38] sm:$0xf]
    %v4884 = vld [vmem:[%s4868 + $0x3c] sm:$0xf]
    %v4901 = vunpack.c.l.b16 %v4869
    %v4902 = vunpack.c.l.b16 %v4870
    %v4903 = vunpack.c.l.b16 %v4871
    %v4904 = vunpack.c.l.b16 %v4872
    %v4905 = vunpack.c.l.b16 %v4873
    %v4906 = vunpack.c.l.b16 %v4874
    %v4907 = vunpack.c.l.b16 %v4875
    %v4908 = vunpack.c.l.b16 %v4876
    %v4909 = vunpack.c.l.b16 %v4877
    %v4910 = vunpack.c.l.b16 %v4878
    %v4911 = vunpack.c.l.b16 %v4879
    %v4912 = vunpack.c.l.b16 %v4880
    %v4913 = vunpack.c.l.b16 %v4881
    %v4914 = vunpack.c.l.b16 %v4882
    %v4915 = vunpack.c.l.b16 %v4883
    %v4916 = vunpack.c.l.b16 %v4884
    %v4917 = vpack.c.b16 %v4902, %v4901
    %v4918 = vpack.c.b16 %v4904, %v4903
    %v4919 = vpack.c.b16 %v4906, %v4905
    %v4920 = vpack.c.b16 %v4908, %v4907
    %v4921 = vpack.c.b16 %v4910, %v4909
    %v4922 = vpack.c.b16 %v4912, %v4911
    %v4923 = vpack.c.b16 %v4914, %v4913
    %v4924 = vpack.c.b16 %v4916, %v4915
    %4933 = vmatpush.bf16.msra.mxu0 %v4924
    %4934 = vmatpush.bf16.msra.mxu0 %v4923
    %4935 = vmatpush.bf16.msra.mxu0 %v4922
    %4936 = vmatpush.bf16.msra.mxu0 %v4921
    %4937 = vmatpush.bf16.msra.mxu0 %v4920
    %4938 = vmatpush.bf16.msra.mxu0 %v4919
    %4939 = vmatpush.bf16.msra.mxu0 %v4918
    %4940 = vmatpush.bf16.msra.mxu0 %v4917
    %4941 = vmatmul.bf16.gmra.mxu0 %v4860
    %v4942 = vpop.f32.mrf.mxu0
    %v4943 = vadd.f32 0.0, %v4942
    %v4944 = vpop.f32.mrf.mxu0
    %v4945 = vadd.f32 0.0, %v4944
    %4946 = vmatmul.bf16.gmra.mxu0 %v4861
    %v4947 = vpop.f32.mrf.mxu0
    %v4948 = vadd.f32 0.0, %v4947
    %v4949 = vpop.f32.mrf.mxu0
    %v4950 = vadd.f32 0.0, %v4949
    %4951 = vmatmul.bf16.gmra.mxu0 %v4862
    %v4952 = vpop.f32.mrf.mxu0
    %v4953 = vadd.f32 0.0, %v4952
    %v4954 = vpop.f32.mrf.mxu0
    %v4955 = vadd.f32 0.0, %v4954
    %4956 = vmatmul.bf16.gmra.mxu0 %v4863
    %v4957 = vpop.f32.mrf.mxu0
    %v4958 = vadd.f32 0.0, %v4957
    %v4959 = vpop.f32.mrf.mxu0
    %v4960 = vadd.f32 0.0, %v4959
    %4961 = vmatmul.bf16.gmra.mxu0 %v4864
    %v4962 = vpop.f32.mrf.mxu0
    %v4963 = vadd.f32 0.0, %v4962
    %v4964 = vpop.f32.mrf.mxu0
    %v4965 = vadd.f32 0.0, %v4964
    %4966 = vmatmul.bf16.gmra.mxu0 %v4865
    %v4967 = vpop.f32.mrf.mxu0
    %v4968 = vadd.f32 0.0, %v4967
    %v4969 = vpop.f32.mrf.mxu0
    %v4970 = vadd.f32 0.0, %v4969
    %4971 = vmatmul.bf16.gmra.mxu0 %v4866
    %v4972 = vpop.f32.mrf.mxu0
    %v4973 = vadd.f32 0.0, %v4972
    %v4974 = vpop.f32.mrf.mxu0
    %v4975 = vadd.f32 0.0, %v4974
    %4976 = vmatmul.bf16.gmra.mxu0 %v4867
    %v4977 = vpop.f32.mrf.mxu0
    %v4978 = vadd.f32 0.0, %v4977
    %v4979 = vpop.f32.mrf.mxu0
    %v4980 = vadd.f32 0.0, %v4979
    %4981 = vdwg.mxu0
    %v4982 = vld [vmem:[%s1523] sm:$0xff]
    %v4983 = vld [vmem:[%s1523 + $0x8] sm:$0xff]
    %v4984 = vld [vmem:[%s1523 + $0x10] sm:$0xff]
    %v4985 = vld [vmem:[%s1523 + $0x18] sm:$0xff]
    %v4986 = vld [vmem:[%s1523 + $0x20] sm:$0xff]
    %v4987 = vld [vmem:[%s1523 + $0x28] sm:$0xff]
    %v4988 = vld [vmem:[%s1523 + $0x30] sm:$0xff]
    %v4989 = vld [vmem:[%s1523 + $0x38] sm:$0xff]
    %v4990 = vld [vmem:[%s1523 + $0x40] sm:$0xff]
    %v4991 = vld [vmem:[%s1523 + $0x48] sm:$0xff]
    %v4992 = vld [vmem:[%s1523 + $0x50] sm:$0xff]
    %v4993 = vld [vmem:[%s1523 + $0x58] sm:$0xff]
    %v4994 = vld [vmem:[%s1523 + $0x60] sm:$0xff]
    %v4995 = vld [vmem:[%s1523 + $0x68] sm:$0xff]
    %v4996 = vld [vmem:[%s1523 + $0x70] sm:$0xff]
    %v4997 = vld [vmem:[%s1523 + $0x78] sm:$0xff]
    %v4998 = vmul.f32 %v4982, %v4943
    %v4999 = vmul.f32 %v4983, %v4945
    %v5000 = vmul.f32 %v4984, %v4948
    %v5001 = vmul.f32 %v4985, %v4950
    %v5002 = vmul.f32 %v4986, %v4953
    %v5003 = vmul.f32 %v4987, %v4955
    %v5004 = vmul.f32 %v4988, %v4958
    %v5005 = vmul.f32 %v4989, %v4960
    %v5006 = vmul.f32 %v4990, %v4963
    %v5007 = vmul.f32 %v4991, %v4965
    %v5008 = vmul.f32 %v4992, %v4968
    %v5009 = vmul.f32 %v4993, %v4970
    %v5010 = vmul.f32 %v4994, %v4973
    %v5011 = vmul.f32 %v4995, %v4975
    %v5012 = vmul.f32 %v4996, %v4978
    %v5013 = vmul.f32 %v4997, %v4980
    %v5014 = vadd.f32 %v4828, %v4998
    %v5015 = vadd.f32 %v4829, %v4999
    %v5016 = vadd.f32 %v4830, %v5000
    %v5017 = vadd.f32 %v4831, %v5001
    %v5018 = vadd.f32 %v4832, %v5002
    %v5019 = vadd.f32 %v4833, %v5003
    %v5020 = vadd.f32 %v4834, %v5004
    %v5021 = vadd.f32 %v4835, %v5005
    %v5022 = vadd.f32 %v4836, %v5006
    %v5023 = vadd.f32 %v4837, %v5007
    %v5024 = vadd.f32 %v4838, %v5008
    %v5025 = vadd.f32 %v4839, %v5009
    %v5026 = vadd.f32 %v4840, %v5010
    %v5027 = vadd.f32 %v4841, %v5011
    %v5028 = vadd.f32 %v4842, %v5012
    %v5029 = vadd.f32 %v4843, %v5013
    %v5030 = vld [vmem:[#allocation2 + $0x10] sm:$0xff]
    %v5031 = vld [vmem:[#allocation2 + $0x18] sm:$0xff]
    %v5032 = vld [vmem:[#allocation2 + $0x20] sm:$0xff]
    %v5033 = vld [vmem:[#allocation2 + $0x28] sm:$0xff]
    %v5034 = vld [vmem:[#allocation2 + $0x30] sm:$0xff]
    %v5035 = vld [vmem:[#allocation2 + $0x38] sm:$0xff]
    %v5036 = vld [vmem:[#allocation2 + $0x40] sm:$0xff]
    %v5037 = vld [vmem:[#allocation2 + $0x48] sm:$0xff]
    %v5038 = vld [vmem:[#allocation2 + $0x50] sm:$0xff]
    %v5039 = vld [vmem:[#allocation2 + $0x58] sm:$0xff]
    %v5040 = vld [vmem:[#allocation2 + $0x60] sm:$0xff]
    %v5041 = vld [vmem:[#allocation2 + $0x68] sm:$0xff]
    %v5042 = vld [vmem:[#allocation2 + $0x70] sm:$0xff]
    %v5043 = vld [vmem:[#allocation2 + $0x78] sm:$0xff]
    %v5044 = vld [vmem:[#allocation2 + $0x80] sm:$0xff]
    %v5045 = vld [vmem:[#allocation2 + $0x88] sm:$0xff]
    %v5046 = vpack.c.bf16 %v5031, %v5030
    %v5047 = vpack.c.bf16 %v5033, %v5032
    %v5048 = vpack.c.bf16 %v5035, %v5034
    %v5049 = vpack.c.bf16 %v5037, %v5036
    %v5050 = vpack.c.bf16 %v5039, %v5038
    %v5051 = vpack.c.bf16 %v5041, %v5040
    %v5052 = vpack.c.bf16 %v5043, %v5042
    %v5053 = vpack.c.bf16 %v5045, %v5044
    %s5054 = scalar_lea.vmem [#allocation11], 1408
    %v5055 = vld [vmem:[%s5054] sm:$0xf]
    %v5056 = vld [vmem:[%s5054 + $0x4] sm:$0xf]
    %v5057 = vld [vmem:[%s5054 + $0x8] sm:$0xf]
    %v5058 = vld [vmem:[%s5054 + $0xc] sm:$0xf]
    %v5059 = vld [vmem:[%s5054 + $0x10] sm:$0xf]
    %v5060 = vld [vmem:[%s5054 + $0x14] sm:$0xf]
    %v5061 = vld [vmem:[%s5054 + $0x18] sm:$0xf]
    %v5062 = vld [vmem:[%s5054 + $0x1c] sm:$0xf]
    %v5063 = vld [vmem:[%s5054 + $0x20] sm:$0xf]
    %v5064 = vld [vmem:[%s5054 + $0x24] sm:$0xf]
    %v5065 = vld [vmem:[%s5054 + $0x28] sm:$0xf]
    %v5066 = vld [vmem:[%s5054 + $0x2c] sm:$0xf]
    %v5067 = vld [vmem:[%s5054 + $0x30] sm:$0xf]
    %v5068 = vld [vmem:[%s5054 + $0x34] sm:$0xf]
    %v5069 = vld [vmem:[%s5054 + $0x38] sm:$0xf]
    %v5070 = vld [vmem:[%s5054 + $0x3c] sm:$0xf]
    %v5087 = vunpack.c.l.b16 %v5055
    %v5088 = vunpack.c.l.b16 %v5056
    %v5089 = vunpack.c.l.b16 %v5057
    %v5090 = vunpack.c.l.b16 %v5058
    %v5091 = vunpack.c.l.b16 %v5059
    %v5092 = vunpack.c.l.b16 %v5060
    %v5093 = vunpack.c.l.b16 %v5061
    %v5094 = vunpack.c.l.b16 %v5062
    %v5095 = vunpack.c.l.b16 %v5063
    %v5096 = vunpack.c.l.b16 %v5064
    %v5097 = vunpack.c.l.b16 %v5065
    %v5098 = vunpack.c.l.b16 %v5066
    %v5099 = vunpack.c.l.b16 %v5067
    %v5100 = vunpack.c.l.b16 %v5068
    %v5101 = vunpack.c.l.b16 %v5069
    %v5102 = vunpack.c.l.b16 %v5070
    %v5103 = vpack.c.b16 %v5088, %v5087
    %v5104 = vpack.c.b16 %v5090, %v5089
    %v5105 = vpack.c.b16 %v5092, %v5091
    %v5106 = vpack.c.b16 %v5094, %v5093
    %v5107 = vpack.c.b16 %v5096, %v5095
    %v5108 = vpack.c.b16 %v5098, %v5097
    %v5109 = vpack.c.b16 %v5100, %v5099
    %v5110 = vpack.c.b16 %v5102, %v5101
    %5119 = vmatpush.bf16.msra.mxu0 %v5110
    %5120 = vmatpush.bf16.msra.mxu0 %v5109
    %5121 = vmatpush.bf16.msra.mxu0 %v5108
    %5122 = vmatpush.bf16.msra.mxu0 %v5107
    %5123 = vmatpush.bf16.msra.mxu0 %v5106
    %5124 = vmatpush.bf16.msra.mxu0 %v5105
    %5125 = vmatpush.bf16.msra.mxu0 %v5104
    %5126 = vmatpush.bf16.msra.mxu0 %v5103
    %5127 = vmatmul.bf16.gmra.mxu0 %v5046
    %v5128 = vpop.f32.mrf.mxu0
    %v5129 = vadd.f32 0.0, %v5128
    %v5130 = vpop.f32.mrf.mxu0
    %v5131 = vadd.f32 0.0, %v5130
    %5132 = vmatmul.bf16.gmra.mxu0 %v5047
    %v5133 = vpop.f32.mrf.mxu0
    %v5134 = vadd.f32 0.0, %v5133
    %v5135 = vpop.f32.mrf.mxu0
    %v5136 = vadd.f32 0.0, %v5135
    %5137 = vmatmul.bf16.gmra.mxu0 %v5048
    %v5138 = vpop.f32.mrf.mxu0
    %v5139 = vadd.f32 0.0, %v5138
    %v5140 = vpop.f32.mrf.mxu0
    %v5141 = vadd.f32 0.0, %v5140
    %5142 = vmatmul.bf16.gmra.mxu0 %v5049
    %v5143 = vpop.f32.mrf.mxu0
    %v5144 = vadd.f32 0.0, %v5143
    %v5145 = vpop.f32.mrf.mxu0
    %v5146 = vadd.f32 0.0, %v5145
    %5147 = vmatmul.bf16.gmra.mxu0 %v5050
    %v5148 = vpop.f32.mrf.mxu0
    %v5149 = vadd.f32 0.0, %v5148
    %v5150 = vpop.f32.mrf.mxu0
    %v5151 = vadd.f32 0.0, %v5150
    %5152 = vmatmul.bf16.gmra.mxu0 %v5051
    %v5153 = vpop.f32.mrf.mxu0
    %v5154 = vadd.f32 0.0, %v5153
    %v5155 = vpop.f32.mrf.mxu0
    %v5156 = vadd.f32 0.0, %v5155
    %5157 = vmatmul.bf16.gmra.mxu0 %v5052
    %v5158 = vpop.f32.mrf.mxu0
    %v5159 = vadd.f32 0.0, %v5158
    %v5160 = vpop.f32.mrf.mxu0
    %v5161 = vadd.f32 0.0, %v5160
    %5162 = vmatmul.bf16.gmra.mxu0 %v5053
    %v5163 = vpop.f32.mrf.mxu0
    %v5164 = vadd.f32 0.0, %v5163
    %v5165 = vpop.f32.mrf.mxu0
    %v5166 = vadd.f32 0.0, %v5165
    %5167 = vdwg.mxu0
    %v5168 = vld [vmem:[%s1710] sm:$0xff]
    %v5169 = vld [vmem:[%s1710 + $0x8] sm:$0xff]
    %v5170 = vld [vmem:[%s1710 + $0x10] sm:$0xff]
    %v5171 = vld [vmem:[%s1710 + $0x18] sm:$0xff]
    %v5172 = vld [vmem:[%s1710 + $0x20] sm:$0xff]
    %v5173 = vld [vmem:[%s1710 + $0x28] sm:$0xff]
    %v5174 = vld [vmem:[%s1710 + $0x30] sm:$0xff]
    %v5175 = vld [vmem:[%s1710 + $0x38] sm:$0xff]
    %v5176 = vld [vmem:[%s1710 + $0x40] sm:$0xff]
    %v5177 = vld [vmem:[%s1710 + $0x48] sm:$0xff]
    %v5178 = vld [vmem:[%s1710 + $0x50] sm:$0xff]
    %v5179 = vld [vmem:[%s1710 + $0x58] sm:$0xff]
    %v5180 = vld [vmem:[%s1710 + $0x60] sm:$0xff]
    %v5181 = vld [vmem:[%s1710 + $0x68] sm:$0xff]
    %v5182 = vld [vmem:[%s1710 + $0x70] sm:$0xff]
    %v5183 = vld [vmem:[%s1710 + $0x78] sm:$0xff]
    %v5184 = vmul.f32 %v5168, %v5129
    %v5185 = vmul.f32 %v5169, %v5131
    %v5186 = vmul.f32 %v5170, %v5134
    %v5187 = vmul.f32 %v5171, %v5136
    %v5188 = vmul.f32 %v5172, %v5139
    %v5189 = vmul.f32 %v5173, %v5141
    %v5190 = vmul.f32 %v5174, %v5144
    %v5191 = vmul.f32 %v5175, %v5146
    %v5192 = vmul.f32 %v5176, %v5149
    %v5193 = vmul.f32 %v5177, %v5151
    %v5194 = vmul.f32 %v5178, %v5154
    %v5195 = vmul.f32 %v5179, %v5156
    %v5196 = vmul.f32 %v5180, %v5159
    %v5197 = vmul.f32 %v5181, %v5161
    %v5198 = vmul.f32 %v5182, %v5164
    %v5199 = vmul.f32 %v5183, %v5166
    %v5200 = vadd.f32 %v5014, %v5184
    %v5201 = vadd.f32 %v5015, %v5185
    %v5202 = vadd.f32 %v5016, %v5186
    %v5203 = vadd.f32 %v5017, %v5187
    %v5204 = vadd.f32 %v5018, %v5188
    %v5205 = vadd.f32 %v5019, %v5189
    %v5206 = vadd.f32 %v5020, %v5190
    %v5207 = vadd.f32 %v5021, %v5191
    %v5208 = vadd.f32 %v5022, %v5192
    %v5209 = vadd.f32 %v5023, %v5193
    %v5210 = vadd.f32 %v5024, %v5194
    %v5211 = vadd.f32 %v5025, %v5195
    %v5212 = vadd.f32 %v5026, %v5196
    %v5213 = vadd.f32 %v5027, %v5197
    %v5214 = vadd.f32 %v5028, %v5198
    %v5215 = vadd.f32 %v5029, %v5199
    %v5216 = vld [vmem:[#allocation2 + $0x11] sm:$0xff]
    %v5217 = vld [vmem:[#allocation2 + $0x19] sm:$0xff]
    %v5218 = vld [vmem:[#allocation2 + $0x21] sm:$0xff]
    %v5219 = vld [vmem:[#allocation2 + $0x29] sm:$0xff]
    %v5220 = vld [vmem:[#allocation2 + $0x31] sm:$0xff]
    %v5221 = vld [vmem:[#allocation2 + $0x39] sm:$0xff]
    %v5222 = vld [vmem:[#allocation2 + $0x41] sm:$0xff]
    %v5223 = vld [vmem:[#allocation2 + $0x49] sm:$0xff]
    %v5224 = vld [vmem:[#allocation2 + $0x51] sm:$0xff]
    %v5225 = vld [vmem:[#allocation2 + $0x59] sm:$0xff]
    %v5226 = vld [vmem:[#allocation2 + $0x61] sm:$0xff]
    %v5227 = vld [vmem:[#allocation2 + $0x69] sm:$0xff]
    %v5228 = vld [vmem:[#allocation2 + $0x71] sm:$0xff]
    %v5229 = vld [vmem:[#allocation2 + $0x79] sm:$0xff]
    %v5230 = vld [vmem:[#allocation2 + $0x81] sm:$0xff]
    %v5231 = vld [vmem:[#allocation2 + $0x89] sm:$0xff]
    %v5232 = vpack.c.bf16 %v5217, %v5216
    %v5233 = vpack.c.bf16 %v5219, %v5218
    %v5234 = vpack.c.bf16 %v5221, %v5220
    %v5235 = vpack.c.bf16 %v5223, %v5222
    %v5236 = vpack.c.bf16 %v5225, %v5224
    %v5237 = vpack.c.bf16 %v5227, %v5226
    %v5238 = vpack.c.bf16 %v5229, %v5228
    %v5239 = vpack.c.bf16 %v5231, %v5230
    %s5240 = scalar_lea.vmem [#allocation11], 1472
    %v5241 = vld [vmem:[%s5240] sm:$0xf]
    %v5242 = vld [vmem:[%s5240 + $0x4] sm:$0xf]
    %v5243 = vld [vmem:[%s5240 + $0x8] sm:$0xf]
    %v5244 = vld [vmem:[%s5240 + $0xc] sm:$0xf]
    %v5245 = vld [vmem:[%s5240 + $0x10] sm:$0xf]
    %v5246 = vld [vmem:[%s5240 + $0x14] sm:$0xf]
    %v5247 = vld [vmem:[%s5240 + $0x18] sm:$0xf]
    %v5248 = vld [vmem:[%s5240 + $0x1c] sm:$0xf]
    %v5249 = vld [vmem:[%s5240 + $0x20] sm:$0xf]
    %v5250 = vld [vmem:[%s5240 + $0x24] sm:$0xf]
    %v5251 = vld [vmem:[%s5240 + $0x28] sm:$0xf]
    %v5252 = vld [vmem:[%s5240 + $0x2c] sm:$0xf]
    %v5253 = vld [vmem:[%s5240 + $0x30] sm:$0xf]
    %v5254 = vld [vmem:[%s5240 + $0x34] sm:$0xf]
    %v5255 = vld [vmem:[%s5240 + $0x38] sm:$0xf]
    %v5256 = vld [vmem:[%s5240 + $0x3c] sm:$0xf]
    %v5273 = vunpack.c.l.b16 %v5241
    %v5274 = vunpack.c.l.b16 %v5242
    %v5275 = vunpack.c.l.b16 %v5243
    %v5276 = vunpack.c.l.b16 %v5244
    %v5277 = vunpack.c.l.b16 %v5245
    %v5278 = vunpack.c.l.b16 %v5246
    %v5279 = vunpack.c.l.b16 %v5247
    %v5280 = vunpack.c.l.b16 %v5248
    %v5281 = vunpack.c.l.b16 %v5249
    %v5282 = vunpack.c.l.b16 %v5250
    %v5283 = vunpack.c.l.b16 %v5251
    %v5284 = vunpack.c.l.b16 %v5252
    %v5285 = vunpack.c.l.b16 %v5253
    %v5286 = vunpack.c.l.b16 %v5254
    %v5287 = vunpack.c.l.b16 %v5255
    %v5288 = vunpack.c.l.b16 %v5256
    %v5289 = vpack.c.b16 %v5274, %v5273
    %v5290 = vpack.c.b16 %v5276, %v5275
    %v5291 = vpack.c.b16 %v5278, %v5277
    %v5292 = vpack.c.b16 %v5280, %v5279
    %v5293 = vpack.c.b16 %v5282, %v5281
    %v5294 = vpack.c.b16 %v5284, %v5283
    %v5295 = vpack.c.b16 %v5286, %v5285
    %v5296 = vpack.c.b16 %v5288, %v5287
    %5305 = vmatpush.bf16.msra.mxu0 %v5296
    %5306 = vmatpush.bf16.msra.mxu0 %v5295
    %5307 = vmatpush.bf16.msra.mxu0 %v5294
    %5308 = vmatpush.bf16.msra.mxu0 %v5293
    %5309 = vmatpush.bf16.msra.mxu0 %v5292
    %5310 = vmatpush.bf16.msra.mxu0 %v5291
    %5311 = vmatpush.bf16.msra.mxu0 %v5290
    %5312 = vmatpush.bf16.msra.mxu0 %v5289
    %5313 = vmatmul.bf16.gmra.mxu0 %v5232
    %v5314 = vpop.f32.mrf.mxu0
    %v5315 = vadd.f32 0.0, %v5314
    %v5316 = vpop.f32.mrf.mxu0
    %v5317 = vadd.f32 0.0, %v5316
    %5318 = vmatmul.bf16.gmra.mxu0 %v5233
    %v5319 = vpop.f32.mrf.mxu0
    %v5320 = vadd.f32 0.0, %v5319
    %v5321 = vpop.f32.mrf.mxu0
    %v5322 = vadd.f32 0.0, %v5321
    %5323 = vmatmul.bf16.gmra.mxu0 %v5234
    %v5324 = vpop.f32.mrf.mxu0
    %v5325 = vadd.f32 0.0, %v5324
    %v5326 = vpop.f32.mrf.mxu0
    %v5327 = vadd.f32 0.0, %v5326
    %5328 = vmatmul.bf16.gmra.mxu0 %v5235
    %v5329 = vpop.f32.mrf.mxu0
    %v5330 = vadd.f32 0.0, %v5329
    %v5331 = vpop.f32.mrf.mxu0
    %v5332 = vadd.f32 0.0, %v5331
    %5333 = vmatmul.bf16.gmra.mxu0 %v5236
    %v5334 = vpop.f32.mrf.mxu0
    %v5335 = vadd.f32 0.0, %v5334
    %v5336 = vpop.f32.mrf.mxu0
    %v5337 = vadd.f32 0.0, %v5336
    %5338 = vmatmul.bf16.gmra.mxu0 %v5237
    %v5339 = vpop.f32.mrf.mxu0
    %v5340 = vadd.f32 0.0, %v5339
    %v5341 = vpop.f32.mrf.mxu0
    %v5342 = vadd.f32 0.0, %v5341
    %5343 = vmatmul.bf16.gmra.mxu0 %v5238
    %v5344 = vpop.f32.mrf.mxu0
    %v5345 = vadd.f32 0.0, %v5344
    %v5346 = vpop.f32.mrf.mxu0
    %v5347 = vadd.f32 0.0, %v5346
    %5348 = vmatmul.bf16.gmra.mxu0 %v5239
    %v5349 = vpop.f32.mrf.mxu0
    %v5350 = vadd.f32 0.0, %v5349
    %v5351 = vpop.f32.mrf.mxu0
    %v5352 = vadd.f32 0.0, %v5351
    %5353 = vdwg.mxu0
    %v5354 = vld [vmem:[%s1897] sm:$0xff]
    %v5355 = vld [vmem:[%s1897 + $0x8] sm:$0xff]
    %v5356 = vld [vmem:[%s1897 + $0x10] sm:$0xff]
    %v5357 = vld [vmem:[%s1897 + $0x18] sm:$0xff]
    %v5358 = vld [vmem:[%s1897 + $0x20] sm:$0xff]
    %v5359 = vld [vmem:[%s1897 + $0x28] sm:$0xff]
    %v5360 = vld [vmem:[%s1897 + $0x30] sm:$0xff]
    %v5361 = vld [vmem:[%s1897 + $0x38] sm:$0xff]
    %v5362 = vld [vmem:[%s1897 + $0x40] sm:$0xff]
    %v5363 = vld [vmem:[%s1897 + $0x48] sm:$0xff]
    %v5364 = vld [vmem:[%s1897 + $0x50] sm:$0xff]
    %v5365 = vld [vmem:[%s1897 + $0x58] sm:$0xff]
    %v5366 = vld [vmem:[%s1897 + $0x60] sm:$0xff]
    %v5367 = vld [vmem:[%s1897 + $0x68] sm:$0xff]
    %v5368 = vld [vmem:[%s1897 + $0x70] sm:$0xff]
    %v5369 = vld [vmem:[%s1897 + $0x78] sm:$0xff]
    %v5370 = vmul.f32 %v5354, %v5315
    %v5371 = vmul.f32 %v5355, %v5317
    %v5372 = vmul.f32 %v5356, %v5320
    %v5373 = vmul.f32 %v5357, %v5322
    %v5374 = vmul.f32 %v5358, %v5325
    %v5375 = vmul.f32 %v5359, %v5327
    %v5376 = vmul.f32 %v5360, %v5330
    %v5377 = vmul.f32 %v5361, %v5332
    %v5378 = vmul.f32 %v5362, %v5335
    %v5379 = vmul.f32 %v5363, %v5337
    %v5380 = vmul.f32 %v5364, %v5340
    %v5381 = vmul.f32 %v5365, %v5342
    %v5382 = vmul.f32 %v5366, %v5345
    %v5383 = vmul.f32 %v5367, %v5347
    %v5384 = vmul.f32 %v5368, %v5350
    %v5385 = vmul.f32 %v5369, %v5352
    %v5386 = vadd.f32 %v5200, %v5370
    %v5387 = vadd.f32 %v5201, %v5371
    %v5388 = vadd.f32 %v5202, %v5372
    %v5389 = vadd.f32 %v5203, %v5373
    %v5390 = vadd.f32 %v5204, %v5374
    %v5391 = vadd.f32 %v5205, %v5375
    %v5392 = vadd.f32 %v5206, %v5376
    %v5393 = vadd.f32 %v5207, %v5377
    %v5394 = vadd.f32 %v5208, %v5378
    %v5395 = vadd.f32 %v5209, %v5379
    %v5396 = vadd.f32 %v5210, %v5380
    %v5397 = vadd.f32 %v5211, %v5381
    %v5398 = vadd.f32 %v5212, %v5382
    %v5399 = vadd.f32 %v5213, %v5383
    %v5400 = vadd.f32 %v5214, %v5384
    %v5401 = vadd.f32 %v5215, %v5385
    %v5402 = vld [vmem:[#allocation2 + $0x17] sm:$0xff]
    %v5403 = vld [vmem:[#allocation2 + $0x1f] sm:$0xff]
    %v5404 = vld [vmem:[#allocation2 + $0x27] sm:$0xff]
    %v5405 = vld [vmem:[#allocation2 + $0x2f] sm:$0xff]
    %v5406 = vld [vmem:[#allocation2 + $0x37] sm:$0xff]
    %v5407 = vld [vmem:[#allocation2 + $0x3f] sm:$0xff]
    %v5408 = vld [vmem:[#allocation2 + $0x47] sm:$0xff]
    %v5409 = vld [vmem:[#allocation2 + $0x4f] sm:$0xff]
    %v5410 = vld [vmem:[#allocation2 + $0x57] sm:$0xff]
    %v5411 = vld [vmem:[#allocation2 + $0x5f] sm:$0xff]
    %v5412 = vld [vmem:[#allocation2 + $0x67] sm:$0xff]
    %v5413 = vld [vmem:[#allocation2 + $0x6f] sm:$0xff]
    %v5414 = vld [vmem:[#allocation2 + $0x77] sm:$0xff]
    %v5415 = vld [vmem:[#allocation2 + $0x7f] sm:$0xff]
    %v5416 = vld [vmem:[#allocation2 + $0x87] sm:$0xff]
    %v5417 = vld [vmem:[#allocation2 + $0x8f] sm:$0xff]
    %v5418 = vpack.c.bf16 %v5403, %v5402
    %v5419 = vpack.c.bf16 %v5405, %v5404
    %v5420 = vpack.c.bf16 %v5407, %v5406
    %v5421 = vpack.c.bf16 %v5409, %v5408
    %v5422 = vpack.c.bf16 %v5411, %v5410
    %v5423 = vpack.c.bf16 %v5413, %v5412
    %v5424 = vpack.c.bf16 %v5415, %v5414
    %v5425 = vpack.c.bf16 %v5417, %v5416
    %s5426 = scalar_lea.vmem [#allocation11], 1536
    %v5427 = vld [vmem:[%s5426] sm:$0xf]
    %v5428 = vld [vmem:[%s5426 + $0x4] sm:$0xf]
    %v5429 = vld [vmem:[%s5426 + $0x8] sm:$0xf]
    %v5430 = vld [vmem:[%s5426 + $0xc] sm:$0xf]
    %v5431 = vld [vmem:[%s5426 + $0x10] sm:$0xf]
    %v5432 = vld [vmem:[%s5426 + $0x14] sm:$0xf]
    %v5433 = vld [vmem:[%s5426 + $0x18] sm:$0xf]
    %v5434 = vld [vmem:[%s5426 + $0x1c] sm:$0xf]
    %v5435 = vld [vmem:[%s5426 + $0x20] sm:$0xf]
    %v5436 = vld [vmem:[%s5426 + $0x24] sm:$0xf]
    %v5437 = vld [vmem:[%s5426 + $0x28] sm:$0xf]
    %v5438 = vld [vmem:[%s5426 + $0x2c] sm:$0xf]
    %v5439 = vld [vmem:[%s5426 + $0x30] sm:$0xf]
    %v5440 = vld [vmem:[%s5426 + $0x34] sm:$0xf]
    %v5441 = vld [vmem:[%s5426 + $0x38] sm:$0xf]
    %v5442 = vld [vmem:[%s5426 + $0x3c] sm:$0xf]
    %v5459 = vunpack.c.l.b16 %v5427
    %v5460 = vunpack.c.l.b16 %v5428
    %v5461 = vunpack.c.l.b16 %v5429
    %v5462 = vunpack.c.l.b16 %v5430
    %v5463 = vunpack.c.l.b16 %v5431
    %v5464 = vunpack.c.l.b16 %v5432
    %v5465 = vunpack.c.l.b16 %v5433
    %v5466 = vunpack.c.l.b16 %v5434
    %v5467 = vunpack.c.l.b16 %v5435
    %v5468 = vunpack.c.l.b16 %v5436
    %v5469 = vunpack.c.l.b16 %v5437
    %v5470 = vunpack.c.l.b16 %v5438
    %v5471 = vunpack.c.l.b16 %v5439
    %v5472 = vunpack.c.l.b16 %v5440
    %v5473 = vunpack.c.l.b16 %v5441
    %v5474 = vunpack.c.l.b16 %v5442
    %v5475 = vpack.c.b16 %v5460, %v5459
    %v5476 = vpack.c.b16 %v5462, %v5461
    %v5477 = vpack.c.b16 %v5464, %v5463
    %v5478 = vpack.c.b16 %v5466, %v5465
    %v5479 = vpack.c.b16 %v5468, %v5467
    %v5480 = vpack.c.b16 %v5470, %v5469
    %v5481 = vpack.c.b16 %v5472, %v5471
    %v5482 = vpack.c.b16 %v5474, %v5473
    %5491 = vmatpush.bf16.msra.mxu0 %v5482
    %5492 = vmatpush.bf16.msra.mxu0 %v5481
    %5493 = vmatpush.bf16.msra.mxu0 %v5480
    %5494 = vmatpush.bf16.msra.mxu0 %v5479
    %5495 = vmatpush.bf16.msra.mxu0 %v5478
    %5496 = vmatpush.bf16.msra.mxu0 %v5477
    %5497 = vmatpush.bf16.msra.mxu0 %v5476
    %5498 = vmatpush.bf16.msra.mxu0 %v5475
    %5499 = vmatmul.bf16.gmra.mxu0 %v5418
    %v5500 = vpop.f32.mrf.mxu0
    %v5501 = vadd.f32 0.0, %v5500
    %v5502 = vpop.f32.mrf.mxu0
    %v5503 = vadd.f32 0.0, %v5502
    %5504 = vmatmul.bf16.gmra.mxu0 %v5419
    %v5505 = vpop.f32.mrf.mxu0
    %v5506 = vadd.f32 0.0, %v5505
    %v5507 = vpop.f32.mrf.mxu0
    %v5508 = vadd.f32 0.0, %v5507
    %5509 = vmatmul.bf16.gmra.mxu0 %v5420
    %v5510 = vpop.f32.mrf.mxu0
    %v5511 = vadd.f32 0.0, %v5510
    %v5512 = vpop.f32.mrf.mxu0
    %v5513 = vadd.f32 0.0, %v5512
    %5514 = vmatmul.bf16.gmra.mxu0 %v5421
    %v5515 = vpop.f32.mrf.mxu0
    %v5516 = vadd.f32 0.0, %v5515
    %v5517 = vpop.f32.mrf.mxu0
    %v5518 = vadd.f32 0.0, %v5517
    %5519 = vmatmul.bf16.gmra.mxu0 %v5422
    %v5520 = vpop.f32.mrf.mxu0
    %v5521 = vadd.f32 0.0, %v5520
    %v5522 = vpop.f32.mrf.mxu0
    %v5523 = vadd.f32 0.0, %v5522
    %5524 = vmatmul.bf16.gmra.mxu0 %v5423
    %v5525 = vpop.f32.mrf.mxu0
    %v5526 = vadd.f32 0.0, %v5525
    %v5527 = vpop.f32.mrf.mxu0
    %v5528 = vadd.f32 0.0, %v5527
    %5529 = vmatmul.bf16.gmra.mxu0 %v5424
    %v5530 = vpop.f32.mrf.mxu0
    %v5531 = vadd.f32 0.0, %v5530
    %v5532 = vpop.f32.mrf.mxu0
    %v5533 = vadd.f32 0.0, %v5532
    %5534 = vmatmul.bf16.gmra.mxu0 %v5425
    %v5535 = vpop.f32.mrf.mxu0
    %v5536 = vadd.f32 0.0, %v5535
    %v5537 = vpop.f32.mrf.mxu0
    %v5538 = vadd.f32 0.0, %v5537
    %5539 = vdwg.mxu0
    %v5540 = vld [vmem:[%s2084] sm:$0xff]
    %v5541 = vld [vmem:[%s2084 + $0x8] sm:$0xff]
    %v5542 = vld [vmem:[%s2084 + $0x10] sm:$0xff]
    %v5543 = vld [vmem:[%s2084 + $0x18] sm:$0xff]
    %v5544 = vld [vmem:[%s2084 + $0x20] sm:$0xff]
    %v5545 = vld [vmem:[%s2084 + $0x28] sm:$0xff]
    %v5546 = vld [vmem:[%s2084 + $0x30] sm:$0xff]
    %v5547 = vld [vmem:[%s2084 + $0x38] sm:$0xff]
    %v5548 = vld [vmem:[%s2084 + $0x40] sm:$0xff]
    %v5549 = vld [vmem:[%s2084 + $0x48] sm:$0xff]
    %v5550 = vld [vmem:[%s2084 + $0x50] sm:$0xff]
    %v5551 = vld [vmem:[%s2084 + $0x58] sm:$0xff]
    %v5552 = vld [vmem:[%s2084 + $0x60] sm:$0xff]
    %v5553 = vld [vmem:[%s2084 + $0x68] sm:$0xff]
    %v5554 = vld [vmem:[%s2084 + $0x70] sm:$0xff]
    %v5555 = vld [vmem:[%s2084 + $0x78] sm:$0xff]
    %v5556 = vmul.f32 %v5540, %v5501
    %v5557 = vmul.f32 %v5541, %v5503
    %v5558 = vmul.f32 %v5542, %v5506
    %v5559 = vmul.f32 %v5543, %v5508
    %v5560 = vmul.f32 %v5544, %v5511
    %v5561 = vmul.f32 %v5545, %v5513
    %v5562 = vmul.f32 %v5546, %v5516
    %v5563 = vmul.f32 %v5547, %v5518
    %v5564 = vmul.f32 %v5548, %v5521
    %v5565 = vmul.f32 %v5549, %v5523
    %v5566 = vmul.f32 %v5550, %v5526
    %v5567 = vmul.f32 %v5551, %v5528
    %v5568 = vmul.f32 %v5552, %v5531
    %v5569 = vmul.f32 %v5553, %v5533
    %v5570 = vmul.f32 %v5554, %v5536
    %v5571 = vmul.f32 %v5555, %v5538
    %v5572 = vadd.f32 %v5386, %v5556
    %v5573 = vadd.f32 %v5387, %v5557
    %v5574 = vadd.f32 %v5388, %v5558
    %v5575 = vadd.f32 %v5389, %v5559
    %v5576 = vadd.f32 %v5390, %v5560
    %v5577 = vadd.f32 %v5391, %v5561
    %v5578 = vadd.f32 %v5392, %v5562
    %v5579 = vadd.f32 %v5393, %v5563
    %v5580 = vadd.f32 %v5394, %v5564
    %v5581 = vadd.f32 %v5395, %v5565
    %v5582 = vadd.f32 %v5396, %v5566
    %v5583 = vadd.f32 %v5397, %v5567
    %v5584 = vadd.f32 %v5398, %v5568
    %v5585 = vadd.f32 %v5399, %v5569
    %v5586 = vadd.f32 %v5400, %v5570
    %v5587 = vadd.f32 %v5401, %v5571
    %v5588 = vld [vmem:[#allocation2 + $0x18] sm:$0xff]
    %v5589 = vld [vmem:[#allocation2 + $0x20] sm:$0xff]
    %v5590 = vld [vmem:[#allocation2 + $0x28] sm:$0xff]
    %v5591 = vld [vmem:[#allocation2 + $0x30] sm:$0xff]
    %v5592 = vld [vmem:[#allocation2 + $0x38] sm:$0xff]
    %v5593 = vld [vmem:[#allocation2 + $0x40] sm:$0xff]
    %v5594 = vld [vmem:[#allocation2 + $0x48] sm:$0xff]
    %v5595 = vld [vmem:[#allocation2 + $0x50] sm:$0xff]
    %v5596 = vld [vmem:[#allocation2 + $0x58] sm:$0xff]
    %v5597 = vld [vmem:[#allocation2 + $0x60] sm:$0xff]
    %v5598 = vld [vmem:[#allocation2 + $0x68] sm:$0xff]
    %v5599 = vld [vmem:[#allocation2 + $0x70] sm:$0xff]
    %v5600 = vld [vmem:[#allocation2 + $0x78] sm:$0xff]
    %v5601 = vld [vmem:[#allocation2 + $0x80] sm:$0xff]
    %v5602 = vld [vmem:[#allocation2 + $0x88] sm:$0xff]
    %v5603 = vld [vmem:[#allocation2 + $0x90] sm:$0xff]
    %v5604 = vpack.c.bf16 %v5589, %v5588
    %v5605 = vpack.c.bf16 %v5591, %v5590
    %v5606 = vpack.c.bf16 %v5593, %v5592
    %v5607 = vpack.c.bf16 %v5595, %v5594
    %v5608 = vpack.c.bf16 %v5597, %v5596
    %v5609 = vpack.c.bf16 %v5599, %v5598
    %v5610 = vpack.c.bf16 %v5601, %v5600
    %v5611 = vpack.c.bf16 %v5603, %v5602
    %s5612 = scalar_lea.vmem [#allocation11], 1600
    %v5613 = vld [vmem:[%s5612] sm:$0xf]
    %v5614 = vld [vmem:[%s5612 + $0x4] sm:$0xf]
    %v5615 = vld [vmem:[%s5612 + $0x8] sm:$0xf]
    %v5616 = vld [vmem:[%s5612 + $0xc] sm:$0xf]
    %v5617 = vld [vmem:[%s5612 + $0x10] sm:$0xf]
    %v5618 = vld [vmem:[%s5612 + $0x14] sm:$0xf]
    %v5619 = vld [vmem:[%s5612 + $0x18] sm:$0xf]
    %v5620 = vld [vmem:[%s5612 + $0x1c] sm:$0xf]
    %v5621 = vld [vmem:[%s5612 + $0x20] sm:$0xf]
    %v5622 = vld [vmem:[%s5612 + $0x24] sm:$0xf]
    %v5623 = vld [vmem:[%s5612 + $0x28] sm:$0xf]
    %v5624 = vld [vmem:[%s5612 + $0x2c] sm:$0xf]
    %v5625 = vld [vmem:[%s5612 + $0x30] sm:$0xf]
    %v5626 = vld [vmem:[%s5612 + $0x34] sm:$0xf]
    %v5627 = vld [vmem:[%s5612 + $0x38] sm:$0xf]
    %v5628 = vld [vmem:[%s5612 + $0x3c] sm:$0xf]
    %v5645 = vunpack.c.l.b16 %v5613
    %v5646 = vunpack.c.l.b16 %v5614
    %v5647 = vunpack.c.l.b16 %v5615
    %v5648 = vunpack.c.l.b16 %v5616
    %v5649 = vunpack.c.l.b16 %v5617
    %v5650 = vunpack.c.l.b16 %v5618
    %v5651 = vunpack.c.l.b16 %v5619
    %v5652 = vunpack.c.l.b16 %v5620
    %v5653 = vunpack.c.l.b16 %v5621
    %v5654 = vunpack.c.l.b16 %v5622
    %v5655 = vunpack.c.l.b16 %v5623
    %v5656 = vunpack.c.l.b16 %v5624
    %v5657 = vunpack.c.l.b16 %v5625
    %v5658 = vunpack.c.l.b16 %v5626
    %v5659 = vunpack.c.l.b16 %v5627
    %v5660 = vunpack.c.l.b16 %v5628
    %v5661 = vpack.c.b16 %v5646, %v5645
    %v5662 = vpack.c.b16 %v5648, %v5647
    %v5663 = vpack.c.b16 %v5650, %v5649
    %v5664 = vpack.c.b16 %v5652, %v5651
    %v5665 = vpack.c.b16 %v5654, %v5653
    %v5666 = vpack.c.b16 %v5656, %v5655
    %v5667 = vpack.c.b16 %v5658, %v5657
    %v5668 = vpack.c.b16 %v5660, %v5659
    %5677 = vmatpush.bf16.msra.mxu0 %v5668
    %5678 = vmatpush.bf16.msra.mxu0 %v5667
    %5679 = vmatpush.bf16.msra.mxu0 %v5666
    %5680 = vmatpush.bf16.msra.mxu0 %v5665
    %5681 = vmatpush.bf16.msra.mxu0 %v5664
    %5682 = vmatpush.bf16.msra.mxu0 %v5663
    %5683 = vmatpush.bf16.msra.mxu0 %v5662
    %5684 = vmatpush.bf16.msra.mxu0 %v5661
    %5685 = vmatmul.bf16.gmra.mxu0 %v5604
    %v5686 = vpop.f32.mrf.mxu0
    %v5687 = vadd.f32 0.0, %v5686
    %v5688 = vpop.f32.mrf.mxu0
    %v5689 = vadd.f32 0.0, %v5688
    %5690 = vmatmul.bf16.gmra.mxu0 %v5605
    %v5691 = vpop.f32.mrf.mxu0
    %v5692 = vadd.f32 0.0, %v5691
    %v5693 = vpop.f32.mrf.mxu0
    %v5694 = vadd.f32 0.0, %v5693
    %5695 = vmatmul.bf16.gmra.mxu0 %v5606
    %v5696 = vpop.f32.mrf.mxu0
    %v5697 = vadd.f32 0.0, %v5696
    %v5698 = vpop.f32.mrf.mxu0
    %v5699 = vadd.f32 0.0, %v5698
    %5700 = vmatmul.bf16.gmra.mxu0 %v5607
    %v5701 = vpop.f32.mrf.mxu0
    %v5702 = vadd.f32 0.0, %v5701
    %v5703 = vpop.f32.mrf.mxu0
    %v5704 = vadd.f32 0.0, %v5703
    %5705 = vmatmul.bf16.gmra.mxu0 %v5608
    %v5706 = vpop.f32.mrf.mxu0
    %v5707 = vadd.f32 0.0, %v5706
    %v5708 = vpop.f32.mrf.mxu0
    %v5709 = vadd.f32 0.0, %v5708
    %5710 = vmatmul.bf16.gmra.mxu0 %v5609
    %v5711 = vpop.f32.mrf.mxu0
    %v5712 = vadd.f32 0.0, %v5711
    %v5713 = vpop.f32.mrf.mxu0
    %v5714 = vadd.f32 0.0, %v5713
    %5715 = vmatmul.bf16.gmra.mxu0 %v5610
    %v5716 = vpop.f32.mrf.mxu0
    %v5717 = vadd.f32 0.0, %v5716
    %v5718 = vpop.f32.mrf.mxu0
    %v5719 = vadd.f32 0.0, %v5718
    %5720 = vmatmul.bf16.gmra.mxu0 %v5611
    %v5721 = vpop.f32.mrf.mxu0
    %v5722 = vadd.f32 0.0, %v5721
    %v5723 = vpop.f32.mrf.mxu0
    %v5724 = vadd.f32 0.0, %v5723
    %5725 = vdwg.mxu0
    %v5726 = vld [vmem:[%s2271] sm:$0xff]
    %v5727 = vld [vmem:[%s2271 + $0x8] sm:$0xff]
    %v5728 = vld [vmem:[%s2271 + $0x10] sm:$0xff]
    %v5729 = vld [vmem:[%s2271 + $0x18] sm:$0xff]
    %v5730 = vld [vmem:[%s2271 + $0x20] sm:$0xff]
    %v5731 = vld [vmem:[%s2271 + $0x28] sm:$0xff]
    %v5732 = vld [vmem:[%s2271 + $0x30] sm:$0xff]
    %v5733 = vld [vmem:[%s2271 + $0x38] sm:$0xff]
    %v5734 = vld [vmem:[%s2271 + $0x40] sm:$0xff]
    %v5735 = vld [vmem:[%s2271 + $0x48] sm:$0xff]
    %v5736 = vld [vmem:[%s2271 + $0x50] sm:$0xff]
    %v5737 = vld [vmem:[%s2271 + $0x58] sm:$0xff]
    %v5738 = vld [vmem:[%s2271 + $0x60] sm:$0xff]
    %v5739 = vld [vmem:[%s2271 + $0x68] sm:$0xff]
    %v5740 = vld [vmem:[%s2271 + $0x70] sm:$0xff]
    %v5741 = vld [vmem:[%s2271 + $0x78] sm:$0xff]
    %v5742 = vmul.f32 %v5726, %v5687
    %v5743 = vmul.f32 %v5727, %v5689
    %v5744 = vmul.f32 %v5728, %v5692
    %v5745 = vmul.f32 %v5729, %v5694
    %v5746 = vmul.f32 %v5730, %v5697
    %v5747 = vmul.f32 %v5731, %v5699
    %v5748 = vmul.f32 %v5732, %v5702
    %v5749 = vmul.f32 %v5733, %v5704
    %v5750 = vmul.f32 %v5734, %v5707
    %v5751 = vmul.f32 %v5735, %v5709
    %v5752 = vmul.f32 %v5736, %v5712
    %v5753 = vmul.f32 %v5737, %v5714
    %v5754 = vmul.f32 %v5738, %v5717
    %v5755 = vmul.f32 %v5739, %v5719
    %v5756 = vmul.f32 %v5740, %v5722
    %v5757 = vmul.f32 %v5741, %v5724
    %v5758 = vadd.f32 %v5572, %v5742
    %v5759 = vadd.f32 %v5573, %v5743
    %v5760 = vadd.f32 %v5574, %v5744
    %v5761 = vadd.f32 %v5575, %v5745
    %v5762 = vadd.f32 %v5576, %v5746
    %v5763 = vadd.f32 %v5577, %v5747
    %v5764 = vadd.f32 %v5578, %v5748
    %v5765 = vadd.f32 %v5579, %v5749
    %v5766 = vadd.f32 %v5580, %v5750
    %v5767 = vadd.f32 %v5581, %v5751
    %v5768 = vadd.f32 %v5582, %v5752
    %v5769 = vadd.f32 %v5583, %v5753
    %v5770 = vadd.f32 %v5584, %v5754
    %v5771 = vadd.f32 %v5585, %v5755
    %v5772 = vadd.f32 %v5586, %v5756
    %v5773 = vadd.f32 %v5587, %v5757
    %v5774 = vld [vmem:[#allocation2 + $0x19] sm:$0xff]
    %v5775 = vld [vmem:[#allocation2 + $0x21] sm:$0xff]
    %v5776 = vld [vmem:[#allocation2 + $0x29] sm:$0xff]
    %v5777 = vld [vmem:[#allocation2 + $0x31] sm:$0xff]
    %v5778 = vld [vmem:[#allocation2 + $0x39] sm:$0xff]
    %v5779 = vld [vmem:[#allocation2 + $0x41] sm:$0xff]
    %v5780 = vld [vmem:[#allocation2 + $0x49] sm:$0xff]
    %v5781 = vld [vmem:[#allocation2 + $0x51] sm:$0xff]
    %v5782 = vld [vmem:[#allocation2 + $0x59] sm:$0xff]
    %v5783 = vld [vmem:[#allocation2 + $0x61] sm:$0xff]
    %v5784 = vld [vmem:[#allocation2 + $0x69] sm:$0xff]
    %v5785 = vld [vmem:[#allocation2 + $0x71] sm:$0xff]
    %v5786 = vld [vmem:[#allocation2 + $0x79] sm:$0xff]
    %v5787 = vld [vmem:[#allocation2 + $0x81] sm:$0xff]
    %v5788 = vld [vmem:[#allocation2 + $0x89] sm:$0xff]
    %v5789 = vld [vmem:[#allocation2 + $0x91] sm:$0xff]
    %v5790 = vpack.c.bf16 %v5775, %v5774
    %v5791 = vpack.c.bf16 %v5777, %v5776
    %v5792 = vpack.c.bf16 %v5779, %v5778
    %v5793 = vpack.c.bf16 %v5781, %v5780
    %v5794 = vpack.c.bf16 %v5783, %v5782
    %v5795 = vpack.c.bf16 %v5785, %v5784
    %v5796 = vpack.c.bf16 %v5787, %v5786
    %v5797 = vpack.c.bf16 %v5789, %v5788
    %s5798 = scalar_lea.vmem [#allocation11], 1664
    %v5799 = vld [vmem:[%s5798] sm:$0xf]
    %v5800 = vld [vmem:[%s5798 + $0x4] sm:$0xf]
    %v5801 = vld [vmem:[%s5798 + $0x8] sm:$0xf]
    %v5802 = vld [vmem:[%s5798 + $0xc] sm:$0xf]
    %v5803 = vld [vmem:[%s5798 + $0x10] sm:$0xf]
    %v5804 = vld [vmem:[%s5798 + $0x14] sm:$0xf]
    %v5805 = vld [vmem:[%s5798 + $0x18] sm:$0xf]
    %v5806 = vld [vmem:[%s5798 + $0x1c] sm:$0xf]
    %v5807 = vld [vmem:[%s5798 + $0x20] sm:$0xf]
    %v5808 = vld [vmem:[%s5798 + $0x24] sm:$0xf]
    %v5809 = vld [vmem:[%s5798 + $0x28] sm:$0xf]
    %v5810 = vld [vmem:[%s5798 + $0x2c] sm:$0xf]
    %v5811 = vld [vmem:[%s5798 + $0x30] sm:$0xf]
    %v5812 = vld [vmem:[%s5798 + $0x34] sm:$0xf]
    %v5813 = vld [vmem:[%s5798 + $0x38] sm:$0xf]
    %v5814 = vld [vmem:[%s5798 + $0x3c] sm:$0xf]
    %v5831 = vunpack.c.l.b16 %v5799
    %v5832 = vunpack.c.l.b16 %v5800
    %v5833 = vunpack.c.l.b16 %v5801
    %v5834 = vunpack.c.l.b16 %v5802
    %v5835 = vunpack.c.l.b16 %v5803
    %v5836 = vunpack.c.l.b16 %v5804
    %v5837 = vunpack.c.l.b16 %v5805
    %v5838 = vunpack.c.l.b16 %v5806
    %v5839 = vunpack.c.l.b16 %v5807
    %v5840 = vunpack.c.l.b16 %v5808
    %v5841 = vunpack.c.l.b16 %v5809
    %v5842 = vunpack.c.l.b16 %v5810
    %v5843 = vunpack.c.l.b16 %v5811
    %v5844 = vunpack.c.l.b16 %v5812
    %v5845 = vunpack.c.l.b16 %v5813
    %v5846 = vunpack.c.l.b16 %v5814
    %v5847 = vpack.c.b16 %v5832, %v5831
    %v5848 = vpack.c.b16 %v5834, %v5833
    %v5849 = vpack.c.b16 %v5836, %v5835
    %v5850 = vpack.c.b16 %v5838, %v5837
    %v5851 = vpack.c.b16 %v5840, %v5839
    %v5852 = vpack.c.b16 %v5842, %v5841
    %v5853 = vpack.c.b16 %v5844, %v5843
    %v5854 = vpack.c.b16 %v5846, %v5845
    %5863 = vmatpush.bf16.msra.mxu0 %v5854
    %5864 = vmatpush.bf16.msra.mxu0 %v5853
    %5865 = vmatpush.bf16.msra.mxu0 %v5852
    %5866 = vmatpush.bf16.msra.mxu0 %v5851
    %5867 = vmatpush.bf16.msra.mxu0 %v5850
    %5868 = vmatpush.bf16.msra.mxu0 %v5849
    %5869 = vmatpush.bf16.msra.mxu0 %v5848
    %5870 = vmatpush.bf16.msra.mxu0 %v5847
    %5871 = vmatmul.bf16.gmra.mxu0 %v5790
    %v5872 = vpop.f32.mrf.mxu0
    %v5873 = vadd.f32 0.0, %v5872
    %v5874 = vpop.f32.mrf.mxu0
    %v5875 = vadd.f32 0.0, %v5874
    %5876 = vmatmul.bf16.gmra.mxu0 %v5791
    %v5877 = vpop.f32.mrf.mxu0
    %v5878 = vadd.f32 0.0, %v5877
    %v5879 = vpop.f32.mrf.mxu0
    %v5880 = vadd.f32 0.0, %v5879
    %5881 = vmatmul.bf16.gmra.mxu0 %v5792
    %v5882 = vpop.f32.mrf.mxu0
    %v5883 = vadd.f32 0.0, %v5882
    %v5884 = vpop.f32.mrf.mxu0
    %v5885 = vadd.f32 0.0, %v5884
    %5886 = vmatmul.bf16.gmra.mxu0 %v5793
    %v5887 = vpop.f32.mrf.mxu0
    %v5888 = vadd.f32 0.0, %v5887
    %v5889 = vpop.f32.mrf.mxu0
    %v5890 = vadd.f32 0.0, %v5889
    %5891 = vmatmul.bf16.gmra.mxu0 %v5794
    %v5892 = vpop.f32.mrf.mxu0
    %v5893 = vadd.f32 0.0, %v5892
    %v5894 = vpop.f32.mrf.mxu0
    %v5895 = vadd.f32 0.0, %v5894
    %5896 = vmatmul.bf16.gmra.mxu0 %v5795
    %v5897 = vpop.f32.mrf.mxu0
    %v5898 = vadd.f32 0.0, %v5897
    %v5899 = vpop.f32.mrf.mxu0
    %v5900 = vadd.f32 0.0, %v5899
    %5901 = vmatmul.bf16.gmra.mxu0 %v5796
    %v5902 = vpop.f32.mrf.mxu0
    %v5903 = vadd.f32 0.0, %v5902
    %v5904 = vpop.f32.mrf.mxu0
    %v5905 = vadd.f32 0.0, %v5904
    %5906 = vmatmul.bf16.gmra.mxu0 %v5797
    %v5907 = vpop.f32.mrf.mxu0
    %v5908 = vadd.f32 0.0, %v5907
    %v5909 = vpop.f32.mrf.mxu0
    %v5910 = vadd.f32 0.0, %v5909
    %5911 = vdwg.mxu0
    %v5912 = vld [vmem:[%s2458] sm:$0xff]
    %v5913 = vld [vmem:[%s2458 + $0x8] sm:$0xff]
    %v5914 = vld [vmem:[%s2458 + $0x10] sm:$0xff]
    %v5915 = vld [vmem:[%s2458 + $0x18] sm:$0xff]
    %v5916 = vld [vmem:[%s2458 + $0x20] sm:$0xff]
    %v5917 = vld [vmem:[%s2458 + $0x28] sm:$0xff]
    %v5918 = vld [vmem:[%s2458 + $0x30] sm:$0xff]
    %v5919 = vld [vmem:[%s2458 + $0x38] sm:$0xff]
    %v5920 = vld [vmem:[%s2458 + $0x40] sm:$0xff]
    %v5921 = vld [vmem:[%s2458 + $0x48] sm:$0xff]
    %v5922 = vld [vmem:[%s2458 + $0x50] sm:$0xff]
    %v5923 = vld [vmem:[%s2458 + $0x58] sm:$0xff]
    %v5924 = vld [vmem:[%s2458 + $0x60] sm:$0xff]
    %v5925 = vld [vmem:[%s2458 + $0x68] sm:$0xff]
    %v5926 = vld [vmem:[%s2458 + $0x70] sm:$0xff]
    %v5927 = vld [vmem:[%s2458 + $0x78] sm:$0xff]
    %v5928 = vmul.f32 %v5912, %v5873
    %v5929 = vmul.f32 %v5913, %v5875
    %v5930 = vmul.f32 %v5914, %v5878
    %v5931 = vmul.f32 %v5915, %v5880
    %v5932 = vmul.f32 %v5916, %v5883
    %v5933 = vmul.f32 %v5917, %v5885
    %v5934 = vmul.f32 %v5918, %v5888
    %v5935 = vmul.f32 %v5919, %v5890
    %v5936 = vmul.f32 %v5920, %v5893
    %v5937 = vmul.f32 %v5921, %v5895
    %v5938 = vmul.f32 %v5922, %v5898
    %v5939 = vmul.f32 %v5923, %v5900
    %v5940 = vmul.f32 %v5924, %v5903
    %v5941 = vmul.f32 %v5925, %v5905
    %v5942 = vmul.f32 %v5926, %v5908
    %v5943 = vmul.f32 %v5927, %v5910
    %v5944 = vadd.f32 %v5758, %v5928
    %v5945 = vadd.f32 %v5759, %v5929
    %v5946 = vadd.f32 %v5760, %v5930
    %v5947 = vadd.f32 %v5761, %v5931
    %v5948 = vadd.f32 %v5762, %v5932
    %v5949 = vadd.f32 %v5763, %v5933
    %v5950 = vadd.f32 %v5764, %v5934
    %v5951 = vadd.f32 %v5765, %v5935
    %v5952 = vadd.f32 %v5766, %v5936
    %v5953 = vadd.f32 %v5767, %v5937
    %v5954 = vadd.f32 %v5768, %v5938
    %v5955 = vadd.f32 %v5769, %v5939
    %v5956 = vadd.f32 %v5770, %v5940
    %v5957 = vadd.f32 %v5771, %v5941
    %v5958 = vadd.f32 %v5772, %v5942
    %v5959 = vadd.f32 %v5773, %v5943
    %s5960 = scalar_lea.vmem [#allocation13], 2
    %v5961 = vld [vmem:[%s5960] sm:$0x1]
    %v5963 = vperm.slane %v5961, 0
    %v5965 = vadd.f32 %v5944, %v5963
    %v5966 = vadd.f32 %v5945, %v5963
    %v5967 = vadd.f32 %v5946, %v5963
    %v5968 = vadd.f32 %v5947, %v5963
    %v5969 = vadd.f32 %v5948, %v5963
    %v5970 = vadd.f32 %v5949, %v5963
    %v5971 = vadd.f32 %v5950, %v5963
    %v5972 = vadd.f32 %v5951, %v5963
    %v5973 = vadd.f32 %v5952, %v5963
    %v5974 = vadd.f32 %v5953, %v5963
    %v5975 = vadd.f32 %v5954, %v5963
    %v5976 = vadd.f32 %v5955, %v5963
    %v5977 = vadd.f32 %v5956, %v5963
    %v5978 = vadd.f32 %v5957, %v5963
    %v5979 = vadd.f32 %v5958, %v5963
    %v5980 = vadd.f32 %v5959, %v5963
    %v5981 = vmax.f32 %v5965, 0.0
    %v5982 = vmax.f32 %v5966, 0.0
    %v5983 = vmax.f32 %v5967, 0.0
    %v5984 = vmax.f32 %v5968, 0.0
    %v5985 = vmax.f32 %v5969, 0.0
    %v5986 = vmax.f32 %v5970, 0.0
    %v5987 = vmax.f32 %v5971, 0.0
    %v5988 = vmax.f32 %v5972, 0.0
    %v5989 = vmax.f32 %v5973, 0.0
    %v5990 = vmax.f32 %v5974, 0.0
    %v5991 = vmax.f32 %v5975, 0.0
    %v5992 = vmax.f32 %v5976, 0.0
    %v5993 = vmax.f32 %v5977, 0.0
    %v5994 = vmax.f32 %v5978, 0.0
    %v5995 = vmax.f32 %v5979, 0.0
    %v5996 = vmax.f32 %v5980, 0.0
    %5997 = vst [vmem:[#allocation2 + $0x10] sm:$0xff] %v5981
    %5998 = vst [vmem:[#allocation2 + $0x18] sm:$0xff] %v5982
    %5999 = vst [vmem:[#allocation2 + $0x20] sm:$0xff] %v5983
    %6000 = vst [vmem:[#allocation2 + $0x28] sm:$0xff] %v5984
    %6001 = vst [vmem:[#allocation2 + $0x30] sm:$0xff] %v5985
    %6002 = vst [vmem:[#allocation2 + $0x38] sm:$0xff] %v5986
    %6003 = vst [vmem:[#allocation2 + $0x40] sm:$0xff] %v5987
    %6004 = vst [vmem:[#allocation2 + $0x48] sm:$0xff] %v5988
    %6005 = vst [vmem:[#allocation2 + $0x50] sm:$0xff] %v5989
    %6006 = vst [vmem:[#allocation2 + $0x58] sm:$0xff] %v5990
    %6007 = vst [vmem:[#allocation2 + $0x60] sm:$0xff] %v5991
    %6008 = vst [vmem:[#allocation2 + $0x68] sm:$0xff] %v5992
    %6009 = vst [vmem:[#allocation2 + $0x70] sm:$0xff] %v5993
    %6010 = vst [vmem:[#allocation2 + $0x78] sm:$0xff] %v5994
    %6011 = vst [vmem:[#allocation2 + $0x80] sm:$0xff] %v5995
    %6012 = vst [vmem:[#allocation2 + $0x88] sm:$0xff] %v5996
    %v6013 = vld [vmem:[#allocation2 + $0x7] sm:$0xff]
    %v6014 = vld [vmem:[#allocation2 + $0xf] sm:$0xff]
    %v6015 = vld [vmem:[#allocation2 + $0x17] sm:$0xff]
    %v6016 = vld [vmem:[#allocation2 + $0x1f] sm:$0xff]
    %v6017 = vld [vmem:[#allocation2 + $0x27] sm:$0xff]
    %v6018 = vld [vmem:[#allocation2 + $0x2f] sm:$0xff]
    %v6019 = vld [vmem:[#allocation2 + $0x37] sm:$0xff]
    %v6020 = vld [vmem:[#allocation2 + $0x3f] sm:$0xff]
    %v6021 = vld [vmem:[#allocation2 + $0x47] sm:$0xff]
    %v6022 = vld [vmem:[#allocation2 + $0x4f] sm:$0xff]
    %v6023 = vld [vmem:[#allocation2 + $0x57] sm:$0xff]
    %v6024 = vld [vmem:[#allocation2 + $0x5f] sm:$0xff]
    %v6025 = vld [vmem:[#allocation2 + $0x67] sm:$0xff]
    %v6026 = vld [vmem:[#allocation2 + $0x6f] sm:$0xff]
    %v6027 = vld [vmem:[#allocation2 + $0x77] sm:$0xff]
    %v6028 = vld [vmem:[#allocation2 + $0x7f] sm:$0xff]
    %v6029 = vpack.c.bf16 %v6014, %v6013
    %v6030 = vpack.c.bf16 %v6016, %v6015
    %v6031 = vpack.c.bf16 %v6018, %v6017
    %v6032 = vpack.c.bf16 %v6020, %v6019
    %v6033 = vpack.c.bf16 %v6022, %v6021
    %v6034 = vpack.c.bf16 %v6024, %v6023
    %v6035 = vpack.c.bf16 %v6026, %v6025
    %v6036 = vpack.c.bf16 %v6028, %v6027
    %s6037 = scalar_lea.vmem [#allocation11], 1728
    %v6038 = vld [vmem:[%s6037] sm:$0xf]
    %v6039 = vld [vmem:[%s6037 + $0x4] sm:$0xf]
    %v6040 = vld [vmem:[%s6037 + $0x8] sm:$0xf]
    %v6041 = vld [vmem:[%s6037 + $0xc] sm:$0xf]
    %v6042 = vld [vmem:[%s6037 + $0x10] sm:$0xf]
    %v6043 = vld [vmem:[%s6037 + $0x14] sm:$0xf]
    %v6044 = vld [vmem:[%s6037 + $0x18] sm:$0xf]
    %v6045 = vld [vmem:[%s6037 + $0x1c] sm:$0xf]
    %v6046 = vld [vmem:[%s6037 + $0x20] sm:$0xf]
    %v6047 = vld [vmem:[%s6037 + $0x24] sm:$0xf]
    %v6048 = vld [vmem:[%s6037 + $0x28] sm:$0xf]
    %v6049 = vld [vmem:[%s6037 + $0x2c] sm:$0xf]
    %v6050 = vld [vmem:[%s6037 + $0x30] sm:$0xf]
    %v6051 = vld [vmem:[%s6037 + $0x34] sm:$0xf]
    %v6052 = vld [vmem:[%s6037 + $0x38] sm:$0xf]
    %v6053 = vld [vmem:[%s6037 + $0x3c] sm:$0xf]
    %v6070 = vunpack.c.l.b16 %v6038
    %v6071 = vunpack.c.l.b16 %v6039
    %v6072 = vunpack.c.l.b16 %v6040
    %v6073 = vunpack.c.l.b16 %v6041
    %v6074 = vunpack.c.l.b16 %v6042
    %v6075 = vunpack.c.l.b16 %v6043
    %v6076 = vunpack.c.l.b16 %v6044
    %v6077 = vunpack.c.l.b16 %v6045
    %v6078 = vunpack.c.l.b16 %v6046
    %v6079 = vunpack.c.l.b16 %v6047
    %v6080 = vunpack.c.l.b16 %v6048
    %v6081 = vunpack.c.l.b16 %v6049
    %v6082 = vunpack.c.l.b16 %v6050
    %v6083 = vunpack.c.l.b16 %v6051
    %v6084 = vunpack.c.l.b16 %v6052
    %v6085 = vunpack.c.l.b16 %v6053
    %v6086 = vpack.c.b16 %v6071, %v6070
    %v6087 = vpack.c.b16 %v6073, %v6072
    %v6088 = vpack.c.b16 %v6075, %v6074
    %v6089 = vpack.c.b16 %v6077, %v6076
    %v6090 = vpack.c.b16 %v6079, %v6078
    %v6091 = vpack.c.b16 %v6081, %v6080
    %v6092 = vpack.c.b16 %v6083, %v6082
    %v6093 = vpack.c.b16 %v6085, %v6084
    %6102 = vmatpush.bf16.msra.mxu0 %v6093
    %6103 = vmatpush.bf16.msra.mxu0 %v6092
    %6104 = vmatpush.bf16.msra.mxu0 %v6091
    %6105 = vmatpush.bf16.msra.mxu0 %v6090
    %6106 = vmatpush.bf16.msra.mxu0 %v6089
    %6107 = vmatpush.bf16.msra.mxu0 %v6088
    %6108 = vmatpush.bf16.msra.mxu0 %v6087
    %6109 = vmatpush.bf16.msra.mxu0 %v6086
    %6110 = vmatmul.bf16.gmra.mxu0 %v6029
    %v6111 = vpop.f32.mrf.mxu0
    %v6112 = vadd.f32 0.0, %v6111
    %v6113 = vpop.f32.mrf.mxu0
    %v6114 = vadd.f32 0.0, %v6113
    %6115 = vmatmul.bf16.gmra.mxu0 %v6030
    %v6116 = vpop.f32.mrf.mxu0
    %v6117 = vadd.f32 0.0, %v6116
    %v6118 = vpop.f32.mrf.mxu0
    %v6119 = vadd.f32 0.0, %v6118
    %6120 = vmatmul.bf16.gmra.mxu0 %v6031
    %v6121 = vpop.f32.mrf.mxu0
    %v6122 = vadd.f32 0.0, %v6121
    %v6123 = vpop.f32.mrf.mxu0
    %v6124 = vadd.f32 0.0, %v6123
    %6125 = vmatmul.bf16.gmra.mxu0 %v6032
    %v6126 = vpop.f32.mrf.mxu0
    %v6127 = vadd.f32 0.0, %v6126
    %v6128 = vpop.f32.mrf.mxu0
    %v6129 = vadd.f32 0.0, %v6128
    %6130 = vmatmul.bf16.gmra.mxu0 %v6033
    %v6131 = vpop.f32.mrf.mxu0
    %v6132 = vadd.f32 0.0, %v6131
    %v6133 = vpop.f32.mrf.mxu0
    %v6134 = vadd.f32 0.0, %v6133
    %6135 = vmatmul.bf16.gmra.mxu0 %v6034
    %v6136 = vpop.f32.mrf.mxu0
    %v6137 = vadd.f32 0.0, %v6136
    %v6138 = vpop.f32.mrf.mxu0
    %v6139 = vadd.f32 0.0, %v6138
    %6140 = vmatmul.bf16.gmra.mxu0 %v6035
    %v6141 = vpop.f32.mrf.mxu0
    %v6142 = vadd.f32 0.0, %v6141
    %v6143 = vpop.f32.mrf.mxu0
    %v6144 = vadd.f32 0.0, %v6143
    %6145 = vmatmul.bf16.gmra.mxu0 %v6036
    %v6146 = vpop.f32.mrf.mxu0
    %v6147 = vadd.f32 0.0, %v6146
    %v6148 = vpop.f32.mrf.mxu0
    %v6149 = vadd.f32 0.0, %v6148
    %6150 = vdwg.mxu0
    %v6151 = vld [vmem:[#allocation14] sm:$0xff]
    %v6152 = vld [vmem:[#allocation14 + $0x8] sm:$0xff]
    %v6153 = vld [vmem:[#allocation14 + $0x10] sm:$0xff]
    %v6154 = vld [vmem:[#allocation14 + $0x18] sm:$0xff]
    %v6155 = vld [vmem:[#allocation14 + $0x20] sm:$0xff]
    %v6156 = vld [vmem:[#allocation14 + $0x28] sm:$0xff]
    %v6157 = vld [vmem:[#allocation14 + $0x30] sm:$0xff]
    %v6158 = vld [vmem:[#allocation14 + $0x38] sm:$0xff]
    %v6159 = vld [vmem:[#allocation14 + $0x40] sm:$0xff]
    %v6160 = vld [vmem:[#allocation14 + $0x48] sm:$0xff]
    %v6161 = vld [vmem:[#allocation14 + $0x50] sm:$0xff]
    %v6162 = vld [vmem:[#allocation14 + $0x58] sm:$0xff]
    %v6163 = vld [vmem:[#allocation14 + $0x60] sm:$0xff]
    %v6164 = vld [vmem:[#allocation14 + $0x68] sm:$0xff]
    %v6165 = vld [vmem:[#allocation14 + $0x70] sm:$0xff]
    %v6166 = vld [vmem:[#allocation14 + $0x78] sm:$0xff]
    %v6167 = vmul.f32 %v6151, %v6112
    %v6168 = vmul.f32 %v6152, %v6114
    %v6169 = vmul.f32 %v6153, %v6117
    %v6170 = vmul.f32 %v6154, %v6119
    %v6171 = vmul.f32 %v6155, %v6122
    %v6172 = vmul.f32 %v6156, %v6124
    %v6173 = vmul.f32 %v6157, %v6127
    %v6174 = vmul.f32 %v6158, %v6129
    %v6175 = vmul.f32 %v6159, %v6132
    %v6176 = vmul.f32 %v6160, %v6134
    %v6177 = vmul.f32 %v6161, %v6137
    %v6178 = vmul.f32 %v6162, %v6139
    %v6179 = vmul.f32 %v6163, %v6142
    %v6180 = vmul.f32 %v6164, %v6144
    %v6181 = vmul.f32 %v6165, %v6147
    %v6182 = vmul.f32 %v6166, %v6149
    %v6183 = vadd.f32 %v6167, 0.0
    %v6184 = vadd.f32 %v6168, 0.0
    %v6185 = vadd.f32 %v6169, 0.0
    %v6186 = vadd.f32 %v6170, 0.0
    %v6187 = vadd.f32 %v6171, 0.0
    %v6188 = vadd.f32 %v6172, 0.0
    %v6189 = vadd.f32 %v6173, 0.0
    %v6190 = vadd.f32 %v6174, 0.0
    %v6191 = vadd.f32 %v6175, 0.0
    %v6192 = vadd.f32 %v6176, 0.0
    %v6193 = vadd.f32 %v6177, 0.0
    %v6194 = vadd.f32 %v6178, 0.0
    %v6195 = vadd.f32 %v6179, 0.0
    %v6196 = vadd.f32 %v6180, 0.0
    %v6197 = vadd.f32 %v6181, 0.0
    %v6198 = vadd.f32 %v6182, 0.0
    %v6199 = vld [vmem:[#allocation2 + $0x8] sm:$0xff]
    %v6200 = vld [vmem:[#allocation2 + $0x10] sm:$0xff]
    %v6201 = vld [vmem:[#allocation2 + $0x18] sm:$0xff]
    %v6202 = vld [vmem:[#allocation2 + $0x20] sm:$0xff]
    %v6203 = vld [vmem:[#allocation2 + $0x28] sm:$0xff]
    %v6204 = vld [vmem:[#allocation2 + $0x30] sm:$0xff]
    %v6205 = vld [vmem:[#allocation2 + $0x38] sm:$0xff]
    %v6206 = vld [vmem:[#allocation2 + $0x40] sm:$0xff]
    %v6207 = vld [vmem:[#allocation2 + $0x48] sm:$0xff]
    %v6208 = vld [vmem:[#allocation2 + $0x50] sm:$0xff]
    %v6209 = vld [vmem:[#allocation2 + $0x58] sm:$0xff]
    %v6210 = vld [vmem:[#allocation2 + $0x60] sm:$0xff]
    %v6211 = vld [vmem:[#allocation2 + $0x68] sm:$0xff]
    %v6212 = vld [vmem:[#allocation2 + $0x70] sm:$0xff]
    %v6213 = vld [vmem:[#allocation2 + $0x78] sm:$0xff]
    %v6214 = vld [vmem:[#allocation2 + $0x80] sm:$0xff]
    %v6215 = vpack.c.bf16 %v6200, %v6199
    %v6216 = vpack.c.bf16 %v6202, %v6201
    %v6217 = vpack.c.bf16 %v6204, %v6203
    %v6218 = vpack.c.bf16 %v6206, %v6205
    %v6219 = vpack.c.bf16 %v6208, %v6207
    %v6220 = vpack.c.bf16 %v6210, %v6209
    %v6221 = vpack.c.bf16 %v6212, %v6211
    %v6222 = vpack.c.bf16 %v6214, %v6213
    %s6223 = scalar_lea.vmem [#allocation11], 1792
    %v6224 = vld [vmem:[%s6223] sm:$0xf]
    %v6225 = vld [vmem:[%s6223 + $0x4] sm:$0xf]
    %v6226 = vld [vmem:[%s6223 + $0x8] sm:$0xf]
    %v6227 = vld [vmem:[%s6223 + $0xc] sm:$0xf]
    %v6228 = vld [vmem:[%s6223 + $0x10] sm:$0xf]
    %v6229 = vld [vmem:[%s6223 + $0x14] sm:$0xf]
    %v6230 = vld [vmem:[%s6223 + $0x18] sm:$0xf]
    %v6231 = vld [vmem:[%s6223 + $0x1c] sm:$0xf]
    %v6232 = vld [vmem:[%s6223 + $0x20] sm:$0xf]
    %v6233 = vld [vmem:[%s6223 + $0x24] sm:$0xf]
    %v6234 = vld [vmem:[%s6223 + $0x28] sm:$0xf]
    %v6235 = vld [vmem:[%s6223 + $0x2c] sm:$0xf]
    %v6236 = vld [vmem:[%s6223 + $0x30] sm:$0xf]
    %v6237 = vld [vmem:[%s6223 + $0x34] sm:$0xf]
    %v6238 = vld [vmem:[%s6223 + $0x38] sm:$0xf]
    %v6239 = vld [vmem:[%s6223 + $0x3c] sm:$0xf]
    %v6256 = vunpack.c.l.b16 %v6224
    %v6257 = vunpack.c.l.b16 %v6225
    %v6258 = vunpack.c.l.b16 %v6226
    %v6259 = vunpack.c.l.b16 %v6227
    %v6260 = vunpack.c.l.b16 %v6228
    %v6261 = vunpack.c.l.b16 %v6229
    %v6262 = vunpack.c.l.b16 %v6230
    %v6263 = vunpack.c.l.b16 %v6231
    %v6264 = vunpack.c.l.b16 %v6232
    %v6265 = vunpack.c.l.b16 %v6233
    %v6266 = vunpack.c.l.b16 %v6234
    %v6267 = vunpack.c.l.b16 %v6235
    %v6268 = vunpack.c.l.b16 %v6236
    %v6269 = vunpack.c.l.b16 %v6237
    %v6270 = vunpack.c.l.b16 %v6238
    %v6271 = vunpack.c.l.b16 %v6239
    %v6272 = vpack.c.b16 %v6257, %v6256
    %v6273 = vpack.c.b16 %v6259, %v6258
    %v6274 = vpack.c.b16 %v6261, %v6260
    %v6275 = vpack.c.b16 %v6263, %v6262
    %v6276 = vpack.c.b16 %v6265, %v6264
    %v6277 = vpack.c.b16 %v6267, %v6266
    %v6278 = vpack.c.b16 %v6269, %v6268
    %v6279 = vpack.c.b16 %v6271, %v6270
    %6288 = vmatpush.bf16.msra.mxu0 %v6279
    %6289 = vmatpush.bf16.msra.mxu0 %v6278
    %6290 = vmatpush.bf16.msra.mxu0 %v6277
    %6291 = vmatpush.bf16.msra.mxu0 %v6276
    %6292 = vmatpush.bf16.msra.mxu0 %v6275
    %6293 = vmatpush.bf16.msra.mxu0 %v6274
    %6294 = vmatpush.bf16.msra.mxu0 %v6273
    %6295 = vmatpush.bf16.msra.mxu0 %v6272
    %6296 = vmatmul.bf16.gmra.mxu0 %v6215
    %v6297 = vpop.f32.mrf.mxu0
    %v6298 = vadd.f32 0.0, %v6297
    %v6299 = vpop.f32.mrf.mxu0
    %v6300 = vadd.f32 0.0, %v6299
    %6301 = vmatmul.bf16.gmra.mxu0 %v6216
    %v6302 = vpop.f32.mrf.mxu0
    %v6303 = vadd.f32 0.0, %v6302
    %v6304 = vpop.f32.mrf.mxu0
    %v6305 = vadd.f32 0.0, %v6304
    %6306 = vmatmul.bf16.gmra.mxu0 %v6217
    %v6307 = vpop.f32.mrf.mxu0
    %v6308 = vadd.f32 0.0, %v6307
    %v6309 = vpop.f32.mrf.mxu0
    %v6310 = vadd.f32 0.0, %v6309
    %6311 = vmatmul.bf16.gmra.mxu0 %v6218
    %v6312 = vpop.f32.mrf.mxu0
    %v6313 = vadd.f32 0.0, %v6312
    %v6314 = vpop.f32.mrf.mxu0
    %v6315 = vadd.f32 0.0, %v6314
    %6316 = vmatmul.bf16.gmra.mxu0 %v6219
    %v6317 = vpop.f32.mrf.mxu0
    %v6318 = vadd.f32 0.0, %v6317
    %v6319 = vpop.f32.mrf.mxu0
    %v6320 = vadd.f32 0.0, %v6319
    %6321 = vmatmul.bf16.gmra.mxu0 %v6220
    %v6322 = vpop.f32.mrf.mxu0
    %v6323 = vadd.f32 0.0, %v6322
    %v6324 = vpop.f32.mrf.mxu0
    %v6325 = vadd.f32 0.0, %v6324
    %6326 = vmatmul.bf16.gmra.mxu0 %v6221
    %v6327 = vpop.f32.mrf.mxu0
    %v6328 = vadd.f32 0.0, %v6327
    %v6329 = vpop.f32.mrf.mxu0
    %v6330 = vadd.f32 0.0, %v6329
    %6331 = vmatmul.bf16.gmra.mxu0 %v6222
    %v6332 = vpop.f32.mrf.mxu0
    %v6333 = vadd.f32 0.0, %v6332
    %v6334 = vpop.f32.mrf.mxu0
    %v6335 = vadd.f32 0.0, %v6334
    %6336 = vdwg.mxu0
    %v6337 = vld [vmem:[%s1149] sm:$0xff]
    %v6338 = vld [vmem:[%s1149 + $0x8] sm:$0xff]
    %v6339 = vld [vmem:[%s1149 + $0x10] sm:$0xff]
    %v6340 = vld [vmem:[%s1149 + $0x18] sm:$0xff]
    %v6341 = vld [vmem:[%s1149 + $0x20] sm:$0xff]
    %v6342 = vld [vmem:[%s1149 + $0x28] sm:$0xff]
    %v6343 = vld [vmem:[%s1149 + $0x30] sm:$0xff]
    %v6344 = vld [vmem:[%s1149 + $0x38] sm:$0xff]
    %v6345 = vld [vmem:[%s1149 + $0x40] sm:$0xff]
    %v6346 = vld [vmem:[%s1149 + $0x48] sm:$0xff]
    %v6347 = vld [vmem:[%s1149 + $0x50] sm:$0xff]
    %v6348 = vld [vmem:[%s1149 + $0x58] sm:$0xff]
    %v6349 = vld [vmem:[%s1149 + $0x60] sm:$0xff]
    %v6350 = vld [vmem:[%s1149 + $0x68] sm:$0xff]
    %v6351 = vld [vmem:[%s1149 + $0x70] sm:$0xff]
    %v6352 = vld [vmem:[%s1149 + $0x78] sm:$0xff]
    %v6353 = vmul.f32 %v6337, %v6298
    %v6354 = vmul.f32 %v6338, %v6300
    %v6355 = vmul.f32 %v6339, %v6303
    %v6356 = vmul.f32 %v6340, %v6305
    %v6357 = vmul.f32 %v6341, %v6308
    %v6358 = vmul.f32 %v6342, %v6310
    %v6359 = vmul.f32 %v6343, %v6313
    %v6360 = vmul.f32 %v6344, %v6315
    %v6361 = vmul.f32 %v6345, %v6318
    %v6362 = vmul.f32 %v6346, %v6320
    %v6363 = vmul.f32 %v6347, %v6323
    %v6364 = vmul.f32 %v6348, %v6325
    %v6365 = vmul.f32 %v6349, %v6328
    %v6366 = vmul.f32 %v6350, %v6330
    %v6367 = vmul.f32 %v6351, %v6333
    %v6368 = vmul.f32 %v6352, %v6335
    %v6369 = vadd.f32 %v6183, %v6353
    %v6370 = vadd.f32 %v6184, %v6354
    %v6371 = vadd.f32 %v6185, %v6355
    %v6372 = vadd.f32 %v6186, %v6356
    %v6373 = vadd.f32 %v6187, %v6357
    %v6374 = vadd.f32 %v6188, %v6358
    %v6375 = vadd.f32 %v6189, %v6359
    %v6376 = vadd.f32 %v6190, %v6360
    %v6377 = vadd.f32 %v6191, %v6361
    %v6378 = vadd.f32 %v6192, %v6362
    %v6379 = vadd.f32 %v6193, %v6363
    %v6380 = vadd.f32 %v6194, %v6364
    %v6381 = vadd.f32 %v6195, %v6365
    %v6382 = vadd.f32 %v6196, %v6366
    %v6383 = vadd.f32 %v6197, %v6367
    %v6384 = vadd.f32 %v6198, %v6368
    %v6385 = vld [vmem:[#allocation2 + $0x9] sm:$0xff]
    %v6386 = vld [vmem:[#allocation2 + $0x11] sm:$0xff]
    %v6387 = vld [vmem:[#allocation2 + $0x19] sm:$0xff]
    %v6388 = vld [vmem:[#allocation2 + $0x21] sm:$0xff]
    %v6389 = vld [vmem:[#allocation2 + $0x29] sm:$0xff]
    %v6390 = vld [vmem:[#allocation2 + $0x31] sm:$0xff]
    %v6391 = vld [vmem:[#allocation2 + $0x39] sm:$0xff]
    %v6392 = vld [vmem:[#allocation2 + $0x41] sm:$0xff]
    %v6393 = vld [vmem:[#allocation2 + $0x49] sm:$0xff]
    %v6394 = vld [vmem:[#allocation2 + $0x51] sm:$0xff]
    %v6395 = vld [vmem:[#allocation2 + $0x59] sm:$0xff]
    %v6396 = vld [vmem:[#allocation2 + $0x61] sm:$0xff]
    %v6397 = vld [vmem:[#allocation2 + $0x69] sm:$0xff]
    %v6398 = vld [vmem:[#allocation2 + $0x71] sm:$0xff]
    %v6399 = vld [vmem:[#allocation2 + $0x79] sm:$0xff]
    %v6400 = vld [vmem:[#allocation2 + $0x81] sm:$0xff]
    %v6401 = vpack.c.bf16 %v6386, %v6385
    %v6402 = vpack.c.bf16 %v6388, %v6387
    %v6403 = vpack.c.bf16 %v6390, %v6389
    %v6404 = vpack.c.bf16 %v6392, %v6391
    %v6405 = vpack.c.bf16 %v6394, %v6393
    %v6406 = vpack.c.bf16 %v6396, %v6395
    %v6407 = vpack.c.bf16 %v6398, %v6397
    %v6408 = vpack.c.bf16 %v6400, %v6399
    %s6409 = scalar_lea.vmem [#allocation11], 1856
    %v6410 = vld [vmem:[%s6409] sm:$0xf]
    %v6411 = vld [vmem:[%s6409 + $0x4] sm:$0xf]
    %v6412 = vld [vmem:[%s6409 + $0x8] sm:$0xf]
    %v6413 = vld [vmem:[%s6409 + $0xc] sm:$0xf]
    %v6414 = vld [vmem:[%s6409 + $0x10] sm:$0xf]
    %v6415 = vld [vmem:[%s6409 + $0x14] sm:$0xf]
    %v6416 = vld [vmem:[%s6409 + $0x18] sm:$0xf]
    %v6417 = vld [vmem:[%s6409 + $0x1c] sm:$0xf]
    %v6418 = vld [vmem:[%s6409 + $0x20] sm:$0xf]
    %v6419 = vld [vmem:[%s6409 + $0x24] sm:$0xf]
    %v6420 = vld [vmem:[%s6409 + $0x28] sm:$0xf]
    %v6421 = vld [vmem:[%s6409 + $0x2c] sm:$0xf]
    %v6422 = vld [vmem:[%s6409 + $0x30] sm:$0xf]
    %v6423 = vld [vmem:[%s6409 + $0x34] sm:$0xf]
    %v6424 = vld [vmem:[%s6409 + $0x38] sm:$0xf]
    %v6425 = vld [vmem:[%s6409 + $0x3c] sm:$0xf]
    %v6442 = vunpack.c.l.b16 %v6410
    %v6443 = vunpack.c.l.b16 %v6411
    %v6444 = vunpack.c.l.b16 %v6412
    %v6445 = vunpack.c.l.b16 %v6413
    %v6446 = vunpack.c.l.b16 %v6414
    %v6447 = vunpack.c.l.b16 %v6415
    %v6448 = vunpack.c.l.b16 %v6416
    %v6449 = vunpack.c.l.b16 %v6417
    %v6450 = vunpack.c.l.b16 %v6418
    %v6451 = vunpack.c.l.b16 %v6419
    %v6452 = vunpack.c.l.b16 %v6420
    %v6453 = vunpack.c.l.b16 %v6421
    %v6454 = vunpack.c.l.b16 %v6422
    %v6455 = vunpack.c.l.b16 %v6423
    %v6456 = vunpack.c.l.b16 %v6424
    %v6457 = vunpack.c.l.b16 %v6425
    %v6458 = vpack.c.b16 %v6443, %v6442
    %v6459 = vpack.c.b16 %v6445, %v6444
    %v6460 = vpack.c.b16 %v6447, %v6446
    %v6461 = vpack.c.b16 %v6449, %v6448
    %v6462 = vpack.c.b16 %v6451, %v6450
    %v6463 = vpack.c.b16 %v6453, %v6452
    %v6464 = vpack.c.b16 %v6455, %v6454
    %v6465 = vpack.c.b16 %v6457, %v6456
    %6474 = vmatpush.bf16.msra.mxu0 %v6465
    %6475 = vmatpush.bf16.msra.mxu0 %v6464
    %6476 = vmatpush.bf16.msra.mxu0 %v6463
    %6477 = vmatpush.bf16.msra.mxu0 %v6462
    %6478 = vmatpush.bf16.msra.mxu0 %v6461
    %6479 = vmatpush.bf16.msra.mxu0 %v6460
    %6480 = vmatpush.bf16.msra.mxu0 %v6459
    %6481 = vmatpush.bf16.msra.mxu0 %v6458
    %6482 = vmatmul.bf16.gmra.mxu0 %v6401
    %v6483 = vpop.f32.mrf.mxu0
    %v6484 = vadd.f32 0.0, %v6483
    %v6485 = vpop.f32.mrf.mxu0
    %v6486 = vadd.f32 0.0, %v6485
    %6487 = vmatmul.bf16.gmra.mxu0 %v6402
    %v6488 = vpop.f32.mrf.mxu0
    %v6489 = vadd.f32 0.0, %v6488
    %v6490 = vpop.f32.mrf.mxu0
    %v6491 = vadd.f32 0.0, %v6490
    %6492 = vmatmul.bf16.gmra.mxu0 %v6403
    %v6493 = vpop.f32.mrf.mxu0
    %v6494 = vadd.f32 0.0, %v6493
    %v6495 = vpop.f32.mrf.mxu0
    %v6496 = vadd.f32 0.0, %v6495
    %6497 = vmatmul.bf16.gmra.mxu0 %v6404
    %v6498 = vpop.f32.mrf.mxu0
    %v6499 = vadd.f32 0.0, %v6498
    %v6500 = vpop.f32.mrf.mxu0
    %v6501 = vadd.f32 0.0, %v6500
    %6502 = vmatmul.bf16.gmra.mxu0 %v6405
    %v6503 = vpop.f32.mrf.mxu0
    %v6504 = vadd.f32 0.0, %v6503
    %v6505 = vpop.f32.mrf.mxu0
    %v6506 = vadd.f32 0.0, %v6505
    %6507 = vmatmul.bf16.gmra.mxu0 %v6406
    %v6508 = vpop.f32.mrf.mxu0
    %v6509 = vadd.f32 0.0, %v6508
    %v6510 = vpop.f32.mrf.mxu0
    %v6511 = vadd.f32 0.0, %v6510
    %6512 = vmatmul.bf16.gmra.mxu0 %v6407
    %v6513 = vpop.f32.mrf.mxu0
    %v6514 = vadd.f32 0.0, %v6513
    %v6515 = vpop.f32.mrf.mxu0
    %v6516 = vadd.f32 0.0, %v6515
    %6517 = vmatmul.bf16.gmra.mxu0 %v6408
    %v6518 = vpop.f32.mrf.mxu0
    %v6519 = vadd.f32 0.0, %v6518
    %v6520 = vpop.f32.mrf.mxu0
    %v6521 = vadd.f32 0.0, %v6520
    %6522 = vdwg.mxu0
    %v6523 = vld [vmem:[%s1336] sm:$0xff]
    %v6524 = vld [vmem:[%s1336 + $0x8] sm:$0xff]
    %v6525 = vld [vmem:[%s1336 + $0x10] sm:$0xff]
    %v6526 = vld [vmem:[%s1336 + $0x18] sm:$0xff]
    %v6527 = vld [vmem:[%s1336 + $0x20] sm:$0xff]
    %v6528 = vld [vmem:[%s1336 + $0x28] sm:$0xff]
    %v6529 = vld [vmem:[%s1336 + $0x30] sm:$0xff]
    %v6530 = vld [vmem:[%s1336 + $0x38] sm:$0xff]
    %v6531 = vld [vmem:[%s1336 + $0x40] sm:$0xff]
    %v6532 = vld [vmem:[%s1336 + $0x48] sm:$0xff]
    %v6533 = vld [vmem:[%s1336 + $0x50] sm:$0xff]
    %v6534 = vld [vmem:[%s1336 + $0x58] sm:$0xff]
    %v6535 = vld [vmem:[%s1336 + $0x60] sm:$0xff]
    %v6536 = vld [vmem:[%s1336 + $0x68] sm:$0xff]
    %v6537 = vld [vmem:[%s1336 + $0x70] sm:$0xff]
    %v6538 = vld [vmem:[%s1336 + $0x78] sm:$0xff]
    %v6539 = vmul.f32 %v6523, %v6484
    %v6540 = vmul.f32 %v6524, %v6486
    %v6541 = vmul.f32 %v6525, %v6489
    %v6542 = vmul.f32 %v6526, %v6491
    %v6543 = vmul.f32 %v6527, %v6494
    %v6544 = vmul.f32 %v6528, %v6496
    %v6545 = vmul.f32 %v6529, %v6499
    %v6546 = vmul.f32 %v6530, %v6501
    %v6547 = vmul.f32 %v6531, %v6504
    %v6548 = vmul.f32 %v6532, %v6506
    %v6549 = vmul.f32 %v6533, %v6509
    %v6550 = vmul.f32 %v6534, %v6511
    %v6551 = vmul.f32 %v6535, %v6514
    %v6552 = vmul.f32 %v6536, %v6516
    %v6553 = vmul.f32 %v6537, %v6519
    %v6554 = vmul.f32 %v6538, %v6521
    %v6555 = vadd.f32 %v6369, %v6539
    %v6556 = vadd.f32 %v6370, %v6540
    %v6557 = vadd.f32 %v6371, %v6541
    %v6558 = vadd.f32 %v6372, %v6542
    %v6559 = vadd.f32 %v6373, %v6543
    %v6560 = vadd.f32 %v6374, %v6544
    %v6561 = vadd.f32 %v6375, %v6545
    %v6562 = vadd.f32 %v6376, %v6546
    %v6563 = vadd.f32 %v6377, %v6547
    %v6564 = vadd.f32 %v6378, %v6548
    %v6565 = vadd.f32 %v6379, %v6549
    %v6566 = vadd.f32 %v6380, %v6550
    %v6567 = vadd.f32 %v6381, %v6551
    %v6568 = vadd.f32 %v6382, %v6552
    %v6569 = vadd.f32 %v6383, %v6553
    %v6570 = vadd.f32 %v6384, %v6554
    %v6571 = vld [vmem:[#allocation2 + $0xf] sm:$0xff]
    %v6572 = vld [vmem:[#allocation2 + $0x17] sm:$0xff]
    %v6573 = vld [vmem:[#allocation2 + $0x1f] sm:$0xff]
    %v6574 = vld [vmem:[#allocation2 + $0x27] sm:$0xff]
    %v6575 = vld [vmem:[#allocation2 + $0x2f] sm:$0xff]
    %v6576 = vld [vmem:[#allocation2 + $0x37] sm:$0xff]
    %v6577 = vld [vmem:[#allocation2 + $0x3f] sm:$0xff]
    %v6578 = vld [vmem:[#allocation2 + $0x47] sm:$0xff]
    %v6579 = vld [vmem:[#allocation2 + $0x4f] sm:$0xff]
    %v6580 = vld [vmem:[#allocation2 + $0x57] sm:$0xff]
    %v6581 = vld [vmem:[#allocation2 + $0x5f] sm:$0xff]
    %v6582 = vld [vmem:[#allocation2 + $0x67] sm:$0xff]
    %v6583 = vld [vmem:[#allocation2 + $0x6f] sm:$0xff]
    %v6584 = vld [vmem:[#allocation2 + $0x77] sm:$0xff]
    %v6585 = vld [vmem:[#allocation2 + $0x7f] sm:$0xff]
    %v6586 = vld [vmem:[#allocation2 + $0x87] sm:$0xff]
    %v6587 = vpack.c.bf16 %v6572, %v6571
    %v6588 = vpack.c.bf16 %v6574, %v6573
    %v6589 = vpack.c.bf16 %v6576, %v6575
    %v6590 = vpack.c.bf16 %v6578, %v6577
    %v6591 = vpack.c.bf16 %v6580, %v6579
    %v6592 = vpack.c.bf16 %v6582, %v6581
    %v6593 = vpack.c.bf16 %v6584, %v6583
    %v6594 = vpack.c.bf16 %v6586, %v6585
    %s6595 = scalar_lea.vmem [#allocation11], 1920
    %v6596 = vld [vmem:[%s6595] sm:$0xf]
    %v6597 = vld [vmem:[%s6595 + $0x4] sm:$0xf]
    %v6598 = vld [vmem:[%s6595 + $0x8] sm:$0xf]
    %v6599 = vld [vmem:[%s6595 + $0xc] sm:$0xf]
    %v6600 = vld [vmem:[%s6595 + $0x10] sm:$0xf]
    %v6601 = vld [vmem:[%s6595 + $0x14] sm:$0xf]
    %v6602 = vld [vmem:[%s6595 + $0x18] sm:$0xf]
    %v6603 = vld [vmem:[%s6595 + $0x1c] sm:$0xf]
    %v6604 = vld [vmem:[%s6595 + $0x20] sm:$0xf]
    %v6605 = vld [vmem:[%s6595 + $0x24] sm:$0xf]
    %v6606 = vld [vmem:[%s6595 + $0x28] sm:$0xf]
    %v6607 = vld [vmem:[%s6595 + $0x2c] sm:$0xf]
    %v6608 = vld [vmem:[%s6595 + $0x30] sm:$0xf]
    %v6609 = vld [vmem:[%s6595 + $0x34] sm:$0xf]
    %v6610 = vld [vmem:[%s6595 + $0x38] sm:$0xf]
    %v6611 = vld [vmem:[%s6595 + $0x3c] sm:$0xf]
    %v6628 = vunpack.c.l.b16 %v6596
    %v6629 = vunpack.c.l.b16 %v6597
    %v6630 = vunpack.c.l.b16 %v6598
    %v6631 = vunpack.c.l.b16 %v6599
    %v6632 = vunpack.c.l.b16 %v6600
    %v6633 = vunpack.c.l.b16 %v6601
    %v6634 = vunpack.c.l.b16 %v6602
    %v6635 = vunpack.c.l.b16 %v6603
    %v6636 = vunpack.c.l.b16 %v6604
    %v6637 = vunpack.c.l.b16 %v6605
    %v6638 = vunpack.c.l.b16 %v6606
    %v6639 = vunpack.c.l.b16 %v6607
    %v6640 = vunpack.c.l.b16 %v6608
    %v6641 = vunpack.c.l.b16 %v6609
    %v6642 = vunpack.c.l.b16 %v6610
    %v6643 = vunpack.c.l.b16 %v6611
    %v6644 = vpack.c.b16 %v6629, %v6628
    %v6645 = vpack.c.b16 %v6631, %v6630
    %v6646 = vpack.c.b16 %v6633, %v6632
    %v6647 = vpack.c.b16 %v6635, %v6634
    %v6648 = vpack.c.b16 %v6637, %v6636
    %v6649 = vpack.c.b16 %v6639, %v6638
    %v6650 = vpack.c.b16 %v6641, %v6640
    %v6651 = vpack.c.b16 %v6643, %v6642
    %6660 = vmatpush.bf16.msra.mxu0 %v6651
    %6661 = vmatpush.bf16.msra.mxu0 %v6650
    %6662 = vmatpush.bf16.msra.mxu0 %v6649
    %6663 = vmatpush.bf16.msra.mxu0 %v6648
    %6664 = vmatpush.bf16.msra.mxu0 %v6647
    %6665 = vmatpush.bf16.msra.mxu0 %v6646
    %6666 = vmatpush.bf16.msra.mxu0 %v6645
    %6667 = vmatpush.bf16.msra.mxu0 %v6644
    %6668 = vmatmul.bf16.gmra.mxu0 %v6587
    %v6669 = vpop.f32.mrf.mxu0
    %v6670 = vadd.f32 0.0, %v6669
    %v6671 = vpop.f32.mrf.mxu0
    %v6672 = vadd.f32 0.0, %v6671
    %6673 = vmatmul.bf16.gmra.mxu0 %v6588
    %v6674 = vpop.f32.mrf.mxu0
    %v6675 = vadd.f32 0.0, %v6674
    %v6676 = vpop.f32.mrf.mxu0
    %v6677 = vadd.f32 0.0, %v6676
    %6678 = vmatmul.bf16.gmra.mxu0 %v6589
    %v6679 = vpop.f32.mrf.mxu0
    %v6680 = vadd.f32 0.0, %v6679
    %v6681 = vpop.f32.mrf.mxu0
    %v6682 = vadd.f32 0.0, %v6681
    %6683 = vmatmul.bf16.gmra.mxu0 %v6590
    %v6684 = vpop.f32.mrf.mxu0
    %v6685 = vadd.f32 0.0, %v6684
    %v6686 = vpop.f32.mrf.mxu0
    %v6687 = vadd.f32 0.0, %v6686
    %6688 = vmatmul.bf16.gmra.mxu0 %v6591
    %v6689 = vpop.f32.mrf.mxu0
    %v6690 = vadd.f32 0.0, %v6689
    %v6691 = vpop.f32.mrf.mxu0
    %v6692 = vadd.f32 0.0, %v6691
    %6693 = vmatmul.bf16.gmra.mxu0 %v6592
    %v6694 = vpop.f32.mrf.mxu0
    %v6695 = vadd.f32 0.0, %v6694
    %v6696 = vpop.f32.mrf.mxu0
    %v6697 = vadd.f32 0.0, %v6696
    %6698 = vmatmul.bf16.gmra.mxu0 %v6593
    %v6699 = vpop.f32.mrf.mxu0
    %v6700 = vadd.f32 0.0, %v6699
    %v6701 = vpop.f32.mrf.mxu0
    %v6702 = vadd.f32 0.0, %v6701
    %6703 = vmatmul.bf16.gmra.mxu0 %v6594
    %v6704 = vpop.f32.mrf.mxu0
    %v6705 = vadd.f32 0.0, %v6704
    %v6706 = vpop.f32.mrf.mxu0
    %v6707 = vadd.f32 0.0, %v6706
    %6708 = vdwg.mxu0
    %v6709 = vld [vmem:[%s1523] sm:$0xff]
    %v6710 = vld [vmem:[%s1523 + $0x8] sm:$0xff]
    %v6711 = vld [vmem:[%s1523 + $0x10] sm:$0xff]
    %v6712 = vld [vmem:[%s1523 + $0x18] sm:$0xff]
    %v6713 = vld [vmem:[%s1523 + $0x20] sm:$0xff]
    %v6714 = vld [vmem:[%s1523 + $0x28] sm:$0xff]
    %v6715 = vld [vmem:[%s1523 + $0x30] sm:$0xff]
    %v6716 = vld [vmem:[%s1523 + $0x38] sm:$0xff]
    %v6717 = vld [vmem:[%s1523 + $0x40] sm:$0xff]
    %v6718 = vld [vmem:[%s1523 + $0x48] sm:$0xff]
    %v6719 = vld [vmem:[%s1523 + $0x50] sm:$0xff]
    %v6720 = vld [vmem:[%s1523 + $0x58] sm:$0xff]
    %v6721 = vld [vmem:[%s1523 + $0x60] sm:$0xff]
    %v6722 = vld [vmem:[%s1523 + $0x68] sm:$0xff]
    %v6723 = vld [vmem:[%s1523 + $0x70] sm:$0xff]
    %v6724 = vld [vmem:[%s1523 + $0x78] sm:$0xff]
    %v6725 = vmul.f32 %v6709, %v6670
    %v6726 = vmul.f32 %v6710, %v6672
    %v6727 = vmul.f32 %v6711, %v6675
    %v6728 = vmul.f32 %v6712, %v6677
    %v6729 = vmul.f32 %v6713, %v6680
    %v6730 = vmul.f32 %v6714, %v6682
    %v6731 = vmul.f32 %v6715, %v6685
    %v6732 = vmul.f32 %v6716, %v6687
    %v6733 = vmul.f32 %v6717, %v6690
    %v6734 = vmul.f32 %v6718, %v6692
    %v6735 = vmul.f32 %v6719, %v6695
    %v6736 = vmul.f32 %v6720, %v6697
    %v6737 = vmul.f32 %v6721, %v6700
    %v6738 = vmul.f32 %v6722, %v6702
    %v6739 = vmul.f32 %v6723, %v6705
    %v6740 = vmul.f32 %v6724, %v6707
    %v6741 = vadd.f32 %v6555, %v6725
    %v6742 = vadd.f32 %v6556, %v6726
    %v6743 = vadd.f32 %v6557, %v6727
    %v6744 = vadd.f32 %v6558, %v6728
    %v6745 = vadd.f32 %v6559, %v6729
    %v6746 = vadd.f32 %v6560, %v6730
    %v6747 = vadd.f32 %v6561, %v6731
    %v6748 = vadd.f32 %v6562, %v6732
    %v6749 = vadd.f32 %v6563, %v6733
    %v6750 = vadd.f32 %v6564, %v6734
    %v6751 = vadd.f32 %v6565, %v6735
    %v6752 = vadd.f32 %v6566, %v6736
    %v6753 = vadd.f32 %v6567, %v6737
    %v6754 = vadd.f32 %v6568, %v6738
    %v6755 = vadd.f32 %v6569, %v6739
    %v6756 = vadd.f32 %v6570, %v6740
    %v6757 = vld [vmem:[#allocation2 + $0x10] sm:$0xff]
    %v6758 = vld [vmem:[#allocation2 + $0x18] sm:$0xff]
    %v6759 = vld [vmem:[#allocation2 + $0x20] sm:$0xff]
    %v6760 = vld [vmem:[#allocation2 + $0x28] sm:$0xff]
    %v6761 = vld [vmem:[#allocation2 + $0x30] sm:$0xff]
    %v6762 = vld [vmem:[#allocation2 + $0x38] sm:$0xff]
    %v6763 = vld [vmem:[#allocation2 + $0x40] sm:$0xff]
    %v6764 = vld [vmem:[#allocation2 + $0x48] sm:$0xff]
    %v6765 = vld [vmem:[#allocation2 + $0x50] sm:$0xff]
    %v6766 = vld [vmem:[#allocation2 + $0x58] sm:$0xff]
    %v6767 = vld [vmem:[#allocation2 + $0x60] sm:$0xff]
    %v6768 = vld [vmem:[#allocation2 + $0x68] sm:$0xff]
    %v6769 = vld [vmem:[#allocation2 + $0x70] sm:$0xff]
    %v6770 = vld [vmem:[#allocation2 + $0x78] sm:$0xff]
    %v6771 = vld [vmem:[#allocation2 + $0x80] sm:$0xff]
    %v6772 = vld [vmem:[#allocation2 + $0x88] sm:$0xff]
    %v6773 = vpack.c.bf16 %v6758, %v6757
    %v6774 = vpack.c.bf16 %v6760, %v6759
    %v6775 = vpack.c.bf16 %v6762, %v6761
    %v6776 = vpack.c.bf16 %v6764, %v6763
    %v6777 = vpack.c.bf16 %v6766, %v6765
    %v6778 = vpack.c.bf16 %v6768, %v6767
    %v6779 = vpack.c.bf16 %v6770, %v6769
    %v6780 = vpack.c.bf16 %v6772, %v6771
    %s6781 = scalar_lea.vmem [#allocation11], 1984
    %v6782 = vld [vmem:[%s6781] sm:$0xf]
    %v6783 = vld [vmem:[%s6781 + $0x4] sm:$0xf]
    %v6784 = vld [vmem:[%s6781 + $0x8] sm:$0xf]
    %v6785 = vld [vmem:[%s6781 + $0xc] sm:$0xf]
    %v6786 = vld [vmem:[%s6781 + $0x10] sm:$0xf]
    %v6787 = vld [vmem:[%s6781 + $0x14] sm:$0xf]
    %v6788 = vld [vmem:[%s6781 + $0x18] sm:$0xf]
    %v6789 = vld [vmem:[%s6781 + $0x1c] sm:$0xf]
    %v6790 = vld [vmem:[%s6781 + $0x20] sm:$0xf]
    %v6791 = vld [vmem:[%s6781 + $0x24] sm:$0xf]
    %v6792 = vld [vmem:[%s6781 + $0x28] sm:$0xf]
    %v6793 = vld [vmem:[%s6781 + $0x2c] sm:$0xf]
    %v6794 = vld [vmem:[%s6781 + $0x30] sm:$0xf]
    %v6795 = vld [vmem:[%s6781 + $0x34] sm:$0xf]
    %v6796 = vld [vmem:[%s6781 + $0x38] sm:$0xf]
    %v6797 = vld [vmem:[%s6781 + $0x3c] sm:$0xf]
    %v6814 = vunpack.c.l.b16 %v6782
    %v6815 = vunpack.c.l.b16 %v6783
    %v6816 = vunpack.c.l.b16 %v6784
    %v6817 = vunpack.c.l.b16 %v6785
    %v6818 = vunpack.c.l.b16 %v6786
    %v6819 = vunpack.c.l.b16 %v6787
    %v6820 = vunpack.c.l.b16 %v6788
    %v6821 = vunpack.c.l.b16 %v6789
    %v6822 = vunpack.c.l.b16 %v6790
    %v6823 = vunpack.c.l.b16 %v6791
    %v6824 = vunpack.c.l.b16 %v6792
    %v6825 = vunpack.c.l.b16 %v6793
    %v6826 = vunpack.c.l.b16 %v6794
    %v6827 = vunpack.c.l.b16 %v6795
    %v6828 = vunpack.c.l.b16 %v6796
    %v6829 = vunpack.c.l.b16 %v6797
    %v6830 = vpack.c.b16 %v6815, %v6814
    %v6831 = vpack.c.b16 %v6817, %v6816
    %v6832 = vpack.c.b16 %v6819, %v6818
    %v6833 = vpack.c.b16 %v6821, %v6820
    %v6834 = vpack.c.b16 %v6823, %v6822
    %v6835 = vpack.c.b16 %v6825, %v6824
    %v6836 = vpack.c.b16 %v6827, %v6826
    %v6837 = vpack.c.b16 %v6829, %v6828
    %6846 = vmatpush.bf16.msra.mxu0 %v6837
    %6847 = vmatpush.bf16.msra.mxu0 %v6836
    %6848 = vmatpush.bf16.msra.mxu0 %v6835
    %6849 = vmatpush.bf16.msra.mxu0 %v6834
    %6850 = vmatpush.bf16.msra.mxu0 %v6833
    %6851 = vmatpush.bf16.msra.mxu0 %v6832
    %6852 = vmatpush.bf16.msra.mxu0 %v6831
    %6853 = vmatpush.bf16.msra.mxu0 %v6830
    %6854 = vmatmul.bf16.gmra.mxu0 %v6773
    %v6855 = vpop.f32.mrf.mxu0
    %v6856 = vadd.f32 0.0, %v6855
    %v6857 = vpop.f32.mrf.mxu0
    %v6858 = vadd.f32 0.0, %v6857
    %6859 = vmatmul.bf16.gmra.mxu0 %v6774
    %v6860 = vpop.f32.mrf.mxu0
    %v6861 = vadd.f32 0.0, %v6860
    %v6862 = vpop.f32.mrf.mxu0
    %v6863 = vadd.f32 0.0, %v6862
    %6864 = vmatmul.bf16.gmra.mxu0 %v6775
    %v6865 = vpop.f32.mrf.mxu0
    %v6866 = vadd.f32 0.0, %v6865
    %v6867 = vpop.f32.mrf.mxu0
    %v6868 = vadd.f32 0.0, %v6867
    %6869 = vmatmul.bf16.gmra.mxu0 %v6776
    %v6870 = vpop.f32.mrf.mxu0
    %v6871 = vadd.f32 0.0, %v6870
    %v6872 = vpop.f32.mrf.mxu0
    %v6873 = vadd.f32 0.0, %v6872
    %6874 = vmatmul.bf16.gmra.mxu0 %v6777
    %v6875 = vpop.f32.mrf.mxu0
    %v6876 = vadd.f32 0.0, %v6875
    %v6877 = vpop.f32.mrf.mxu0
    %v6878 = vadd.f32 0.0, %v6877
    %6879 = vmatmul.bf16.gmra.mxu0 %v6778
    %v6880 = vpop.f32.mrf.mxu0
    %v6881 = vadd.f32 0.0, %v6880
    %v6882 = vpop.f32.mrf.mxu0
    %v6883 = vadd.f32 0.0, %v6882
    %6884 = vmatmul.bf16.gmra.mxu0 %v6779
    %v6885 = vpop.f32.mrf.mxu0
    %v6886 = vadd.f32 0.0, %v6885
    %v6887 = vpop.f32.mrf.mxu0
    %v6888 = vadd.f32 0.0, %v6887
    %6889 = vmatmul.bf16.gmra.mxu0 %v6780
    %v6890 = vpop.f32.mrf.mxu0
    %v6891 = vadd.f32 0.0, %v6890
    %v6892 = vpop.f32.mrf.mxu0
    %v6893 = vadd.f32 0.0, %v6892
    %6894 = vdwg.mxu0
    %v6895 = vld [vmem:[%s1710] sm:$0xff]
    %v6896 = vld [vmem:[%s1710 + $0x8] sm:$0xff]
    %v6897 = vld [vmem:[%s1710 + $0x10] sm:$0xff]
    %v6898 = vld [vmem:[%s1710 + $0x18] sm:$0xff]
    %v6899 = vld [vmem:[%s1710 + $0x20] sm:$0xff]
    %v6900 = vld [vmem:[%s1710 + $0x28] sm:$0xff]
    %v6901 = vld [vmem:[%s1710 + $0x30] sm:$0xff]
    %v6902 = vld [vmem:[%s1710 + $0x38] sm:$0xff]
    %v6903 = vld [vmem:[%s1710 + $0x40] sm:$0xff]
    %v6904 = vld [vmem:[%s1710 + $0x48] sm:$0xff]
    %v6905 = vld [vmem:[%s1710 + $0x50] sm:$0xff]
    %v6906 = vld [vmem:[%s1710 + $0x58] sm:$0xff]
    %v6907 = vld [vmem:[%s1710 + $0x60] sm:$0xff]
    %v6908 = vld [vmem:[%s1710 + $0x68] sm:$0xff]
    %v6909 = vld [vmem:[%s1710 + $0x70] sm:$0xff]
    %v6910 = vld [vmem:[%s1710 + $0x78] sm:$0xff]
    %v6911 = vmul.f32 %v6895, %v6856
    %v6912 = vmul.f32 %v6896, %v6858
    %v6913 = vmul.f32 %v6897, %v6861
    %v6914 = vmul.f32 %v6898, %v6863
    %v6915 = vmul.f32 %v6899, %v6866
    %v6916 = vmul.f32 %v6900, %v6868
    %v6917 = vmul.f32 %v6901, %v6871
    %v6918 = vmul.f32 %v6902, %v6873
    %v6919 = vmul.f32 %v6903, %v6876
    %v6920 = vmul.f32 %v6904, %v6878
    %v6921 = vmul.f32 %v6905, %v6881
    %v6922 = vmul.f32 %v6906, %v6883
    %v6923 = vmul.f32 %v6907, %v6886
    %v6924 = vmul.f32 %v6908, %v6888
    %v6925 = vmul.f32 %v6909, %v6891
    %v6926 = vmul.f32 %v6910, %v6893
    %v6927 = vadd.f32 %v6741, %v6911
    %v6928 = vadd.f32 %v6742, %v6912
    %v6929 = vadd.f32 %v6743, %v6913
    %v6930 = vadd.f32 %v6744, %v6914
    %v6931 = vadd.f32 %v6745, %v6915
    %v6932 = vadd.f32 %v6746, %v6916
    %v6933 = vadd.f32 %v6747, %v6917
    %v6934 = vadd.f32 %v6748, %v6918
    %v6935 = vadd.f32 %v6749, %v6919
    %v6936 = vadd.f32 %v6750, %v6920
    %v6937 = vadd.f32 %v6751, %v6921
    %v6938 = vadd.f32 %v6752, %v6922
    %v6939 = vadd.f32 %v6753, %v6923
    %v6940 = vadd.f32 %v6754, %v6924
    %v6941 = vadd.f32 %v6755, %v6925
    %v6942 = vadd.f32 %v6756, %v6926
    %v6943 = vld [vmem:[#allocation2 + $0x11] sm:$0xff]
    %v6944 = vld [vmem:[#allocation2 + $0x19] sm:$0xff]
    %v6945 = vld [vmem:[#allocation2 + $0x21] sm:$0xff]
    %v6946 = vld [vmem:[#allocation2 + $0x29] sm:$0xff]
    %v6947 = vld [vmem:[#allocation2 + $0x31] sm:$0xff]
    %v6948 = vld [vmem:[#allocation2 + $0x39] sm:$0xff]
    %v6949 = vld [vmem:[#allocation2 + $0x41] sm:$0xff]
    %v6950 = vld [vmem:[#allocation2 + $0x49] sm:$0xff]
    %v6951 = vld [vmem:[#allocation2 + $0x51] sm:$0xff]
    %v6952 = vld [vmem:[#allocation2 + $0x59] sm:$0xff]
    %v6953 = vld [vmem:[#allocation2 + $0x61] sm:$0xff]
    %v6954 = vld [vmem:[#allocation2 + $0x69] sm:$0xff]
    %v6955 = vld [vmem:[#allocation2 + $0x71] sm:$0xff]
    %v6956 = vld [vmem:[#allocation2 + $0x79] sm:$0xff]
    %v6957 = vld [vmem:[#allocation2 + $0x81] sm:$0xff]
    %v6958 = vld [vmem:[#allocation2 + $0x89] sm:$0xff]
    %v6959 = vpack.c.bf16 %v6944, %v6943
    %v6960 = vpack.c.bf16 %v6946, %v6945
    %v6961 = vpack.c.bf16 %v6948, %v6947
    %v6962 = vpack.c.bf16 %v6950, %v6949
    %v6963 = vpack.c.bf16 %v6952, %v6951
    %v6964 = vpack.c.bf16 %v6954, %v6953
    %v6965 = vpack.c.bf16 %v6956, %v6955
    %v6966 = vpack.c.bf16 %v6958, %v6957
    %s6967 = scalar_lea.vmem [#allocation11], 2048
    %v6968 = vld [vmem:[%s6967] sm:$0xf]
    %v6969 = vld [vmem:[%s6967 + $0x4] sm:$0xf]
    %v6970 = vld [vmem:[%s6967 + $0x8] sm:$0xf]
    %v6971 = vld [vmem:[%s6967 + $0xc] sm:$0xf]
    %v6972 = vld [vmem:[%s6967 + $0x10] sm:$0xf]
    %v6973 = vld [vmem:[%s6967 + $0x14] sm:$0xf]
    %v6974 = vld [vmem:[%s6967 + $0x18] sm:$0xf]
    %v6975 = vld [vmem:[%s6967 + $0x1c] sm:$0xf]
    %v6976 = vld [vmem:[%s6967 + $0x20] sm:$0xf]
    %v6977 = vld [vmem:[%s6967 + $0x24] sm:$0xf]
    %v6978 = vld [vmem:[%s6967 + $0x28] sm:$0xf]
    %v6979 = vld [vmem:[%s6967 + $0x2c] sm:$0xf]
    %v6980 = vld [vmem:[%s6967 + $0x30] sm:$0xf]
    %v6981 = vld [vmem:[%s6967 + $0x34] sm:$0xf]
    %v6982 = vld [vmem:[%s6967 + $0x38] sm:$0xf]
    %v6983 = vld [vmem:[%s6967 + $0x3c] sm:$0xf]
    %v7000 = vunpack.c.l.b16 %v6968
    %v7001 = vunpack.c.l.b16 %v6969
    %v7002 = vunpack.c.l.b16 %v6970
    %v7003 = vunpack.c.l.b16 %v6971
    %v7004 = vunpack.c.l.b16 %v6972
    %v7005 = vunpack.c.l.b16 %v6973
    %v7006 = vunpack.c.l.b16 %v6974
    %v7007 = vunpack.c.l.b16 %v6975
    %v7008 = vunpack.c.l.b16 %v6976
    %v7009 = vunpack.c.l.b16 %v6977
    %v7010 = vunpack.c.l.b16 %v6978
    %v7011 = vunpack.c.l.b16 %v6979
    %v7012 = vunpack.c.l.b16 %v6980
    %v7013 = vunpack.c.l.b16 %v6981
    %v7014 = vunpack.c.l.b16 %v6982
    %v7015 = vunpack.c.l.b16 %v6983
    %v7016 = vpack.c.b16 %v7001, %v7000
    %v7017 = vpack.c.b16 %v7003, %v7002
    %v7018 = vpack.c.b16 %v7005, %v7004
    %v7019 = vpack.c.b16 %v7007, %v7006
    %v7020 = vpack.c.b16 %v7009, %v7008
    %v7021 = vpack.c.b16 %v7011, %v7010
    %v7022 = vpack.c.b16 %v7013, %v7012
    %v7023 = vpack.c.b16 %v7015, %v7014
    %7032 = vmatpush.bf16.msra.mxu0 %v7023
    %7033 = vmatpush.bf16.msra.mxu0 %v7022
    %7034 = vmatpush.bf16.msra.mxu0 %v7021
    %7035 = vmatpush.bf16.msra.mxu0 %v7020
    %7036 = vmatpush.bf16.msra.mxu0 %v7019
    %7037 = vmatpush.bf16.msra.mxu0 %v7018
    %7038 = vmatpush.bf16.msra.mxu0 %v7017
    %7039 = vmatpush.bf16.msra.mxu0 %v7016
    %7040 = vmatmul.bf16.gmra.mxu0 %v6959
    %v7041 = vpop.f32.mrf.mxu0
    %v7042 = vadd.f32 0.0, %v7041
    %v7043 = vpop.f32.mrf.mxu0
    %v7044 = vadd.f32 0.0, %v7043
    %7045 = vmatmul.bf16.gmra.mxu0 %v6960
    %v7046 = vpop.f32.mrf.mxu0
    %v7047 = vadd.f32 0.0, %v7046
    %v7048 = vpop.f32.mrf.mxu0
    %v7049 = vadd.f32 0.0, %v7048
    %7050 = vmatmul.bf16.gmra.mxu0 %v6961
    %v7051 = vpop.f32.mrf.mxu0
    %v7052 = vadd.f32 0.0, %v7051
    %v7053 = vpop.f32.mrf.mxu0
    %v7054 = vadd.f32 0.0, %v7053
    %7055 = vmatmul.bf16.gmra.mxu0 %v6962
    %v7056 = vpop.f32.mrf.mxu0
    %v7057 = vadd.f32 0.0, %v7056
    %v7058 = vpop.f32.mrf.mxu0
    %v7059 = vadd.f32 0.0, %v7058
    %7060 = vmatmul.bf16.gmra.mxu0 %v6963
    %v7061 = vpop.f32.mrf.mxu0
    %v7062 = vadd.f32 0.0, %v7061
    %v7063 = vpop.f32.mrf.mxu0
    %v7064 = vadd.f32 0.0, %v7063
    %7065 = vmatmul.bf16.gmra.mxu0 %v6964
    %v7066 = vpop.f32.mrf.mxu0
    %v7067 = vadd.f32 0.0, %v7066
    %v7068 = vpop.f32.mrf.mxu0
    %v7069 = vadd.f32 0.0, %v7068
    %7070 = vmatmul.bf16.gmra.mxu0 %v6965
    %v7071 = vpop.f32.mrf.mxu0
    %v7072 = vadd.f32 0.0, %v7071
    %v7073 = vpop.f32.mrf.mxu0
    %v7074 = vadd.f32 0.0, %v7073
    %7075 = vmatmul.bf16.gmra.mxu0 %v6966
    %v7076 = vpop.f32.mrf.mxu0
    %v7077 = vadd.f32 0.0, %v7076
    %v7078 = vpop.f32.mrf.mxu0
    %v7079 = vadd.f32 0.0, %v7078
    %7080 = vdwg.mxu0
    %v7081 = vld [vmem:[%s1897] sm:$0xff]
    %v7082 = vld [vmem:[%s1897 + $0x8] sm:$0xff]
    %v7083 = vld [vmem:[%s1897 + $0x10] sm:$0xff]
    %v7084 = vld [vmem:[%s1897 + $0x18] sm:$0xff]
    %v7085 = vld [vmem:[%s1897 + $0x20] sm:$0xff]
    %v7086 = vld [vmem:[%s1897 + $0x28] sm:$0xff]
    %v7087 = vld [vmem:[%s1897 + $0x30] sm:$0xff]
    %v7088 = vld [vmem:[%s1897 + $0x38] sm:$0xff]
    %v7089 = vld [vmem:[%s1897 + $0x40] sm:$0xff]
    %v7090 = vld [vmem:[%s1897 + $0x48] sm:$0xff]
    %v7091 = vld [vmem:[%s1897 + $0x50] sm:$0xff]
    %v7092 = vld [vmem:[%s1897 + $0x58] sm:$0xff]
    %v7093 = vld [vmem:[%s1897 + $0x60] sm:$0xff]
    %v7094 = vld [vmem:[%s1897 + $0x68] sm:$0xff]
    %v7095 = vld [vmem:[%s1897 + $0x70] sm:$0xff]
    %v7096 = vld [vmem:[%s1897 + $0x78] sm:$0xff]
    %v7097 = vmul.f32 %v7081, %v7042
    %v7098 = vmul.f32 %v7082, %v7044
    %v7099 = vmul.f32 %v7083, %v7047
    %v7100 = vmul.f32 %v7084, %v7049
    %v7101 = vmul.f32 %v7085, %v7052
    %v7102 = vmul.f32 %v7086, %v7054
    %v7103 = vmul.f32 %v7087, %v7057
    %v7104 = vmul.f32 %v7088, %v7059
    %v7105 = vmul.f32 %v7089, %v7062
    %v7106 = vmul.f32 %v7090, %v7064
    %v7107 = vmul.f32 %v7091, %v7067
    %v7108 = vmul.f32 %v7092, %v7069
    %v7109 = vmul.f32 %v7093, %v7072
    %v7110 = vmul.f32 %v7094, %v7074
    %v7111 = vmul.f32 %v7095, %v7077
    %v7112 = vmul.f32 %v7096, %v7079
    %v7113 = vadd.f32 %v6927, %v7097
    %v7114 = vadd.f32 %v6928, %v7098
    %v7115 = vadd.f32 %v6929, %v7099
    %v7116 = vadd.f32 %v6930, %v7100
    %v7117 = vadd.f32 %v6931, %v7101
    %v7118 = vadd.f32 %v6932, %v7102
    %v7119 = vadd.f32 %v6933, %v7103
    %v7120 = vadd.f32 %v6934, %v7104
    %v7121 = vadd.f32 %v6935, %v7105
    %v7122 = vadd.f32 %v6936, %v7106
    %v7123 = vadd.f32 %v6937, %v7107
    %v7124 = vadd.f32 %v6938, %v7108
    %v7125 = vadd.f32 %v6939, %v7109
    %v7126 = vadd.f32 %v6940, %v7110
    %v7127 = vadd.f32 %v6941, %v7111
    %v7128 = vadd.f32 %v6942, %v7112
    %v7129 = vld [vmem:[#allocation2 + $0x17] sm:$0xff]
    %v7130 = vld [vmem:[#allocation2 + $0x1f] sm:$0xff]
    %v7131 = vld [vmem:[#allocation2 + $0x27] sm:$0xff]
    %v7132 = vld [vmem:[#allocation2 + $0x2f] sm:$0xff]
    %v7133 = vld [vmem:[#allocation2 + $0x37] sm:$0xff]
    %v7134 = vld [vmem:[#allocation2 + $0x3f] sm:$0xff]
    %v7135 = vld [vmem:[#allocation2 + $0x47] sm:$0xff]
    %v7136 = vld [vmem:[#allocation2 + $0x4f] sm:$0xff]
    %v7137 = vld [vmem:[#allocation2 + $0x57] sm:$0xff]
    %v7138 = vld [vmem:[#allocation2 + $0x5f] sm:$0xff]
    %v7139 = vld [vmem:[#allocation2 + $0x67] sm:$0xff]
    %v7140 = vld [vmem:[#allocation2 + $0x6f] sm:$0xff]
    %v7141 = vld [vmem:[#allocation2 + $0x77] sm:$0xff]
    %v7142 = vld [vmem:[#allocation2 + $0x7f] sm:$0xff]
    %v7143 = vld [vmem:[#allocation2 + $0x87] sm:$0xff]
    %v7144 = vld [vmem:[#allocation2 + $0x8f] sm:$0xff]
    %v7145 = vpack.c.bf16 %v7130, %v7129
    %v7146 = vpack.c.bf16 %v7132, %v7131
    %v7147 = vpack.c.bf16 %v7134, %v7133
    %v7148 = vpack.c.bf16 %v7136, %v7135
    %v7149 = vpack.c.bf16 %v7138, %v7137
    %v7150 = vpack.c.bf16 %v7140, %v7139
    %v7151 = vpack.c.bf16 %v7142, %v7141
    %v7152 = vpack.c.bf16 %v7144, %v7143
    %s7153 = scalar_lea.vmem [#allocation11], 2112
    %v7154 = vld [vmem:[%s7153] sm:$0xf]
    %v7155 = vld [vmem:[%s7153 + $0x4] sm:$0xf]
    %v7156 = vld [vmem:[%s7153 + $0x8] sm:$0xf]
    %v7157 = vld [vmem:[%s7153 + $0xc] sm:$0xf]
    %v7158 = vld [vmem:[%s7153 + $0x10] sm:$0xf]
    %v7159 = vld [vmem:[%s7153 + $0x14] sm:$0xf]
    %v7160 = vld [vmem:[%s7153 + $0x18] sm:$0xf]
    %v7161 = vld [vmem:[%s7153 + $0x1c] sm:$0xf]
    %v7162 = vld [vmem:[%s7153 + $0x20] sm:$0xf]
    %v7163 = vld [vmem:[%s7153 + $0x24] sm:$0xf]
    %v7164 = vld [vmem:[%s7153 + $0x28] sm:$0xf]
    %v7165 = vld [vmem:[%s7153 + $0x2c] sm:$0xf]
    %v7166 = vld [vmem:[%s7153 + $0x30] sm:$0xf]
    %v7167 = vld [vmem:[%s7153 + $0x34] sm:$0xf]
    %v7168 = vld [vmem:[%s7153 + $0x38] sm:$0xf]
    %v7169 = vld [vmem:[%s7153 + $0x3c] sm:$0xf]
    %v7186 = vunpack.c.l.b16 %v7154
    %v7187 = vunpack.c.l.b16 %v7155
    %v7188 = vunpack.c.l.b16 %v7156
    %v7189 = vunpack.c.l.b16 %v7157
    %v7190 = vunpack.c.l.b16 %v7158
    %v7191 = vunpack.c.l.b16 %v7159
    %v7192 = vunpack.c.l.b16 %v7160
    %v7193 = vunpack.c.l.b16 %v7161
    %v7194 = vunpack.c.l.b16 %v7162
    %v7195 = vunpack.c.l.b16 %v7163
    %v7196 = vunpack.c.l.b16 %v7164
    %v7197 = vunpack.c.l.b16 %v7165
    %v7198 = vunpack.c.l.b16 %v7166
    %v7199 = vunpack.c.l.b16 %v7167
    %v7200 = vunpack.c.l.b16 %v7168
    %v7201 = vunpack.c.l.b16 %v7169
    %v7202 = vpack.c.b16 %v7187, %v7186
    %v7203 = vpack.c.b16 %v7189, %v7188
    %v7204 = vpack.c.b16 %v7191, %v7190
    %v7205 = vpack.c.b16 %v7193, %v7192
    %v7206 = vpack.c.b16 %v7195, %v7194
    %v7207 = vpack.c.b16 %v7197, %v7196
    %v7208 = vpack.c.b16 %v7199, %v7198
    %v7209 = vpack.c.b16 %v7201, %v7200
    %7218 = vmatpush.bf16.msra.mxu0 %v7209
    %7219 = vmatpush.bf16.msra.mxu0 %v7208
    %7220 = vmatpush.bf16.msra.mxu0 %v7207
    %7221 = vmatpush.bf16.msra.mxu0 %v7206
    %7222 = vmatpush.bf16.msra.mxu0 %v7205
    %7223 = vmatpush.bf16.msra.mxu0 %v7204
    %7224 = vmatpush.bf16.msra.mxu0 %v7203
    %7225 = vmatpush.bf16.msra.mxu0 %v7202
    %7226 = vmatmul.bf16.gmra.mxu0 %v7145
    %v7227 = vpop.f32.mrf.mxu0
    %v7228 = vadd.f32 0.0, %v7227
    %v7229 = vpop.f32.mrf.mxu0
    %v7230 = vadd.f32 0.0, %v7229
    %7231 = vmatmul.bf16.gmra.mxu0 %v7146
    %v7232 = vpop.f32.mrf.mxu0
    %v7233 = vadd.f32 0.0, %v7232
    %v7234 = vpop.f32.mrf.mxu0
    %v7235 = vadd.f32 0.0, %v7234
    %7236 = vmatmul.bf16.gmra.mxu0 %v7147
    %v7237 = vpop.f32.mrf.mxu0
    %v7238 = vadd.f32 0.0, %v7237
    %v7239 = vpop.f32.mrf.mxu0
    %v7240 = vadd.f32 0.0, %v7239
    %7241 = vmatmul.bf16.gmra.mxu0 %v7148
    %v7242 = vpop.f32.mrf.mxu0
    %v7243 = vadd.f32 0.0, %v7242
    %v7244 = vpop.f32.mrf.mxu0
    %v7245 = vadd.f32 0.0, %v7244
    %7246 = vmatmul.bf16.gmra.mxu0 %v7149
    %v7247 = vpop.f32.mrf.mxu0
    %v7248 = vadd.f32 0.0, %v7247
    %v7249 = vpop.f32.mrf.mxu0
    %v7250 = vadd.f32 0.0, %v7249
    %7251 = vmatmul.bf16.gmra.mxu0 %v7150
    %v7252 = vpop.f32.mrf.mxu0
    %v7253 = vadd.f32 0.0, %v7252
    %v7254 = vpop.f32.mrf.mxu0
    %v7255 = vadd.f32 0.0, %v7254
    %7256 = vmatmul.bf16.gmra.mxu0 %v7151
    %v7257 = vpop.f32.mrf.mxu0
    %v7258 = vadd.f32 0.0, %v7257
    %v7259 = vpop.f32.mrf.mxu0
    %v7260 = vadd.f32 0.0, %v7259
    %7261 = vmatmul.bf16.gmra.mxu0 %v7152
    %v7262 = vpop.f32.mrf.mxu0
    %v7263 = vadd.f32 0.0, %v7262
    %v7264 = vpop.f32.mrf.mxu0
    %v7265 = vadd.f32 0.0, %v7264
    %7266 = vdwg.mxu0
    %v7267 = vld [vmem:[%s2084] sm:$0xff]
    %v7268 = vld [vmem:[%s2084 + $0x8] sm:$0xff]
    %v7269 = vld [vmem:[%s2084 + $0x10] sm:$0xff]
    %v7270 = vld [vmem:[%s2084 + $0x18] sm:$0xff]
    %v7271 = vld [vmem:[%s2084 + $0x20] sm:$0xff]
    %v7272 = vld [vmem:[%s2084 + $0x28] sm:$0xff]
    %v7273 = vld [vmem:[%s2084 + $0x30] sm:$0xff]
    %v7274 = vld [vmem:[%s2084 + $0x38] sm:$0xff]
    %v7275 = vld [vmem:[%s2084 + $0x40] sm:$0xff]
    %v7276 = vld [vmem:[%s2084 + $0x48] sm:$0xff]
    %v7277 = vld [vmem:[%s2084 + $0x50] sm:$0xff]
    %v7278 = vld [vmem:[%s2084 + $0x58] sm:$0xff]
    %v7279 = vld [vmem:[%s2084 + $0x60] sm:$0xff]
    %v7280 = vld [vmem:[%s2084 + $0x68] sm:$0xff]
    %v7281 = vld [vmem:[%s2084 + $0x70] sm:$0xff]
    %v7282 = vld [vmem:[%s2084 + $0x78] sm:$0xff]
    %v7283 = vmul.f32 %v7267, %v7228
    %v7284 = vmul.f32 %v7268, %v7230
    %v7285 = vmul.f32 %v7269, %v7233
    %v7286 = vmul.f32 %v7270, %v7235
    %v7287 = vmul.f32 %v7271, %v7238
    %v7288 = vmul.f32 %v7272, %v7240
    %v7289 = vmul.f32 %v7273, %v7243
    %v7290 = vmul.f32 %v7274, %v7245
    %v7291 = vmul.f32 %v7275, %v7248
    %v7292 = vmul.f32 %v7276, %v7250
    %v7293 = vmul.f32 %v7277, %v7253
    %v7294 = vmul.f32 %v7278, %v7255
    %v7295 = vmul.f32 %v7279, %v7258
    %v7296 = vmul.f32 %v7280, %v7260
    %v7297 = vmul.f32 %v7281, %v7263
    %v7298 = vmul.f32 %v7282, %v7265
    %v7299 = vadd.f32 %v7113, %v7283
    %v7300 = vadd.f32 %v7114, %v7284
    %v7301 = vadd.f32 %v7115, %v7285
    %v7302 = vadd.f32 %v7116, %v7286
    %v7303 = vadd.f32 %v7117, %v7287
    %v7304 = vadd.f32 %v7118, %v7288
    %v7305 = vadd.f32 %v7119, %v7289
    %v7306 = vadd.f32 %v7120, %v7290
    %v7307 = vadd.f32 %v7121, %v7291
    %v7308 = vadd.f32 %v7122, %v7292
    %v7309 = vadd.f32 %v7123, %v7293
    %v7310 = vadd.f32 %v7124, %v7294
    %v7311 = vadd.f32 %v7125, %v7295
    %v7312 = vadd.f32 %v7126, %v7296
    %v7313 = vadd.f32 %v7127, %v7297
    %v7314 = vadd.f32 %v7128, %v7298
    %v7315 = vld [vmem:[#allocation2 + $0x18] sm:$0xff]
    %v7316 = vld [vmem:[#allocation2 + $0x20] sm:$0xff]
    %v7317 = vld [vmem:[#allocation2 + $0x28] sm:$0xff]
    %v7318 = vld [vmem:[#allocation2 + $0x30] sm:$0xff]
    %v7319 = vld [vmem:[#allocation2 + $0x38] sm:$0xff]
    %v7320 = vld [vmem:[#allocation2 + $0x40] sm:$0xff]
    %v7321 = vld [vmem:[#allocation2 + $0x48] sm:$0xff]
    %v7322 = vld [vmem:[#allocation2 + $0x50] sm:$0xff]
    %v7323 = vld [vmem:[#allocation2 + $0x58] sm:$0xff]
    %v7324 = vld [vmem:[#allocation2 + $0x60] sm:$0xff]
    %v7325 = vld [vmem:[#allocation2 + $0x68] sm:$0xff]
    %v7326 = vld [vmem:[#allocation2 + $0x70] sm:$0xff]
    %v7327 = vld [vmem:[#allocation2 + $0x78] sm:$0xff]
    %v7328 = vld [vmem:[#allocation2 + $0x80] sm:$0xff]
    %v7329 = vld [vmem:[#allocation2 + $0x88] sm:$0xff]
    %v7330 = vld [vmem:[#allocation2 + $0x90] sm:$0xff]
    %v7331 = vpack.c.bf16 %v7316, %v7315
    %v7332 = vpack.c.bf16 %v7318, %v7317
    %v7333 = vpack.c.bf16 %v7320, %v7319
    %v7334 = vpack.c.bf16 %v7322, %v7321
    %v7335 = vpack.c.bf16 %v7324, %v7323
    %v7336 = vpack.c.bf16 %v7326, %v7325
    %v7337 = vpack.c.bf16 %v7328, %v7327
    %v7338 = vpack.c.bf16 %v7330, %v7329
    %s7339 = scalar_lea.vmem [#allocation11], 2176
    %v7340 = vld [vmem:[%s7339] sm:$0xf]
    %v7341 = vld [vmem:[%s7339 + $0x4] sm:$0xf]
    %v7342 = vld [vmem:[%s7339 + $0x8] sm:$0xf]
    %v7343 = vld [vmem:[%s7339 + $0xc] sm:$0xf]
    %v7344 = vld [vmem:[%s7339 + $0x10] sm:$0xf]
    %v7345 = vld [vmem:[%s7339 + $0x14] sm:$0xf]
    %v7346 = vld [vmem:[%s7339 + $0x18] sm:$0xf]
    %v7347 = vld [vmem:[%s7339 + $0x1c] sm:$0xf]
    %v7348 = vld [vmem:[%s7339 + $0x20] sm:$0xf]
    %v7349 = vld [vmem:[%s7339 + $0x24] sm:$0xf]
    %v7350 = vld [vmem:[%s7339 + $0x28] sm:$0xf]
    %v7351 = vld [vmem:[%s7339 + $0x2c] sm:$0xf]
    %v7352 = vld [vmem:[%s7339 + $0x30] sm:$0xf]
    %v7353 = vld [vmem:[%s7339 + $0x34] sm:$0xf]
    %v7354 = vld [vmem:[%s7339 + $0x38] sm:$0xf]
    %v7355 = vld [vmem:[%s7339 + $0x3c] sm:$0xf]
    %v7372 = vunpack.c.l.b16 %v7340
    %v7373 = vunpack.c.l.b16 %v7341
    %v7374 = vunpack.c.l.b16 %v7342
    %v7375 = vunpack.c.l.b16 %v7343
    %v7376 = vunpack.c.l.b16 %v7344
    %v7377 = vunpack.c.l.b16 %v7345
    %v7378 = vunpack.c.l.b16 %v7346
    %v7379 = vunpack.c.l.b16 %v7347
    %v7380 = vunpack.c.l.b16 %v7348
    %v7381 = vunpack.c.l.b16 %v7349
    %v7382 = vunpack.c.l.b16 %v7350
    %v7383 = vunpack.c.l.b16 %v7351
    %v7384 = vunpack.c.l.b16 %v7352
    %v7385 = vunpack.c.l.b16 %v7353
    %v7386 = vunpack.c.l.b16 %v7354
    %v7387 = vunpack.c.l.b16 %v7355
    %v7388 = vpack.c.b16 %v7373, %v7372
    %v7389 = vpack.c.b16 %v7375, %v7374
    %v7390 = vpack.c.b16 %v7377, %v7376
    %v7391 = vpack.c.b16 %v7379, %v7378
    %v7392 = vpack.c.b16 %v7381, %v7380
    %v7393 = vpack.c.b16 %v7383, %v7382
    %v7394 = vpack.c.b16 %v7385, %v7384
    %v7395 = vpack.c.b16 %v7387, %v7386
    %7404 = vmatpush.bf16.msra.mxu0 %v7395
    %7405 = vmatpush.bf16.msra.mxu0 %v7394
    %7406 = vmatpush.bf16.msra.mxu0 %v7393
    %7407 = vmatpush.bf16.msra.mxu0 %v7392
    %7408 = vmatpush.bf16.msra.mxu0 %v7391
    %7409 = vmatpush.bf16.msra.mxu0 %v7390
    %7410 = vmatpush.bf16.msra.mxu0 %v7389
    %7411 = vmatpush.bf16.msra.mxu0 %v7388
    %7412 = vmatmul.bf16.gmra.mxu0 %v7331
    %v7413 = vpop.f32.mrf.mxu0
    %v7414 = vadd.f32 0.0, %v7413
    %v7415 = vpop.f32.mrf.mxu0
    %v7416 = vadd.f32 0.0, %v7415
    %7417 = vmatmul.bf16.gmra.mxu0 %v7332
    %v7418 = vpop.f32.mrf.mxu0
    %v7419 = vadd.f32 0.0, %v7418
    %v7420 = vpop.f32.mrf.mxu0
    %v7421 = vadd.f32 0.0, %v7420
    %7422 = vmatmul.bf16.gmra.mxu0 %v7333
    %v7423 = vpop.f32.mrf.mxu0
    %v7424 = vadd.f32 0.0, %v7423
    %v7425 = vpop.f32.mrf.mxu0
    %v7426 = vadd.f32 0.0, %v7425
    %7427 = vmatmul.bf16.gmra.mxu0 %v7334
    %v7428 = vpop.f32.mrf.mxu0
    %v7429 = vadd.f32 0.0, %v7428
    %v7430 = vpop.f32.mrf.mxu0
    %v7431 = vadd.f32 0.0, %v7430
    %7432 = vmatmul.bf16.gmra.mxu0 %v7335
    %v7433 = vpop.f32.mrf.mxu0
    %v7434 = vadd.f32 0.0, %v7433
    %v7435 = vpop.f32.mrf.mxu0
    %v7436 = vadd.f32 0.0, %v7435
    %7437 = vmatmul.bf16.gmra.mxu0 %v7336
    %v7438 = vpop.f32.mrf.mxu0
    %v7439 = vadd.f32 0.0, %v7438
    %v7440 = vpop.f32.mrf.mxu0
    %v7441 = vadd.f32 0.0, %v7440
    %7442 = vmatmul.bf16.gmra.mxu0 %v7337
    %v7443 = vpop.f32.mrf.mxu0
    %v7444 = vadd.f32 0.0, %v7443
    %v7445 = vpop.f32.mrf.mxu0
    %v7446 = vadd.f32 0.0, %v7445
    %7447 = vmatmul.bf16.gmra.mxu0 %v7338
    %v7448 = vpop.f32.mrf.mxu0
    %v7449 = vadd.f32 0.0, %v7448
    %v7450 = vpop.f32.mrf.mxu0
    %v7451 = vadd.f32 0.0, %v7450
    %7452 = vdwg.mxu0
    %v7453 = vld [vmem:[%s2271] sm:$0xff]
    %v7454 = vld [vmem:[%s2271 + $0x8] sm:$0xff]
    %v7455 = vld [vmem:[%s2271 + $0x10] sm:$0xff]
    %v7456 = vld [vmem:[%s2271 + $0x18] sm:$0xff]
    %v7457 = vld [vmem:[%s2271 + $0x20] sm:$0xff]
    %v7458 = vld [vmem:[%s2271 + $0x28] sm:$0xff]
    %v7459 = vld [vmem:[%s2271 + $0x30] sm:$0xff]
    %v7460 = vld [vmem:[%s2271 + $0x38] sm:$0xff]
    %v7461 = vld [vmem:[%s2271 + $0x40] sm:$0xff]
    %v7462 = vld [vmem:[%s2271 + $0x48] sm:$0xff]
    %v7463 = vld [vmem:[%s2271 + $0x50] sm:$0xff]
    %v7464 = vld [vmem:[%s2271 + $0x58] sm:$0xff]
    %v7465 = vld [vmem:[%s2271 + $0x60] sm:$0xff]
    %v7466 = vld [vmem:[%s2271 + $0x68] sm:$0xff]
    %v7467 = vld [vmem:[%s2271 + $0x70] sm:$0xff]
    %v7468 = vld [vmem:[%s2271 + $0x78] sm:$0xff]
    %v7469 = vmul.f32 %v7453, %v7414
    %v7470 = vmul.f32 %v7454, %v7416
    %v7471 = vmul.f32 %v7455, %v7419
    %v7472 = vmul.f32 %v7456, %v7421
    %v7473 = vmul.f32 %v7457, %v7424
    %v7474 = vmul.f32 %v7458, %v7426
    %v7475 = vmul.f32 %v7459, %v7429
    %v7476 = vmul.f32 %v7460, %v7431
    %v7477 = vmul.f32 %v7461, %v7434
    %v7478 = vmul.f32 %v7462, %v7436
    %v7479 = vmul.f32 %v7463, %v7439
    %v7480 = vmul.f32 %v7464, %v7441
    %v7481 = vmul.f32 %v7465, %v7444
    %v7482 = vmul.f32 %v7466, %v7446
    %v7483 = vmul.f32 %v7467, %v7449
    %v7484 = vmul.f32 %v7468, %v7451
    %v7485 = vadd.f32 %v7299, %v7469
    %v7486 = vadd.f32 %v7300, %v7470
    %v7487 = vadd.f32 %v7301, %v7471
    %v7488 = vadd.f32 %v7302, %v7472
    %v7489 = vadd.f32 %v7303, %v7473
    %v7490 = vadd.f32 %v7304, %v7474
    %v7491 = vadd.f32 %v7305, %v7475
    %v7492 = vadd.f32 %v7306, %v7476
    %v7493 = vadd.f32 %v7307, %v7477
    %v7494 = vadd.f32 %v7308, %v7478
    %v7495 = vadd.f32 %v7309, %v7479
    %v7496 = vadd.f32 %v7310, %v7480
    %v7497 = vadd.f32 %v7311, %v7481
    %v7498 = vadd.f32 %v7312, %v7482
    %v7499 = vadd.f32 %v7313, %v7483
    %v7500 = vadd.f32 %v7314, %v7484
    %v7501 = vld [vmem:[#allocation2 + $0x19] sm:$0xff]
    %v7502 = vld [vmem:[#allocation2 + $0x21] sm:$0xff]
    %v7503 = vld [vmem:[#allocation2 + $0x29] sm:$0xff]
    %v7504 = vld [vmem:[#allocation2 + $0x31] sm:$0xff]
    %v7505 = vld [vmem:[#allocation2 + $0x39] sm:$0xff]
    %v7506 = vld [vmem:[#allocation2 + $0x41] sm:$0xff]
    %v7507 = vld [vmem:[#allocation2 + $0x49] sm:$0xff]
    %v7508 = vld [vmem:[#allocation2 + $0x51] sm:$0xff]
    %v7509 = vld [vmem:[#allocation2 + $0x59] sm:$0xff]
    %v7510 = vld [vmem:[#allocation2 + $0x61] sm:$0xff]
    %v7511 = vld [vmem:[#allocation2 + $0x69] sm:$0xff]
    %v7512 = vld [vmem:[#allocation2 + $0x71] sm:$0xff]
    %v7513 = vld [vmem:[#allocation2 + $0x79] sm:$0xff]
    %v7514 = vld [vmem:[#allocation2 + $0x81] sm:$0xff]
    %v7515 = vld [vmem:[#allocation2 + $0x89] sm:$0xff]
    %v7516 = vld [vmem:[#allocation2 + $0x91] sm:$0xff]
    %v7517 = vpack.c.bf16 %v7502, %v7501
    %v7518 = vpack.c.bf16 %v7504, %v7503
    %v7519 = vpack.c.bf16 %v7506, %v7505
    %v7520 = vpack.c.bf16 %v7508, %v7507
    %v7521 = vpack.c.bf16 %v7510, %v7509
    %v7522 = vpack.c.bf16 %v7512, %v7511
    %v7523 = vpack.c.bf16 %v7514, %v7513
    %v7524 = vpack.c.bf16 %v7516, %v7515
    %s7525 = scalar_lea.vmem [#allocation11], 2240
    %v7526 = vld [vmem:[%s7525] sm:$0xf]
    %v7527 = vld [vmem:[%s7525 + $0x4] sm:$0xf]
    %v7528 = vld [vmem:[%s7525 + $0x8] sm:$0xf]
    %v7529 = vld [vmem:[%s7525 + $0xc] sm:$0xf]
    %v7530 = vld [vmem:[%s7525 + $0x10] sm:$0xf]
    %v7531 = vld [vmem:[%s7525 + $0x14] sm:$0xf]
    %v7532 = vld [vmem:[%s7525 + $0x18] sm:$0xf]
    %v7533 = vld [vmem:[%s7525 + $0x1c] sm:$0xf]
    %v7534 = vld [vmem:[%s7525 + $0x20] sm:$0xf]
    %v7535 = vld [vmem:[%s7525 + $0x24] sm:$0xf]
    %v7536 = vld [vmem:[%s7525 + $0x28] sm:$0xf]
    %v7537 = vld [vmem:[%s7525 + $0x2c] sm:$0xf]
    %v7538 = vld [vmem:[%s7525 + $0x30] sm:$0xf]
    %v7539 = vld [vmem:[%s7525 + $0x34] sm:$0xf]
    %v7540 = vld [vmem:[%s7525 + $0x38] sm:$0xf]
    %v7541 = vld [vmem:[%s7525 + $0x3c] sm:$0xf]
    %v7558 = vunpack.c.l.b16 %v7526
    %v7559 = vunpack.c.l.b16 %v7527
    %v7560 = vunpack.c.l.b16 %v7528
    %v7561 = vunpack.c.l.b16 %v7529
    %v7562 = vunpack.c.l.b16 %v7530
    %v7563 = vunpack.c.l.b16 %v7531
    %v7564 = vunpack.c.l.b16 %v7532
    %v7565 = vunpack.c.l.b16 %v7533
    %v7566 = vunpack.c.l.b16 %v7534
    %v7567 = vunpack.c.l.b16 %v7535
    %v7568 = vunpack.c.l.b16 %v7536
    %v7569 = vunpack.c.l.b16 %v7537
    %v7570 = vunpack.c.l.b16 %v7538
    %v7571 = vunpack.c.l.b16 %v7539
    %v7572 = vunpack.c.l.b16 %v7540
    %v7573 = vunpack.c.l.b16 %v7541
    %v7574 = vpack.c.b16 %v7559, %v7558
    %v7575 = vpack.c.b16 %v7561, %v7560
    %v7576 = vpack.c.b16 %v7563, %v7562
    %v7577 = vpack.c.b16 %v7565, %v7564
    %v7578 = vpack.c.b16 %v7567, %v7566
    %v7579 = vpack.c.b16 %v7569, %v7568
    %v7580 = vpack.c.b16 %v7571, %v7570
    %v7581 = vpack.c.b16 %v7573, %v7572
    %7590 = vmatpush.bf16.msra.mxu0 %v7581
    %7591 = vmatpush.bf16.msra.mxu0 %v7580
    %7592 = vmatpush.bf16.msra.mxu0 %v7579
    %7593 = vmatpush.bf16.msra.mxu0 %v7578
    %7594 = vmatpush.bf16.msra.mxu0 %v7577
    %7595 = vmatpush.bf16.msra.mxu0 %v7576
    %7596 = vmatpush.bf16.msra.mxu0 %v7575
    %7597 = vmatpush.bf16.msra.mxu0 %v7574
    %7598 = vmatmul.bf16.gmra.mxu0 %v7517
    %v7599 = vpop.f32.mrf.mxu0
    %v7600 = vadd.f32 0.0, %v7599
    %v7601 = vpop.f32.mrf.mxu0
    %v7602 = vadd.f32 0.0, %v7601
    %7603 = vmatmul.bf16.gmra.mxu0 %v7518
    %v7604 = vpop.f32.mrf.mxu0
    %v7605 = vadd.f32 0.0, %v7604
    %v7606 = vpop.f32.mrf.mxu0
    %v7607 = vadd.f32 0.0, %v7606
    %7608 = vmatmul.bf16.gmra.mxu0 %v7519
    %v7609 = vpop.f32.mrf.mxu0
    %v7610 = vadd.f32 0.0, %v7609
    %v7611 = vpop.f32.mrf.mxu0
    %v7612 = vadd.f32 0.0, %v7611
    %7613 = vmatmul.bf16.gmra.mxu0 %v7520
    %v7614 = vpop.f32.mrf.mxu0
    %v7615 = vadd.f32 0.0, %v7614
    %v7616 = vpop.f32.mrf.mxu0
    %v7617 = vadd.f32 0.0, %v7616
    %7618 = vmatmul.bf16.gmra.mxu0 %v7521
    %v7619 = vpop.f32.mrf.mxu0
    %v7620 = vadd.f32 0.0, %v7619
    %v7621 = vpop.f32.mrf.mxu0
    %v7622 = vadd.f32 0.0, %v7621
    %7623 = vmatmul.bf16.gmra.mxu0 %v7522
    %v7624 = vpop.f32.mrf.mxu0
    %v7625 = vadd.f32 0.0, %v7624
    %v7626 = vpop.f32.mrf.mxu0
    %v7627 = vadd.f32 0.0, %v7626
    %7628 = vmatmul.bf16.gmra.mxu0 %v7523
    %v7629 = vpop.f32.mrf.mxu0
    %v7630 = vadd.f32 0.0, %v7629
    %v7631 = vpop.f32.mrf.mxu0
    %v7632 = vadd.f32 0.0, %v7631
    %7633 = vmatmul.bf16.gmra.mxu0 %v7524
    %v7634 = vpop.f32.mrf.mxu0
    %v7635 = vadd.f32 0.0, %v7634
    %v7636 = vpop.f32.mrf.mxu0
    %v7637 = vadd.f32 0.0, %v7636
    %7638 = vdwg.mxu0
    %v7639 = vld [vmem:[%s2458] sm:$0xff]
    %v7640 = vld [vmem:[%s2458 + $0x8] sm:$0xff]
    %v7641 = vld [vmem:[%s2458 + $0x10] sm:$0xff]
    %v7642 = vld [vmem:[%s2458 + $0x18] sm:$0xff]
    %v7643 = vld [vmem:[%s2458 + $0x20] sm:$0xff]
    %v7644 = vld [vmem:[%s2458 + $0x28] sm:$0xff]
    %v7645 = vld [vmem:[%s2458 + $0x30] sm:$0xff]
    %v7646 = vld [vmem:[%s2458 + $0x38] sm:$0xff]
    %v7647 = vld [vmem:[%s2458 + $0x40] sm:$0xff]
    %v7648 = vld [vmem:[%s2458 + $0x48] sm:$0xff]
    %v7649 = vld [vmem:[%s2458 + $0x50] sm:$0xff]
    %v7650 = vld [vmem:[%s2458 + $0x58] sm:$0xff]
    %v7651 = vld [vmem:[%s2458 + $0x60] sm:$0xff]
    %v7652 = vld [vmem:[%s2458 + $0x68] sm:$0xff]
    %v7653 = vld [vmem:[%s2458 + $0x70] sm:$0xff]
    %v7654 = vld [vmem:[%s2458 + $0x78] sm:$0xff]
    %v7655 = vmul.f32 %v7639, %v7600
    %v7656 = vmul.f32 %v7640, %v7602
    %v7657 = vmul.f32 %v7641, %v7605
    %v7658 = vmul.f32 %v7642, %v7607
    %v7659 = vmul.f32 %v7643, %v7610
    %v7660 = vmul.f32 %v7644, %v7612
    %v7661 = vmul.f32 %v7645, %v7615
    %v7662 = vmul.f32 %v7646, %v7617
    %v7663 = vmul.f32 %v7647, %v7620
    %v7664 = vmul.f32 %v7648, %v7622
    %v7665 = vmul.f32 %v7649, %v7625
    %v7666 = vmul.f32 %v7650, %v7627
    %v7667 = vmul.f32 %v7651, %v7630
    %v7668 = vmul.f32 %v7652, %v7632
    %v7669 = vmul.f32 %v7653, %v7635
    %v7670 = vmul.f32 %v7654, %v7637
    %v7671 = vadd.f32 %v7485, %v7655
    %v7672 = vadd.f32 %v7486, %v7656
    %v7673 = vadd.f32 %v7487, %v7657
    %v7674 = vadd.f32 %v7488, %v7658
    %v7675 = vadd.f32 %v7489, %v7659
    %v7676 = vadd.f32 %v7490, %v7660
    %v7677 = vadd.f32 %v7491, %v7661
    %v7678 = vadd.f32 %v7492, %v7662
    %v7679 = vadd.f32 %v7493, %v7663
    %v7680 = vadd.f32 %v7494, %v7664
    %v7681 = vadd.f32 %v7495, %v7665
    %v7682 = vadd.f32 %v7496, %v7666
    %v7683 = vadd.f32 %v7497, %v7667
    %v7684 = vadd.f32 %v7498, %v7668
    %v7685 = vadd.f32 %v7499, %v7669
    %v7686 = vadd.f32 %v7500, %v7670
    %s7687 = scalar_lea.vmem [#allocation13], 3
    %v7688 = vld [vmem:[%s7687] sm:$0x1]
    %v7690 = vperm.slane %v7688, 0
    %v7692 = vadd.f32 %v7671, %v7690
    %v7693 = vadd.f32 %v7672, %v7690
    %v7694 = vadd.f32 %v7673, %v7690
    %v7695 = vadd.f32 %v7674, %v7690
    %v7696 = vadd.f32 %v7675, %v7690
    %v7697 = vadd.f32 %v7676, %v7690
    %v7698 = vadd.f32 %v7677, %v7690
    %v7699 = vadd.f32 %v7678, %v7690
    %v7700 = vadd.f32 %v7679, %v7690
    %v7701 = vadd.f32 %v7680, %v7690
    %v7702 = vadd.f32 %v7681, %v7690
    %v7703 = vadd.f32 %v7682, %v7690
    %v7704 = vadd.f32 %v7683, %v7690
    %v7705 = vadd.f32 %v7684, %v7690
    %v7706 = vadd.f32 %v7685, %v7690
    %v7707 = vadd.f32 %v7686, %v7690
    %v7708 = vmax.f32 %v7692, 0.0
    %v7709 = vmax.f32 %v7693, 0.0
    %v7710 = vmax.f32 %v7694, 0.0
    %v7711 = vmax.f32 %v7695, 0.0
    %v7712 = vmax.f32 %v7696, 0.0
    %v7713 = vmax.f32 %v7697, 0.0
    %v7714 = vmax.f32 %v7698, 0.0
    %v7715 = vmax.f32 %v7699, 0.0
    %v7716 = vmax.f32 %v7700, 0.0
    %v7717 = vmax.f32 %v7701, 0.0
    %v7718 = vmax.f32 %v7702, 0.0
    %v7719 = vmax.f32 %v7703, 0.0
    %v7720 = vmax.f32 %v7704, 0.0
    %v7721 = vmax.f32 %v7705, 0.0
    %v7722 = vmax.f32 %v7706, 0.0
    %v7723 = vmax.f32 %v7707, 0.0
    %7724 = vst [vmem:[#allocation2 + $0x10] sm:$0xff] %v7708
    %7725 = vst [vmem:[#allocation2 + $0x18] sm:$0xff] %v7709
    %7726 = vst [vmem:[#allocation2 + $0x20] sm:$0xff] %v7710
    %7727 = vst [vmem:[#allocation2 + $0x28] sm:$0xff] %v7711
    %7728 = vst [vmem:[#allocation2 + $0x30] sm:$0xff] %v7712
    %7729 = vst [vmem:[#allocation2 + $0x38] sm:$0xff] %v7713
    %7730 = vst [vmem:[#allocation2 + $0x40] sm:$0xff] %v7714
    %7731 = vst [vmem:[#allocation2 + $0x48] sm:$0xff] %v7715
    %7732 = vst [vmem:[#allocation2 + $0x50] sm:$0xff] %v7716
    %7733 = vst [vmem:[#allocation2 + $0x58] sm:$0xff] %v7717
    %7734 = vst [vmem:[#allocation2 + $0x60] sm:$0xff] %v7718
    %7735 = vst [vmem:[#allocation2 + $0x68] sm:$0xff] %v7719
    %7736 = vst [vmem:[#allocation2 + $0x70] sm:$0xff] %v7720
    %7737 = vst [vmem:[#allocation2 + $0x78] sm:$0xff] %v7721
    %7738 = vst [vmem:[#allocation2 + $0x80] sm:$0xff] %v7722
    %7739 = vst [vmem:[#allocation2 + $0x88] sm:$0xff] %v7723
    %v7740 = vld [vmem:[#allocation2 + $0x7] sm:$0xff]
    %v7741 = vld [vmem:[#allocation2 + $0xf] sm:$0xff]
    %v7742 = vld [vmem:[#allocation2 + $0x17] sm:$0xff]
    %v7743 = vld [vmem:[#allocation2 + $0x1f] sm:$0xff]
    %v7744 = vld [vmem:[#allocation2 + $0x27] sm:$0xff]
    %v7745 = vld [vmem:[#allocation2 + $0x2f] sm:$0xff]
    %v7746 = vld [vmem:[#allocation2 + $0x37] sm:$0xff]
    %v7747 = vld [vmem:[#allocation2 + $0x3f] sm:$0xff]
    %v7748 = vld [vmem:[#allocation2 + $0x47] sm:$0xff]
    %v7749 = vld [vmem:[#allocation2 + $0x4f] sm:$0xff]
    %v7750 = vld [vmem:[#allocation2 + $0x57] sm:$0xff]
    %v7751 = vld [vmem:[#allocation2 + $0x5f] sm:$0xff]
    %v7752 = vld [vmem:[#allocation2 + $0x67] sm:$0xff]
    %v7753 = vld [vmem:[#allocation2 + $0x6f] sm:$0xff]
    %v7754 = vld [vmem:[#allocation2 + $0x77] sm:$0xff]
    %v7755 = vld [vmem:[#allocation2 + $0x7f] sm:$0xff]
    %v7756 = vpack.c.bf16 %v7741, %v7740
    %v7757 = vpack.c.bf16 %v7743, %v7742
    %v7758 = vpack.c.bf16 %v7745, %v7744
    %v7759 = vpack.c.bf16 %v7747, %v7746
    %v7760 = vpack.c.bf16 %v7749, %v7748
    %v7761 = vpack.c.bf16 %v7751, %v7750
    %v7762 = vpack.c.bf16 %v7753, %v7752
    %v7763 = vpack.c.bf16 %v7755, %v7754
    %s7764 = scalar_lea.vmem [#allocation11], 2304
    %v7765 = vld [vmem:[%s7764] sm:$0xf]
    %v7766 = vld [vmem:[%s7764 + $0x4] sm:$0xf]
    %v7767 = vld [vmem:[%s7764 + $0x8] sm:$0xf]
    %v7768 = vld [vmem:[%s7764 + $0xc] sm:$0xf]
    %v7769 = vld [vmem:[%s7764 + $0x10] sm:$0xf]
    %v7770 = vld [vmem:[%s7764 + $0x14] sm:$0xf]
    %v7771 = vld [vmem:[%s7764 + $0x18] sm:$0xf]
    %v7772 = vld [vmem:[%s7764 + $0x1c] sm:$0xf]
    %v7773 = vld [vmem:[%s7764 + $0x20] sm:$0xf]
    %v7774 = vld [vmem:[%s7764 + $0x24] sm:$0xf]
    %v7775 = vld [vmem:[%s7764 + $0x28] sm:$0xf]
    %v7776 = vld [vmem:[%s7764 + $0x2c] sm:$0xf]
    %v7777 = vld [vmem:[%s7764 + $0x30] sm:$0xf]
    %v7778 = vld [vmem:[%s7764 + $0x34] sm:$0xf]
    %v7779 = vld [vmem:[%s7764 + $0x38] sm:$0xf]
    %v7780 = vld [vmem:[%s7764 + $0x3c] sm:$0xf]
    %v7797 = vunpack.c.l.b16 %v7765
    %v7798 = vunpack.c.l.b16 %v7766
    %v7799 = vunpack.c.l.b16 %v7767
    %v7800 = vunpack.c.l.b16 %v7768
    %v7801 = vunpack.c.l.b16 %v7769
    %v7802 = vunpack.c.l.b16 %v7770
    %v7803 = vunpack.c.l.b16 %v7771
    %v7804 = vunpack.c.l.b16 %v7772
    %v7805 = vunpack.c.l.b16 %v7773
    %v7806 = vunpack.c.l.b16 %v7774
    %v7807 = vunpack.c.l.b16 %v7775
    %v7808 = vunpack.c.l.b16 %v7776
    %v7809 = vunpack.c.l.b16 %v7777
    %v7810 = vunpack.c.l.b16 %v7778
    %v7811 = vunpack.c.l.b16 %v7779
    %v7812 = vunpack.c.l.b16 %v7780
    %v7813 = vpack.c.b16 %v7798, %v7797
    %v7814 = vpack.c.b16 %v7800, %v7799
    %v7815 = vpack.c.b16 %v7802, %v7801
    %v7816 = vpack.c.b16 %v7804, %v7803
    %v7817 = vpack.c.b16 %v7806, %v7805
    %v7818 = vpack.c.b16 %v7808, %v7807
    %v7819 = vpack.c.b16 %v7810, %v7809
    %v7820 = vpack.c.b16 %v7812, %v7811
    %7829 = vmatpush.bf16.msra.mxu0 %v7820
    %7830 = vmatpush.bf16.msra.mxu0 %v7819
    %7831 = vmatpush.bf16.msra.mxu0 %v7818
    %7832 = vmatpush.bf16.msra.mxu0 %v7817
    %7833 = vmatpush.bf16.msra.mxu0 %v7816
    %7834 = vmatpush.bf16.msra.mxu0 %v7815
    %7835 = vmatpush.bf16.msra.mxu0 %v7814
    %7836 = vmatpush.bf16.msra.mxu0 %v7813
    %7837 = vmatmul.bf16.gmra.mxu0 %v7756
    %v7838 = vpop.f32.mrf.mxu0
    %v7839 = vadd.f32 0.0, %v7838
    %v7840 = vpop.f32.mrf.mxu0
    %v7841 = vadd.f32 0.0, %v7840
    %7842 = vmatmul.bf16.gmra.mxu0 %v7757
    %v7843 = vpop.f32.mrf.mxu0
    %v7844 = vadd.f32 0.0, %v7843
    %v7845 = vpop.f32.mrf.mxu0
    %v7846 = vadd.f32 0.0, %v7845
    %7847 = vmatmul.bf16.gmra.mxu0 %v7758
    %v7848 = vpop.f32.mrf.mxu0
    %v7849 = vadd.f32 0.0, %v7848
    %v7850 = vpop.f32.mrf.mxu0
    %v7851 = vadd.f32 0.0, %v7850
    %7852 = vmatmul.bf16.gmra.mxu0 %v7759
    %v7853 = vpop.f32.mrf.mxu0
    %v7854 = vadd.f32 0.0, %v7853
    %v7855 = vpop.f32.mrf.mxu0
    %v7856 = vadd.f32 0.0, %v7855
    %7857 = vmatmul.bf16.gmra.mxu0 %v7760
    %v7858 = vpop.f32.mrf.mxu0
    %v7859 = vadd.f32 0.0, %v7858
    %v7860 = vpop.f32.mrf.mxu0
    %v7861 = vadd.f32 0.0, %v7860
    %7862 = vmatmul.bf16.gmra.mxu0 %v7761
    %v7863 = vpop.f32.mrf.mxu0
    %v7864 = vadd.f32 0.0, %v7863
    %v7865 = vpop.f32.mrf.mxu0
    %v7866 = vadd.f32 0.0, %v7865
    %7867 = vmatmul.bf16.gmra.mxu0 %v7762
    %v7868 = vpop.f32.mrf.mxu0
    %v7869 = vadd.f32 0.0, %v7868
    %v7870 = vpop.f32.mrf.mxu0
    %v7871 = vadd.f32 0.0, %v7870
    %7872 = vmatmul.bf16.gmra.mxu0 %v7763
    %v7873 = vpop.f32.mrf.mxu0
    %v7874 = vadd.f32 0.0, %v7873
    %v7875 = vpop.f32.mrf.mxu0
    %v7876 = vadd.f32 0.0, %v7875
    %7877 = vdwg.mxu0
    %v7878 = vld [vmem:[#allocation14] sm:$0xff]
    %v7879 = vld [vmem:[#allocation14 + $0x8] sm:$0xff]
    %v7880 = vld [vmem:[#allocation14 + $0x10] sm:$0xff]
    %v7881 = vld [vmem:[#allocation14 + $0x18] sm:$0xff]
    %v7882 = vld [vmem:[#allocation14 + $0x20] sm:$0xff]
    %v7883 = vld [vmem:[#allocation14 + $0x28] sm:$0xff]
    %v7884 = vld [vmem:[#allocation14 + $0x30] sm:$0xff]
    %v7885 = vld [vmem:[#allocation14 + $0x38] sm:$0xff]
    %v7886 = vld [vmem:[#allocation14 + $0x40] sm:$0xff]
    %v7887 = vld [vmem:[#allocation14 + $0x48] sm:$0xff]
    %v7888 = vld [vmem:[#allocation14 + $0x50] sm:$0xff]
    %v7889 = vld [vmem:[#allocation14 + $0x58] sm:$0xff]
    %v7890 = vld [vmem:[#allocation14 + $0x60] sm:$0xff]
    %v7891 = vld [vmem:[#allocation14 + $0x68] sm:$0xff]
    %v7892 = vld [vmem:[#allocation14 + $0x70] sm:$0xff]
    %v7893 = vld [vmem:[#allocation14 + $0x78] sm:$0xff]
    %v7894 = vmul.f32 %v7878, %v7839
    %v7895 = vmul.f32 %v7879, %v7841
    %v7896 = vmul.f32 %v7880, %v7844
    %v7897 = vmul.f32 %v7881, %v7846
    %v7898 = vmul.f32 %v7882, %v7849
    %v7899 = vmul.f32 %v7883, %v7851
    %v7900 = vmul.f32 %v7884, %v7854
    %v7901 = vmul.f32 %v7885, %v7856
    %v7902 = vmul.f32 %v7886, %v7859
    %v7903 = vmul.f32 %v7887, %v7861
    %v7904 = vmul.f32 %v7888, %v7864
    %v7905 = vmul.f32 %v7889, %v7866
    %v7906 = vmul.f32 %v7890, %v7869
    %v7907 = vmul.f32 %v7891, %v7871
    %v7908 = vmul.f32 %v7892, %v7874
    %v7909 = vmul.f32 %v7893, %v7876
    %v7910 = vadd.f32 %v7894, 0.0
    %v7911 = vadd.f32 %v7895, 0.0
    %v7912 = vadd.f32 %v7896, 0.0
    %v7913 = vadd.f32 %v7897, 0.0
    %v7914 = vadd.f32 %v7898, 0.0
    %v7915 = vadd.f32 %v7899, 0.0
    %v7916 = vadd.f32 %v7900, 0.0
    %v7917 = vadd.f32 %v7901, 0.0
    %v7918 = vadd.f32 %v7902, 0.0
    %v7919 = vadd.f32 %v7903, 0.0
    %v7920 = vadd.f32 %v7904, 0.0
    %v7921 = vadd.f32 %v7905, 0.0
    %v7922 = vadd.f32 %v7906, 0.0
    %v7923 = vadd.f32 %v7907, 0.0
    %v7924 = vadd.f32 %v7908, 0.0
    %v7925 = vadd.f32 %v7909, 0.0
    %v7926 = vld [vmem:[#allocation2 + $0x8] sm:$0xff]
    %v7927 = vld [vmem:[#allocation2 + $0x10] sm:$0xff]
    %v7928 = vld [vmem:[#allocation2 + $0x18] sm:$0xff]
    %v7929 = vld [vmem:[#allocation2 + $0x20] sm:$0xff]
    %v7930 = vld [vmem:[#allocation2 + $0x28] sm:$0xff]
    %v7931 = vld [vmem:[#allocation2 + $0x30] sm:$0xff]
    %v7932 = vld [vmem:[#allocation2 + $0x38] sm:$0xff]
    %v7933 = vld [vmem:[#allocation2 + $0x40] sm:$0xff]
    %v7934 = vld [vmem:[#allocation2 + $0x48] sm:$0xff]
    %v7935 = vld [vmem:[#allocation2 + $0x50] sm:$0xff]
    %v7936 = vld [vmem:[#allocation2 + $0x58] sm:$0xff]
    %v7937 = vld [vmem:[#allocation2 + $0x60] sm:$0xff]
    %v7938 = vld [vmem:[#allocation2 + $0x68] sm:$0xff]
    %v7939 = vld [vmem:[#allocation2 + $0x70] sm:$0xff]
    %v7940 = vld [vmem:[#allocation2 + $0x78] sm:$0xff]
    %v7941 = vld [vmem:[#allocation2 + $0x80] sm:$0xff]
    %v7942 = vpack.c.bf16 %v7927, %v7926
    %v7943 = vpack.c.bf16 %v7929, %v7928
    %v7944 = vpack.c.bf16 %v7931, %v7930
    %v7945 = vpack.c.bf16 %v7933, %v7932
    %v7946 = vpack.c.bf16 %v7935, %v7934
    %v7947 = vpack.c.bf16 %v7937, %v7936
    %v7948 = vpack.c.bf16 %v7939, %v7938
    %v7949 = vpack.c.bf16 %v7941, %v7940
    %s7950 = scalar_lea.vmem [#allocation11], 2368
    %v7951 = vld [vmem:[%s7950] sm:$0xf]
    %v7952 = vld [vmem:[%s7950 + $0x4] sm:$0xf]
    %v7953 = vld [vmem:[%s7950 + $0x8] sm:$0xf]
    %v7954 = vld [vmem:[%s7950 + $0xc] sm:$0xf]
    %v7955 = vld [vmem:[%s7950 + $0x10] sm:$0xf]
    %v7956 = vld [vmem:[%s7950 + $0x14] sm:$0xf]
    %v7957 = vld [vmem:[%s7950 + $0x18] sm:$0xf]
    %v7958 = vld [vmem:[%s7950 + $0x1c] sm:$0xf]
    %v7959 = vld [vmem:[%s7950 + $0x20] sm:$0xf]
    %v7960 = vld [vmem:[%s7950 + $0x24] sm:$0xf]
    %v7961 = vld [vmem:[%s7950 + $0x28] sm:$0xf]
    %v7962 = vld [vmem:[%s7950 + $0x2c] sm:$0xf]
    %v7963 = vld [vmem:[%s7950 + $0x30] sm:$0xf]
    %v7964 = vld [vmem:[%s7950 + $0x34] sm:$0xf]
    %v7965 = vld [vmem:[%s7950 + $0x38] sm:$0xf]
    %v7966 = vld [vmem:[%s7950 + $0x3c] sm:$0xf]
    %v7983 = vunpack.c.l.b16 %v7951
    %v7984 = vunpack.c.l.b16 %v7952
    %v7985 = vunpack.c.l.b16 %v7953
    %v7986 = vunpack.c.l.b16 %v7954
    %v7987 = vunpack.c.l.b16 %v7955
    %v7988 = vunpack.c.l.b16 %v7956
    %v7989 = vunpack.c.l.b16 %v7957
    %v7990 = vunpack.c.l.b16 %v7958
    %v7991 = vunpack.c.l.b16 %v7959
    %v7992 = vunpack.c.l.b16 %v7960
    %v7993 = vunpack.c.l.b16 %v7961
    %v7994 = vunpack.c.l.b16 %v7962
    %v7995 = vunpack.c.l.b16 %v7963
    %v7996 = vunpack.c.l.b16 %v7964
    %v7997 = vunpack.c.l.b16 %v7965
    %v7998 = vunpack.c.l.b16 %v7966
    %v7999 = vpack.c.b16 %v7984, %v7983
    %v8000 = vpack.c.b16 %v7986, %v7985
    %v8001 = vpack.c.b16 %v7988, %v7987
    %v8002 = vpack.c.b16 %v7990, %v7989
    %v8003 = vpack.c.b16 %v7992, %v7991
    %v8004 = vpack.c.b16 %v7994, %v7993
    %v8005 = vpack.c.b16 %v7996, %v7995
    %v8006 = vpack.c.b16 %v7998, %v7997
    %8015 = vmatpush.bf16.msra.mxu0 %v8006
    %8016 = vmatpush.bf16.msra.mxu0 %v8005
    %8017 = vmatpush.bf16.msra.mxu0 %v8004
    %8018 = vmatpush.bf16.msra.mxu0 %v8003
    %8019 = vmatpush.bf16.msra.mxu0 %v8002
    %8020 = vmatpush.bf16.msra.mxu0 %v8001
    %8021 = vmatpush.bf16.msra.mxu0 %v8000
    %8022 = vmatpush.bf16.msra.mxu0 %v7999
    %8023 = vmatmul.bf16.gmra.mxu0 %v7942
    %v8024 = vpop.f32.mrf.mxu0
    %v8025 = vadd.f32 0.0, %v8024
    %v8026 = vpop.f32.mrf.mxu0
    %v8027 = vadd.f32 0.0, %v8026
    %8028 = vmatmul.bf16.gmra.mxu0 %v7943
    %v8029 = vpop.f32.mrf.mxu0
    %v8030 = vadd.f32 0.0, %v8029
    %v8031 = vpop.f32.mrf.mxu0
    %v8032 = vadd.f32 0.0, %v8031
    %8033 = vmatmul.bf16.gmra.mxu0 %v7944
    %v8034 = vpop.f32.mrf.mxu0
    %v8035 = vadd.f32 0.0, %v8034
    %v8036 = vpop.f32.mrf.mxu0
    %v8037 = vadd.f32 0.0, %v8036
    %8038 = vmatmul.bf16.gmra.mxu0 %v7945
    %v8039 = vpop.f32.mrf.mxu0
    %v8040 = vadd.f32 0.0, %v8039
    %v8041 = vpop.f32.mrf.mxu0
    %v8042 = vadd.f32 0.0, %v8041
    %8043 = vmatmul.bf16.gmra.mxu0 %v7946
    %v8044 = vpop.f32.mrf.mxu0
    %v8045 = vadd.f32 0.0, %v8044
    %v8046 = vpop.f32.mrf.mxu0
    %v8047 = vadd.f32 0.0, %v8046
    %8048 = vmatmul.bf16.gmra.mxu0 %v7947
    %v8049 = vpop.f32.mrf.mxu0
    %v8050 = vadd.f32 0.0, %v8049
    %v8051 = vpop.f32.mrf.mxu0
    %v8052 = vadd.f32 0.0, %v8051
    %8053 = vmatmul.bf16.gmra.mxu0 %v7948
    %v8054 = vpop.f32.mrf.mxu0
    %v8055 = vadd.f32 0.0, %v8054
    %v8056 = vpop.f32.mrf.mxu0
    %v8057 = vadd.f32 0.0, %v8056
    %8058 = vmatmul.bf16.gmra.mxu0 %v7949
    %v8059 = vpop.f32.mrf.mxu0
    %v8060 = vadd.f32 0.0, %v8059
    %v8061 = vpop.f32.mrf.mxu0
    %v8062 = vadd.f32 0.0, %v8061
    %8063 = vdwg.mxu0
    %v8064 = vld [vmem:[%s1149] sm:$0xff]
    %v8065 = vld [vmem:[%s1149 + $0x8] sm:$0xff]
    %v8066 = vld [vmem:[%s1149 + $0x10] sm:$0xff]
    %v8067 = vld [vmem:[%s1149 + $0x18] sm:$0xff]
    %v8068 = vld [vmem:[%s1149 + $0x20] sm:$0xff]
    %v8069 = vld [vmem:[%s1149 + $0x28] sm:$0xff]
    %v8070 = vld [vmem:[%s1149 + $0x30] sm:$0xff]
    %v8071 = vld [vmem:[%s1149 + $0x38] sm:$0xff]
    %v8072 = vld [vmem:[%s1149 + $0x40] sm:$0xff]
    %v8073 = vld [vmem:[%s1149 + $0x48] sm:$0xff]
    %v8074 = vld [vmem:[%s1149 + $0x50] sm:$0xff]
    %v8075 = vld [vmem:[%s1149 + $0x58] sm:$0xff]
    %v8076 = vld [vmem:[%s1149 + $0x60] sm:$0xff]
    %v8077 = vld [vmem:[%s1149 + $0x68] sm:$0xff]
    %v8078 = vld [vmem:[%s1149 + $0x70] sm:$0xff]
    %v8079 = vld [vmem:[%s1149 + $0x78] sm:$0xff]
    %v8080 = vmul.f32 %v8064, %v8025
    %v8081 = vmul.f32 %v8065, %v8027
    %v8082 = vmul.f32 %v8066, %v8030
    %v8083 = vmul.f32 %v8067, %v8032
    %v8084 = vmul.f32 %v8068, %v8035
    %v8085 = vmul.f32 %v8069, %v8037
    %v8086 = vmul.f32 %v8070, %v8040
    %v8087 = vmul.f32 %v8071, %v8042
    %v8088 = vmul.f32 %v8072, %v8045
    %v8089 = vmul.f32 %v8073, %v8047
    %v8090 = vmul.f32 %v8074, %v8050
    %v8091 = vmul.f32 %v8075, %v8052
    %v8092 = vmul.f32 %v8076, %v8055
    %v8093 = vmul.f32 %v8077, %v8057
    %v8094 = vmul.f32 %v8078, %v8060
    %v8095 = vmul.f32 %v8079, %v8062
    %v8096 = vadd.f32 %v7910, %v8080
    %v8097 = vadd.f32 %v7911, %v8081
    %v8098 = vadd.f32 %v7912, %v8082
    %v8099 = vadd.f32 %v7913, %v8083
    %v8100 = vadd.f32 %v7914, %v8084
    %v8101 = vadd.f32 %v7915, %v8085
    %v8102 = vadd.f32 %v7916, %v8086
    %v8103 = vadd.f32 %v7917, %v8087
    %v8104 = vadd.f32 %v7918, %v8088
    %v8105 = vadd.f32 %v7919, %v8089
    %v8106 = vadd.f32 %v7920, %v8090
    %v8107 = vadd.f32 %v7921, %v8091
    %v8108 = vadd.f32 %v7922, %v8092
    %v8109 = vadd.f32 %v7923, %v8093
    %v8110 = vadd.f32 %v7924, %v8094
    %v8111 = vadd.f32 %v7925, %v8095
    %v8112 = vld [vmem:[#allocation2 + $0x9] sm:$0xff]
    %v8113 = vld [vmem:[#allocation2 + $0x11] sm:$0xff]
    %v8114 = vld [vmem:[#allocation2 + $0x19] sm:$0xff]
    %v8115 = vld [vmem:[#allocation2 + $0x21] sm:$0xff]
    %v8116 = vld [vmem:[#allocation2 + $0x29] sm:$0xff]
    %v8117 = vld [vmem:[#allocation2 + $0x31] sm:$0xff]
    %v8118 = vld [vmem:[#allocation2 + $0x39] sm:$0xff]
    %v8119 = vld [vmem:[#allocation2 + $0x41] sm:$0xff]
    %v8120 = vld [vmem:[#allocation2 + $0x49] sm:$0xff]
    %v8121 = vld [vmem:[#allocation2 + $0x51] sm:$0xff]
    %v8122 = vld [vmem:[#allocation2 + $0x59] sm:$0xff]
    %v8123 = vld [vmem:[#allocation2 + $0x61] sm:$0xff]
    %v8124 = vld [vmem:[#allocation2 + $0x69] sm:$0xff]
    %v8125 = vld [vmem:[#allocation2 + $0x71] sm:$0xff]
    %v8126 = vld [vmem:[#allocation2 + $0x79] sm:$0xff]
    %v8127 = vld [vmem:[#allocation2 + $0x81] sm:$0xff]
    %v8128 = vpack.c.bf16 %v8113, %v8112
    %v8129 = vpack.c.bf16 %v8115, %v8114
    %v8130 = vpack.c.bf16 %v8117, %v8116
    %v8131 = vpack.c.bf16 %v8119, %v8118
    %v8132 = vpack.c.bf16 %v8121, %v8120
    %v8133 = vpack.c.bf16 %v8123, %v8122
    %v8134 = vpack.c.bf16 %v8125, %v8124
    %v8135 = vpack.c.bf16 %v8127, %v8126
    %s8136 = scalar_lea.vmem [#allocation11], 2432
    %v8137 = vld [vmem:[%s8136] sm:$0xf]
    %v8138 = vld [vmem:[%s8136 + $0x4] sm:$0xf]
    %v8139 = vld [vmem:[%s8136 + $0x8] sm:$0xf]
    %v8140 = vld [vmem:[%s8136 + $0xc] sm:$0xf]
    %v8141 = vld [vmem:[%s8136 + $0x10] sm:$0xf]
    %v8142 = vld [vmem:[%s8136 + $0x14] sm:$0xf]
    %v8143 = vld [vmem:[%s8136 + $0x18] sm:$0xf]
    %v8144 = vld [vmem:[%s8136 + $0x1c] sm:$0xf]
    %v8145 = vld [vmem:[%s8136 + $0x20] sm:$0xf]
    %v8146 = vld [vmem:[%s8136 + $0x24] sm:$0xf]
    %v8147 = vld [vmem:[%s8136 + $0x28] sm:$0xf]
    %v8148 = vld [vmem:[%s8136 + $0x2c] sm:$0xf]
    %v8149 = vld [vmem:[%s8136 + $0x30] sm:$0xf]
    %v8150 = vld [vmem:[%s8136 + $0x34] sm:$0xf]
    %v8151 = vld [vmem:[%s8136 + $0x38] sm:$0xf]
    %v8152 = vld [vmem:[%s8136 + $0x3c] sm:$0xf]
    %v8169 = vunpack.c.l.b16 %v8137
    %v8170 = vunpack.c.l.b16 %v8138
    %v8171 = vunpack.c.l.b16 %v8139
    %v8172 = vunpack.c.l.b16 %v8140
    %v8173 = vunpack.c.l.b16 %v8141
    %v8174 = vunpack.c.l.b16 %v8142
    %v8175 = vunpack.c.l.b16 %v8143
    %v8176 = vunpack.c.l.b16 %v8144
    %v8177 = vunpack.c.l.b16 %v8145
    %v8178 = vunpack.c.l.b16 %v8146
    %v8179 = vunpack.c.l.b16 %v8147
    %v8180 = vunpack.c.l.b16 %v8148
    %v8181 = vunpack.c.l.b16 %v8149
    %v8182 = vunpack.c.l.b16 %v8150
    %v8183 = vunpack.c.l.b16 %v8151
    %v8184 = vunpack.c.l.b16 %v8152
    %v8185 = vpack.c.b16 %v8170, %v8169
    %v8186 = vpack.c.b16 %v8172, %v8171
    %v8187 = vpack.c.b16 %v8174, %v8173
    %v8188 = vpack.c.b16 %v8176, %v8175
    %v8189 = vpack.c.b16 %v8178, %v8177
    %v8190 = vpack.c.b16 %v8180, %v8179
    %v8191 = vpack.c.b16 %v8182, %v8181
    %v8192 = vpack.c.b16 %v8184, %v8183
    %8201 = vmatpush.bf16.msra.mxu0 %v8192
    %8202 = vmatpush.bf16.msra.mxu0 %v8191
    %8203 = vmatpush.bf16.msra.mxu0 %v8190
    %8204 = vmatpush.bf16.msra.mxu0 %v8189
    %8205 = vmatpush.bf16.msra.mxu0 %v8188
    %8206 = vmatpush.bf16.msra.mxu0 %v8187
    %8207 = vmatpush.bf16.msra.mxu0 %v8186
    %8208 = vmatpush.bf16.msra.mxu0 %v8185
    %8209 = vmatmul.bf16.gmra.mxu0 %v8128
    %v8210 = vpop.f32.mrf.mxu0
    %v8211 = vadd.f32 0.0, %v8210
    %v8212 = vpop.f32.mrf.mxu0
    %v8213 = vadd.f32 0.0, %v8212
    %8214 = vmatmul.bf16.gmra.mxu0 %v8129
    %v8215 = vpop.f32.mrf.mxu0
    %v8216 = vadd.f32 0.0, %v8215
    %v8217 = vpop.f32.mrf.mxu0
    %v8218 = vadd.f32 0.0, %v8217
    %8219 = vmatmul.bf16.gmra.mxu0 %v8130
    %v8220 = vpop.f32.mrf.mxu0
    %v8221 = vadd.f32 0.0, %v8220
    %v8222 = vpop.f32.mrf.mxu0
    %v8223 = vadd.f32 0.0, %v8222
    %8224 = vmatmul.bf16.gmra.mxu0 %v8131
    %v8225 = vpop.f32.mrf.mxu0
    %v8226 = vadd.f32 0.0, %v8225
    %v8227 = vpop.f32.mrf.mxu0
    %v8228 = vadd.f32 0.0, %v8227
    %8229 = vmatmul.bf16.gmra.mxu0 %v8132
    %v8230 = vpop.f32.mrf.mxu0
    %v8231 = vadd.f32 0.0, %v8230
    %v8232 = vpop.f32.mrf.mxu0
    %v8233 = vadd.f32 0.0, %v8232
    %8234 = vmatmul.bf16.gmra.mxu0 %v8133
    %v8235 = vpop.f32.mrf.mxu0
    %v8236 = vadd.f32 0.0, %v8235
    %v8237 = vpop.f32.mrf.mxu0
    %v8238 = vadd.f32 0.0, %v8237
    %8239 = vmatmul.bf16.gmra.mxu0 %v8134
    %v8240 = vpop.f32.mrf.mxu0
    %v8241 = vadd.f32 0.0, %v8240
    %v8242 = vpop.f32.mrf.mxu0
    %v8243 = vadd.f32 0.0, %v8242
    %8244 = vmatmul.bf16.gmra.mxu0 %v8135
    %v8245 = vpop.f32.mrf.mxu0
    %v8246 = vadd.f32 0.0, %v8245
    %v8247 = vpop.f32.mrf.mxu0
    %v8248 = vadd.f32 0.0, %v8247
    %8249 = vdwg.mxu0
    %v8250 = vld [vmem:[%s1336] sm:$0xff]
    %v8251 = vld [vmem:[%s1336 + $0x8] sm:$0xff]
    %v8252 = vld [vmem:[%s1336 + $0x10] sm:$0xff]
    %v8253 = vld [vmem:[%s1336 + $0x18] sm:$0xff]
    %v8254 = vld [vmem:[%s1336 + $0x20] sm:$0xff]
    %v8255 = vld [vmem:[%s1336 + $0x28] sm:$0xff]
    %v8256 = vld [vmem:[%s1336 + $0x30] sm:$0xff]
    %v8257 = vld [vmem:[%s1336 + $0x38] sm:$0xff]
    %v8258 = vld [vmem:[%s1336 + $0x40] sm:$0xff]
    %v8259 = vld [vmem:[%s1336 + $0x48] sm:$0xff]
    %v8260 = vld [vmem:[%s1336 + $0x50] sm:$0xff]
    %v8261 = vld [vmem:[%s1336 + $0x58] sm:$0xff]
    %v8262 = vld [vmem:[%s1336 + $0x60] sm:$0xff]
    %v8263 = vld [vmem:[%s1336 + $0x68] sm:$0xff]
    %v8264 = vld [vmem:[%s1336 + $0x70] sm:$0xff]
    %v8265 = vld [vmem:[%s1336 + $0x78] sm:$0xff]
    %v8266 = vmul.f32 %v8250, %v8211
    %v8267 = vmul.f32 %v8251, %v8213
    %v8268 = vmul.f32 %v8252, %v8216
    %v8269 = vmul.f32 %v8253, %v8218
    %v8270 = vmul.f32 %v8254, %v8221
    %v8271 = vmul.f32 %v8255, %v8223
    %v8272 = vmul.f32 %v8256, %v8226
    %v8273 = vmul.f32 %v8257, %v8228
    %v8274 = vmul.f32 %v8258, %v8231
    %v8275 = vmul.f32 %v8259, %v8233
    %v8276 = vmul.f32 %v8260, %v8236
    %v8277 = vmul.f32 %v8261, %v8238
    %v8278 = vmul.f32 %v8262, %v8241
    %v8279 = vmul.f32 %v8263, %v8243
    %v8280 = vmul.f32 %v8264, %v8246
    %v8281 = vmul.f32 %v8265, %v8248
    %v8282 = vadd.f32 %v8096, %v8266
    %v8283 = vadd.f32 %v8097, %v8267
    %v8284 = vadd.f32 %v8098, %v8268
    %v8285 = vadd.f32 %v8099, %v8269
    %v8286 = vadd.f32 %v8100, %v8270
    %v8287 = vadd.f32 %v8101, %v8271
    %v8288 = vadd.f32 %v8102, %v8272
    %v8289 = vadd.f32 %v8103, %v8273
    %v8290 = vadd.f32 %v8104, %v8274
    %v8291 = vadd.f32 %v8105, %v8275
    %v8292 = vadd.f32 %v8106, %v8276
    %v8293 = vadd.f32 %v8107, %v8277
    %v8294 = vadd.f32 %v8108, %v8278
    %v8295 = vadd.f32 %v8109, %v8279
    %v8296 = vadd.f32 %v8110, %v8280
    %v8297 = vadd.f32 %v8111, %v8281
    %v8298 = vld [vmem:[#allocation2 + $0xf] sm:$0xff]
    %v8299 = vld [vmem:[#allocation2 + $0x17] sm:$0xff]
    %v8300 = vld [vmem:[#allocation2 + $0x1f] sm:$0xff]
    %v8301 = vld [vmem:[#allocation2 + $0x27] sm:$0xff]
    %v8302 = vld [vmem:[#allocation2 + $0x2f] sm:$0xff]
    %v8303 = vld [vmem:[#allocation2 + $0x37] sm:$0xff]
    %v8304 = vld [vmem:[#allocation2 + $0x3f] sm:$0xff]
    %v8305 = vld [vmem:[#allocation2 + $0x47] sm:$0xff]
    %v8306 = vld [vmem:[#allocation2 + $0x4f] sm:$0xff]
    %v8307 = vld [vmem:[#allocation2 + $0x57] sm:$0xff]
    %v8308 = vld [vmem:[#allocation2 + $0x5f] sm:$0xff]
    %v8309 = vld [vmem:[#allocation2 + $0x67] sm:$0xff]
    %v8310 = vld [vmem:[#allocation2 + $0x6f] sm:$0xff]
    %v8311 = vld [vmem:[#allocation2 + $0x77] sm:$0xff]
    %v8312 = vld [vmem:[#allocation2 + $0x7f] sm:$0xff]
    %v8313 = vld [vmem:[#allocation2 + $0x87] sm:$0xff]
    %v8314 = vpack.c.bf16 %v8299, %v8298
    %v8315 = vpack.c.bf16 %v8301, %v8300
    %v8316 = vpack.c.bf16 %v8303, %v8302
    %v8317 = vpack.c.bf16 %v8305, %v8304
    %v8318 = vpack.c.bf16 %v8307, %v8306
    %v8319 = vpack.c.bf16 %v8309, %v8308
    %v8320 = vpack.c.bf16 %v8311, %v8310
    %v8321 = vpack.c.bf16 %v8313, %v8312
    %s8322 = scalar_lea.vmem [#allocation11], 2496
    %v8323 = vld [vmem:[%s8322] sm:$0xf]
    %v8324 = vld [vmem:[%s8322 + $0x4] sm:$0xf]
    %v8325 = vld [vmem:[%s8322 + $0x8] sm:$0xf]
    %v8326 = vld [vmem:[%s8322 + $0xc] sm:$0xf]
    %v8327 = vld [vmem:[%s8322 + $0x10] sm:$0xf]
    %v8328 = vld [vmem:[%s8322 + $0x14] sm:$0xf]
    %v8329 = vld [vmem:[%s8322 + $0x18] sm:$0xf]
    %v8330 = vld [vmem:[%s8322 + $0x1c] sm:$0xf]
    %v8331 = vld [vmem:[%s8322 + $0x20] sm:$0xf]
    %v8332 = vld [vmem:[%s8322 + $0x24] sm:$0xf]
    %v8333 = vld [vmem:[%s8322 + $0x28] sm:$0xf]
    %v8334 = vld [vmem:[%s8322 + $0x2c] sm:$0xf]
    %v8335 = vld [vmem:[%s8322 + $0x30] sm:$0xf]
    %v8336 = vld [vmem:[%s8322 + $0x34] sm:$0xf]
    %v8337 = vld [vmem:[%s8322 + $0x38] sm:$0xf]
    %v8338 = vld [vmem:[%s8322 + $0x3c] sm:$0xf]
    %v8355 = vunpack.c.l.b16 %v8323
    %v8356 = vunpack.c.l.b16 %v8324
    %v8357 = vunpack.c.l.b16 %v8325
    %v8358 = vunpack.c.l.b16 %v8326
    %v8359 = vunpack.c.l.b16 %v8327
    %v8360 = vunpack.c.l.b16 %v8328
    %v8361 = vunpack.c.l.b16 %v8329
    %v8362 = vunpack.c.l.b16 %v8330
    %v8363 = vunpack.c.l.b16 %v8331
    %v8364 = vunpack.c.l.b16 %v8332
    %v8365 = vunpack.c.l.b16 %v8333
    %v8366 = vunpack.c.l.b16 %v8334
    %v8367 = vunpack.c.l.b16 %v8335
    %v8368 = vunpack.c.l.b16 %v8336
    %v8369 = vunpack.c.l.b16 %v8337
    %v8370 = vunpack.c.l.b16 %v8338
    %v8371 = vpack.c.b16 %v8356, %v8355
    %v8372 = vpack.c.b16 %v8358, %v8357
    %v8373 = vpack.c.b16 %v8360, %v8359
    %v8374 = vpack.c.b16 %v8362, %v8361
    %v8375 = vpack.c.b16 %v8364, %v8363
    %v8376 = vpack.c.b16 %v8366, %v8365
    %v8377 = vpack.c.b16 %v8368, %v8367
    %v8378 = vpack.c.b16 %v8370, %v8369
    %8387 = vmatpush.bf16.msra.mxu0 %v8378
    %8388 = vmatpush.bf16.msra.mxu0 %v8377
    %8389 = vmatpush.bf16.msra.mxu0 %v8376
    %8390 = vmatpush.bf16.msra.mxu0 %v8375
    %8391 = vmatpush.bf16.msra.mxu0 %v8374
    %8392 = vmatpush.bf16.msra.mxu0 %v8373
    %8393 = vmatpush.bf16.msra.mxu0 %v8372
    %8394 = vmatpush.bf16.msra.mxu0 %v8371
    %8395 = vmatmul.bf16.gmra.mxu0 %v8314
    %v8396 = vpop.f32.mrf.mxu0
    %v8397 = vadd.f32 0.0, %v8396
    %v8398 = vpop.f32.mrf.mxu0
    %v8399 = vadd.f32 0.0, %v8398
    %8400 = vmatmul.bf16.gmra.mxu0 %v8315
    %v8401 = vpop.f32.mrf.mxu0
    %v8402 = vadd.f32 0.0, %v8401
    %v8403 = vpop.f32.mrf.mxu0
    %v8404 = vadd.f32 0.0, %v8403
    %8405 = vmatmul.bf16.gmra.mxu0 %v8316
    %v8406 = vpop.f32.mrf.mxu0
    %v8407 = vadd.f32 0.0, %v8406
    %v8408 = vpop.f32.mrf.mxu0
    %v8409 = vadd.f32 0.0, %v8408
    %8410 = vmatmul.bf16.gmra.mxu0 %v8317
    %v8411 = vpop.f32.mrf.mxu0
    %v8412 = vadd.f32 0.0, %v8411
    %v8413 = vpop.f32.mrf.mxu0
    %v8414 = vadd.f32 0.0, %v8413
    %8415 = vmatmul.bf16.gmra.mxu0 %v8318
    %v8416 = vpop.f32.mrf.mxu0
    %v8417 = vadd.f32 0.0, %v8416
    %v8418 = vpop.f32.mrf.mxu0
    %v8419 = vadd.f32 0.0, %v8418
    %8420 = vmatmul.bf16.gmra.mxu0 %v8319
    %v8421 = vpop.f32.mrf.mxu0
    %v8422 = vadd.f32 0.0, %v8421
    %v8423 = vpop.f32.mrf.mxu0
    %v8424 = vadd.f32 0.0, %v8423
    %8425 = vmatmul.bf16.gmra.mxu0 %v8320
    %v8426 = vpop.f32.mrf.mxu0
    %v8427 = vadd.f32 0.0, %v8426
    %v8428 = vpop.f32.mrf.mxu0
    %v8429 = vadd.f32 0.0, %v8428
    %8430 = vmatmul.bf16.gmra.mxu0 %v8321
    %v8431 = vpop.f32.mrf.mxu0
    %v8432 = vadd.f32 0.0, %v8431
    %v8433 = vpop.f32.mrf.mxu0
    %v8434 = vadd.f32 0.0, %v8433
    %8435 = vdwg.mxu0
    %v8436 = vld [vmem:[%s1523] sm:$0xff]
    %v8437 = vld [vmem:[%s1523 + $0x8] sm:$0xff]
    %v8438 = vld [vmem:[%s1523 + $0x10] sm:$0xff]
    %v8439 = vld [vmem:[%s1523 + $0x18] sm:$0xff]
    %v8440 = vld [vmem:[%s1523 + $0x20] sm:$0xff]
    %v8441 = vld [vmem:[%s1523 + $0x28] sm:$0xff]
    %v8442 = vld [vmem:[%s1523 + $0x30] sm:$0xff]
    %v8443 = vld [vmem:[%s1523 + $0x38] sm:$0xff]
    %v8444 = vld [vmem:[%s1523 + $0x40] sm:$0xff]
    %v8445 = vld [vmem:[%s1523 + $0x48] sm:$0xff]
    %v8446 = vld [vmem:[%s1523 + $0x50] sm:$0xff]
    %v8447 = vld [vmem:[%s1523 + $0x58] sm:$0xff]
    %v8448 = vld [vmem:[%s1523 + $0x60] sm:$0xff]
    %v8449 = vld [vmem:[%s1523 + $0x68] sm:$0xff]
    %v8450 = vld [vmem:[%s1523 + $0x70] sm:$0xff]
    %v8451 = vld [vmem:[%s1523 + $0x78] sm:$0xff]
    %v8452 = vmul.f32 %v8436, %v8397
    %v8453 = vmul.f32 %v8437, %v8399
    %v8454 = vmul.f32 %v8438, %v8402
    %v8455 = vmul.f32 %v8439, %v8404
    %v8456 = vmul.f32 %v8440, %v8407
    %v8457 = vmul.f32 %v8441, %v8409
    %v8458 = vmul.f32 %v8442, %v8412
    %v8459 = vmul.f32 %v8443, %v8414
    %v8460 = vmul.f32 %v8444, %v8417
    %v8461 = vmul.f32 %v8445, %v8419
    %v8462 = vmul.f32 %v8446, %v8422
    %v8463 = vmul.f32 %v8447, %v8424
    %v8464 = vmul.f32 %v8448, %v8427
    %v8465 = vmul.f32 %v8449, %v8429
    %v8466 = vmul.f32 %v8450, %v8432
    %v8467 = vmul.f32 %v8451, %v8434
    %v8468 = vadd.f32 %v8282, %v8452
    %v8469 = vadd.f32 %v8283, %v8453
    %v8470 = vadd.f32 %v8284, %v8454
    %v8471 = vadd.f32 %v8285, %v8455
    %v8472 = vadd.f32 %v8286, %v8456
    %v8473 = vadd.f32 %v8287, %v8457
    %v8474 = vadd.f32 %v8288, %v8458
    %v8475 = vadd.f32 %v8289, %v8459
    %v8476 = vadd.f32 %v8290, %v8460
    %v8477 = vadd.f32 %v8291, %v8461
    %v8478 = vadd.f32 %v8292, %v8462
    %v8479 = vadd.f32 %v8293, %v8463
    %v8480 = vadd.f32 %v8294, %v8464
    %v8481 = vadd.f32 %v8295, %v8465
    %v8482 = vadd.f32 %v8296, %v8466
    %v8483 = vadd.f32 %v8297, %v8467
    %v8484 = vld [vmem:[#allocation2 + $0x10] sm:$0xff]
    %v8485 = vld [vmem:[#allocation2 + $0x18] sm:$0xff]
    %v8486 = vld [vmem:[#allocation2 + $0x20] sm:$0xff]
    %v8487 = vld [vmem:[#allocation2 + $0x28] sm:$0xff]
    %v8488 = vld [vmem:[#allocation2 + $0x30] sm:$0xff]
    %v8489 = vld [vmem:[#allocation2 + $0x38] sm:$0xff]
    %v8490 = vld [vmem:[#allocation2 + $0x40] sm:$0xff]
    %v8491 = vld [vmem:[#allocation2 + $0x48] sm:$0xff]
    %v8492 = vld [vmem:[#allocation2 + $0x50] sm:$0xff]
    %v8493 = vld [vmem:[#allocation2 + $0x58] sm:$0xff]
    %v8494 = vld [vmem:[#allocation2 + $0x60] sm:$0xff]
    %v8495 = vld [vmem:[#allocation2 + $0x68] sm:$0xff]
    %v8496 = vld [vmem:[#allocation2 + $0x70] sm:$0xff]
    %v8497 = vld [vmem:[#allocation2 + $0x78] sm:$0xff]
    %v8498 = vld [vmem:[#allocation2 + $0x80] sm:$0xff]
    %v8499 = vld [vmem:[#allocation2 + $0x88] sm:$0xff]
    %v8500 = vpack.c.bf16 %v8485, %v8484
    %v8501 = vpack.c.bf16 %v8487, %v8486
    %v8502 = vpack.c.bf16 %v8489, %v8488
    %v8503 = vpack.c.bf16 %v8491, %v8490
    %v8504 = vpack.c.bf16 %v8493, %v8492
    %v8505 = vpack.c.bf16 %v8495, %v8494
    %v8506 = vpack.c.bf16 %v8497, %v8496
    %v8507 = vpack.c.bf16 %v8499, %v8498
    %s8508 = scalar_lea.vmem [#allocation11], 2560
    %v8509 = vld [vmem:[%s8508] sm:$0xf]
    %v8510 = vld [vmem:[%s8508 + $0x4] sm:$0xf]
    %v8511 = vld [vmem:[%s8508 + $0x8] sm:$0xf]
    %v8512 = vld [vmem:[%s8508 + $0xc] sm:$0xf]
    %v8513 = vld [vmem:[%s8508 + $0x10] sm:$0xf]
    %v8514 = vld [vmem:[%s8508 + $0x14] sm:$0xf]
    %v8515 = vld [vmem:[%s8508 + $0x18] sm:$0xf]
    %v8516 = vld [vmem:[%s8508 + $0x1c] sm:$0xf]
    %v8517 = vld [vmem:[%s8508 + $0x20] sm:$0xf]
    %v8518 = vld [vmem:[%s8508 + $0x24] sm:$0xf]
    %v8519 = vld [vmem:[%s8508 + $0x28] sm:$0xf]
    %v8520 = vld [vmem:[%s8508 + $0x2c] sm:$0xf]
    %v8521 = vld [vmem:[%s8508 + $0x30] sm:$0xf]
    %v8522 = vld [vmem:[%s8508 + $0x34] sm:$0xf]
    %v8523 = vld [vmem:[%s8508 + $0x38] sm:$0xf]
    %v8524 = vld [vmem:[%s8508 + $0x3c] sm:$0xf]
    %v8541 = vunpack.c.l.b16 %v8509
    %v8542 = vunpack.c.l.b16 %v8510
    %v8543 = vunpack.c.l.b16 %v8511
    %v8544 = vunpack.c.l.b16 %v8512
    %v8545 = vunpack.c.l.b16 %v8513
    %v8546 = vunpack.c.l.b16 %v8514
    %v8547 = vunpack.c.l.b16 %v8515
    %v8548 = vunpack.c.l.b16 %v8516
    %v8549 = vunpack.c.l.b16 %v8517
    %v8550 = vunpack.c.l.b16 %v8518
    %v8551 = vunpack.c.l.b16 %v8519
    %v8552 = vunpack.c.l.b16 %v8520
    %v8553 = vunpack.c.l.b16 %v8521
    %v8554 = vunpack.c.l.b16 %v8522
    %v8555 = vunpack.c.l.b16 %v8523
    %v8556 = vunpack.c.l.b16 %v8524
    %v8557 = vpack.c.b16 %v8542, %v8541
    %v8558 = vpack.c.b16 %v8544, %v8543
    %v8559 = vpack.c.b16 %v8546, %v8545
    %v8560 = vpack.c.b16 %v8548, %v8547
    %v8561 = vpack.c.b16 %v8550, %v8549
    %v8562 = vpack.c.b16 %v8552, %v8551
    %v8563 = vpack.c.b16 %v8554, %v8553
    %v8564 = vpack.c.b16 %v8556, %v8555
    %8573 = vmatpush.bf16.msra.mxu0 %v8564
    %8574 = vmatpush.bf16.msra.mxu0 %v8563
    %8575 = vmatpush.bf16.msra.mxu0 %v8562
    %8576 = vmatpush.bf16.msra.mxu0 %v8561
    %8577 = vmatpush.bf16.msra.mxu0 %v8560
    %8578 = vmatpush.bf16.msra.mxu0 %v8559
    %8579 = vmatpush.bf16.msra.mxu0 %v8558
    %8580 = vmatpush.bf16.msra.mxu0 %v8557
    %8581 = vmatmul.bf16.gmra.mxu0 %v8500
    %v8582 = vpop.f32.mrf.mxu0
    %v8583 = vadd.f32 0.0, %v8582
    %v8584 = vpop.f32.mrf.mxu0
    %v8585 = vadd.f32 0.0, %v8584
    %8586 = vmatmul.bf16.gmra.mxu0 %v8501
    %v8587 = vpop.f32.mrf.mxu0
    %v8588 = vadd.f32 0.0, %v8587
    %v8589 = vpop.f32.mrf.mxu0
    %v8590 = vadd.f32 0.0, %v8589
    %8591 = vmatmul.bf16.gmra.mxu0 %v8502
    %v8592 = vpop.f32.mrf.mxu0
    %v8593 = vadd.f32 0.0, %v8592
    %v8594 = vpop.f32.mrf.mxu0
    %v8595 = vadd.f32 0.0, %v8594
    %8596 = vmatmul.bf16.gmra.mxu0 %v8503
    %v8597 = vpop.f32.mrf.mxu0
    %v8598 = vadd.f32 0.0, %v8597
    %v8599 = vpop.f32.mrf.mxu0
    %v8600 = vadd.f32 0.0, %v8599
    %8601 = vmatmul.bf16.gmra.mxu0 %v8504
    %v8602 = vpop.f32.mrf.mxu0
    %v8603 = vadd.f32 0.0, %v8602
    %v8604 = vpop.f32.mrf.mxu0
    %v8605 = vadd.f32 0.0, %v8604
    %8606 = vmatmul.bf16.gmra.mxu0 %v8505
    %v8607 = vpop.f32.mrf.mxu0
    %v8608 = vadd.f32 0.0, %v8607
    %v8609 = vpop.f32.mrf.mxu0
    %v8610 = vadd.f32 0.0, %v8609
    %8611 = vmatmul.bf16.gmra.mxu0 %v8506
    %v8612 = vpop.f32.mrf.mxu0
    %v8613 = vadd.f32 0.0, %v8612
    %v8614 = vpop.f32.mrf.mxu0
    %v8615 = vadd.f32 0.0, %v8614
    %8616 = vmatmul.bf16.gmra.mxu0 %v8507
    %v8617 = vpop.f32.mrf.mxu0
    %v8618 = vadd.f32 0.0, %v8617
    %v8619 = vpop.f32.mrf.mxu0
    %v8620 = vadd.f32 0.0, %v8619
    %8621 = vdwg.mxu0
    %v8622 = vld [vmem:[%s1710] sm:$0xff]
    %v8623 = vld [vmem:[%s1710 + $0x8] sm:$0xff]
    %v8624 = vld [vmem:[%s1710 + $0x10] sm:$0xff]
    %v8625 = vld [vmem:[%s1710 + $0x18] sm:$0xff]
    %v8626 = vld [vmem:[%s1710 + $0x20] sm:$0xff]
    %v8627 = vld [vmem:[%s1710 + $0x28] sm:$0xff]
    %v8628 = vld [vmem:[%s1710 + $0x30] sm:$0xff]
    %v8629 = vld [vmem:[%s1710 + $0x38] sm:$0xff]
    %v8630 = vld [vmem:[%s1710 + $0x40] sm:$0xff]
    %v8631 = vld [vmem:[%s1710 + $0x48] sm:$0xff]
    %v8632 = vld [vmem:[%s1710 + $0x50] sm:$0xff]
    %v8633 = vld [vmem:[%s1710 + $0x58] sm:$0xff]
    %v8634 = vld [vmem:[%s1710 + $0x60] sm:$0xff]
    %v8635 = vld [vmem:[%s1710 + $0x68] sm:$0xff]
    %v8636 = vld [vmem:[%s1710 + $0x70] sm:$0xff]
    %v8637 = vld [vmem:[%s1710 + $0x78] sm:$0xff]
    %v8638 = vmul.f32 %v8622, %v8583
    %v8639 = vmul.f32 %v8623, %v8585
    %v8640 = vmul.f32 %v8624, %v8588
    %v8641 = vmul.f32 %v8625, %v8590
    %v8642 = vmul.f32 %v8626, %v8593
    %v8643 = vmul.f32 %v8627, %v8595
    %v8644 = vmul.f32 %v8628, %v8598
    %v8645 = vmul.f32 %v8629, %v8600
    %v8646 = vmul.f32 %v8630, %v8603
    %v8647 = vmul.f32 %v8631, %v8605
    %v8648 = vmul.f32 %v8632, %v8608
    %v8649 = vmul.f32 %v8633, %v8610
    %v8650 = vmul.f32 %v8634, %v8613
    %v8651 = vmul.f32 %v8635, %v8615
    %v8652 = vmul.f32 %v8636, %v8618
    %v8653 = vmul.f32 %v8637, %v8620
    %v8654 = vadd.f32 %v8468, %v8638
    %v8655 = vadd.f32 %v8469, %v8639
    %v8656 = vadd.f32 %v8470, %v8640
    %v8657 = vadd.f32 %v8471, %v8641
    %v8658 = vadd.f32 %v8472, %v8642
    %v8659 = vadd.f32 %v8473, %v8643
    %v8660 = vadd.f32 %v8474, %v8644
    %v8661 = vadd.f32 %v8475, %v8645
    %v8662 = vadd.f32 %v8476, %v8646
    %v8663 = vadd.f32 %v8477, %v8647
    %v8664 = vadd.f32 %v8478, %v8648
    %v8665 = vadd.f32 %v8479, %v8649
    %v8666 = vadd.f32 %v8480, %v8650
    %v8667 = vadd.f32 %v8481, %v8651
    %v8668 = vadd.f32 %v8482, %v8652
    %v8669 = vadd.f32 %v8483, %v8653
    %v8670 = vld [vmem:[#allocation2 + $0x11] sm:$0xff]
    %v8671 = vld [vmem:[#allocation2 + $0x19] sm:$0xff]
    %v8672 = vld [vmem:[#allocation2 + $0x21] sm:$0xff]
    %v8673 = vld [vmem:[#allocation2 + $0x29] sm:$0xff]
    %v8674 = vld [vmem:[#allocation2 + $0x31] sm:$0xff]
    %v8675 = vld [vmem:[#allocation2 + $0x39] sm:$0xff]
    %v8676 = vld [vmem:[#allocation2 + $0x41] sm:$0xff]
    %v8677 = vld [vmem:[#allocation2 + $0x49] sm:$0xff]
    %v8678 = vld [vmem:[#allocation2 + $0x51] sm:$0xff]
    %v8679 = vld [vmem:[#allocation2 + $0x59] sm:$0xff]
    %v8680 = vld [vmem:[#allocation2 + $0x61] sm:$0xff]
    %v8681 = vld [vmem:[#allocation2 + $0x69] sm:$0xff]
    %v8682 = vld [vmem:[#allocation2 + $0x71] sm:$0xff]
    %v8683 = vld [vmem:[#allocation2 + $0x79] sm:$0xff]
    %v8684 = vld [vmem:[#allocation2 + $0x81] sm:$0xff]
    %v8685 = vld [vmem:[#allocation2 + $0x89] sm:$0xff]
    %v8686 = vpack.c.bf16 %v8671, %v8670
    %v8687 = vpack.c.bf16 %v8673, %v8672
    %v8688 = vpack.c.bf16 %v8675, %v8674
    %v8689 = vpack.c.bf16 %v8677, %v8676
    %v8690 = vpack.c.bf16 %v8679, %v8678
    %v8691 = vpack.c.bf16 %v8681, %v8680
    %v8692 = vpack.c.bf16 %v8683, %v8682
    %v8693 = vpack.c.bf16 %v8685, %v8684
    %s8694 = scalar_lea.vmem [#allocation11], 2624
    %v8695 = vld [vmem:[%s8694] sm:$0xf]
    %v8696 = vld [vmem:[%s8694 + $0x4] sm:$0xf]
    %v8697 = vld [vmem:[%s8694 + $0x8] sm:$0xf]
    %v8698 = vld [vmem:[%s8694 + $0xc] sm:$0xf]
    %v8699 = vld [vmem:[%s8694 + $0x10] sm:$0xf]
    %v8700 = vld [vmem:[%s8694 + $0x14] sm:$0xf]
    %v8701 = vld [vmem:[%s8694 + $0x18] sm:$0xf]
    %v8702 = vld [vmem:[%s8694 + $0x1c] sm:$0xf]
    %v8703 = vld [vmem:[%s8694 + $0x20] sm:$0xf]
    %v8704 = vld [vmem:[%s8694 + $0x24] sm:$0xf]
    %v8705 = vld [vmem:[%s8694 + $0x28] sm:$0xf]
    %v8706 = vld [vmem:[%s8694 + $0x2c] sm:$0xf]
    %v8707 = vld [vmem:[%s8694 + $0x30] sm:$0xf]
    %v8708 = vld [vmem:[%s8694 + $0x34] sm:$0xf]
    %v8709 = vld [vmem:[%s8694 + $0x38] sm:$0xf]
    %v8710 = vld [vmem:[%s8694 + $0x3c] sm:$0xf]
    %v8727 = vunpack.c.l.b16 %v8695
    %v8728 = vunpack.c.l.b16 %v8696
    %v8729 = vunpack.c.l.b16 %v8697
    %v8730 = vunpack.c.l.b16 %v8698
    %v8731 = vunpack.c.l.b16 %v8699
    %v8732 = vunpack.c.l.b16 %v8700
    %v8733 = vunpack.c.l.b16 %v8701
    %v8734 = vunpack.c.l.b16 %v8702
    %v8735 = vunpack.c.l.b16 %v8703
    %v8736 = vunpack.c.l.b16 %v8704
    %v8737 = vunpack.c.l.b16 %v8705
    %v8738 = vunpack.c.l.b16 %v8706
    %v8739 = vunpack.c.l.b16 %v8707
    %v8740 = vunpack.c.l.b16 %v8708
    %v8741 = vunpack.c.l.b16 %v8709
    %v8742 = vunpack.c.l.b16 %v8710
    %v8743 = vpack.c.b16 %v8728, %v8727
    %v8744 = vpack.c.b16 %v8730, %v8729
    %v8745 = vpack.c.b16 %v8732, %v8731
    %v8746 = vpack.c.b16 %v8734, %v8733
    %v8747 = vpack.c.b16 %v8736, %v8735
    %v8748 = vpack.c.b16 %v8738, %v8737
    %v8749 = vpack.c.b16 %v8740, %v8739
    %v8750 = vpack.c.b16 %v8742, %v8741
    %8759 = vmatpush.bf16.msra.mxu0 %v8750
    %8760 = vmatpush.bf16.msra.mxu0 %v8749
    %8761 = vmatpush.bf16.msra.mxu0 %v8748
    %8762 = vmatpush.bf16.msra.mxu0 %v8747
    %8763 = vmatpush.bf16.msra.mxu0 %v8746
    %8764 = vmatpush.bf16.msra.mxu0 %v8745
    %8765 = vmatpush.bf16.msra.mxu0 %v8744
    %8766 = vmatpush.bf16.msra.mxu0 %v8743
    %8767 = vmatmul.bf16.gmra.mxu0 %v8686
    %v8768 = vpop.f32.mrf.mxu0
    %v8769 = vadd.f32 0.0, %v8768
    %v8770 = vpop.f32.mrf.mxu0
    %v8771 = vadd.f32 0.0, %v8770
    %8772 = vmatmul.bf16.gmra.mxu0 %v8687
    %v8773 = vpop.f32.mrf.mxu0
    %v8774 = vadd.f32 0.0, %v8773
    %v8775 = vpop.f32.mrf.mxu0
    %v8776 = vadd.f32 0.0, %v8775
    %8777 = vmatmul.bf16.gmra.mxu0 %v8688
    %v8778 = vpop.f32.mrf.mxu0
    %v8779 = vadd.f32 0.0, %v8778
    %v8780 = vpop.f32.mrf.mxu0
    %v8781 = vadd.f32 0.0, %v8780
    %8782 = vmatmul.bf16.gmra.mxu0 %v8689
    %v8783 = vpop.f32.mrf.mxu0
    %v8784 = vadd.f32 0.0, %v8783
    %v8785 = vpop.f32.mrf.mxu0
    %v8786 = vadd.f32 0.0, %v8785
    %8787 = vmatmul.bf16.gmra.mxu0 %v8690
    %v8788 = vpop.f32.mrf.mxu0
    %v8789 = vadd.f32 0.0, %v8788
    %v8790 = vpop.f32.mrf.mxu0
    %v8791 = vadd.f32 0.0, %v8790
    %8792 = vmatmul.bf16.gmra.mxu0 %v8691
    %v8793 = vpop.f32.mrf.mxu0
    %v8794 = vadd.f32 0.0, %v8793
    %v8795 = vpop.f32.mrf.mxu0
    %v8796 = vadd.f32 0.0, %v8795
    %8797 = vmatmul.bf16.gmra.mxu0 %v8692
    %v8798 = vpop.f32.mrf.mxu0
    %v8799 = vadd.f32 0.0, %v8798
    %v8800 = vpop.f32.mrf.mxu0
    %v8801 = vadd.f32 0.0, %v8800
    %8802 = vmatmul.bf16.gmra.mxu0 %v8693
    %v8803 = vpop.f32.mrf.mxu0
    %v8804 = vadd.f32 0.0, %v8803
    %v8805 = vpop.f32.mrf.mxu0
    %v8806 = vadd.f32 0.0, %v8805
    %8807 = vdwg.mxu0
    %v8808 = vld [vmem:[%s1897] sm:$0xff]
    %v8809 = vld [vmem:[%s1897 + $0x8] sm:$0xff]
    %v8810 = vld [vmem:[%s1897 + $0x10] sm:$0xff]
    %v8811 = vld [vmem:[%s1897 + $0x18] sm:$0xff]
    %v8812 = vld [vmem:[%s1897 + $0x20] sm:$0xff]
    %v8813 = vld [vmem:[%s1897 + $0x28] sm:$0xff]
    %v8814 = vld [vmem:[%s1897 + $0x30] sm:$0xff]
    %v8815 = vld [vmem:[%s1897 + $0x38] sm:$0xff]
    %v8816 = vld [vmem:[%s1897 + $0x40] sm:$0xff]
    %v8817 = vld [vmem:[%s1897 + $0x48] sm:$0xff]
    %v8818 = vld [vmem:[%s1897 + $0x50] sm:$0xff]
    %v8819 = vld [vmem:[%s1897 + $0x58] sm:$0xff]
    %v8820 = vld [vmem:[%s1897 + $0x60] sm:$0xff]
    %v8821 = vld [vmem:[%s1897 + $0x68] sm:$0xff]
    %v8822 = vld [vmem:[%s1897 + $0x70] sm:$0xff]
    %v8823 = vld [vmem:[%s1897 + $0x78] sm:$0xff]
    %v8824 = vmul.f32 %v8808, %v8769
    %v8825 = vmul.f32 %v8809, %v8771
    %v8826 = vmul.f32 %v8810, %v8774
    %v8827 = vmul.f32 %v8811, %v8776
    %v8828 = vmul.f32 %v8812, %v8779
    %v8829 = vmul.f32 %v8813, %v8781
    %v8830 = vmul.f32 %v8814, %v8784
    %v8831 = vmul.f32 %v8815, %v8786
    %v8832 = vmul.f32 %v8816, %v8789
    %v8833 = vmul.f32 %v8817, %v8791
    %v8834 = vmul.f32 %v8818, %v8794
    %v8835 = vmul.f32 %v8819, %v8796
    %v8836 = vmul.f32 %v8820, %v8799
    %v8837 = vmul.f32 %v8821, %v8801
    %v8838 = vmul.f32 %v8822, %v8804
    %v8839 = vmul.f32 %v8823, %v8806
    %v8840 = vadd.f32 %v8654, %v8824
    %v8841 = vadd.f32 %v8655, %v8825
    %v8842 = vadd.f32 %v8656, %v8826
    %v8843 = vadd.f32 %v8657, %v8827
    %v8844 = vadd.f32 %v8658, %v8828
    %v8845 = vadd.f32 %v8659, %v8829
    %v8846 = vadd.f32 %v8660, %v8830
    %v8847 = vadd.f32 %v8661, %v8831
    %v8848 = vadd.f32 %v8662, %v8832
    %v8849 = vadd.f32 %v8663, %v8833
    %v8850 = vadd.f32 %v8664, %v8834
    %v8851 = vadd.f32 %v8665, %v8835
    %v8852 = vadd.f32 %v8666, %v8836
    %v8853 = vadd.f32 %v8667, %v8837
    %v8854 = vadd.f32 %v8668, %v8838
    %v8855 = vadd.f32 %v8669, %v8839
    %v8856 = vld [vmem:[#allocation2 + $0x17] sm:$0xff]
    %v8857 = vld [vmem:[#allocation2 + $0x1f] sm:$0xff]
    %v8858 = vld [vmem:[#allocation2 + $0x27] sm:$0xff]
    %v8859 = vld [vmem:[#allocation2 + $0x2f] sm:$0xff]
    %v8860 = vld [vmem:[#allocation2 + $0x37] sm:$0xff]
    %v8861 = vld [vmem:[#allocation2 + $0x3f] sm:$0xff]
    %v8862 = vld [vmem:[#allocation2 + $0x47] sm:$0xff]
    %v8863 = vld [vmem:[#allocation2 + $0x4f] sm:$0xff]
    %v8864 = vld [vmem:[#allocation2 + $0x57] sm:$0xff]
    %v8865 = vld [vmem:[#allocation2 + $0x5f] sm:$0xff]
    %v8866 = vld [vmem:[#allocation2 + $0x67] sm:$0xff]
    %v8867 = vld [vmem:[#allocation2 + $0x6f] sm:$0xff]
    %v8868 = vld [vmem:[#allocation2 + $0x77] sm:$0xff]
    %v8869 = vld [vmem:[#allocation2 + $0x7f] sm:$0xff]
    %v8870 = vld [vmem:[#allocation2 + $0x87] sm:$0xff]
    %v8871 = vld [vmem:[#allocation2 + $0x8f] sm:$0xff]
    %v8872 = vpack.c.bf16 %v8857, %v8856
    %v8873 = vpack.c.bf16 %v8859, %v8858
    %v8874 = vpack.c.bf16 %v8861, %v8860
    %v8875 = vpack.c.bf16 %v8863, %v8862
    %v8876 = vpack.c.bf16 %v8865, %v8864
    %v8877 = vpack.c.bf16 %v8867, %v8866
    %v8878 = vpack.c.bf16 %v8869, %v8868
    %v8879 = vpack.c.bf16 %v8871, %v8870
    %s8880 = scalar_lea.vmem [#allocation11], 2688
    %v8881 = vld [vmem:[%s8880] sm:$0xf]
    %v8882 = vld [vmem:[%s8880 + $0x4] sm:$0xf]
    %v8883 = vld [vmem:[%s8880 + $0x8] sm:$0xf]
    %v8884 = vld [vmem:[%s8880 + $0xc] sm:$0xf]
    %v8885 = vld [vmem:[%s8880 + $0x10] sm:$0xf]
    %v8886 = vld [vmem:[%s8880 + $0x14] sm:$0xf]
    %v8887 = vld [vmem:[%s8880 + $0x18] sm:$0xf]
    %v8888 = vld [vmem:[%s8880 + $0x1c] sm:$0xf]
    %v8889 = vld [vmem:[%s8880 + $0x20] sm:$0xf]
    %v8890 = vld [vmem:[%s8880 + $0x24] sm:$0xf]
    %v8891 = vld [vmem:[%s8880 + $0x28] sm:$0xf]
    %v8892 = vld [vmem:[%s8880 + $0x2c] sm:$0xf]
    %v8893 = vld [vmem:[%s8880 + $0x30] sm:$0xf]
    %v8894 = vld [vmem:[%s8880 + $0x34] sm:$0xf]
    %v8895 = vld [vmem:[%s8880 + $0x38] sm:$0xf]
    %v8896 = vld [vmem:[%s8880 + $0x3c] sm:$0xf]
    %v8913 = vunpack.c.l.b16 %v8881
    %v8914 = vunpack.c.l.b16 %v8882
    %v8915 = vunpack.c.l.b16 %v8883
    %v8916 = vunpack.c.l.b16 %v8884
    %v8917 = vunpack.c.l.b16 %v8885
    %v8918 = vunpack.c.l.b16 %v8886
    %v8919 = vunpack.c.l.b16 %v8887
    %v8920 = vunpack.c.l.b16 %v8888
    %v8921 = vunpack.c.l.b16 %v8889
    %v8922 = vunpack.c.l.b16 %v8890
    %v8923 = vunpack.c.l.b16 %v8891
    %v8924 = vunpack.c.l.b16 %v8892
    %v8925 = vunpack.c.l.b16 %v8893
    %v8926 = vunpack.c.l.b16 %v8894
    %v8927 = vunpack.c.l.b16 %v8895
    %v8928 = vunpack.c.l.b16 %v8896
    %v8929 = vpack.c.b16 %v8914, %v8913
    %v8930 = vpack.c.b16 %v8916, %v8915
    %v8931 = vpack.c.b16 %v8918, %v8917
    %v8932 = vpack.c.b16 %v8920, %v8919
    %v8933 = vpack.c.b16 %v8922, %v8921
    %v8934 = vpack.c.b16 %v8924, %v8923
    %v8935 = vpack.c.b16 %v8926, %v8925
    %v8936 = vpack.c.b16 %v8928, %v8927
    %8945 = vmatpush.bf16.msra.mxu0 %v8936
    %8946 = vmatpush.bf16.msra.mxu0 %v8935
    %8947 = vmatpush.bf16.msra.mxu0 %v8934
    %8948 = vmatpush.bf16.msra.mxu0 %v8933
    %8949 = vmatpush.bf16.msra.mxu0 %v8932
    %8950 = vmatpush.bf16.msra.mxu0 %v8931
    %8951 = vmatpush.bf16.msra.mxu0 %v8930
    %8952 = vmatpush.bf16.msra.mxu0 %v8929
    %8953 = vmatmul.bf16.gmra.mxu0 %v8872
    %v8954 = vpop.f32.mrf.mxu0
    %v8955 = vadd.f32 0.0, %v8954
    %v8956 = vpop.f32.mrf.mxu0
    %v8957 = vadd.f32 0.0, %v8956
    %8958 = vmatmul.bf16.gmra.mxu0 %v8873
    %v8959 = vpop.f32.mrf.mxu0
    %v8960 = vadd.f32 0.0, %v8959
    %v8961 = vpop.f32.mrf.mxu0
    %v8962 = vadd.f32 0.0, %v8961
    %8963 = vmatmul.bf16.gmra.mxu0 %v8874
    %v8964 = vpop.f32.mrf.mxu0
    %v8965 = vadd.f32 0.0, %v8964
    %v8966 = vpop.f32.mrf.mxu0
    %v8967 = vadd.f32 0.0, %v8966
    %8968 = vmatmul.bf16.gmra.mxu0 %v8875
    %v8969 = vpop.f32.mrf.mxu0
    %v8970 = vadd.f32 0.0, %v8969
    %v8971 = vpop.f32.mrf.mxu0
    %v8972 = vadd.f32 0.0, %v8971
    %8973 = vmatmul.bf16.gmra.mxu0 %v8876
    %v8974 = vpop.f32.mrf.mxu0
    %v8975 = vadd.f32 0.0, %v8974
    %v8976 = vpop.f32.mrf.mxu0
    %v8977 = vadd.f32 0.0, %v8976
    %8978 = vmatmul.bf16.gmra.mxu0 %v8877
    %v8979 = vpop.f32.mrf.mxu0
    %v8980 = vadd.f32 0.0, %v8979
    %v8981 = vpop.f32.mrf.mxu0
    %v8982 = vadd.f32 0.0, %v8981
    %8983 = vmatmul.bf16.gmra.mxu0 %v8878
    %v8984 = vpop.f32.mrf.mxu0
    %v8985 = vadd.f32 0.0, %v8984
    %v8986 = vpop.f32.mrf.mxu0
    %v8987 = vadd.f32 0.0, %v8986
    %8988 = vmatmul.bf16.gmra.mxu0 %v8879
    %v8989 = vpop.f32.mrf.mxu0
    %v8990 = vadd.f32 0.0, %v8989
    %v8991 = vpop.f32.mrf.mxu0
    %v8992 = vadd.f32 0.0, %v8991
    %8993 = vdwg.mxu0
    %v8994 = vld [vmem:[%s2084] sm:$0xff]
    %v8995 = vld [vmem:[%s2084 + $0x8] sm:$0xff]
    %v8996 = vld [vmem:[%s2084 + $0x10] sm:$0xff]
    %v8997 = vld [vmem:[%s2084 + $0x18] sm:$0xff]
    %v8998 = vld [vmem:[%s2084 + $0x20] sm:$0xff]
    %v8999 = vld [vmem:[%s2084 + $0x28] sm:$0xff]
    %v9000 = vld [vmem:[%s2084 + $0x30] sm:$0xff]
    %v9001 = vld [vmem:[%s2084 + $0x38] sm:$0xff]
    %v9002 = vld [vmem:[%s2084 + $0x40] sm:$0xff]
    %v9003 = vld [vmem:[%s2084 + $0x48] sm:$0xff]
    %v9004 = vld [vmem:[%s2084 + $0x50] sm:$0xff]
    %v9005 = vld [vmem:[%s2084 + $0x58] sm:$0xff]
    %v9006 = vld [vmem:[%s2084 + $0x60] sm:$0xff]
    %v9007 = vld [vmem:[%s2084 + $0x68] sm:$0xff]
    %v9008 = vld [vmem:[%s2084 + $0x70] sm:$0xff]
    %v9009 = vld [vmem:[%s2084 + $0x78] sm:$0xff]
    %v9010 = vmul.f32 %v8994, %v8955
    %v9011 = vmul.f32 %v8995, %v8957
    %v9012 = vmul.f32 %v8996, %v8960
    %v9013 = vmul.f32 %v8997, %v8962
    %v9014 = vmul.f32 %v8998, %v8965
    %v9015 = vmul.f32 %v8999, %v8967
    %v9016 = vmul.f32 %v9000, %v8970
    %v9017 = vmul.f32 %v9001, %v8972
    %v9018 = vmul.f32 %v9002, %v8975
    %v9019 = vmul.f32 %v9003, %v8977
    %v9020 = vmul.f32 %v9004, %v8980
    %v9021 = vmul.f32 %v9005, %v8982
    %v9022 = vmul.f32 %v9006, %v8985
    %v9023 = vmul.f32 %v9007, %v8987
    %v9024 = vmul.f32 %v9008, %v8990
    %v9025 = vmul.f32 %v9009, %v8992
    %v9026 = vadd.f32 %v8840, %v9010
    %v9027 = vadd.f32 %v8841, %v9011
    %v9028 = vadd.f32 %v8842, %v9012
    %v9029 = vadd.f32 %v8843, %v9013
    %v9030 = vadd.f32 %v8844, %v9014
    %v9031 = vadd.f32 %v8845, %v9015
    %v9032 = vadd.f32 %v8846, %v9016
    %v9033 = vadd.f32 %v8847, %v9017
    %v9034 = vadd.f32 %v8848, %v9018
    %v9035 = vadd.f32 %v8849, %v9019
    %v9036 = vadd.f32 %v8850, %v9020
    %v9037 = vadd.f32 %v8851, %v9021
    %v9038 = vadd.f32 %v8852, %v9022
    %v9039 = vadd.f32 %v8853, %v9023
    %v9040 = vadd.f32 %v8854, %v9024
    %v9041 = vadd.f32 %v8855, %v9025
    %v9042 = vld [vmem:[#allocation2 + $0x18] sm:$0xff]
    %v9043 = vld [vmem:[#allocation2 + $0x20] sm:$0xff]
    %v9044 = vld [vmem:[#allocation2 + $0x28] sm:$0xff]
    %v9045 = vld [vmem:[#allocation2 + $0x30] sm:$0xff]
    %v9046 = vld [vmem:[#allocation2 + $0x38] sm:$0xff]
    %v9047 = vld [vmem:[#allocation2 + $0x40] sm:$0xff]
    %v9048 = vld [vmem:[#allocation2 + $0x48] sm:$0xff]
    %v9049 = vld [vmem:[#allocation2 + $0x50] sm:$0xff]
    %v9050 = vld [vmem:[#allocation2 + $0x58] sm:$0xff]
    %v9051 = vld [vmem:[#allocation2 + $0x60] sm:$0xff]
    %v9052 = vld [vmem:[#allocation2 + $0x68] sm:$0xff]
    %v9053 = vld [vmem:[#allocation2 + $0x70] sm:$0xff]
    %v9054 = vld [vmem:[#allocation2 + $0x78] sm:$0xff]
    %v9055 = vld [vmem:[#allocation2 + $0x80] sm:$0xff]
    %v9056 = vld [vmem:[#allocation2 + $0x88] sm:$0xff]
    %v9057 = vld [vmem:[#allocation2 + $0x90] sm:$0xff]
    %v9058 = vpack.c.bf16 %v9043, %v9042
    %v9059 = vpack.c.bf16 %v9045, %v9044
    %v9060 = vpack.c.bf16 %v9047, %v9046
    %v9061 = vpack.c.bf16 %v9049, %v9048
    %v9062 = vpack.c.bf16 %v9051, %v9050
    %v9063 = vpack.c.bf16 %v9053, %v9052
    %v9064 = vpack.c.bf16 %v9055, %v9054
    %v9065 = vpack.c.bf16 %v9057, %v9056
    %s9066 = scalar_lea.vmem [#allocation11], 2752
    %v9067 = vld [vmem:[%s9066] sm:$0xf]
    %v9068 = vld [vmem:[%s9066 + $0x4] sm:$0xf]
    %v9069 = vld [vmem:[%s9066 + $0x8] sm:$0xf]
    %v9070 = vld [vmem:[%s9066 + $0xc] sm:$0xf]
    %v9071 = vld [vmem:[%s9066 + $0x10] sm:$0xf]
    %v9072 = vld [vmem:[%s9066 + $0x14] sm:$0xf]
    %v9073 = vld [vmem:[%s9066 + $0x18] sm:$0xf]
    %v9074 = vld [vmem:[%s9066 + $0x1c] sm:$0xf]
    %v9075 = vld [vmem:[%s9066 + $0x20] sm:$0xf]
    %v9076 = vld [vmem:[%s9066 + $0x24] sm:$0xf]
    %v9077 = vld [vmem:[%s9066 + $0x28] sm:$0xf]
    %v9078 = vld [vmem:[%s9066 + $0x2c] sm:$0xf]
    %v9079 = vld [vmem:[%s9066 + $0x30] sm:$0xf]
    %v9080 = vld [vmem:[%s9066 + $0x34] sm:$0xf]
    %v9081 = vld [vmem:[%s9066 + $0x38] sm:$0xf]
    %v9082 = vld [vmem:[%s9066 + $0x3c] sm:$0xf]
    %v9099 = vunpack.c.l.b16 %v9067
    %v9100 = vunpack.c.l.b16 %v9068
    %v9101 = vunpack.c.l.b16 %v9069
    %v9102 = vunpack.c.l.b16 %v9070
    %v9103 = vunpack.c.l.b16 %v9071
    %v9104 = vunpack.c.l.b16 %v9072
    %v9105 = vunpack.c.l.b16 %v9073
    %v9106 = vunpack.c.l.b16 %v9074
    %v9107 = vunpack.c.l.b16 %v9075
    %v9108 = vunpack.c.l.b16 %v9076
    %v9109 = vunpack.c.l.b16 %v9077
    %v9110 = vunpack.c.l.b16 %v9078
    %v9111 = vunpack.c.l.b16 %v9079
    %v9112 = vunpack.c.l.b16 %v9080
    %v9113 = vunpack.c.l.b16 %v9081
    %v9114 = vunpack.c.l.b16 %v9082
    %v9115 = vpack.c.b16 %v9100, %v9099
    %v9116 = vpack.c.b16 %v9102, %v9101
    %v9117 = vpack.c.b16 %v9104, %v9103
    %v9118 = vpack.c.b16 %v9106, %v9105
    %v9119 = vpack.c.b16 %v9108, %v9107
    %v9120 = vpack.c.b16 %v9110, %v9109
    %v9121 = vpack.c.b16 %v9112, %v9111
    %v9122 = vpack.c.b16 %v9114, %v9113
    %9131 = vmatpush.bf16.msra.mxu0 %v9122
    %9132 = vmatpush.bf16.msra.mxu0 %v9121
    %9133 = vmatpush.bf16.msra.mxu0 %v9120
    %9134 = vmatpush.bf16.msra.mxu0 %v9119
    %9135 = vmatpush.bf16.msra.mxu0 %v9118
    %9136 = vmatpush.bf16.msra.mxu0 %v9117
    %9137 = vmatpush.bf16.msra.mxu0 %v9116
    %9138 = vmatpush.bf16.msra.mxu0 %v9115
    %9139 = vmatmul.bf16.gmra.mxu0 %v9058
    %v9140 = vpop.f32.mrf.mxu0
    %v9141 = vadd.f32 0.0, %v9140
    %v9142 = vpop.f32.mrf.mxu0
    %v9143 = vadd.f32 0.0, %v9142
    %9144 = vmatmul.bf16.gmra.mxu0 %v9059
    %v9145 = vpop.f32.mrf.mxu0
    %v9146 = vadd.f32 0.0, %v9145
    %v9147 = vpop.f32.mrf.mxu0
    %v9148 = vadd.f32 0.0, %v9147
    %9149 = vmatmul.bf16.gmra.mxu0 %v9060
    %v9150 = vpop.f32.mrf.mxu0
    %v9151 = vadd.f32 0.0, %v9150
    %v9152 = vpop.f32.mrf.mxu0
    %v9153 = vadd.f32 0.0, %v9152
    %9154 = vmatmul.bf16.gmra.mxu0 %v9061
    %v9155 = vpop.f32.mrf.mxu0
    %v9156 = vadd.f32 0.0, %v9155
    %v9157 = vpop.f32.mrf.mxu0
    %v9158 = vadd.f32 0.0, %v9157
    %9159 = vmatmul.bf16.gmra.mxu0 %v9062
    %v9160 = vpop.f32.mrf.mxu0
    %v9161 = vadd.f32 0.0, %v9160
    %v9162 = vpop.f32.mrf.mxu0
    %v9163 = vadd.f32 0.0, %v9162
    %9164 = vmatmul.bf16.gmra.mxu0 %v9063
    %v9165 = vpop.f32.mrf.mxu0
    %v9166 = vadd.f32 0.0, %v9165
    %v9167 = vpop.f32.mrf.mxu0
    %v9168 = vadd.f32 0.0, %v9167
    %9169 = vmatmul.bf16.gmra.mxu0 %v9064
    %v9170 = vpop.f32.mrf.mxu0
    %v9171 = vadd.f32 0.0, %v9170
    %v9172 = vpop.f32.mrf.mxu0
    %v9173 = vadd.f32 0.0, %v9172
    %9174 = vmatmul.bf16.gmra.mxu0 %v9065
    %v9175 = vpop.f32.mrf.mxu0
    %v9176 = vadd.f32 0.0, %v9175
    %v9177 = vpop.f32.mrf.mxu0
    %v9178 = vadd.f32 0.0, %v9177
    %9179 = vdwg.mxu0
    %v9180 = vld [vmem:[%s2271] sm:$0xff]
    %v9181 = vld [vmem:[%s2271 + $0x8] sm:$0xff]
    %v9182 = vld [vmem:[%s2271 + $0x10] sm:$0xff]
    %v9183 = vld [vmem:[%s2271 + $0x18] sm:$0xff]
    %v9184 = vld [vmem:[%s2271 + $0x20] sm:$0xff]
    %v9185 = vld [vmem:[%s2271 + $0x28] sm:$0xff]
    %v9186 = vld [vmem:[%s2271 + $0x30] sm:$0xff]
    %v9187 = vld [vmem:[%s2271 + $0x38] sm:$0xff]
    %v9188 = vld [vmem:[%s2271 + $0x40] sm:$0xff]
    %v9189 = vld [vmem:[%s2271 + $0x48] sm:$0xff]
    %v9190 = vld [vmem:[%s2271 + $0x50] sm:$0xff]
    %v9191 = vld [vmem:[%s2271 + $0x58] sm:$0xff]
    %v9192 = vld [vmem:[%s2271 + $0x60] sm:$0xff]
    %v9193 = vld [vmem:[%s2271 + $0x68] sm:$0xff]
    %v9194 = vld [vmem:[%s2271 + $0x70] sm:$0xff]
    %v9195 = vld [vmem:[%s2271 + $0x78] sm:$0xff]
    %v9196 = vmul.f32 %v9180, %v9141
    %v9197 = vmul.f32 %v9181, %v9143
    %v9198 = vmul.f32 %v9182, %v9146
    %v9199 = vmul.f32 %v9183, %v9148
    %v9200 = vmul.f32 %v9184, %v9151
    %v9201 = vmul.f32 %v9185, %v9153
    %v9202 = vmul.f32 %v9186, %v9156
    %v9203 = vmul.f32 %v9187, %v9158
    %v9204 = vmul.f32 %v9188, %v9161
    %v9205 = vmul.f32 %v9189, %v9163
    %v9206 = vmul.f32 %v9190, %v9166
    %v9207 = vmul.f32 %v9191, %v9168
    %v9208 = vmul.f32 %v9192, %v9171
    %v9209 = vmul.f32 %v9193, %v9173
    %v9210 = vmul.f32 %v9194, %v9176
    %v9211 = vmul.f32 %v9195, %v9178
    %v9212 = vadd.f32 %v9026, %v9196
    %v9213 = vadd.f32 %v9027, %v9197
    %v9214 = vadd.f32 %v9028, %v9198
    %v9215 = vadd.f32 %v9029, %v9199
    %v9216 = vadd.f32 %v9030, %v9200
    %v9217 = vadd.f32 %v9031, %v9201
    %v9218 = vadd.f32 %v9032, %v9202
    %v9219 = vadd.f32 %v9033, %v9203
    %v9220 = vadd.f32 %v9034, %v9204
    %v9221 = vadd.f32 %v9035, %v9205
    %v9222 = vadd.f32 %v9036, %v9206
    %v9223 = vadd.f32 %v9037, %v9207
    %v9224 = vadd.f32 %v9038, %v9208
    %v9225 = vadd.f32 %v9039, %v9209
    %v9226 = vadd.f32 %v9040, %v9210
    %v9227 = vadd.f32 %v9041, %v9211
    %v9228 = vld [vmem:[#allocation2 + $0x19] sm:$0xff]
    %v9229 = vld [vmem:[#allocation2 + $0x21] sm:$0xff]
    %v9230 = vld [vmem:[#allocation2 + $0x29] sm:$0xff]
    %v9231 = vld [vmem:[#allocation2 + $0x31] sm:$0xff]
    %v9232 = vld [vmem:[#allocation2 + $0x39] sm:$0xff]
    %v9233 = vld [vmem:[#allocation2 + $0x41] sm:$0xff]
    %v9234 = vld [vmem:[#allocation2 + $0x49] sm:$0xff]
    %v9235 = vld [vmem:[#allocation2 + $0x51] sm:$0xff]
    %v9236 = vld [vmem:[#allocation2 + $0x59] sm:$0xff]
    %v9237 = vld [vmem:[#allocation2 + $0x61] sm:$0xff]
    %v9238 = vld [vmem:[#allocation2 + $0x69] sm:$0xff]
    %v9239 = vld [vmem:[#allocation2 + $0x71] sm:$0xff]
    %v9240 = vld [vmem:[#allocation2 + $0x79] sm:$0xff]
    %v9241 = vld [vmem:[#allocation2 + $0x81] sm:$0xff]
    %v9242 = vld [vmem:[#allocation2 + $0x89] sm:$0xff]
    %v9243 = vld [vmem:[#allocation2 + $0x91] sm:$0xff]
    %v9244 = vpack.c.bf16 %v9229, %v9228
    %v9245 = vpack.c.bf16 %v9231, %v9230
    %v9246 = vpack.c.bf16 %v9233, %v9232
    %v9247 = vpack.c.bf16 %v9235, %v9234
    %v9248 = vpack.c.bf16 %v9237, %v9236
    %v9249 = vpack.c.bf16 %v9239, %v9238
    %v9250 = vpack.c.bf16 %v9241, %v9240
    %v9251 = vpack.c.bf16 %v9243, %v9242
    %s9252 = scalar_lea.vmem [#allocation11], 2816
    %v9253 = vld [vmem:[%s9252] sm:$0xf]
    %v9254 = vld [vmem:[%s9252 + $0x4] sm:$0xf]
    %v9255 = vld [vmem:[%s9252 + $0x8] sm:$0xf]
    %v9256 = vld [vmem:[%s9252 + $0xc] sm:$0xf]
    %v9257 = vld [vmem:[%s9252 + $0x10] sm:$0xf]
    %v9258 = vld [vmem:[%s9252 + $0x14] sm:$0xf]
    %v9259 = vld [vmem:[%s9252 + $0x18] sm:$0xf]
    %v9260 = vld [vmem:[%s9252 + $0x1c] sm:$0xf]
    %v9261 = vld [vmem:[%s9252 + $0x20] sm:$0xf]
    %v9262 = vld [vmem:[%s9252 + $0x24] sm:$0xf]
    %v9263 = vld [vmem:[%s9252 + $0x28] sm:$0xf]
    %v9264 = vld [vmem:[%s9252 + $0x2c] sm:$0xf]
    %v9265 = vld [vmem:[%s9252 + $0x30] sm:$0xf]
    %v9266 = vld [vmem:[%s9252 + $0x34] sm:$0xf]
    %v9267 = vld [vmem:[%s9252 + $0x38] sm:$0xf]
    %v9268 = vld [vmem:[%s9252 + $0x3c] sm:$0xf]
    %v9285 = vunpack.c.l.b16 %v9253
    %v9286 = vunpack.c.l.b16 %v9254
    %v9287 = vunpack.c.l.b16 %v9255
    %v9288 = vunpack.c.l.b16 %v9256
    %v9289 = vunpack.c.l.b16 %v9257
    %v9290 = vunpack.c.l.b16 %v9258
    %v9291 = vunpack.c.l.b16 %v9259
    %v9292 = vunpack.c.l.b16 %v9260
    %v9293 = vunpack.c.l.b16 %v9261
    %v9294 = vunpack.c.l.b16 %v9262
    %v9295 = vunpack.c.l.b16 %v9263
    %v9296 = vunpack.c.l.b16 %v9264
    %v9297 = vunpack.c.l.b16 %v9265
    %v9298 = vunpack.c.l.b16 %v9266
    %v9299 = vunpack.c.l.b16 %v9267
    %v9300 = vunpack.c.l.b16 %v9268
    %v9301 = vpack.c.b16 %v9286, %v9285
    %v9302 = vpack.c.b16 %v9288, %v9287
    %v9303 = vpack.c.b16 %v9290, %v9289
    %v9304 = vpack.c.b16 %v9292, %v9291
    %v9305 = vpack.c.b16 %v9294, %v9293
    %v9306 = vpack.c.b16 %v9296, %v9295
    %v9307 = vpack.c.b16 %v9298, %v9297
    %v9308 = vpack.c.b16 %v9300, %v9299
    %9317 = vmatpush.bf16.msra.mxu0 %v9308
    %9318 = vmatpush.bf16.msra.mxu0 %v9307
    %9319 = vmatpush.bf16.msra.mxu0 %v9306
    %9320 = vmatpush.bf16.msra.mxu0 %v9305
    %9321 = vmatpush.bf16.msra.mxu0 %v9304
    %9322 = vmatpush.bf16.msra.mxu0 %v9303
    %9323 = vmatpush.bf16.msra.mxu0 %v9302
    %9324 = vmatpush.bf16.msra.mxu0 %v9301
    %9325 = vmatmul.bf16.gmra.mxu0 %v9244
    %v9326 = vpop.f32.mrf.mxu0
    %v9327 = vadd.f32 0.0, %v9326
    %v9328 = vpop.f32.mrf.mxu0
    %v9329 = vadd.f32 0.0, %v9328
    %9330 = vmatmul.bf16.gmra.mxu0 %v9245
    %v9331 = vpop.f32.mrf.mxu0
    %v9332 = vadd.f32 0.0, %v9331
    %v9333 = vpop.f32.mrf.mxu0
    %v9334 = vadd.f32 0.0, %v9333
    %9335 = vmatmul.bf16.gmra.mxu0 %v9246
    %v9336 = vpop.f32.mrf.mxu0
    %v9337 = vadd.f32 0.0, %v9336
    %v9338 = vpop.f32.mrf.mxu0
    %v9339 = vadd.f32 0.0, %v9338
    %9340 = vmatmul.bf16.gmra.mxu0 %v9247
    %v9341 = vpop.f32.mrf.mxu0
    %v9342 = vadd.f32 0.0, %v9341
    %v9343 = vpop.f32.mrf.mxu0
    %v9344 = vadd.f32 0.0, %v9343
    %9345 = vmatmul.bf16.gmra.mxu0 %v9248
    %v9346 = vpop.f32.mrf.mxu0
    %v9347 = vadd.f32 0.0, %v9346
    %v9348 = vpop.f32.mrf.mxu0
    %v9349 = vadd.f32 0.0, %v9348
    %9350 = vmatmul.bf16.gmra.mxu0 %v9249
    %v9351 = vpop.f32.mrf.mxu0
    %v9352 = vadd.f32 0.0, %v9351
    %v9353 = vpop.f32.mrf.mxu0
    %v9354 = vadd.f32 0.0, %v9353
    %9355 = vmatmul.bf16.gmra.mxu0 %v9250
    %v9356 = vpop.f32.mrf.mxu0
    %v9357 = vadd.f32 0.0, %v9356
    %v9358 = vpop.f32.mrf.mxu0
    %v9359 = vadd.f32 0.0, %v9358
    %9360 = vmatmul.bf16.gmra.mxu0 %v9251
    %v9361 = vpop.f32.mrf.mxu0
    %v9362 = vadd.f32 0.0, %v9361
    %v9363 = vpop.f32.mrf.mxu0
    %v9364 = vadd.f32 0.0, %v9363
    %9365 = vdwg.mxu0
    %v9366 = vld [vmem:[%s2458] sm:$0xff]
    %v9367 = vld [vmem:[%s2458 + $0x8] sm:$0xff]
    %v9368 = vld [vmem:[%s2458 + $0x10] sm:$0xff]
    %v9369 = vld [vmem:[%s2458 + $0x18] sm:$0xff]
    %v9370 = vld [vmem:[%s2458 + $0x20] sm:$0xff]
    %v9371 = vld [vmem:[%s2458 + $0x28] sm:$0xff]
    %v9372 = vld [vmem:[%s2458 + $0x30] sm:$0xff]
    %v9373 = vld [vmem:[%s2458 + $0x38] sm:$0xff]
    %v9374 = vld [vmem:[%s2458 + $0x40] sm:$0xff]
    %v9375 = vld [vmem:[%s2458 + $0x48] sm:$0xff]
    %v9376 = vld [vmem:[%s2458 + $0x50] sm:$0xff]
    %v9377 = vld [vmem:[%s2458 + $0x58] sm:$0xff]
    %v9378 = vld [vmem:[%s2458 + $0x60] sm:$0xff]
    %v9379 = vld [vmem:[%s2458 + $0x68] sm:$0xff]
    %v9380 = vld [vmem:[%s2458 + $0x70] sm:$0xff]
    %v9381 = vld [vmem:[%s2458 + $0x78] sm:$0xff]
    %v9382 = vmul.f32 %v9366, %v9327
    %v9383 = vmul.f32 %v9367, %v9329
    %v9384 = vmul.f32 %v9368, %v9332
    %v9385 = vmul.f32 %v9369, %v9334
    %v9386 = vmul.f32 %v9370, %v9337
    %v9387 = vmul.f32 %v9371, %v9339
    %v9388 = vmul.f32 %v9372, %v9342
    %v9389 = vmul.f32 %v9373, %v9344
    %v9390 = vmul.f32 %v9374, %v9347
    %v9391 = vmul.f32 %v9375, %v9349
    %v9392 = vmul.f32 %v9376, %v9352
    %v9393 = vmul.f32 %v9377, %v9354
    %v9394 = vmul.f32 %v9378, %v9357
    %v9395 = vmul.f32 %v9379, %v9359
    %v9396 = vmul.f32 %v9380, %v9362
    %v9397 = vmul.f32 %v9381, %v9364
    %v9398 = vadd.f32 %v9212, %v9382
    %v9399 = vadd.f32 %v9213, %v9383
    %v9400 = vadd.f32 %v9214, %v9384
    %v9401 = vadd.f32 %v9215, %v9385
    %v9402 = vadd.f32 %v9216, %v9386
    %v9403 = vadd.f32 %v9217, %v9387
    %v9404 = vadd.f32 %v9218, %v9388
    %v9405 = vadd.f32 %v9219, %v9389
    %v9406 = vadd.f32 %v9220, %v9390
    %v9407 = vadd.f32 %v9221, %v9391
    %v9408 = vadd.f32 %v9222, %v9392
    %v9409 = vadd.f32 %v9223, %v9393
    %v9410 = vadd.f32 %v9224, %v9394
    %v9411 = vadd.f32 %v9225, %v9395
    %v9412 = vadd.f32 %v9226, %v9396
    %v9413 = vadd.f32 %v9227, %v9397
    %s9414 = scalar_lea.vmem [#allocation13], 4
    %v9415 = vld [vmem:[%s9414] sm:$0x1]
    %v9417 = vperm.slane %v9415, 0
    %v9419 = vadd.f32 %v9398, %v9417
    %v9420 = vadd.f32 %v9399, %v9417
    %v9421 = vadd.f32 %v9400, %v9417
    %v9422 = vadd.f32 %v9401, %v9417
    %v9423 = vadd.f32 %v9402, %v9417
    %v9424 = vadd.f32 %v9403, %v9417
    %v9425 = vadd.f32 %v9404, %v9417
    %v9426 = vadd.f32 %v9405, %v9417
    %v9427 = vadd.f32 %v9406, %v9417
    %v9428 = vadd.f32 %v9407, %v9417
    %v9429 = vadd.f32 %v9408, %v9417
    %v9430 = vadd.f32 %v9409, %v9417
    %v9431 = vadd.f32 %v9410, %v9417
    %v9432 = vadd.f32 %v9411, %v9417
    %v9433 = vadd.f32 %v9412, %v9417
    %v9434 = vadd.f32 %v9413, %v9417
    %v9435 = vmax.f32 %v9419, 0.0
    %v9436 = vmax.f32 %v9420, 0.0
    %v9437 = vmax.f32 %v9421, 0.0
    %v9438 = vmax.f32 %v9422, 0.0
    %v9439 = vmax.f32 %v9423, 0.0
    %v9440 = vmax.f32 %v9424, 0.0
    %v9441 = vmax.f32 %v9425, 0.0
    %v9442 = vmax.f32 %v9426, 0.0
    %v9443 = vmax.f32 %v9427, 0.0
    %v9444 = vmax.f32 %v9428, 0.0
    %v9445 = vmax.f32 %v9429, 0.0
    %v9446 = vmax.f32 %v9430, 0.0
    %v9447 = vmax.f32 %v9431, 0.0
    %v9448 = vmax.f32 %v9432, 0.0
    %v9449 = vmax.f32 %v9433, 0.0
    %v9450 = vmax.f32 %v9434, 0.0
    %9451 = vst [vmem:[%s9] sm:$0xff] %v9435
    %9452 = vst [vmem:[%s9 + $0x8] sm:$0xff] %v9436
    %9453 = vst [vmem:[%s9 + $0x10] sm:$0xff] %v9437
    %9454 = vst [vmem:[%s9 + $0x18] sm:$0xff] %v9438
    %9455 = vst [vmem:[%s9 + $0x20] sm:$0xff] %v9439
    %9456 = vst [vmem:[%s9 + $0x28] sm:$0xff] %v9440
    %9457 = vst [vmem:[%s9 + $0x30] sm:$0xff] %v9441
    %9458 = vst [vmem:[%s9 + $0x38] sm:$0xff] %v9442
    %9459 = vst [vmem:[%s9 + $0x40] sm:$0xff] %v9443
    %9460 = vst [vmem:[%s9 + $0x48] sm:$0xff] %v9444
    %9461 = vst [vmem:[%s9 + $0x50] sm:$0xff] %v9445
    %9462 = vst [vmem:[%s9 + $0x58] sm:$0xff] %v9446
    %9463 = vst [vmem:[%s9 + $0x60] sm:$0xff] %v9447
    %9464 = vst [vmem:[%s9 + $0x68] sm:$0xff] %v9448
    %9465 = vst [vmem:[%s9 + $0x70] sm:$0xff] %v9449
    %9466 = vst [vmem:[%s9 + $0x78] sm:$0xff] %v9450
    // Predicated region
    $region70: #{forward.1} parent=1 // pred_check
      _
    $region71: #{forward.1} parent=1 // pred_check_branch
      %9468 = sbr.rel (0) target = $region73
    $region72: #{forward.1} parent=1 // pred_region
      _
    $region73: #{forward.1} parent=1 // pred_fallthru
      _
    // Predicated region
    $region74: #{forward.1} parent=1 // pred_check
      _
    $region75: #{forward.1} parent=1 // pred_check_branch
      %9470 = sbr.rel (0) target = $region77
    $region76: #{forward.1} parent=1 // pred_region
      _
    $region77: #{forward.1} parent=1 // pred_fallthru
      _
    %9471 = vsyncpa [#allocation4], 1
    %9472 = vsyncpa [#allocation6], 1
    %9473 = vsyncpa [#allocation9], 1
    %9474 = vsyncpa [#allocation12], 1
    %9475 = vsyncpa [#allocation15], 1

</llo_original>
